<compile_context>
chip_gen: v6e
topology: v6e:2x2x1
jax: 0.10.0
libtpu: 0.0.40
codegen_flags: <defaults>
</compile_context>

<pallas_src>
import math

import jax
import jax.numpy as jnp
from jax import lax
from jax.experimental import pallas as pl
from jax.experimental.pallas import tpu as pltpu

LANE = 128
VMEM_LIMIT = 32 * 1024 * 1024  # tight-but-ample on v5e/v6e (128 MiB) and v7x (64 MiB)

# (name, cin, kh, kw, stride, pad) -- static conv hyper-params.
CONV_CFG = (
    ("conv1", 1, 3, 3, 1, 1),
    ("conv2", 32, 4, 4, 2, 1),
    ("conv3", 32, 3, 3, 1, 1),
    ("conv4", 64, 4, 4, 2, 1),
)


def _round_up(v, m):
    return (v + m - 1) // m * m


# ---------------------------------------------------------------------------
# Fused conv1..conv4 kernel: one image per grid step, activations in VMEM.
# ---------------------------------------------------------------------------
def _conv_stack_kernel(x_ref, w1, b1, w2, b2, w3, b3, w4, b4, sel2, sel4,
                       out_ref, c2, c3, c4):
    """x_ref: (1,28,28,9) conv1 patches; out_ref: (1,7,7,64) conv4 output.

    c2/c3/c4 are zero-padded NHWC canvases (VMEM scratch) holding the inputs
    of conv2/conv3/conv4.
    """
    # Re-zero the canvases each grid step (only the 1-px borders really need
    # it; interiors are fully overwritten).  Keeps "parallel" semantics safe.
    c2[...] = jnp.zeros_like(c2)
    c3[...] = jnp.zeros_like(c3)
    c4[...] = jnp.zeros_like(c4)

    # conv1: 1->32, k3 s1 p1, 28x28 -> 28x28, written into c2's interior.
    def conv1_row(i, carry):
        lhs = x_ref[0, i, :, :]                                           # (28, 9)
        acc = jnp.dot(lhs, w1[...], preferred_element_type=jnp.float32)   # (28, 32)
        acc = jnp.maximum(acc + b1[...], 0.0)
        c2[i + 1, 1:29, :] = acc.astype(c2.dtype)
        return carry
    lax.fori_loop(0, 28, conv1_row, 0)

    # conv2: 32->32, k4 s2 p1, 28x28 -> 14x14.  In-kernel im2col: 16 shifted
    # window slices concatenated along K; the column stride-2 is absorbed by
    # the constant selection matmul sel2 (no strided memory access).
    def conv2_row(i, carry):
        pieces = [c2[2 * i + di, dj:dj + 27, :]
                  for di in range(4) for dj in range(4)]
        lhs = jnp.concatenate(pieces, axis=-1)                            # (27, 512)
        z = jnp.dot(lhs, w2[...], preferred_element_type=jnp.float32)     # (27, 32)
        acc = jnp.dot(sel2[...], z, preferred_element_type=jnp.float32)   # (14, 32)
        acc = jnp.maximum(acc + b2[...], 0.0)
        c3[i + 1, 1:15, :] = acc.astype(c3.dtype)
        return carry
    lax.fori_loop(0, 14, conv2_row, 0)

    # conv3: 32->64, k3 s1 p1, 14x14 -> 14x14.
    def conv3_row(i, carry):
        pieces = [c3[i + di, dj:dj + 14, :]
                  for di in range(3) for dj in range(3)]
        lhs = jnp.concatenate(pieces, axis=-1)                            # (14, 288)
        acc = jnp.dot(lhs, w3[...], preferred_element_type=jnp.float32)   # (14, 64)
        acc = jnp.maximum(acc + b3[...], 0.0)
        c4[i + 1, 1:15, :] = acc.astype(c4.dtype)
        return carry
    lax.fori_loop(0, 14, conv3_row, 0)

    # conv4: 64->64, k4 s2 p1, 14x14 -> 7x7; rows go straight to the output.
    def conv4_row(i, carry):
        pieces = [c4[2 * i + di, dj:dj + 13, :]
                  for di in range(4) for dj in range(4)]
        lhs = jnp.concatenate(pieces, axis=-1)                            # (13, 1024)
        z = jnp.dot(lhs, w4[...], preferred_element_type=jnp.float32)     # (13, 64)
        acc = jnp.dot(sel4[...], z, preferred_element_type=jnp.float32)   # (7, 64)
        acc = jnp.maximum(acc + b4[...], 0.0)
        out_ref[0, i, :, :] = acc.astype(out_ref.dtype)
        return carry
    lax.fori_loop(0, 7, conv4_row, 0)


def conv_stack(x_cols, params):
    """x_cols: (B,28,28,9) bf16 conv1 patches -> (B,7,7,64) bf16 conv4 output."""
    B = x_cols.shape[0]
    w1, b1 = params["conv1"]
    w2, b2 = params["conv2"]
    w3, b3 = params["conv3"]
    w4, b4 = params["conv4"]
    sel2, sel4 = params["sel2"], params["sel4"]

    def resident(a):
        nd = a.ndim
        return pl.BlockSpec(a.shape, lambda b, _nd=nd: (0,) * _nd)

    return pl.pallas_call(
        _conv_stack_kernel,
        out_shape=jax.ShapeDtypeStruct((B, 7, 7, 64), jnp.bfloat16),
        grid=(B,),
        in_specs=[
            pl.BlockSpec((1, 28, 28, 9), lambda b: (b, 0, 0, 0)),
            resident(w1), resident(b1),
            resident(w2), resident(b2),
            resident(w3), resident(b3),
            resident(w4), resident(b4),
            resident(sel2), resident(sel4),
        ],
        out_specs=pl.BlockSpec((1, 7, 7, 64), lambda b: (b, 0, 0, 0)),
        scratch_shapes=[
            pltpu.VMEM((30, 30, 32), jnp.bfloat16),   # conv2 input canvas (padded)
            pltpu.VMEM((16, 16, 32), jnp.bfloat16),   # conv3 input canvas (padded)
            pltpu.VMEM((16, 16, 64), jnp.bfloat16),   # conv4 input canvas (padded)
        ],
        compiler_params=pltpu.CompilerParams(
            dimension_semantics=("parallel",),
            vmem_limit_bytes=VMEM_LIMIT,
        ),
    )(x_cols, w1, b1, w2, b2, w3, b3, w4, b4, sel2, sel4)


# ---------------------------------------------------------------------------
# Fused fc5 -> relu -> fc6 -> relu -> fc7 kernel (intermediates stay in VMEM).
# ---------------------------------------------------------------------------
def _fc_head_kernel(x_ref, w5_ref, b5_ref, w6_ref, b6_ref, w7_ref, b7_ref, o_ref):
    h = jnp.dot(x_ref[...], w5_ref[...], preferred_element_type=jnp.float32)
    h = jnp.maximum(h + b5_ref[...], 0.0)
    h = jnp.dot(h.astype(jnp.bfloat16), w6_ref[...], preferred_element_type=jnp.float32)
    h = jnp.maximum(h + b6_ref[...], 0.0)
    h = jnp.dot(h.astype(jnp.bfloat16), w7_ref[...], preferred_element_type=jnp.float32)
    o_ref[...] = (h + b7_ref[...]).astype(o_ref.dtype)


def fc_head(x, fc5, fc6, fc7, *, block_m=1024):
    """x: (B, 3136) bf16 -> (B, 128) f32 (columns >= 10 are lane padding)."""
    w5, b5 = fc5
    w6, b6 = fc6
    w7, b7 = fc7
    M, K = x.shape
    Np = w7.shape[1]
    # >= 2 grid steps whenever M allows (v7x has 2 TensorCores); multiples of
    # 16 rows for bf16 sublane packing.
    half = _round_up(max(1, -(-M // 2)), 16)
    Mt = max(16, min(block_m, half))
    grid = (pl.cdiv(M, Mt),)

    def resident(a):
        return pl.BlockSpec(a.shape, lambda i: (0, 0))

    return pl.pallas_call(
        _fc_head_kernel,
        out_shape=jax.ShapeDtypeStruct((M, Np), jnp.float32),
        grid=grid,
        in_specs=[
            pl.BlockSpec((Mt, K), lambda i: (i, 0)),
            resident(w5), resident(b5),
            resident(w6), resident(b6),
            resident(w7), resident(b7),
        ],
        out_specs=pl.BlockSpec((Mt, Np), lambda i: (i, 0)),
        compiler_params=pltpu.CompilerParams(
            dimension_semantics=("parallel",),
            vmem_limit_bytes=VMEM_LIMIT,
        ),
    )(x.astype(jnp.bfloat16), w5, b5, w6, b6, w7, b7)


# ---------------------------------------------------------------------------
# Parameters: PyTorch-layout init (same scheme as Net.__init__) + one-time
# relayout into kernel-friendly layout (outside the jitted forward).
# ---------------------------------------------------------------------------
def init_torch_params(key):
    params = {}

    def conv_init(k, cout, cin, kh, kw):
        n = kh * kw * cout
        w = jax.random.normal(k, (cout, cin, kh, kw), jnp.float32) * math.sqrt(2.0 / n)
        b = jnp.zeros((cout,), jnp.float32)
        return w, b

    def fc_init(k, fout, fin):
        k1, k2 = jax.random.split(k)
        bound = 1.0 / math.sqrt(fin)
        w = jax.random.uniform(k1, (fout, fin), jnp.float32, -bound, bound)
        b = jax.random.uniform(k2, (fout,), jnp.float32, -bound, bound)
        return w, b

    keys = jax.random.split(key, 7)
    params["conv1"] = conv_init(keys[0], 32, 1, 3, 3)
    params["conv2"] = conv_init(keys[1], 32, 32, 4, 4)
    params["conv3"] = conv_init(keys[2], 64, 32, 3, 3)
    params["conv4"] = conv_init(keys[3], 64, 64, 4, 4)
    params["fc5"] = fc_init(keys[4], 512, 64 * 7 * 7)
    params["fc6"] = fc_init(keys[5], 512, 512)
    params["fc7"] = fc_init(keys[6], 10, 512)
    return params


def _prep_fc(w, b, pad_out):
    fout = w.shape[0]
    npad = _round_up(fout, LANE) if pad_out else fout
    wm = jnp.pad(w.T, ((0, 0), (0, npad - fout))).astype(jnp.bfloat16)
    bp = jnp.pad(b, (0, npad - fout)).astype(jnp.float32).reshape(1, npad)
    return wm, bp


def prepare_params(tp):
    p = {}
    for name, cin, kh, kw, _stride, _pad in CONV_CFG:
        w, b = tp[name]
        cout = w.shape[0]
        # (cout, cin, kh, kw) -> (kh*kw*cin, cout): rows ordered (kh, kw, cin),
        # matching the in-kernel window concatenation order.
        wm = jnp.transpose(w, (2, 3, 1, 0)).reshape(kh * kw * cin, cout)
        p[name] = (wm.astype(jnp.bfloat16),
                   b.astype(jnp.float32).reshape(1, cout))
    # fc5: permute columns from PyTorch's NCHW flatten order (c,h,w) to our
    # NHWC flatten order (h,w,c).
    w5, b5 = tp["fc5"]
    w5 = w5.reshape(512, 64, 7, 7).transpose(0, 2, 3, 1).reshape(512, 64 * 7 * 7)
    p["fc5"] = _prep_fc(w5, b5, pad_out=False)
    p["fc6"] = _prep_fc(*tp["fc6"], pad_out=False)
    p["fc7"] = _prep_fc(*tp["fc7"], pad_out=True)   # 10 -> 128 lane-dense output
    # Constant 0/1 column-selection matrices for the stride-2 convs.
    p["sel2"] = (jnp.arange(14)[:, None] * 2 == jnp.arange(27)[None, :]).astype(jnp.float32)
    p["sel4"] = (jnp.arange(7)[:, None] * 2 == jnp.arange(13)[None, :]).astype(jnp.float32)
    return p


# ---------------------------------------------------------------------------
# Net.forward
# ---------------------------------------------------------------------------
def conv1_im2col(x):
    # x: (B, 1, 28, 28) NCHW.  The 1-channel input is tiny, so conv1's 3x3
    # patch gather stays as cheap XLA glue (~14 KB/image, bf16).
    img = x[:, 0].astype(jnp.bfloat16)                    # (B, 28, 28)
    xp = jnp.pad(img, ((0, 0), (1, 1), (1, 1)))           # (B, 30, 30)
    cols = jnp.stack(
        [xp[:, di:di + 28, dj:dj + 28] for di in range(3) for dj in range(3)],
        axis=-1)                                          # (B, 28, 28, 9), (kh,kw) order
    return cols


def net_forward(params, x):
    B = x.shape[0]
    cols1 = conv1_im2col(x)                               # (B, 28, 28, 9) bf16
    feats = conv_stack(cols1, params)                     # (B, 7, 7, 64) bf16
    feats = feats.reshape(B, 7 * 7 * 64)                  # NHWC flatten (h, w, c)
    out = fc_head(feats, params["fc5"], params["fc6"], params["fc7"])  # (B, 128)
    return out[:, :10]


# ---------------------------------------------------------------------------
# Precision-matched pure-JAX reference (bf16 inputs, f32 accumulation).
# ---------------------------------------------------------------------------
def reference_forward(tp, x):
    act = x
    for name, _cin, _kh, _kw, stride, pad in CONV_CFG:
        w, b = tp[name]
        act = lax.conv_general_dilated(
            act.astype(jnp.bfloat16), w.astype(jnp.bfloat16),
            window_strides=(stride, stride), padding=[(pad, pad), (pad, pad)],
            dimension_numbers=("NCHW", "OIHW", "NCHW"),
            preferred_element_type=jnp.float32)
        act = jnp.maximum(act + b.reshape(1, -1, 1, 1), 0.0).astype(jnp.bfloat16)
    h = act.reshape(act.shape[0], -1).astype(jnp.float32)  # (c,h,w) flatten (PyTorch order)
    for name in ("fc5", "fc6"):
        w, b = tp[name]
        h = jnp.dot(h.astype(jnp.bfloat16), w.T.astype(jnp.bfloat16),
                    preferred_element_type=jnp.float32) + b
        h = jnp.maximum(h, 0.0)
    w, b = tp["fc7"]
    return jnp.dot(h.astype(jnp.bfloat16), w.T.astype(jnp.bfloat16),
                   preferred_element_type=jnp.float32) + b


if __name__ == "__main__":
    key = jax.random.PRNGKey(0)
    pkey, xkey = jax.random.split(key)
    torch_params = init_torch_params(pkey)
    params = prepare_params(torch_params)   # one-time weight relayout (outside jit)
    # fc5 expects 64*7*7 features => input spatial must be 28x28 (MNIST-like).
    x = jax.random.normal(xkey, (2, 1, 28, 28), jnp.float32)

    out = jax.jit(net_forward)(params, x)
    out = jax.block_until_ready(out)
    assert out.shape == (2, 10), out.shape
    assert out.dtype == jnp.float32
    assert bool(jnp.all(jnp.isfinite(out)))

    ref = jax.jit(reference_forward)(torch_params, x)
    ref = jax.block_until_ready(ref)
    err = float(jnp.max(jnp.abs(out - ref)))
    assert err < 5e-2, f"max abs error vs reference: {err}"
    print("KERNEL_OK")
</pallas_src>

<mosaic_0001>
module attributes {stable_mosaic.version = 11 : i64} {
  func.func @_fc_head_kernel(%arg0: i32, %arg1: memref<16x3136xbf16, #tpu.memory_space<vmem>>, %arg2: memref<3136x512xbf16, #tpu.memory_space<vmem>>, %arg3: memref<1x512xf32, #tpu.memory_space<vmem>>, %arg4: memref<512x512xbf16, #tpu.memory_space<vmem>>, %arg5: memref<1x512xf32, #tpu.memory_space<vmem>>, %arg6: memref<512x128xbf16, #tpu.memory_space<vmem>>, %arg7: memref<1x128xf32, #tpu.memory_space<vmem>>, %arg8: memref<16x128xf32, #tpu.memory_space<vmem>>) attributes {dimension_semantics = [#tpu.dimension_semantics<parallel>], iteration_bounds = array<i64: 1>, scalar_prefetch = 0 : i64, scratch_operands = 0 : i64, tpu.core_type = #tpu.core_type<tc>, window_params = [{transform_indices = @transform_0, window_bounds = array<i64: 16, 3136>}, {pipeline_mode = #tpu.pipeline_mode<synchronous>, transform_indices = @transform_1, window_bounds = array<i64: 3136, 512>}, {pipeline_mode = #tpu.pipeline_mode<synchronous>, transform_indices = @transform_2, window_bounds = array<i64: 1, 512>}, {pipeline_mode = #tpu.pipeline_mode<synchronous>, transform_indices = @transform_3, window_bounds = array<i64: 512, 512>}, {pipeline_mode = #tpu.pipeline_mode<synchronous>, transform_indices = @transform_4, window_bounds = array<i64: 1, 512>}, {pipeline_mode = #tpu.pipeline_mode<synchronous>, transform_indices = @transform_5, window_bounds = array<i64: 512, 128>}, {pipeline_mode = #tpu.pipeline_mode<synchronous>, transform_indices = @transform_6, window_bounds = array<i64: 1, 128>}, {transform_indices = @transform_7, window_bounds = array<i64: 16, 128>}]} {
    %c0 = arith.constant 0 : index
    %c0_0 = arith.constant 0 : index
    %0 = vector.load %arg1[%c0, %c0_0] : memref<16x3136xbf16, #tpu.memory_space<vmem>>, vector<16x3136xbf16>
    %c0_1 = arith.constant 0 : index
    %c0_2 = arith.constant 0 : index
    %1 = vector.load %arg2[%c0_1, %c0_2] : memref<3136x512xbf16, #tpu.memory_space<vmem>>, vector<3136x512xbf16>
    %cst = arith.constant dense<0.000000e+00> : vector<16x512xf32>
    %2 = tpu.matmul %0, %1, %cst {dimension_numbers = #tpu.dot_dimension_numbers<[1], [0], [0], [1], [0, 0, 1, 1], [], []>} : vector<16x3136xbf16>, vector<3136x512xbf16>, vector<16x512xf32> -> vector<16x512xf32>
    %c0_3 = arith.constant 0 : index
    %c0_4 = arith.constant 0 : index
    %3 = vector.load %arg3[%c0_3, %c0_4] : memref<1x512xf32, #tpu.memory_space<vmem>>, vector<1x512xf32>
    %4 = vector.broadcast %3 : vector<1x512xf32> to vector<16x512xf32>
    %5 = arith.addf %2, %4 : vector<16x512xf32>
    %cst_5 = arith.constant 0.000000e+00 : f32
    %6 = vector.broadcast %cst_5 : f32 to vector<16x512xf32>
    %7 = arith.maximumf %5, %6 : vector<16x512xf32>
    %8 = arith.truncf %7 : vector<16x512xf32> to vector<16x512xbf16>
    %c0_6 = arith.constant 0 : index
    %c0_7 = arith.constant 0 : index
    %9 = vector.load %arg4[%c0_6, %c0_7] : memref<512x512xbf16, #tpu.memory_space<vmem>>, vector<512x512xbf16>
    %cst_8 = arith.constant dense<0.000000e+00> : vector<16x512xf32>
    %10 = tpu.matmul %8, %9, %cst_8 {dimension_numbers = #tpu.dot_dimension_numbers<[1], [0], [0], [1], [0, 0, 1, 1], [], []>} : vector<16x512xbf16>, vector<512x512xbf16>, vector<16x512xf32> -> vector<16x512xf32>
    %c0_9 = arith.constant 0 : index
    %c0_10 = arith.constant 0 : index
    %11 = vector.load %arg5[%c0_9, %c0_10] : memref<1x512xf32, #tpu.memory_space<vmem>>, vector<1x512xf32>
    %12 = vector.broadcast %11 : vector<1x512xf32> to vector<16x512xf32>
    %13 = arith.addf %10, %12 : vector<16x512xf32>
    %cst_11 = arith.constant 0.000000e+00 : f32
    %14 = vector.broadcast %cst_11 : f32 to vector<16x512xf32>
    %15 = arith.maximumf %13, %14 : vector<16x512xf32>
    %16 = arith.truncf %15 : vector<16x512xf32> to vector<16x512xbf16>
    %c0_12 = arith.constant 0 : index
    %c0_13 = arith.constant 0 : index
    %17 = vector.load %arg6[%c0_12, %c0_13] : memref<512x128xbf16, #tpu.memory_space<vmem>>, vector<512x128xbf16>
    %cst_14 = arith.constant dense<0.000000e+00> : vector<16x128xf32>
    %18 = tpu.matmul %16, %17, %cst_14 {dimension_numbers = #tpu.dot_dimension_numbers<[1], [0], [0], [1], [0, 0, 1, 1], [], []>} : vector<16x512xbf16>, vector<512x128xbf16>, vector<16x128xf32> -> vector<16x128xf32>
    %c0_15 = arith.constant 0 : index
    %c0_16 = arith.constant 0 : index
    %19 = vector.load %arg7[%c0_15, %c0_16] : memref<1x128xf32, #tpu.memory_space<vmem>>, vector<1x128xf32>
    %20 = vector.broadcast %19 : vector<1x128xf32> to vector<16x128xf32>
    %21 = arith.addf %18, %20 : vector<16x128xf32>
    %c0_17 = arith.constant 0 : index
    %c0_18 = arith.constant 0 : index
    %22 = vector.load %arg8[%c0_17, %c0_18] : memref<16x128xf32, #tpu.memory_space<vmem>>, vector<16x128xf32>
    tpu.vector_store %arg8[%c0_17, %c0_18], %21 {strides = array<i32>} : memref<16x128xf32, #tpu.memory_space<vmem>>, vector<16x128xf32>,
    return
  }
  func.func @transform_0(%arg0: i32) -> (i32, i32) {
    %c0_i32 = arith.constant 0 : i32
    %c0_i32_0 = arith.constant 0 : i32
    return %arg0, %c0_i32 : i32, i32
  }
  func.func @transform_1(%arg0: i32) -> (i32, i32) {
    %c0_i32 = arith.constant 0 : i32
    %c0_i32_0 = arith.constant 0 : i32
    %c0_i32_1 = arith.constant 0 : i32
    return %c0_i32, %c0_i32_0 : i32, i32
  }
  func.func @transform_2(%arg0: i32) -> (i32, i32) {
    %c0_i32 = arith.constant 0 : i32
    %c0_i32_0 = arith.constant 0 : i32
    %c0_i32_1 = arith.constant 0 : i32
    return %c0_i32, %c0_i32_0 : i32, i32
  }
  func.func @transform_3(%arg0: i32) -> (i32, i32) {
    %c0_i32 = arith.constant 0 : i32
    %c0_i32_0 = arith.constant 0 : i32
    %c0_i32_1 = arith.constant 0 : i32
    return %c0_i32, %c0_i32_0 : i32, i32
  }
  func.func @transform_4(%arg0: i32) -> (i32, i32) {
    %c0_i32 = arith.constant 0 : i32
    %c0_i32_0 = arith.constant 0 : i32
    %c0_i32_1 = arith.constant 0 : i32
    return %c0_i32, %c0_i32_0 : i32, i32
  }
  func.func @transform_5(%arg0: i32) -> (i32, i32) {
    %c0_i32 = arith.constant 0 : i32
    %c0_i32_0 = arith.constant 0 : i32
    %c0_i32_1 = arith.constant 0 : i32
    return %c0_i32, %c0_i32_0 : i32, i32
  }
  func.func @transform_6(%arg0: i32) -> (i32, i32) {
    %c0_i32 = arith.constant 0 : i32
    %c0_i32_0 = arith.constant 0 : i32
    %c0_i32_1 = arith.constant 0 : i32
    return %c0_i32, %c0_i32_0 : i32, i32
  }
  func.func @transform_7(%arg0: i32) -> (i32, i32) {
    %c0_i32 = arith.constant 0 : i32
    %c0_i32_0 = arith.constant 0 : i32
    return %arg0, %c0_i32 : i32, i32
  }
}

module attributes {stable_mosaic.version = 11 : i64} {
  func.func @_conv_stack_kernel(%arg0: i32, %arg1: memref<1x28x28x9xbf16, #tpu.memory_space<vmem>>, %arg2: memref<9x32xbf16, #tpu.memory_space<vmem>>, %arg3: memref<1x32xf32, #tpu.memory_space<vmem>>, %arg4: memref<512x32xbf16, #tpu.memory_space<vmem>>, %arg5: memref<1x32xf32, #tpu.memory_space<vmem>>, %arg6: memref<288x64xbf16, #tpu.memory_space<vmem>>, %arg7: memref<1x64xf32, #tpu.memory_space<vmem>>, %arg8: memref<1024x64xbf16, #tpu.memory_space<vmem>>, %arg9: memref<1x64xf32, #tpu.memory_space<vmem>>, %arg10: memref<14x27xf32, #tpu.memory_space<vmem>>, %arg11: memref<7x13xf32, #tpu.memory_space<vmem>>, %arg12: memref<1x7x7x64xbf16, #tpu.memory_space<vmem>>, %arg13: memref<30x30x32xbf16, #tpu.memory_space<vmem>>, %arg14: memref<16x16x32xbf16, #tpu.memory_space<vmem>>, %arg15: memref<16x16x64xbf16, #tpu.memory_space<vmem>>) attributes {dimension_semantics = [#tpu.dimension_semantics<parallel>], iteration_bounds = array<i64: 2>, scalar_prefetch = 0 : i64, scratch_operands = 3 : i64, tpu.core_type = #tpu.core_type<tc>, window_params = [{transform_indices = @transform_0, window_bounds = array<i64: 1, 28, 28, 9>}, {pipeline_mode = #tpu.pipeline_mode<synchronous>, transform_indices = @transform_1, window_bounds = array<i64: 9, 32>}, {pipeline_mode = #tpu.pipeline_mode<synchronous>, transform_indices = @transform_2, window_bounds = array<i64: 1, 32>}, {pipeline_mode = #tpu.pipeline_mode<synchronous>, transform_indices = @transform_3, window_bounds = array<i64: 512, 32>}, {pipeline_mode = #tpu.pipeline_mode<synchronous>, transform_indices = @transform_4, window_bounds = array<i64: 1, 32>}, {pipeline_mode = #tpu.pipeline_mode<synchronous>, transform_indices = @transform_5, window_bounds = array<i64: 288, 64>}, {pipeline_mode = #tpu.pipeline_mode<synchronous>, transform_indices = @transform_6, window_bounds = array<i64: 1, 64>}, {pipeline_mode = #tpu.pipeline_mode<synchronous>, transform_indices = @transform_7, window_bounds = array<i64: 1024, 64>}, {pipeline_mode = #tpu.pipeline_mode<synchronous>, transform_indices = @transform_8, window_bounds = array<i64: 1, 64>}, {pipeline_mode = #tpu.pipeline_mode<synchronous>, transform_indices = @transform_9, window_bounds = array<i64: 14, 27>}, {pipeline_mode = #tpu.pipeline_mode<synchronous>, transform_indices = @transform_10, window_bounds = array<i64: 7, 13>}, {transform_indices = @transform_11, window_bounds = array<i64: 1, 7, 7, 64>}]} {
    %cst = arith.constant 0.000000e+00 : bf16
    %0 = vector.broadcast %cst : bf16 to vector<30x30x32xbf16>
    %c0 = arith.constant 0 : index
    %c0_0 = arith.constant 0 : index
    %c0_1 = arith.constant 0 : index
    %1 = vector.load %arg13[%c0, %c0_0, %c0_1] : memref<30x30x32xbf16, #tpu.memory_space<vmem>>, vector<30x30x32xbf16>
    tpu.vector_store %arg13[%c0, %c0_0, %c0_1], %0 {strides = array<i32>} : memref<30x30x32xbf16, #tpu.memory_space<vmem>>, vector<30x30x32xbf16>,
    %cst_2 = arith.constant 0.000000e+00 : bf16
    %2 = vector.broadcast %cst_2 : bf16 to vector<16x16x32xbf16>
    %c0_3 = arith.constant 0 : index
    %c0_4 = arith.constant 0 : index
    %c0_5 = arith.constant 0 : index
    %3 = vector.load %arg14[%c0_3, %c0_4, %c0_5] : memref<16x16x32xbf16, #tpu.memory_space<vmem>>, vector<16x16x32xbf16>
    tpu.vector_store %arg14[%c0_3, %c0_4, %c0_5], %2 {strides = array<i32>} : memref<16x16x32xbf16, #tpu.memory_space<vmem>>, vector<16x16x32xbf16>,
    %cst_6 = arith.constant 0.000000e+00 : bf16
    %4 = vector.broadcast %cst_6 : bf16 to vector<16x16x64xbf16>
    %c0_7 = arith.constant 0 : index
    %c0_8 = arith.constant 0 : index
    %c0_9 = arith.constant 0 : index
    %5 = vector.load %arg15[%c0_7, %c0_8, %c0_9] : memref<16x16x64xbf16, #tpu.memory_space<vmem>>, vector<16x16x64xbf16>
    tpu.vector_store %arg15[%c0_7, %c0_8, %c0_9], %4 {strides = array<i32>} : memref<16x16x64xbf16, #tpu.memory_space<vmem>>, vector<16x16x64xbf16>,
    %c0_i32 = arith.constant 0 : i32
    %c28_i32 = arith.constant 28 : i32
    %6 = arith.addi %c0_i32, %c28_i32 : i32
    %c1_i32 = arith.constant 1 : i32
    scf.for %arg16 = %c0_i32 to %6 step %c1_i32  : i32 {
      %c0_21 = arith.constant 0 : index
      %10 = arith.index_cast %arg16 : i32 to index
      %c0_22 = arith.constant 0 : index
      %c0_23 = arith.constant 0 : index
      %11 = vector.load %arg1[%c0_21, %10, %c0_22, %c0_23] : memref<1x28x28x9xbf16, #tpu.memory_space<vmem>>, vector<1x1x28x9xbf16>
      %12 = vector.shape_cast %11 : vector<1x1x28x9xbf16> to vector<28x9xbf16>
      %c0_24 = arith.constant 0 : index
      %c0_25 = arith.constant 0 : index
      %13 = vector.load %arg2[%c0_24, %c0_25] : memref<9x32xbf16, #tpu.memory_space<vmem>>, vector<9x32xbf16>
      %cst_26 = arith.constant dense<0.000000e+00> : vector<28x32xf32>
      %14 = tpu.matmul %12, %13, %cst_26 {dimension_numbers = #tpu.dot_dimension_numbers<[1], [0], [0], [1], [0, 0, 1, 1], [], []>} : vector<28x9xbf16>, vector<9x32xbf16>, vector<28x32xf32> -> vector<28x32xf32>
      %c0_27 = arith.constant 0 : index
      %c0_28 = arith.constant 0 : index
      %15 = vector.load %arg3[%c0_27, %c0_28] : memref<1x32xf32, #tpu.memory_space<vmem>>, vector<1x32xf32>
      %16 = vector.broadcast %15 : vector<1x32xf32> to vector<28x32xf32>
      %17 = arith.addf %14, %16 : vector<28x32xf32>
      %cst_29 = arith.constant 0.000000e+00 : f32
      %18 = vector.broadcast %cst_29 : f32 to vector<28x32xf32>
      %19 = arith.maximumf %17, %18 : vector<28x32xf32>
      %20 = arith.truncf %19 : vector<28x32xf32> to vector<28x32xbf16>
      %c1_i32_30 = arith.constant 1 : i32
      %21 = arith.addi %arg16, %c1_i32_30 : i32
      %22 = arith.index_cast %21 : i32 to index
      %c1 = arith.constant 1 : index
      %c0_31 = arith.constant 0 : index
      %23 = vector.load %arg13[%22, %c1, %c0_31] : memref<30x30x32xbf16, #tpu.memory_space<vmem>>, vector<1x28x32xbf16>
      %24 = vector.shape_cast %23 : vector<1x28x32xbf16> to vector<28x32xbf16>
      %25 = vector.shape_cast %20 : vector<28x32xbf16> to vector<1x28x32xbf16>
      tpu.vector_store %arg13[%22, %c1, %c0_31], %25 {strides = array<i32>} : memref<30x30x32xbf16, #tpu.memory_space<vmem>>, vector<1x28x32xbf16>,
    }
    %c28_i32_10 = arith.constant 28 : i32
    %c0_i32_11 = arith.constant 0 : i32
    %c14_i32 = arith.constant 14 : i32
    %7 = arith.addi %c0_i32_11, %c14_i32 : i32
    %c1_i32_12 = arith.constant 1 : i32
    scf.for %arg16 = %c0_i32_11 to %7 step %c1_i32_12  : i32 {
      %c2_i32 = arith.constant 2 : i32
      %10 = arith.muli %c2_i32, %arg16 : i32
      %c0_i32_21 = arith.constant 0 : i32
      %11 = arith.addi %10, %c0_i32_21 : i32
      %12 = arith.index_cast %11 : i32 to index
      %c0_22 = arith.constant 0 : index
      %c0_23 = arith.constant 0 : index
      %13 = vector.load %arg13[%12, %c0_22, %c0_23] : memref<30x30x32xbf16, #tpu.memory_space<vmem>>, vector<1x27x32xbf16>
      %14 = vector.shape_cast %13 : vector<1x27x32xbf16> to vector<27x32xbf16>
      %c2_i32_24 = arith.constant 2 : i32
      %15 = arith.muli %c2_i32_24, %arg16 : i32
      %c0_i32_25 = arith.constant 0 : i32
      %16 = arith.addi %15, %c0_i32_25 : i32
      %17 = arith.index_cast %16 : i32 to index
      %c1 = arith.constant 1 : index
      %c0_26 = arith.constant 0 : index
      %18 = vector.load %arg13[%17, %c1, %c0_26] : memref<30x30x32xbf16, #tpu.memory_space<vmem>>, vector<1x27x32xbf16>
      %19 = vector.shape_cast %18 : vector<1x27x32xbf16> to vector<27x32xbf16>
      %c2_i32_27 = arith.constant 2 : i32
      %20 = arith.muli %c2_i32_27, %arg16 : i32
      %c0_i32_28 = arith.constant 0 : i32
      %21 = arith.addi %20, %c0_i32_28 : i32
      %22 = arith.index_cast %21 : i32 to index
      %c2 = arith.constant 2 : index
      %c0_29 = arith.constant 0 : index
      %23 = vector.load %arg13[%22, %c2, %c0_29] : memref<30x30x32xbf16, #tpu.memory_space<vmem>>, vector<1x27x32xbf16>
      %24 = vector.shape_cast %23 : vector<1x27x32xbf16> to vector<27x32xbf16>
      %c2_i32_30 = arith.constant 2 : i32
      %25 = arith.muli %c2_i32_30, %arg16 : i32
      %c0_i32_31 = arith.constant 0 : i32
      %26 = arith.addi %25, %c0_i32_31 : i32
      %27 = arith.index_cast %26 : i32 to index
      %c3 = arith.constant 3 : index
      %c0_32 = arith.constant 0 : index
      %28 = vector.load %arg13[%27, %c3, %c0_32] : memref<30x30x32xbf16, #tpu.memory_space<vmem>>, vector<1x27x32xbf16>
      %29 = vector.shape_cast %28 : vector<1x27x32xbf16> to vector<27x32xbf16>
      %c2_i32_33 = arith.constant 2 : i32
      %30 = arith.muli %c2_i32_33, %arg16 : i32
      %c1_i32_34 = arith.constant 1 : i32
      %31 = arith.addi %30, %c1_i32_34 : i32
      %32 = arith.index_cast %31 : i32 to index
      %c0_35 = arith.constant 0 : index
      %c0_36 = arith.constant 0 : index
      %33 = vector.load %arg13[%32, %c0_35, %c0_36] : memref<30x30x32xbf16, #tpu.memory_space<vmem>>, vector<1x27x32xbf16>
      %34 = vector.shape_cast %33 : vector<1x27x32xbf16> to vector<27x32xbf16>
      %c2_i32_37 = arith.constant 2 : i32
      %35 = arith.muli %c2_i32_37, %arg16 : i32
      %c1_i32_38 = arith.constant 1 : i32
      %36 = arith.addi %35, %c1_i32_38 : i32
      %37 = arith.index_cast %36 : i32 to index
      %c1_39 = arith.constant 1 : index
      %c0_40 = arith.constant 0 : index
      %38 = vector.load %arg13[%37, %c1_39, %c0_40] : memref<30x30x32xbf16, #tpu.memory_space<vmem>>, vector<1x27x32xbf16>
      %39 = vector.shape_cast %38 : vector<1x27x32xbf16> to vector<27x32xbf16>
      %c2_i32_41 = arith.constant 2 : i32
      %40 = arith.muli %c2_i32_41, %arg16 : i32
      %c1_i32_42 = arith.constant 1 : i32
      %41 = arith.addi %40, %c1_i32_42 : i32
      %42 = arith.index_cast %41 : i32 to index
      %c2_43 = arith.constant 2 : index
      %c0_44 = arith.constant 0 : index
      %43 = vector.load %arg13[%42, %c2_43, %c0_44] : memref<30x30x32xbf16, #tpu.memory_space<vmem>>, vector<1x27x32xbf16>
      %44 = vector.shape_cast %43 : vector<1x27x32xbf16> to vector<27x32xbf16>
      %c2_i32_45 = arith.constant 2 : i32
      %45 = arith.muli %c2_i32_45, %arg16 : i32
      %c1_i32_46 = arith.constant 1 : i32
      %46 = arith.addi %45, %c1_i32_46 : i32
      %47 = arith.index_cast %46 : i32 to index
      %c3_47 = arith.constant 3 : index
      %c0_48 = arith.constant 0 : index
      %48 = vector.load %arg13[%47, %c3_47, %c0_48] : memref<30x30x32xbf16, #tpu.memory_space<vmem>>, vector<1x27x32xbf16>
      %49 = vector.shape_cast %48 : vector<1x27x32xbf16> to vector<27x32xbf16>
      %c2_i32_49 = arith.constant 2 : i32
      %50 = arith.muli %c2_i32_49, %arg16 : i32
      %c2_i32_50 = arith.constant 2 : i32
      %51 = arith.addi %50, %c2_i32_50 : i32
      %52 = arith.index_cast %51 : i32 to index
      %c0_51 = arith.constant 0 : index
      %c0_52 = arith.constant 0 : index
      %53 = vector.load %arg13[%52, %c0_51, %c0_52] : memref<30x30x32xbf16, #tpu.memory_space<vmem>>, vector<1x27x32xbf16>
      %54 = vector.shape_cast %53 : vector<1x27x32xbf16> to vector<27x32xbf16>
      %c2_i32_53 = arith.constant 2 : i32
      %55 = arith.muli %c2_i32_53, %arg16 : i32
      %c2_i32_54 = arith.constant 2 : i32
      %56 = arith.addi %55, %c2_i32_54 : i32
      %57 = arith.index_cast %56 : i32 to index
      %c1_55 = arith.constant 1 : index
      %c0_56 = arith.constant 0 : index
      %58 = vector.load %arg13[%57, %c1_55, %c0_56] : memref<30x30x32xbf16, #tpu.memory_space<vmem>>, vector<1x27x32xbf16>
      %59 = vector.shape_cast %58 : vector<1x27x32xbf16> to vector<27x32xbf16>
      %c2_i32_57 = arith.constant 2 : i32
      %60 = arith.muli %c2_i32_57, %arg16 : i32
      %c2_i32_58 = arith.constant 2 : i32
      %61 = arith.addi %60, %c2_i32_58 : i32
      %62 = arith.index_cast %61 : i32 to index
      %c2_59 = arith.constant 2 : index
      %c0_60 = arith.constant 0 : index
      %63 = vector.load %arg13[%62, %c2_59, %c0_60] : memref<30x30x32xbf16, #tpu.memory_space<vmem>>, vector<1x27x32xbf16>
      %64 = vector.shape_cast %63 : vector<1x27x32xbf16> to vector<27x32xbf16>
      %c2_i32_61 = arith.constant 2 : i32
      %65 = arith.muli %c2_i32_61, %arg16 : i32
      %c2_i32_62 = arith.constant 2 : i32
      %66 = arith.addi %65, %c2_i32_62 : i32
      %67 = arith.index_cast %66 : i32 to index
      %c3_63 = arith.constant 3 : index
      %c0_64 = arith.constant 0 : index
      %68 = vector.load %arg13[%67, %c3_63, %c0_64] : memref<30x30x32xbf16, #tpu.memory_space<vmem>>, vector<1x27x32xbf16>
      %69 = vector.shape_cast %68 : vector<1x27x32xbf16> to vector<27x32xbf16>
      %c2_i32_65 = arith.constant 2 : i32
      %70 = arith.muli %c2_i32_65, %arg16 : i32
      %c3_i32 = arith.constant 3 : i32
      %71 = arith.addi %70, %c3_i32 : i32
      %72 = arith.index_cast %71 : i32 to index
      %c0_66 = arith.constant 0 : index
      %c0_67 = arith.constant 0 : index
      %73 = vector.load %arg13[%72, %c0_66, %c0_67] : memref<30x30x32xbf16, #tpu.memory_space<vmem>>, vector<1x27x32xbf16>
      %74 = vector.shape_cast %73 : vector<1x27x32xbf16> to vector<27x32xbf16>
      %c2_i32_68 = arith.constant 2 : i32
      %75 = arith.muli %c2_i32_68, %arg16 : i32
      %c3_i32_69 = arith.constant 3 : i32
      %76 = arith.addi %75, %c3_i32_69 : i32
      %77 = arith.index_cast %76 : i32 to index
      %c1_70 = arith.constant 1 : index
      %c0_71 = arith.constant 0 : index
      %78 = vector.load %arg13[%77, %c1_70, %c0_71] : memref<30x30x32xbf16, #tpu.memory_space<vmem>>, vector<1x27x32xbf16>
      %79 = vector.shape_cast %78 : vector<1x27x32xbf16> to vector<27x32xbf16>
      %c2_i32_72 = arith.constant 2 : i32
      %80 = arith.muli %c2_i32_72, %arg16 : i32
      %c3_i32_73 = arith.constant 3 : i32
      %81 = arith.addi %80, %c3_i32_73 : i32
      %82 = arith.index_cast %81 : i32 to index
      %c2_74 = arith.constant 2 : index
      %c0_75 = arith.constant 0 : index
      %83 = vector.load %arg13[%82, %c2_74, %c0_75] : memref<30x30x32xbf16, #tpu.memory_space<vmem>>, vector<1x27x32xbf16>
      %84 = vector.shape_cast %83 : vector<1x27x32xbf16> to vector<27x32xbf16>
      %c2_i32_76 = arith.constant 2 : i32
      %85 = arith.muli %c2_i32_76, %arg16 : i32
      %c3_i32_77 = arith.constant 3 : i32
      %86 = arith.addi %85, %c3_i32_77 : i32
      %87 = arith.index_cast %86 : i32 to index
      %c3_78 = arith.constant 3 : index
      %c0_79 = arith.constant 0 : index
      %88 = vector.load %arg13[%87, %c3_78, %c0_79] : memref<30x30x32xbf16, #tpu.memory_space<vmem>>, vector<1x27x32xbf16>
      %89 = vector.shape_cast %88 : vector<1x27x32xbf16> to vector<27x32xbf16>
      %90 = tpu.concatenate %14, %19, %24, %29, %34, %39, %44, %49, %54, %59, %64, %69, %74, %79, %84, %89 in 1 : vector<27x32xbf16>, vector<27x32xbf16>, vector<27x32xbf16>, vector<27x32xbf16>, vector<27x32xbf16>, vector<27x32xbf16>, vector<27x32xbf16>, vector<27x32xbf16>, vector<27x32xbf16>, vector<27x32xbf16>, vector<27x32xbf16>, vector<27x32xbf16>, vector<27x32xbf16>, vector<27x32xbf16>, vector<27x32xbf16>, vector<27x32xbf16> -> vector<27x512xbf16>
      %c0_80 = arith.constant 0 : index
      %c0_81 = arith.constant 0 : index
      %91 = vector.load %arg4[%c0_80, %c0_81] : memref<512x32xbf16, #tpu.memory_space<vmem>>, vector<512x32xbf16>
      %cst_82 = arith.constant dense<0.000000e+00> : vector<27x32xf32>
      %92 = tpu.matmul %90, %91, %cst_82 {dimension_numbers = #tpu.dot_dimension_numbers<[1], [0], [0], [1], [0, 0, 1, 1], [], []>} : vector<27x512xbf16>, vector<512x32xbf16>, vector<27x32xf32> -> vector<27x32xf32>
      %c0_83 = arith.constant 0 : index
      %c0_84 = arith.constant 0 : index
      %93 = vector.load %arg10[%c0_83, %c0_84] : memref<14x27xf32, #tpu.memory_space<vmem>>, vector<14x27xf32>
      %cst_85 = arith.constant dense<0.000000e+00> : vector<14x32xf32>
      %94 = tpu.matmul %93, %92, %cst_85 {dimension_numbers = #tpu.dot_dimension_numbers<[1], [0], [0], [1], [0, 0, 1, 1], [], []>} : vector<14x27xf32>, vector<27x32xf32>, vector<14x32xf32> -> vector<14x32xf32>
      %c0_86 = arith.constant 0 : index
      %c0_87 = arith.constant 0 : index
      %95 = vector.load %arg5[%c0_86, %c0_87] : memref<1x32xf32, #tpu.memory_space<vmem>>, vector<1x32xf32>
      %96 = vector.broadcast %95 : vector<1x32xf32> to vector<14x32xf32>
      %97 = arith.addf %94, %96 : vector<14x32xf32>
      %cst_88 = arith.constant 0.000000e+00 : f32
      %98 = vector.broadcast %cst_88 : f32 to vector<14x32xf32>
      %99 = arith.maximumf %97, %98 : vector<14x32xf32>
      %100 = arith.truncf %99 : vector<14x32xf32> to vector<14x32xbf16>
      %c1_i32_89 = arith.constant 1 : i32
      %101 = arith.addi %arg16, %c1_i32_89 : i32
      %102 = arith.index_cast %101 : i32 to index
      %c1_90 = arith.constant 1 : index
      %c0_91 = arith.constant 0 : index
      %103 = vector.load %arg14[%102, %c1_90, %c0_91] : memref<16x16x32xbf16, #tpu.memory_space<vmem>>, vector<1x14x32xbf16>
      %104 = vector.shape_cast %103 : vector<1x14x32xbf16> to vector<14x32xbf16>
      %105 = vector.shape_cast %100 : vector<14x32xbf16> to vector<1x14x32xbf16>
      tpu.vector_store %arg14[%102, %c1_90, %c0_91], %105 {strides = array<i32>} : memref<16x16x32xbf16, #tpu.memory_space<vmem>>, vector<1x14x32xbf16>,
    }
    %c14_i32_13 = arith.constant 14 : i32
    %c0_i32_14 = arith.constant 0 : i32
    %c14_i32_15 = arith.constant 14 : i32
    %8 = arith.addi %c0_i32_14, %c14_i32_15 : i32
    %c1_i32_16 = arith.constant 1 : i32
    scf.for %arg16 = %c0_i32_14 to %8 step %c1_i32_16  : i32 {
      %c0_i32_21 = arith.constant 0 : i32
      %10 = arith.addi %arg16, %c0_i32_21 : i32
      %11 = arith.index_cast %10 : i32 to index
      %c0_22 = arith.constant 0 : index
      %c0_23 = arith.constant 0 : index
      %12 = vector.load %arg14[%11, %c0_22, %c0_23] : memref<16x16x32xbf16, #tpu.memory_space<vmem>>, vector<1x14x32xbf16>
      %13 = vector.shape_cast %12 : vector<1x14x32xbf16> to vector<14x32xbf16>
      %c0_i32_24 = arith.constant 0 : i32
      %14 = arith.addi %arg16, %c0_i32_24 : i32
      %15 = arith.index_cast %14 : i32 to index
      %c1 = arith.constant 1 : index
      %c0_25 = arith.constant 0 : index
      %16 = vector.load %arg14[%15, %c1, %c0_25] : memref<16x16x32xbf16, #tpu.memory_space<vmem>>, vector<1x14x32xbf16>
      %17 = vector.shape_cast %16 : vector<1x14x32xbf16> to vector<14x32xbf16>
      %c0_i32_26 = arith.constant 0 : i32
      %18 = arith.addi %arg16, %c0_i32_26 : i32
      %19 = arith.index_cast %18 : i32 to index
      %c2 = arith.constant 2 : index
      %c0_27 = arith.constant 0 : index
      %20 = vector.load %arg14[%19, %c2, %c0_27] : memref<16x16x32xbf16, #tpu.memory_space<vmem>>, vector<1x14x32xbf16>
      %21 = vector.shape_cast %20 : vector<1x14x32xbf16> to vector<14x32xbf16>
      %c1_i32_28 = arith.constant 1 : i32
      %22 = arith.addi %arg16, %c1_i32_28 : i32
      %23 = arith.index_cast %22 : i32 to index
      %c0_29 = arith.constant 0 : index
      %c0_30 = arith.constant 0 : index
      %24 = vector.load %arg14[%23, %c0_29, %c0_30] : memref<16x16x32xbf16, #tpu.memory_space<vmem>>, vector<1x14x32xbf16>
      %25 = vector.shape_cast %24 : vector<1x14x32xbf16> to vector<14x32xbf16>
      %c1_i32_31 = arith.constant 1 : i32
      %26 = arith.addi %arg16, %c1_i32_31 : i32
      %27 = arith.index_cast %26 : i32 to index
      %c1_32 = arith.constant 1 : index
      %c0_33 = arith.constant 0 : index
      %28 = vector.load %arg14[%27, %c1_32, %c0_33] : memref<16x16x32xbf16, #tpu.memory_space<vmem>>, vector<1x14x32xbf16>
      %29 = vector.shape_cast %28 : vector<1x14x32xbf16> to vector<14x32xbf16>
      %c1_i32_34 = arith.constant 1 : i32
      %30 = arith.addi %arg16, %c1_i32_34 : i32
      %31 = arith.index_cast %30 : i32 to index
      %c2_35 = arith.constant 2 : index
      %c0_36 = arith.constant 0 : index
      %32 = vector.load %arg14[%31, %c2_35, %c0_36] : memref<16x16x32xbf16, #tpu.memory_space<vmem>>, vector<1x14x32xbf16>
      %33 = vector.shape_cast %32 : vector<1x14x32xbf16> to vector<14x32xbf16>
      %c2_i32 = arith.constant 2 : i32
      %34 = arith.addi %arg16, %c2_i32 : i32
      %35 = arith.index_cast %34 : i32 to index
      %c0_37 = arith.constant 0 : index
      %c0_38 = arith.constant 0 : index
      %36 = vector.load %arg14[%35, %c0_37, %c0_38] : memref<16x16x32xbf16, #tpu.memory_space<vmem>>, vector<1x14x32xbf16>
      %37 = vector.shape_cast %36 : vector<1x14x32xbf16> to vector<14x32xbf16>
      %c2_i32_39 = arith.constant 2 : i32
      %38 = arith.addi %arg16, %c2_i32_39 : i32
      %39 = arith.index_cast %38 : i32 to index
      %c1_40 = arith.constant 1 : index
      %c0_41 = arith.constant 0 : index
      %40 = vector.load %arg14[%39, %c1_40, %c0_41] : memref<16x16x32xbf16, #tpu.memory_space<vmem>>, vector<1x14x32xbf16>
      %41 = vector.shape_cast %40 : vector<1x14x32xbf16> to vector<14x32xbf16>
      %c2_i32_42 = arith.constant 2 : i32
      %42 = arith.addi %arg16, %c2_i32_42 : i32
      %43 = arith.index_cast %42 : i32 to index
      %c2_43 = arith.constant 2 : index
      %c0_44 = arith.constant 0 : index
      %44 = vector.load %arg14[%43, %c2_43, %c0_44] : memref<16x16x32xbf16, #tpu.memory_space<vmem>>, vector<1x14x32xbf16>
      %45 = vector.shape_cast %44 : vector<1x14x32xbf16> to vector<14x32xbf16>
      %46 = tpu.concatenate %13, %17, %21, %25, %29, %33, %37, %41, %45 in 1 : vector<14x32xbf16>, vector<14x32xbf16>, vector<14x32xbf16>, vector<14x32xbf16>, vector<14x32xbf16>, vector<14x32xbf16>, vector<14x32xbf16>, vector<14x32xbf16>, vector<14x32xbf16> -> vector<14x288xbf16>
      %c0_45 = arith.constant 0 : index
      %c0_46 = arith.constant 0 : index
      %47 = vector.load %arg6[%c0_45, %c0_46] : memref<288x64xbf16, #tpu.memory_space<vmem>>, vector<288x64xbf16>
      %cst_47 = arith.constant dense<0.000000e+00> : vector<14x64xf32>
      %48 = tpu.matmul %46, %47, %cst_47 {dimension_numbers = #tpu.dot_dimension_numbers<[1], [0], [0], [1], [0, 0, 1, 1], [], []>} : vector<14x288xbf16>, vector<288x64xbf16>, vector<14x64xf32> -> vector<14x64xf32>
      %c0_48 = arith.constant 0 : index
      %c0_49 = arith.constant 0 : index
      %49 = vector.load %arg7[%c0_48, %c0_49] : memref<1x64xf32, #tpu.memory_space<vmem>>, vector<1x64xf32>
      %50 = vector.broadcast %49 : vector<1x64xf32> to vector<14x64xf32>
      %51 = arith.addf %48, %50 : vector<14x64xf32>
      %cst_50 = arith.constant 0.000000e+00 : f32
      %52 = vector.broadcast %cst_50 : f32 to vector<14x64xf32>
      %53 = arith.maximumf %51, %52 : vector<14x64xf32>
      %54 = arith.truncf %53 : vector<14x64xf32> to vector<14x64xbf16>
      %c1_i32_51 = arith.constant 1 : i32
      %55 = arith.addi %arg16, %c1_i32_51 : i32
      %56 = arith.index_cast %55 : i32 to index
      %c1_52 = arith.constant 1 : index
      %c0_53 = arith.constant 0 : index
      %57 = vector.load %arg15[%56, %c1_52, %c0_53] : memref<16x16x64xbf16, #tpu.memory_space<vmem>>, vector<1x14x64xbf16>
      %58 = vector.shape_cast %57 : vector<1x14x64xbf16> to vector<14x64xbf16>
      %59 = vector.shape_cast %54 : vector<14x64xbf16> to vector<1x14x64xbf16>
      tpu.vector_store %arg15[%56, %c1_52, %c0_53], %59 {strides = array<i32>} : memref<16x16x64xbf16, #tpu.memory_space<vmem>>, vector<1x14x64xbf16>,
    }
    %c14_i32_17 = arith.constant 14 : i32
    %c0_i32_18 = arith.constant 0 : i32
    %c7_i32 = arith.constant 7 : i32
    %9 = arith.addi %c0_i32_18, %c7_i32 : i32
    %c1_i32_19 = arith.constant 1 : i32
    scf.for %arg16 = %c0_i32_18 to %9 step %c1_i32_19  : i32 {
      %c2_i32 = arith.constant 2 : i32
      %10 = arith.muli %c2_i32, %arg16 : i32
      %c0_i32_21 = arith.constant 0 : i32
      %11 = arith.addi %10, %c0_i32_21 : i32
      %12 = arith.index_cast %11 : i32 to index
      %c0_22 = arith.constant 0 : index
      %c0_23 = arith.constant 0 : index
      %13 = vector.load %arg15[%12, %c0_22, %c0_23] : memref<16x16x64xbf16, #tpu.memory_space<vmem>>, vector<1x13x64xbf16>
      %14 = vector.shape_cast %13 : vector<1x13x64xbf16> to vector<13x64xbf16>
      %c2_i32_24 = arith.constant 2 : i32
      %15 = arith.muli %c2_i32_24, %arg16 : i32
      %c0_i32_25 = arith.constant 0 : i32
      %16 = arith.addi %15, %c0_i32_25 : i32
      %17 = arith.index_cast %16 : i32 to index
      %c1 = arith.constant 1 : index
      %c0_26 = arith.constant 0 : index
      %18 = vector.load %arg15[%17, %c1, %c0_26] : memref<16x16x64xbf16, #tpu.memory_space<vmem>>, vector<1x13x64xbf16>
      %19 = vector.shape_cast %18 : vector<1x13x64xbf16> to vector<13x64xbf16>
      %c2_i32_27 = arith.constant 2 : i32
      %20 = arith.muli %c2_i32_27, %arg16 : i32
      %c0_i32_28 = arith.constant 0 : i32
      %21 = arith.addi %20, %c0_i32_28 : i32
      %22 = arith.index_cast %21 : i32 to index
      %c2 = arith.constant 2 : index
      %c0_29 = arith.constant 0 : index
      %23 = vector.load %arg15[%22, %c2, %c0_29] : memref<16x16x64xbf16, #tpu.memory_space<vmem>>, vector<1x13x64xbf16>
      %24 = vector.shape_cast %23 : vector<1x13x64xbf16> to vector<13x64xbf16>
      %c2_i32_30 = arith.constant 2 : i32
      %25 = arith.muli %c2_i32_30, %arg16 : i32
      %c0_i32_31 = arith.constant 0 : i32
      %26 = arith.addi %25, %c0_i32_31 : i32
      %27 = arith.index_cast %26 : i32 to index
      %c3 = arith.constant 3 : index
      %c0_32 = arith.constant 0 : index
      %28 = vector.load %arg15[%27, %c3, %c0_32] : memref<16x16x64xbf16, #tpu.memory_space<vmem>>, vector<1x13x64xbf16>
      %29 = vector.shape_cast %28 : vector<1x13x64xbf16> to vector<13x64xbf16>
      %c2_i32_33 = arith.constant 2 : i32
      %30 = arith.muli %c2_i32_33, %arg16 : i32
      %c1_i32_34 = arith.constant 1 : i32
      %31 = arith.addi %30, %c1_i32_34 : i32
      %32 = arith.index_cast %31 : i32 to index
      %c0_35 = arith.constant 0 : index
      %c0_36 = arith.constant 0 : index
      %33 = vector.load %arg15[%32, %c0_35, %c0_36] : memref<16x16x64xbf16, #tpu.memory_space<vmem>>, vector<1x13x64xbf16>
      %34 = vector.shape_cast %33 : vector<1x13x64xbf16> to vector<13x64xbf16>
      %c2_i32_37 = arith.constant 2 : i32
      %35 = arith.muli %c2_i32_37, %arg16 : i32
      %c1_i32_38 = arith.constant 1 : i32
      %36 = arith.addi %35, %c1_i32_38 : i32
      %37 = arith.index_cast %36 : i32 to index
      %c1_39 = arith.constant 1 : index
      %c0_40 = arith.constant 0 : index
      %38 = vector.load %arg15[%37, %c1_39, %c0_40] : memref<16x16x64xbf16, #tpu.memory_space<vmem>>, vector<1x13x64xbf16>
      %39 = vector.shape_cast %38 : vector<1x13x64xbf16> to vector<13x64xbf16>
      %c2_i32_41 = arith.constant 2 : i32
      %40 = arith.muli %c2_i32_41, %arg16 : i32
      %c1_i32_42 = arith.constant 1 : i32
      %41 = arith.addi %40, %c1_i32_42 : i32
      %42 = arith.index_cast %41 : i32 to index
      %c2_43 = arith.constant 2 : index
      %c0_44 = arith.constant 0 : index
      %43 = vector.load %arg15[%42, %c2_43, %c0_44] : memref<16x16x64xbf16, #tpu.memory_space<vmem>>, vector<1x13x64xbf16>
      %44 = vector.shape_cast %43 : vector<1x13x64xbf16> to vector<13x64xbf16>
      %c2_i32_45 = arith.constant 2 : i32
      %45 = arith.muli %c2_i32_45, %arg16 : i32
      %c1_i32_46 = arith.constant 1 : i32
      %46 = arith.addi %45, %c1_i32_46 : i32
      %47 = arith.index_cast %46 : i32 to index
      %c3_47 = arith.constant 3 : index
      %c0_48 = arith.constant 0 : index
      %48 = vector.load %arg15[%47, %c3_47, %c0_48] : memref<16x16x64xbf16, #tpu.memory_space<vmem>>, vector<1x13x64xbf16>
      %49 = vector.shape_cast %48 : vector<1x13x64xbf16> to vector<13x64xbf16>
      %c2_i32_49 = arith.constant 2 : i32
      %50 = arith.muli %c2_i32_49, %arg16 : i32
      %c2_i32_50 = arith.constant 2 : i32
      %51 = arith.addi %50, %c2_i32_50 : i32
      %52 = arith.index_cast %51 : i32 to index
      %c0_51 = arith.constant 0 : index
      %c0_52 = arith.constant 0 : index
      %53 = vector.load %arg15[%52, %c0_51, %c0_52] : memref<16x16x64xbf16, #tpu.memory_space<vmem>>, vector<1x13x64xbf16>
      %54 = vector.shape_cast %53 : vector<1x13x64xbf16> to vector<13x64xbf16>
      %c2_i32_53 = arith.constant 2 : i32
      %55 = arith.muli %c2_i32_53, %arg16 : i32
      %c2_i32_54 = arith.constant 2 : i32
      %56 = arith.addi %55, %c2_i32_54 : i32
      %57 = arith.index_cast %56 : i32 to index
      %c1_55 = arith.constant 1 : index
      %c0_56 = arith.constant 0 : index
      %58 = vector.load %arg15[%57, %c1_55, %c0_56] : memref<16x16x64xbf16, #tpu.memory_space<vmem>>, vector<1x13x64xbf16>
      %59 = vector.shape_cast %58 : vector<1x13x64xbf16> to vector<13x64xbf16>
      %c2_i32_57 = arith.constant 2 : i32
      %60 = arith.muli %c2_i32_57, %arg16 : i32
      %c2_i32_58 = arith.constant 2 : i32
      %61 = arith.addi %60, %c2_i32_58 : i32
      %62 = arith.index_cast %61 : i32 to index
      %c2_59 = arith.constant 2 : index
      %c0_60 = arith.constant 0 : index
      %63 = vector.load %arg15[%62, %c2_59, %c0_60] : memref<16x16x64xbf16, #tpu.memory_space<vmem>>, vector<1x13x64xbf16>
      %64 = vector.shape_cast %63 : vector<1x13x64xbf16> to vector<13x64xbf16>
      %c2_i32_61 = arith.constant 2 : i32
      %65 = arith.muli %c2_i32_61, %arg16 : i32
      %c2_i32_62 = arith.constant 2 : i32
      %66 = arith.addi %65, %c2_i32_62 : i32
      %67 = arith.index_cast %66 : i32 to index
      %c3_63 = arith.constant 3 : index
      %c0_64 = arith.constant 0 : index
      %68 = vector.load %arg15[%67, %c3_63, %c0_64] : memref<16x16x64xbf16, #tpu.memory_space<vmem>>, vector<1x13x64xbf16>
      %69 = vector.shape_cast %68 : vector<1x13x64xbf16> to vector<13x64xbf16>
      %c2_i32_65 = arith.constant 2 : i32
      %70 = arith.muli %c2_i32_65, %arg16 : i32
      %c3_i32 = arith.constant 3 : i32
      %71 = arith.addi %70, %c3_i32 : i32
      %72 = arith.index_cast %71 : i32 to index
      %c0_66 = arith.constant 0 : index
      %c0_67 = arith.constant 0 : index
      %73 = vector.load %arg15[%72, %c0_66, %c0_67] : memref<16x16x64xbf16, #tpu.memory_space<vmem>>, vector<1x13x64xbf16>
      %74 = vector.shape_cast %73 : vector<1x13x64xbf16> to vector<13x64xbf16>
      %c2_i32_68 = arith.constant 2 : i32
      %75 = arith.muli %c2_i32_68, %arg16 : i32
      %c3_i32_69 = arith.constant 3 : i32
      %76 = arith.addi %75, %c3_i32_69 : i32
      %77 = arith.index_cast %76 : i32 to index
      %c1_70 = arith.constant 1 : index
      %c0_71 = arith.constant 0 : index
      %78 = vector.load %arg15[%77, %c1_70, %c0_71] : memref<16x16x64xbf16, #tpu.memory_space<vmem>>, vector<1x13x64xbf16>
      %79 = vector.shape_cast %78 : vector<1x13x64xbf16> to vector<13x64xbf16>
      %c2_i32_72 = arith.constant 2 : i32
      %80 = arith.muli %c2_i32_72, %arg16 : i32
      %c3_i32_73 = arith.constant 3 : i32
      %81 = arith.addi %80, %c3_i32_73 : i32
      %82 = arith.index_cast %81 : i32 to index
      %c2_74 = arith.constant 2 : index
      %c0_75 = arith.constant 0 : index
      %83 = vector.load %arg15[%82, %c2_74, %c0_75] : memref<16x16x64xbf16, #tpu.memory_space<vmem>>, vector<1x13x64xbf16>
      %84 = vector.shape_cast %83 : vector<1x13x64xbf16> to vector<13x64xbf16>
      %c2_i32_76 = arith.constant 2 : i32
      %85 = arith.muli %c2_i32_76, %arg16 : i32
      %c3_i32_77 = arith.constant 3 : i32
      %86 = arith.addi %85, %c3_i32_77 : i32
      %87 = arith.index_cast %86 : i32 to index
      %c3_78 = arith.constant 3 : index
      %c0_79 = arith.constant 0 : index
      %88 = vector.load %arg15[%87, %c3_78, %c0_79] : memref<16x16x64xbf16, #tpu.memory_space<vmem>>, vector<1x13x64xbf16>
      %89 = vector.shape_cast %88 : vector<1x13x64xbf16> to vector<13x64xbf16>
      %90 = tpu.concatenate %14, %19, %24, %29, %34, %39, %44, %49, %54, %59, %64, %69, %74, %79, %84, %89 in 1 : vector<13x64xbf16>, vector<13x64xbf16>, vector<13x64xbf16>, vector<13x64xbf16>, vector<13x64xbf16>, vector<13x64xbf16>, vector<13x64xbf16>, vector<13x64xbf16>, vector<13x64xbf16>, vector<13x64xbf16>, vector<13x64xbf16>, vector<13x64xbf16>, vector<13x64xbf16>, vector<13x64xbf16>, vector<13x64xbf16>, vector<13x64xbf16> -> vector<13x1024xbf16>
      %c0_80 = arith.constant 0 : index
      %c0_81 = arith.constant 0 : index
      %91 = vector.load %arg8[%c0_80, %c0_81] : memref<1024x64xbf16, #tpu.memory_space<vmem>>, vector<1024x64xbf16>
      %cst_82 = arith.constant dense<0.000000e+00> : vector<13x64xf32>
      %92 = tpu.matmul %90, %91, %cst_82 {dimension_numbers = #tpu.dot_dimension_numbers<[1], [0], [0], [1], [0, 0, 1, 1], [], []>} : vector<13x1024xbf16>, vector<1024x64xbf16>, vector<13x64xf32> -> vector<13x64xf32>
      %c0_83 = arith.constant 0 : index
      %c0_84 = arith.constant 0 : index
      %93 = vector.load %arg11[%c0_83, %c0_84] : memref<7x13xf32, #tpu.memory_space<vmem>>, vector<7x13xf32>
      %cst_85 = arith.constant dense<0.000000e+00> : vector<7x64xf32>
      %94 = tpu.matmul %93, %92, %cst_85 {dimension_numbers = #tpu.dot_dimension_numbers<[1], [0], [0], [1], [0, 0, 1, 1], [], []>} : vector<7x13xf32>, vector<13x64xf32>, vector<7x64xf32> -> vector<7x64xf32>
      %c0_86 = arith.constant 0 : index
      %c0_87 = arith.constant 0 : index
      %95 = vector.load %arg9[%c0_86, %c0_87] : memref<1x64xf32, #tpu.memory_space<vmem>>, vector<1x64xf32>
      %96 = vector.broadcast %95 : vector<1x64xf32> to vector<7x64xf32>
      %97 = arith.addf %94, %96 : vector<7x64xf32>
      %cst_88 = arith.constant 0.000000e+00 : f32
      %98 = vector.broadcast %cst_88 : f32 to vector<7x64xf32>
      %99 = arith.maximumf %97, %98 : vector<7x64xf32>
      %100 = arith.truncf %99 : vector<7x64xf32> to vector<7x64xbf16>
      %c0_89 = arith.constant 0 : index
      %101 = arith.index_cast %arg16 : i32 to index
      %c0_90 = arith.constant 0 : index
      %c0_91 = arith.constant 0 : index
      %102 = vector.load %arg12[%c0_89, %101, %c0_90, %c0_91] : memref<1x7x7x64xbf16, #tpu.memory_space<vmem>>, vector<1x1x7x64xbf16>
      %103 = vector.shape_cast %102 : vector<1x1x7x64xbf16> to vector<7x64xbf16>
      %104 = vector.shape_cast %100 : vector<7x64xbf16> to vector<1x1x7x64xbf16>
      tpu.vector_store %arg12[%c0_89, %101, %c0_90, %c0_91], %104 {strides = array<i32>} : memref<1x7x7x64xbf16, #tpu.memory_space<vmem>>, vector<1x1x7x64xbf16>,
    }
    %c7_i32_20 = arith.constant 7 : i32
    return
  }
  func.func @transform_0(%arg0: i32) -> (i32, i32, i32, i32) {
    %c0_i32 = arith.constant 0 : i32
    %c0_i32_0 = arith.constant 0 : i32
    %c0_i32_1 = arith.constant 0 : i32
    %c0_i32_2 = arith.constant 0 : i32
    return %arg0, %c0_i32, %c0_i32_0, %c0_i32_1 : i32, i32, i32, i32
  }
  func.func @transform_1(%arg0: i32) -> (i32, i32) {
    %c0_i32 = arith.constant 0 : i32
    %c0_i32_0 = arith.constant 0 : i32
    %c0_i32_1 = arith.constant 0 : i32
    return %c0_i32, %c0_i32_0 : i32, i32
  }
  func.func @transform_2(%arg0: i32) -> (i32, i32) {
    %c0_i32 = arith.constant 0 : i32
    %c0_i32_0 = arith.constant 0 : i32
    %c0_i32_1 = arith.constant 0 : i32
    return %c0_i32, %c0_i32_0 : i32, i32
  }
  func.func @transform_3(%arg0: i32) -> (i32, i32) {
    %c0_i32 = arith.constant 0 : i32
    %c0_i32_0 = arith.constant 0 : i32
    %c0_i32_1 = arith.constant 0 : i32
    return %c0_i32, %c0_i32_0 : i32, i32
  }
  func.func @transform_4(%arg0: i32) -> (i32, i32) {
    %c0_i32 = arith.constant 0 : i32
    %c0_i32_0 = arith.constant 0 : i32
    %c0_i32_1 = arith.constant 0 : i32
    return %c0_i32, %c0_i32_0 : i32, i32
  }
  func.func @transform_5(%arg0: i32) -> (i32, i32) {
    %c0_i32 = arith.constant 0 : i32
    %c0_i32_0 = arith.constant 0 : i32
    %c0_i32_1 = arith.constant 0 : i32
    return %c0_i32, %c0_i32_0 : i32, i32
  }
  func.func @transform_6(%arg0: i32) -> (i32, i32) {
    %c0_i32 = arith.constant 0 : i32
    %c0_i32_0 = arith.constant 0 : i32
    %c0_i32_1 = arith.constant 0 : i32
    return %c0_i32, %c0_i32_0 : i32, i32
  }
  func.func @transform_7(%arg0: i32) -> (i32, i32) {
    %c0_i32 = arith.constant 0 : i32
    %c0_i32_0 = arith.constant 0 : i32
    %c0_i32_1 = arith.constant 0 : i32
    return %c0_i32, %c0_i32_0 : i32, i32
  }
  func.func @transform_8(%arg0: i32) -> (i32, i32) {
    %c0_i32 = arith.constant 0 : i32
    %c0_i32_0 = arith.constant 0 : i32
    %c0_i32_1 = arith.constant 0 : i32
    return %c0_i32, %c0_i32_0 : i32, i32
  }
  func.func @transform_9(%arg0: i32) -> (i32, i32) {
    %c0_i32 = arith.constant 0 : i32
    %c0_i32_0 = arith.constant 0 : i32
    %c0_i32_1 = arith.constant 0 : i32
    return %c0_i32, %c0_i32_0 : i32, i32
  }
  func.func @transform_10(%arg0: i32) -> (i32, i32) {
    %c0_i32 = arith.constant 0 : i32
    %c0_i32_0 = arith.constant 0 : i32
    %c0_i32_1 = arith.constant 0 : i32
    return %c0_i32, %c0_i32_0 : i32, i32
  }
  func.func @transform_11(%arg0: i32) -> (i32, i32, i32, i32) {
    %c0_i32 = arith.constant 0 : i32
    %c0_i32_0 = arith.constant 0 : i32
    %c0_i32_1 = arith.constant 0 : i32
    %c0_i32_2 = arith.constant 0 : i32
    return %arg0, %c0_i32, %c0_i32_0, %c0_i32_1 : i32, i32, i32, i32
  }
}

</mosaic_0001>

<llo_original>
// kernel: net_forward.2
$region0: #{net_forward.2}
  #allocation0 [shape = 'u32[]', space=smem, size = 0x4, offset = 0x4, fixed_abs, tag = 'smem constant byte address 0x4 - core index']
  #allocation1 [shape = 'u32[144,128]{1,0:T(1,128)}', space=vmem, size = 0x12000, scoped, tag = 'internal scratch']
  #allocation2 [shape = 'bf16[30,30,32]{2,1,0:T(8,128)(2,1)}', space=vmem, size = 0x3c000, scoped, tag = 'scratch operand']
  #allocation3 [shape = 'bf16[16,16,32]{2,1,0:T(8,128)(2,1)}', space=vmem, size = 0x10000, scoped, tag = 'scratch operand']
  #allocation4 [shape = 'bf16[16,16,64]{2,1,0:T(8,128)(2,1)}', space=vmem, size = 0x10000, scoped, tag = 'scratch operand']
  %s0 = inlined_call_operand.vmem [shape: bf16[2,28,28,9], index: 0, kind: input, shape index: {}]
  %s1 = inlined_call_operand.vmem [shape: bf16[9,32], index: 1, kind: input, shape index: {}]
  %s2 = inlined_call_operand.vmem [shape: f32[1,32], index: 2, kind: input, shape index: {}]
  %s3 = inlined_call_operand.vmem [shape: bf16[512,32], index: 3, kind: input, shape index: {}]
  %s4 = inlined_call_operand.vmem [shape: f32[1,32], index: 4, kind: input, shape index: {}]
  %s5 = inlined_call_operand.vmem [shape: bf16[288,64], index: 5, kind: input, shape index: {}]
  %s6 = inlined_call_operand.vmem [shape: f32[1,64], index: 6, kind: input, shape index: {}]
  %s7 = inlined_call_operand.vmem [shape: bf16[1024,64], index: 7, kind: input, shape index: {}]
  %s8 = inlined_call_operand.vmem [shape: f32[1,64], index: 8, kind: input, shape index: {}]
  %s9 = inlined_call_operand.vmem [shape: f32[14,27], index: 9, kind: input, shape index: {}]
  %s10 = inlined_call_operand.vmem [shape: f32[7,13], index: 10, kind: input, shape index: {}]
  %s11 = inlined_call_operand.vmem [shape: bf16[2,7,7,64], index: 11, kind: output, shape index: {}]
  %s12 = sld [smem:[#allocation0]]
  $region105: #{net_forward.2} parent=0
    _
  %s14 = ssub.s32 1, %s12
  %s15 = scalar_select 0, %s14, %s12
  loop: start=0, step=1, limit=4
  $region2: #{net_forward.2} parent=0 // loop_pre_header
    _
  $region3: #{net_forward.2} parent=0 // loop_header
    %s17 = sphi 0, %s21
    %p18 = scmp.ge.s32.totalorder %s17, 4
    %s27 = sphi 0, %s29
    %s30 = sphi 0, %s27
    %s31 = sphi 0, %s30
    %s47 = sphi 0, %s31
    %s51 = sphi 0, %s51
    %s53 = sphi 0, %s51
    %s54 = sphi 0, %s53
    %s68 = sphi 0, %s54
    %s72 = sphi 0, %s72
    %s74 = sphi 0, %s72
    %s75 = sphi 0, %s74
    %s89 = sphi 0, %s75
    %s93 = sphi 0, %s93
    %s95 = sphi 0, %s93
    %s96 = sphi 0, %s95
    %s110 = sphi 0, %s96
    %s114 = sphi 0, %s114
    %s116 = sphi 0, %s114
    %s117 = sphi 0, %s116
    %s131 = sphi 0, %s117
    %s135 = sphi 0, %s135
    %s137 = sphi 0, %s135
    %s138 = sphi 0, %s137
    %s152 = sphi 0, %s138
    %s156 = sphi 0, %s156
    %s158 = sphi 0, %s156
    %s159 = sphi 0, %s158
    %s173 = sphi 0, %s159
    %s177 = sphi 0, %s177
    %s179 = sphi 0, %s177
    %s180 = sphi 0, %s179
    %s194 = sphi 0, %s180
    %s198 = sphi 0, %s198
    %s200 = sphi 0, %s198
    %s201 = sphi 0, %s200
    %s215 = sphi 0, %s201
    %s219 = sphi 0, %s219
    %s221 = sphi 0, %s219
    %s222 = sphi 0, %s221
    %s236 = sphi 0, %s222
    %s240 = sphi 0, %s240
    %s242 = sphi 0, %s240
    %s243 = sphi 0, %s242
    %s257 = sphi 0, %s243
    %s263 = sphi 0, %s265
    %s266 = sphi 0, %s263
    %s267 = sphi 0, %s266
    %s283 = sphi 0, %s267
  $region4: #{net_forward.2} parent=0 // loop_header_branch
    %20 = sbr.rel (%p18) target = $region8
  $region5: #{net_forward.2} parent=0 // loop_body
    %s22 = ssub.s32 %s17, 1
    %s23 = ssub.s32 %s17, 2
    %s24 = sadd.s32 %s17, 1
    %s25 = ssub.s32 %s17, %s24
    %p26 = scmp.eq.s32.totalorder %s25, 0
    %s28 = sadd.s32 %s27, 1
    %s29 = scalar_select %p26, %s27, %s28
    %p32 = pneg %p26
    %p33 = scmp.eq.s32.totalorder %s17, 1
    %p34 = por %p32, %p33
    %p35 = scmp.ne.s32.totalorder %s27, %s30
    %p36 = scmp.eq.s32.totalorder %s17, 0
    %p37 = por %p35, %p36
    %p38 = scmp.ne.s32.totalorder %s27, %s30
    %p39 = scmp.eq.s32.totalorder %s22, 1
    %p40 = por %p38, %p39
    %p41 = scmp.ne.s32.totalorder %s30, %s31
    %p42 = scmp.eq.s32.totalorder %s22, 0
    %p43 = por %p41, %p42
    %p44 = scmp.ne.s32.totalorder %s30, %s31
    %p45 = scmp.eq.s32.totalorder %s23, 1
    %p46 = por %p44, %p45
    %p48 = scmp.ne.s32.totalorder %s31, %s47
    %p49 = scmp.eq.s32.totalorder %s23, 0
    %p50 = por %p48, %p49
    %s52 = sadd.s32 %s51, 1
    %p55 = scmp.eq.s32.totalorder %s17, 1
    %p56 = scmp.ne.s32.totalorder %s51, %s53
    %p57 = scmp.eq.s32.totalorder %s17, 0
    %p58 = por %p56, %p57
    %p59 = scmp.ne.s32.totalorder %s51, %s53
    %p60 = scmp.eq.s32.totalorder %s22, 1
    %p61 = por %p59, %p60
    %p62 = scmp.ne.s32.totalorder %s53, %s54
    %p63 = scmp.eq.s32.totalorder %s22, 0
    %p64 = por %p62, %p63
    %p65 = scmp.ne.s32.totalorder %s53, %s54
    %p66 = scmp.eq.s32.totalorder %s23, 1
    %p67 = por %p65, %p66
    %p69 = scmp.ne.s32.totalorder %s54, %s68
    %p70 = scmp.eq.s32.totalorder %s23, 0
    %p71 = por %p69, %p70
    %s73 = sadd.s32 %s72, 1
    %p76 = scmp.eq.s32.totalorder %s17, 1
    %p77 = scmp.ne.s32.totalorder %s72, %s74
    %p78 = scmp.eq.s32.totalorder %s17, 0
    %p79 = por %p77, %p78
    %p80 = scmp.ne.s32.totalorder %s72, %s74
    %p81 = scmp.eq.s32.totalorder %s22, 1
    %p82 = por %p80, %p81
    %p83 = scmp.ne.s32.totalorder %s74, %s75
    %p84 = scmp.eq.s32.totalorder %s22, 0
    %p85 = por %p83, %p84
    %p86 = scmp.ne.s32.totalorder %s74, %s75
    %p87 = scmp.eq.s32.totalorder %s23, 1
    %p88 = por %p86, %p87
    %p90 = scmp.ne.s32.totalorder %s75, %s89
    %p91 = scmp.eq.s32.totalorder %s23, 0
    %p92 = por %p90, %p91
    %s94 = sadd.s32 %s93, 1
    %p97 = scmp.eq.s32.totalorder %s17, 1
    %p98 = scmp.ne.s32.totalorder %s93, %s95
    %p99 = scmp.eq.s32.totalorder %s17, 0
    %p100 = por %p98, %p99
    %p101 = scmp.ne.s32.totalorder %s93, %s95
    %p102 = scmp.eq.s32.totalorder %s22, 1
    %p103 = por %p101, %p102
    %p104 = scmp.ne.s32.totalorder %s95, %s96
    %p105 = scmp.eq.s32.totalorder %s22, 0
    %p106 = por %p104, %p105
    %p107 = scmp.ne.s32.totalorder %s95, %s96
    %p108 = scmp.eq.s32.totalorder %s23, 1
    %p109 = por %p107, %p108
    %p111 = scmp.ne.s32.totalorder %s96, %s110
    %p112 = scmp.eq.s32.totalorder %s23, 0
    %p113 = por %p111, %p112
    %s115 = sadd.s32 %s114, 1
    %p118 = scmp.eq.s32.totalorder %s17, 1
    %p119 = scmp.ne.s32.totalorder %s114, %s116
    %p120 = scmp.eq.s32.totalorder %s17, 0
    %p121 = por %p119, %p120
    %p122 = scmp.ne.s32.totalorder %s114, %s116
    %p123 = scmp.eq.s32.totalorder %s22, 1
    %p124 = por %p122, %p123
    %p125 = scmp.ne.s32.totalorder %s116, %s117
    %p126 = scmp.eq.s32.totalorder %s22, 0
    %p127 = por %p125, %p126
    %p128 = scmp.ne.s32.totalorder %s116, %s117
    %p129 = scmp.eq.s32.totalorder %s23, 1
    %p130 = por %p128, %p129
    %p132 = scmp.ne.s32.totalorder %s117, %s131
    %p133 = scmp.eq.s32.totalorder %s23, 0
    %p134 = por %p132, %p133
    %s136 = sadd.s32 %s135, 1
    %p139 = scmp.eq.s32.totalorder %s17, 1
    %p140 = scmp.ne.s32.totalorder %s135, %s137
    %p141 = scmp.eq.s32.totalorder %s17, 0
    %p142 = por %p140, %p141
    %p143 = scmp.ne.s32.totalorder %s135, %s137
    %p144 = scmp.eq.s32.totalorder %s22, 1
    %p145 = por %p143, %p144
    %p146 = scmp.ne.s32.totalorder %s137, %s138
    %p147 = scmp.eq.s32.totalorder %s22, 0
    %p148 = por %p146, %p147
    %p149 = scmp.ne.s32.totalorder %s137, %s138
    %p150 = scmp.eq.s32.totalorder %s23, 1
    %p151 = por %p149, %p150
    %p153 = scmp.ne.s32.totalorder %s138, %s152
    %p154 = scmp.eq.s32.totalorder %s23, 0
    %p155 = por %p153, %p154
    %s157 = sadd.s32 %s156, 1
    %p160 = scmp.eq.s32.totalorder %s17, 1
    %p161 = scmp.ne.s32.totalorder %s156, %s158
    %p162 = scmp.eq.s32.totalorder %s17, 0
    %p163 = por %p161, %p162
    %p164 = scmp.ne.s32.totalorder %s156, %s158
    %p165 = scmp.eq.s32.totalorder %s22, 1
    %p166 = por %p164, %p165
    %p167 = scmp.ne.s32.totalorder %s158, %s159
    %p168 = scmp.eq.s32.totalorder %s22, 0
    %p169 = por %p167, %p168
    %p170 = scmp.ne.s32.totalorder %s158, %s159
    %p171 = scmp.eq.s32.totalorder %s23, 1
    %p172 = por %p170, %p171
    %p174 = scmp.ne.s32.totalorder %s159, %s173
    %p175 = scmp.eq.s32.totalorder %s23, 0
    %p176 = por %p174, %p175
    %s178 = sadd.s32 %s177, 1
    %p181 = scmp.eq.s32.totalorder %s17, 1
    %p182 = scmp.ne.s32.totalorder %s177, %s179
    %p183 = scmp.eq.s32.totalorder %s17, 0
    %p184 = por %p182, %p183
    %p185 = scmp.ne.s32.totalorder %s177, %s179
    %p186 = scmp.eq.s32.totalorder %s22, 1
    %p187 = por %p185, %p186
    %p188 = scmp.ne.s32.totalorder %s179, %s180
    %p189 = scmp.eq.s32.totalorder %s22, 0
    %p190 = por %p188, %p189
    %p191 = scmp.ne.s32.totalorder %s179, %s180
    %p192 = scmp.eq.s32.totalorder %s23, 1
    %p193 = por %p191, %p192
    %p195 = scmp.ne.s32.totalorder %s180, %s194
    %p196 = scmp.eq.s32.totalorder %s23, 0
    %p197 = por %p195, %p196
    %s199 = sadd.s32 %s198, 1
    %p202 = scmp.eq.s32.totalorder %s17, 1
    %p203 = scmp.ne.s32.totalorder %s198, %s200
    %p204 = scmp.eq.s32.totalorder %s17, 0
    %p205 = por %p203, %p204
    %p206 = scmp.ne.s32.totalorder %s198, %s200
    %p207 = scmp.eq.s32.totalorder %s22, 1
    %p208 = por %p206, %p207
    %p209 = scmp.ne.s32.totalorder %s200, %s201
    %p210 = scmp.eq.s32.totalorder %s22, 0
    %p211 = por %p209, %p210
    %p212 = scmp.ne.s32.totalorder %s200, %s201
    %p213 = scmp.eq.s32.totalorder %s23, 1
    %p214 = por %p212, %p213
    %p216 = scmp.ne.s32.totalorder %s201, %s215
    %p217 = scmp.eq.s32.totalorder %s23, 0
    %p218 = por %p216, %p217
    %s220 = sadd.s32 %s219, 1
    %p223 = scmp.eq.s32.totalorder %s17, 1
    %p224 = scmp.ne.s32.totalorder %s219, %s221
    %p225 = scmp.eq.s32.totalorder %s17, 0
    %p226 = por %p224, %p225
    %p227 = scmp.ne.s32.totalorder %s219, %s221
    %p228 = scmp.eq.s32.totalorder %s22, 1
    %p229 = por %p227, %p228
    %p230 = scmp.ne.s32.totalorder %s221, %s222
    %p231 = scmp.eq.s32.totalorder %s22, 0
    %p232 = por %p230, %p231
    %p233 = scmp.ne.s32.totalorder %s221, %s222
    %p234 = scmp.eq.s32.totalorder %s23, 1
    %p235 = por %p233, %p234
    %p237 = scmp.ne.s32.totalorder %s222, %s236
    %p238 = scmp.eq.s32.totalorder %s23, 0
    %p239 = por %p237, %p238
    %s241 = sadd.s32 %s240, 1
    %p244 = scmp.eq.s32.totalorder %s17, 1
    %p245 = scmp.ne.s32.totalorder %s240, %s242
    %p246 = scmp.eq.s32.totalorder %s17, 0
    %p247 = por %p245, %p246
    %p248 = scmp.ne.s32.totalorder %s240, %s242
    %p249 = scmp.eq.s32.totalorder %s22, 1
    %p250 = por %p248, %p249
    %p251 = scmp.ne.s32.totalorder %s242, %s243
    %p252 = scmp.eq.s32.totalorder %s22, 0
    %p253 = por %p251, %p252
    %p254 = scmp.ne.s32.totalorder %s242, %s243
    %p255 = scmp.eq.s32.totalorder %s23, 1
    %p256 = por %p254, %p255
    %p258 = scmp.ne.s32.totalorder %s243, %s257
    %p259 = scmp.eq.s32.totalorder %s23, 0
    %p260 = por %p258, %p259
    %s261 = ssub.s32 %s17, %s24
    %p262 = scmp.eq.s32.totalorder %s261, 0
    %s264 = sadd.s32 %s263, 1
    %s265 = scalar_select %p262, %s263, %s264
    %p268 = pneg %p262
    %p269 = scmp.eq.s32.totalorder %s17, 1
    %p270 = por %p268, %p269
    %p271 = scmp.ne.s32.totalorder %s263, %s266
    %p272 = scmp.eq.s32.totalorder %s17, 0
    %p273 = por %p271, %p272
    %p274 = scmp.ne.s32.totalorder %s263, %s266
    %p275 = scmp.eq.s32.totalorder %s22, 1
    %p276 = por %p274, %p275
    %p277 = scmp.ne.s32.totalorder %s266, %s267
    %p278 = scmp.eq.s32.totalorder %s22, 0
    %p279 = por %p277, %p278
    %p280 = scmp.ne.s32.totalorder %s266, %s267
    %p281 = scmp.eq.s32.totalorder %s23, 1
    %p282 = por %p280, %p281
    %p284 = scmp.ne.s32.totalorder %s267, %s283
    %p285 = scmp.eq.s32.totalorder %s23, 0
    %p286 = por %p284, %p285
    %p287 = scmp.le.s32.totalorder 1, %s17
    %p288 = scmp.lt.s32.totalorder %s17, 3
    %p289 = pnand %p287, %p288
    %p290 = pneg %p289
    // Predicated region
    $region9: #{net_forward.2} parent=5 // pred_check
      _
    $region10: #{net_forward.2} parent=5 // pred_check_branch
      %292 = sbr.rel (%p289) target = $region12
    $region11: #{net_forward.2} parent=5 // pred_region
      %s293 = ssub.s32 %s17, 1
      // Predicated region
      $region13: #{net_forward.2} parent=11 // pred_check
        %p294 = pneg %p64
      $region14: #{net_forward.2} parent=11 // pred_check_branch
        %296 = sbr.rel (%p294) target = $region16
      $region15: #{net_forward.2} parent=11 // pred_region
        _
      $region16: #{net_forward.2} parent=11 // pred_fallthru
        _
      // Predicated region
      $region17: #{net_forward.2} parent=11 // pred_check
        %p297 = pneg %p85
      $region18: #{net_forward.2} parent=11 // pred_check_branch
        %299 = sbr.rel (%p297) target = $region20
      $region19: #{net_forward.2} parent=11 // pred_region
        _
      $region20: #{net_forward.2} parent=11 // pred_fallthru
        _
      // Predicated region
      $region21: #{net_forward.2} parent=11 // pred_check
        %p300 = pneg %p106
      $region22: #{net_forward.2} parent=11 // pred_check_branch
        %302 = sbr.rel (%p300) target = $region24
      $region23: #{net_forward.2} parent=11 // pred_region
        _
      $region24: #{net_forward.2} parent=11 // pred_fallthru
        _
      // Predicated region
      $region25: #{net_forward.2} parent=11 // pred_check
        %p303 = pneg %p127
      $region26: #{net_forward.2} parent=11 // pred_check_branch
        %305 = sbr.rel (%p303) target = $region28
      $region27: #{net_forward.2} parent=11 // pred_region
        _
      $region28: #{net_forward.2} parent=11 // pred_fallthru
        _
      // Predicated region
      $region29: #{net_forward.2} parent=11 // pred_check
        %p306 = pneg %p148
      $region30: #{net_forward.2} parent=11 // pred_check_branch
        %308 = sbr.rel (%p306) target = $region32
      $region31: #{net_forward.2} parent=11 // pred_region
        _
      $region32: #{net_forward.2} parent=11 // pred_fallthru
        _
      // Predicated region
      $region33: #{net_forward.2} parent=11 // pred_check
        %p309 = pneg %p169
      $region34: #{net_forward.2} parent=11 // pred_check_branch
        %311 = sbr.rel (%p309) target = $region36
      $region35: #{net_forward.2} parent=11 // pred_region
        _
      $region36: #{net_forward.2} parent=11 // pred_fallthru
        _
      // Predicated region
      $region37: #{net_forward.2} parent=11 // pred_check
        %p312 = pneg %p190
      $region38: #{net_forward.2} parent=11 // pred_check_branch
        %314 = sbr.rel (%p312) target = $region40
      $region39: #{net_forward.2} parent=11 // pred_region
        _
      $region40: #{net_forward.2} parent=11 // pred_fallthru
        _
      // Predicated region
      $region41: #{net_forward.2} parent=11 // pred_check
        %p315 = pneg %p211
      $region42: #{net_forward.2} parent=11 // pred_check_branch
        %317 = sbr.rel (%p315) target = $region44
      $region43: #{net_forward.2} parent=11 // pred_region
        _
      $region44: #{net_forward.2} parent=11 // pred_fallthru
        _
      // Predicated region
      $region45: #{net_forward.2} parent=11 // pred_check
        %p318 = pneg %p232
      $region46: #{net_forward.2} parent=11 // pred_check_branch
        %320 = sbr.rel (%p318) target = $region48
      $region47: #{net_forward.2} parent=11 // pred_region
        _
      $region48: #{net_forward.2} parent=11 // pred_fallthru
        _
      // Predicated region
      $region49: #{net_forward.2} parent=11 // pred_check
        %p321 = pneg %p253
      $region50: #{net_forward.2} parent=11 // pred_check_branch
        %323 = sbr.rel (%p321) target = $region52
      $region51: #{net_forward.2} parent=11 // pred_region
        _
      $region52: #{net_forward.2} parent=11 // pred_fallthru
        _
    $region12: #{net_forward.2} parent=5 // pred_fallthru
      _
    %p324 = scmp.lt.s32.totalorder %s17, 2
    // Predicated region
    $region53: #{net_forward.2} parent=5 // pred_check
      %p325 = pneg %p324
    $region54: #{net_forward.2} parent=5 // pred_check_branch
      %327 = sbr.rel (%p325) target = $region56
    $region55: #{net_forward.2} parent=5 // pred_region
      // Predicated region
      $region57: #{net_forward.2} parent=55 // pred_check
        %p328 = pneg %p37
      $region58: #{net_forward.2} parent=55 // pred_check_branch
        %330 = sbr.rel (%p328) target = $region60
      $region59: #{net_forward.2} parent=55 // pred_region
        %p331 = scmp.lt.s32.totalorder %s17, 1
        %s332 = scalar_select %p331, %s17, 1
        %s333 = smul.addr %s332, 112
        %s334 = smul.addr %s333, 4
        %s335 = scalar_lea.vmem %s0, %s334
      $region60: #{net_forward.2} parent=55 // pred_fallthru
        _
    $region56: #{net_forward.2} parent=5 // pred_fallthru
      _
    %p336 = scmp.le.s32.totalorder 1, %s17
    %p337 = scmp.lt.s32.totalorder %s17, 3
    %p338 = pnand %p336, %p337
    %p339 = pneg %p338
    // Predicated region
    $region61: #{net_forward.2} parent=5 // pred_check
      _
    $region62: #{net_forward.2} parent=5 // pred_check_branch
      %341 = sbr.rel (%p338) target = $region64
    $region63: #{net_forward.2} parent=5 // pred_region
      %s342 = ssub.s32 %s17, 1
      %p343 = scmp.lt.s32.totalorder %s22, 1
      %s344 = scalar_select %p343, %s22, 1
      %s345 = smul.addr %s344, 112
      %s346 = smul.addr %s345, 4
      %s347 = scalar_lea.vmem %s0, %s346
      %p348 = pneg %p43
      %p349 = pneg %p40
      %p350 = pneg %p64
      %p351 = pneg %p61
      %p352 = pneg %p85
      %p353 = pneg %p82
      %p354 = pneg %p106
      %p355 = pneg %p103
      %p356 = pneg %p127
      %p357 = pneg %p124
      %p358 = pneg %p148
      %p359 = pneg %p145
      %p360 = pneg %p169
      %p361 = pneg %p166
      %p362 = pneg %p190
      %p363 = pneg %p187
      %p364 = pneg %p211
      %p365 = pneg %p208
      %p366 = pneg %p232
      %p367 = pneg %p229
      %p368 = pneg %p253
      %p369 = pneg %p250
      %p370 = pneg %p279
      %p371 = pneg %p276
      %p372 = scmp.lt.s32.totalorder %s22, 1
      %s373 = scalar_select %p372, %s22, 1
      %s374 = smul.addr %s373, 7
      %s375 = smul.addr %s374, 4
      %s376 = scalar_lea.vmem %s11, %s375
      %p377 = scmp.lt.s32.totalorder %s22, 1
      %s378 = scalar_select %p377, %s22, 1
      %s379 = smul.addr %s378, 112
      %s380 = smul.addr %s379, 4
      %s381 = scalar_lea.vmem %s0, %s380
      %p382 = scmp.lt.s32.totalorder %s22, 1
      %s383 = scalar_select %p382, %s22, 1
      %s384 = smul.addr %s383, 7
      %s385 = smul.addr %s384, 4
      %s386 = scalar_lea.vmem %s11, %s385
      %vm388 = vcmask 257024
      %389 = vst.msk [vmem:[#allocation2] sm:$0xf] %vm388, 0
      %390 = vst.msk [vmem:[#allocation2 + $0x4] sm:$0xf] %vm388, 0
      %391 = vst.msk [vmem:[#allocation2 + $0x8] sm:$0xf] %vm388, 0
      %vm392 = vcmask 256000
      %393 = vst.msk [vmem:[#allocation2 + $0xc] sm:$0x7] %vm392, 0
      %394 = vst.msk [vmem:[#allocation2 + $0x10] sm:$0xf] %vm388, 0
      %395 = vst.msk [vmem:[#allocation2 + $0x14] sm:$0xf] %vm388, 0
      %396 = vst.msk [vmem:[#allocation2 + $0x18] sm:$0xf] %vm388, 0
      %397 = vst.msk [vmem:[#allocation2 + $0x1c] sm:$0x7] %vm392, 0
      %398 = vst.msk [vmem:[#allocation2 + $0x20] sm:$0xf] %vm388, 0
      %399 = vst.msk [vmem:[#allocation2 + $0x24] sm:$0xf] %vm388, 0
      %400 = vst.msk [vmem:[#allocation2 + $0x28] sm:$0xf] %vm388, 0
      %401 = vst.msk [vmem:[#allocation2 + $0x2c] sm:$0x7] %vm392, 0
      %402 = vst.msk [vmem:[#allocation2 + $0x30] sm:$0xf] %vm388, 0
      %403 = vst.msk [vmem:[#allocation2 + $0x34] sm:$0xf] %vm388, 0
      %404 = vst.msk [vmem:[#allocation2 + $0x38] sm:$0xf] %vm388, 0
      %405 = vst.msk [vmem:[#allocation2 + $0x3c] sm:$0x7] %vm392, 0
      %406 = vst.msk [vmem:[#allocation2 + $0x40] sm:$0xf] %vm388, 0
      %407 = vst.msk [vmem:[#allocation2 + $0x44] sm:$0xf] %vm388, 0
      %408 = vst.msk [vmem:[#allocation2 + $0x48] sm:$0xf] %vm388, 0
      %409 = vst.msk [vmem:[#allocation2 + $0x4c] sm:$0x7] %vm392, 0
      %410 = vst.msk [vmem:[#allocation2 + $0x50] sm:$0xf] %vm388, 0
      %411 = vst.msk [vmem:[#allocation2 + $0x54] sm:$0xf] %vm388, 0
      %412 = vst.msk [vmem:[#allocation2 + $0x58] sm:$0xf] %vm388, 0
      %413 = vst.msk [vmem:[#allocation2 + $0x5c] sm:$0x7] %vm392, 0
      %414 = vst.msk [vmem:[#allocation2 + $0x60] sm:$0xf] %vm388, 0
      %415 = vst.msk [vmem:[#allocation2 + $0x64] sm:$0xf] %vm388, 0
      %416 = vst.msk [vmem:[#allocation2 + $0x68] sm:$0xf] %vm388, 0
      %417 = vst.msk [vmem:[#allocation2 + $0x6c] sm:$0x7] %vm392, 0
      %418 = vst.msk [vmem:[#allocation2 + $0x70] sm:$0xf] %vm388, 0
      %419 = vst.msk [vmem:[#allocation2 + $0x74] sm:$0xf] %vm388, 0
      %420 = vst.msk [vmem:[#allocation2 + $0x78] sm:$0xf] %vm388, 0
      %421 = vst.msk [vmem:[#allocation2 + $0x7c] sm:$0x7] %vm392, 0
      %422 = vst.msk [vmem:[#allocation2 + $0x80] sm:$0xf] %vm388, 0
      %423 = vst.msk [vmem:[#allocation2 + $0x84] sm:$0xf] %vm388, 0
      %424 = vst.msk [vmem:[#allocation2 + $0x88] sm:$0xf] %vm388, 0
      %425 = vst.msk [vmem:[#allocation2 + $0x8c] sm:$0x7] %vm392, 0
      %426 = vst.msk [vmem:[#allocation2 + $0x90] sm:$0xf] %vm388, 0
      %427 = vst.msk [vmem:[#allocation2 + $0x94] sm:$0xf] %vm388, 0
      %428 = vst.msk [vmem:[#allocation2 + $0x98] sm:$0xf] %vm388, 0
      %429 = vst.msk [vmem:[#allocation2 + $0x9c] sm:$0x7] %vm392, 0
      %430 = vst.msk [vmem:[#allocation2 + $0xa0] sm:$0xf] %vm388, 0
      %431 = vst.msk [vmem:[#allocation2 + $0xa4] sm:$0xf] %vm388, 0
      %432 = vst.msk [vmem:[#allocation2 + $0xa8] sm:$0xf] %vm388, 0
      %433 = vst.msk [vmem:[#allocation2 + $0xac] sm:$0x7] %vm392, 0
      %434 = vst.msk [vmem:[#allocation2 + $0xb0] sm:$0xf] %vm388, 0
      %435 = vst.msk [vmem:[#allocation2 + $0xb4] sm:$0xf] %vm388, 0
      %436 = vst.msk [vmem:[#allocation2 + $0xb8] sm:$0xf] %vm388, 0
      %437 = vst.msk [vmem:[#allocation2 + $0xbc] sm:$0x7] %vm392, 0
      %438 = vst.msk [vmem:[#allocation2 + $0xc0] sm:$0xf] %vm388, 0
      %439 = vst.msk [vmem:[#allocation2 + $0xc4] sm:$0xf] %vm388, 0
      %440 = vst.msk [vmem:[#allocation2 + $0xc8] sm:$0xf] %vm388, 0
      %441 = vst.msk [vmem:[#allocation2 + $0xcc] sm:$0x7] %vm392, 0
      %442 = vst.msk [vmem:[#allocation2 + $0xd0] sm:$0xf] %vm388, 0
      %443 = vst.msk [vmem:[#allocation2 + $0xd4] sm:$0xf] %vm388, 0
      %444 = vst.msk [vmem:[#allocation2 + $0xd8] sm:$0xf] %vm388, 0
      %445 = vst.msk [vmem:[#allocation2 + $0xdc] sm:$0x7] %vm392, 0
      %446 = vst.msk [vmem:[#allocation2 + $0xe0] sm:$0xf] %vm388, 0
      %447 = vst.msk [vmem:[#allocation2 + $0xe4] sm:$0xf] %vm388, 0
      %448 = vst.msk [vmem:[#allocation2 + $0xe8] sm:$0xf] %vm388, 0
      %449 = vst.msk [vmem:[#allocation2 + $0xec] sm:$0x7] %vm392, 0
      %450 = vst.msk [vmem:[#allocation2 + $0xf0] sm:$0xf] %vm388, 0
      %451 = vst.msk [vmem:[#allocation2 + $0xf4] sm:$0xf] %vm388, 0
      %452 = vst.msk [vmem:[#allocation2 + $0xf8] sm:$0xf] %vm388, 0
      %453 = vst.msk [vmem:[#allocation2 + $0xfc] sm:$0x7] %vm392, 0
      %454 = vst.msk [vmem:[#allocation2 + $0x100] sm:$0xf] %vm388, 0
      %455 = vst.msk [vmem:[#allocation2 + $0x104] sm:$0xf] %vm388, 0
      %456 = vst.msk [vmem:[#allocation2 + $0x108] sm:$0xf] %vm388, 0
      %457 = vst.msk [vmem:[#allocation2 + $0x10c] sm:$0x7] %vm392, 0
      %458 = vst.msk [vmem:[#allocation2 + $0x110] sm:$0xf] %vm388, 0
      %459 = vst.msk [vmem:[#allocation2 + $0x114] sm:$0xf] %vm388, 0
      %460 = vst.msk [vmem:[#allocation2 + $0x118] sm:$0xf] %vm388, 0
      %461 = vst.msk [vmem:[#allocation2 + $0x11c] sm:$0x7] %vm392, 0
      %462 = vst.msk [vmem:[#allocation2 + $0x120] sm:$0xf] %vm388, 0
      %463 = vst.msk [vmem:[#allocation2 + $0x124] sm:$0xf] %vm388, 0
      %464 = vst.msk [vmem:[#allocation2 + $0x128] sm:$0xf] %vm388, 0
      %465 = vst.msk [vmem:[#allocation2 + $0x12c] sm:$0x7] %vm392, 0
      %466 = vst.msk [vmem:[#allocation2 + $0x130] sm:$0xf] %vm388, 0
      %467 = vst.msk [vmem:[#allocation2 + $0x134] sm:$0xf] %vm388, 0
      %468 = vst.msk [vmem:[#allocation2 + $0x138] sm:$0xf] %vm388, 0
      %469 = vst.msk [vmem:[#allocation2 + $0x13c] sm:$0x7] %vm392, 0
      %470 = vst.msk [vmem:[#allocation2 + $0x140] sm:$0xf] %vm388, 0
      %471 = vst.msk [vmem:[#allocation2 + $0x144] sm:$0xf] %vm388, 0
      %472 = vst.msk [vmem:[#allocation2 + $0x148] sm:$0xf] %vm388, 0
      %473 = vst.msk [vmem:[#allocation2 + $0x14c] sm:$0x7] %vm392, 0
      %474 = vst.msk [vmem:[#allocation2 + $0x150] sm:$0xf] %vm388, 0
      %475 = vst.msk [vmem:[#allocation2 + $0x154] sm:$0xf] %vm388, 0
      %476 = vst.msk [vmem:[#allocation2 + $0x158] sm:$0xf] %vm388, 0
      %477 = vst.msk [vmem:[#allocation2 + $0x15c] sm:$0x7] %vm392, 0
      %478 = vst.msk [vmem:[#allocation2 + $0x160] sm:$0xf] %vm388, 0
      %479 = vst.msk [vmem:[#allocation2 + $0x164] sm:$0xf] %vm388, 0
      %480 = vst.msk [vmem:[#allocation2 + $0x168] sm:$0xf] %vm388, 0
      %481 = vst.msk [vmem:[#allocation2 + $0x16c] sm:$0x7] %vm392, 0
      %482 = vst.msk [vmem:[#allocation2 + $0x170] sm:$0xf] %vm388, 0
      %483 = vst.msk [vmem:[#allocation2 + $0x174] sm:$0xf] %vm388, 0
      %484 = vst.msk [vmem:[#allocation2 + $0x178] sm:$0xf] %vm388, 0
      %485 = vst.msk [vmem:[#allocation2 + $0x17c] sm:$0x7] %vm392, 0
      %486 = vst.msk [vmem:[#allocation2 + $0x180] sm:$0xf] %vm388, 0
      %487 = vst.msk [vmem:[#allocation2 + $0x184] sm:$0xf] %vm388, 0
      %488 = vst.msk [vmem:[#allocation2 + $0x188] sm:$0xf] %vm388, 0
      %489 = vst.msk [vmem:[#allocation2 + $0x18c] sm:$0x7] %vm392, 0
      %490 = vst.msk [vmem:[#allocation2 + $0x190] sm:$0xf] %vm388, 0
      %491 = vst.msk [vmem:[#allocation2 + $0x194] sm:$0xf] %vm388, 0
      %492 = vst.msk [vmem:[#allocation2 + $0x198] sm:$0xf] %vm388, 0
      %493 = vst.msk [vmem:[#allocation2 + $0x19c] sm:$0x7] %vm392, 0
      %494 = vst.msk [vmem:[#allocation2 + $0x1a0] sm:$0xf] %vm388, 0
      %495 = vst.msk [vmem:[#allocation2 + $0x1a4] sm:$0xf] %vm388, 0
      %496 = vst.msk [vmem:[#allocation2 + $0x1a8] sm:$0xf] %vm388, 0
      %497 = vst.msk [vmem:[#allocation2 + $0x1ac] sm:$0x7] %vm392, 0
      %498 = vst.msk [vmem:[#allocation2 + $0x1b0] sm:$0xf] %vm388, 0
      %499 = vst.msk [vmem:[#allocation2 + $0x1b4] sm:$0xf] %vm388, 0
      %500 = vst.msk [vmem:[#allocation2 + $0x1b8] sm:$0xf] %vm388, 0
      %501 = vst.msk [vmem:[#allocation2 + $0x1bc] sm:$0x7] %vm392, 0
      %502 = vst.msk [vmem:[#allocation2 + $0x1c0] sm:$0xf] %vm388, 0
      %503 = vst.msk [vmem:[#allocation2 + $0x1c4] sm:$0xf] %vm388, 0
      %504 = vst.msk [vmem:[#allocation2 + $0x1c8] sm:$0xf] %vm388, 0
      %505 = vst.msk [vmem:[#allocation2 + $0x1cc] sm:$0x7] %vm392, 0
      %506 = vst.msk [vmem:[#allocation2 + $0x1d0] sm:$0xf] %vm388, 0
      %507 = vst.msk [vmem:[#allocation2 + $0x1d4] sm:$0xf] %vm388, 0
      %508 = vst.msk [vmem:[#allocation2 + $0x1d8] sm:$0xf] %vm388, 0
      %509 = vst.msk [vmem:[#allocation2 + $0x1dc] sm:$0x7] %vm392, 0
      %510 = vst.msk [vmem:[#allocation3] sm:$0xf] %vm388, 0
      %511 = vst.msk [vmem:[#allocation3 + $0x4] sm:$0xf] %vm388, 0
      %512 = vst.msk [vmem:[#allocation3 + $0x8] sm:$0xf] %vm388, 0
      %513 = vst.msk [vmem:[#allocation3 + $0xc] sm:$0xf] %vm388, 0
      %514 = vst.msk [vmem:[#allocation3 + $0x10] sm:$0xf] %vm388, 0
      %515 = vst.msk [vmem:[#allocation3 + $0x14] sm:$0xf] %vm388, 0
      %516 = vst.msk [vmem:[#allocation3 + $0x18] sm:$0xf] %vm388, 0
      %517 = vst.msk [vmem:[#allocation3 + $0x1c] sm:$0xf] %vm388, 0
      %518 = vst.msk [vmem:[#allocation3 + $0x20] sm:$0xf] %vm388, 0
      %519 = vst.msk [vmem:[#allocation3 + $0x24] sm:$0xf] %vm388, 0
      %520 = vst.msk [vmem:[#allocation3 + $0x28] sm:$0xf] %vm388, 0
      %521 = vst.msk [vmem:[#allocation3 + $0x2c] sm:$0xf] %vm388, 0
      %522 = vst.msk [vmem:[#allocation3 + $0x30] sm:$0xf] %vm388, 0
      %523 = vst.msk [vmem:[#allocation3 + $0x34] sm:$0xf] %vm388, 0
      %524 = vst.msk [vmem:[#allocation3 + $0x38] sm:$0xf] %vm388, 0
      %525 = vst.msk [vmem:[#allocation3 + $0x3c] sm:$0xf] %vm388, 0
      %526 = vst.msk [vmem:[#allocation3 + $0x40] sm:$0xf] %vm388, 0
      %527 = vst.msk [vmem:[#allocation3 + $0x44] sm:$0xf] %vm388, 0
      %528 = vst.msk [vmem:[#allocation3 + $0x48] sm:$0xf] %vm388, 0
      %529 = vst.msk [vmem:[#allocation3 + $0x4c] sm:$0xf] %vm388, 0
      %530 = vst.msk [vmem:[#allocation3 + $0x50] sm:$0xf] %vm388, 0
      %531 = vst.msk [vmem:[#allocation3 + $0x54] sm:$0xf] %vm388, 0
      %532 = vst.msk [vmem:[#allocation3 + $0x58] sm:$0xf] %vm388, 0
      %533 = vst.msk [vmem:[#allocation3 + $0x5c] sm:$0xf] %vm388, 0
      %534 = vst.msk [vmem:[#allocation3 + $0x60] sm:$0xf] %vm388, 0
      %535 = vst.msk [vmem:[#allocation3 + $0x64] sm:$0xf] %vm388, 0
      %536 = vst.msk [vmem:[#allocation3 + $0x68] sm:$0xf] %vm388, 0
      %537 = vst.msk [vmem:[#allocation3 + $0x6c] sm:$0xf] %vm388, 0
      %538 = vst.msk [vmem:[#allocation3 + $0x70] sm:$0xf] %vm388, 0
      %539 = vst.msk [vmem:[#allocation3 + $0x74] sm:$0xf] %vm388, 0
      %540 = vst.msk [vmem:[#allocation3 + $0x78] sm:$0xf] %vm388, 0
      %541 = vst.msk [vmem:[#allocation3 + $0x7c] sm:$0xf] %vm388, 0
      %vm542 = vcmask 519168
      %543 = vst.msk [vmem:[#allocation4] sm:$0xf] %vm542, 0
      %544 = vst.msk [vmem:[#allocation4 + $0x4] sm:$0xf] %vm542, 0
      %545 = vst.msk [vmem:[#allocation4 + $0x8] sm:$0xf] %vm542, 0
      %546 = vst.msk [vmem:[#allocation4 + $0xc] sm:$0xf] %vm542, 0
      %547 = vst.msk [vmem:[#allocation4 + $0x10] sm:$0xf] %vm542, 0
      %548 = vst.msk [vmem:[#allocation4 + $0x14] sm:$0xf] %vm542, 0
      %549 = vst.msk [vmem:[#allocation4 + $0x18] sm:$0xf] %vm542, 0
      %550 = vst.msk [vmem:[#allocation4 + $0x1c] sm:$0xf] %vm542, 0
      %551 = vst.msk [vmem:[#allocation4 + $0x20] sm:$0xf] %vm542, 0
      %552 = vst.msk [vmem:[#allocation4 + $0x24] sm:$0xf] %vm542, 0
      %553 = vst.msk [vmem:[#allocation4 + $0x28] sm:$0xf] %vm542, 0
      %554 = vst.msk [vmem:[#allocation4 + $0x2c] sm:$0xf] %vm542, 0
      %555 = vst.msk [vmem:[#allocation4 + $0x30] sm:$0xf] %vm542, 0
      %556 = vst.msk [vmem:[#allocation4 + $0x34] sm:$0xf] %vm542, 0
      %557 = vst.msk [vmem:[#allocation4 + $0x38] sm:$0xf] %vm542, 0
      %558 = vst.msk [vmem:[#allocation4 + $0x3c] sm:$0xf] %vm542, 0
      %559 = vst.msk [vmem:[#allocation4 + $0x40] sm:$0xf] %vm542, 0
      %560 = vst.msk [vmem:[#allocation4 + $0x44] sm:$0xf] %vm542, 0
      %561 = vst.msk [vmem:[#allocation4 + $0x48] sm:$0xf] %vm542, 0
      %562 = vst.msk [vmem:[#allocation4 + $0x4c] sm:$0xf] %vm542, 0
      %563 = vst.msk [vmem:[#allocation4 + $0x50] sm:$0xf] %vm542, 0
      %564 = vst.msk [vmem:[#allocation4 + $0x54] sm:$0xf] %vm542, 0
      %565 = vst.msk [vmem:[#allocation4 + $0x58] sm:$0xf] %vm542, 0
      %566 = vst.msk [vmem:[#allocation4 + $0x5c] sm:$0xf] %vm542, 0
      %567 = vst.msk [vmem:[#allocation4 + $0x60] sm:$0xf] %vm542, 0
      %568 = vst.msk [vmem:[#allocation4 + $0x64] sm:$0xf] %vm542, 0
      %569 = vst.msk [vmem:[#allocation4 + $0x68] sm:$0xf] %vm542, 0
      %570 = vst.msk [vmem:[#allocation4 + $0x6c] sm:$0xf] %vm542, 0
      %571 = vst.msk [vmem:[#allocation4 + $0x70] sm:$0xf] %vm542, 0
      %572 = vst.msk [vmem:[#allocation4 + $0x74] sm:$0xf] %vm542, 0
      %573 = vst.msk [vmem:[#allocation4 + $0x78] sm:$0xf] %vm542, 0
      %574 = vst.msk [vmem:[#allocation4 + $0x7c] sm:$0xf] %vm542, 0
      loop: start=0, step=1, limit=28
      $region65: #{net_forward.2} parent=63 // loop_pre_header
        _
      $region66: #{net_forward.2} parent=63 // loop_header
        %s576 = sphi 0, %s580
        %p577 = scmp.ge.s32.totalorder %s576, 28
      $region67: #{net_forward.2} parent=63 // loop_header_branch
        %579 = sbr.rel (%p577) target = $region71
      $region68: #{net_forward.2} parent=63 // loop_body
        %s581 = smul.u32 %s576, 4
        %s582 = smul.addr %s581, 4
        %s583 = scalar_lea.vmem %s381, %s582
        %v584 = vld [vmem:[%s583] sm:$0xf]
        %v585 = vld [vmem:[%s583 + $0x4] sm:$0xf]
        %v586 = vld [vmem:[%s583 + $0x8] sm:$0xf]
        %v587 = vld [vmem:[%s583 + $0xc] sm:$0x3]
        %v588 = vld [vmem:[%s1] sm:$0xf]
        %v589 = vld [vmem:[%s1 + $0x4] sm:$0x1]
        %v590 = vld [vmem:[%s2] sm:$0x1]
        %v592 = vlaneseq
        %v593 = vshrl.u32 %v592, 7
        %v594 = vsub.s32 0, %v593
        %v595 = vrot.slane %v590, %v594
        %v601 = vunpack.c.l.b16 %v584
        %v602 = vunpack.c.l.b16 %v585
        %v603 = vunpack.c.l.b16 %v586
        %v604 = vunpack.c.l.b16 %v587
        %v605 = vpack.c.b16 %v602, %v601
        %v606 = vpack.c.b16 %v604, %v603
        %v609 = vunpack.c.l.b16 %v588
        %v610 = vunpack.c.l.b16 %v589
        %v611 = vpack.c.b16 %v610, %v609
        %vm612 = vcmask 72704
        %v614 = vsel %vm612, %v605, 0
        %v617 = vsel %vm612, %v606, 0
        %vm619 = vcmask 1043456
        %vm620 = vcmask 1044480
        %v621 = vsel %vm619, 4294967295, 65535
        %v622 = vsel %vm620, %v621, 0
        %v624 = vand.u32 %v611, %v622
        %626 = vmatprep.subr.bf16.mxu0 0
        %627 = vmatpush1.bf16.msra.mxu0 0
        %628 = vmatprep.subr.bf16.mxu0 0
        %629 = vmatpush1.bf16.msra.mxu0 0
        %630 = vmatprep.subr.bf16.mxu0 0
        %631 = vmatpush1.bf16.msra.mxu0 0
        %632 = vmatprep.subr.bf16.mxu0 0
        %633 = vmatpush1.bf16.msra.mxu0 0
        %634 = vmatprep.subr.bf16.mxu0 0
        %635 = vmatpush1.bf16.msra.mxu0 0
        %636 = vmatprep.subr.bf16.mxu0 0
        %637 = vmatpush1.bf16.msra.mxu0 0
        %638 = vmatprep.subr.bf16.mxu0 0
        %639 = vmatpush1.bf16.msra.mxu0 0
        %640 = vmatprep.subr.bf16.mxu0 0
        %641 = vmatpush1.bf16.msra.mxu0 %v624
        %642 = vmatprep.subr.bf16.mxu0 0
        %643 = vmatpush2.bf16.msra.mxu0 0
        %644 = vmatprep.subr.bf16.mxu0 0
        %645 = vmatpush2.bf16.msra.mxu0 0
        %646 = vmatprep.subr.bf16.mxu0 0
        %647 = vmatpush2.bf16.msra.mxu0 0
        %648 = vmatprep.subr.bf16.mxu0 0
        %649 = vmatpush2.bf16.msra.mxu0 0
        %650 = vmatprep.subr.bf16.mxu0 0
        %651 = vmatpush2.bf16.msra.mxu0 0
        %652 = vmatprep.subr.bf16.mxu0 0
        %653 = vmatpush2.bf16.msra.mxu0 0
        %654 = vmatprep.subr.bf16.mxu0 0
        %655 = vmatpush2.bf16.msra.mxu0 0
        %656 = vmatprep.subr.bf16.mxu0 0
        %657 = vmatpush2.bf16.msra.mxu0 0
        %658 = vmatprep.mubr.bf16.mxu0 0
        %659 = vmatmul.mubr.bf16.gmra.mxu0 %v614
        %v660 = vpop.f32.mrf.mxu0
        %v661 = vadd.f32 %v595, %v660
        %v662 = vpop.f32.mrf.mxu0
        %v663 = vpop.f32.mrf.mxu0
        %v664 = vadd.f32 %v595, %v663
        %v665 = vpop.f32.mrf.mxu0
        %666 = vmatprep.mubr.bf16.mxu0 0
        %667 = vmatmul.mubr.bf16.gmra.mxu0 %v617
        %v668 = vpop.f32.mrf.mxu0
        %v669 = vadd.f32 %v595, %v668
        %v670 = vpop.f32.mrf.mxu0
        %v671 = vpop.f32.mrf.mxu0
        %v672 = vadd.f32 %v595, %v671
        %v673 = vpop.f32.mrf.mxu0
        %674 = vdwg.mxu0
        %v675 = vmax.f32 %v661, 0.0
        %v676 = vmax.f32 %v664, 0.0
        %v677 = vmax.f32 %v669, 0.0
        %v678 = vmax.f32 %v672, 0.0
        %v679 = vpack.c.bf16 %v676, %v675
        %v680 = vpack.c.bf16 %v678, %v677
        %s681 = sadd.s32 %s576, 1
        %v684 = vunpack.c.l.b16 %v679
        %v685 = vunpack.c.h.b16 %v679
        %v686 = vunpack.c.l.b16 %v680
        %v687 = vunpack.c.h.b16 %v680
        %v688 = vpack.c.b16 %v684, %v684
        %v689 = vpack.c.b16 %v685, %v685
        %v690 = vpack.c.b16 %v686, %v686
        %v691 = vpack.c.b16 %v687, %v687
        %vm692 = vsmask.f32 256
        %vm693 = vsmask.f32 4368
        %vm694 = vmor %vm692, %vm693
        %v696 = vshrl.u32 %v688, 16
        %v698 = vrot.slane %v696, 7
        %v699 = vshll.u32 %v688, 16
        %v701 = vor.u32 %v698, %v699
        %v702 = vrot.slane %v698, 4
        %v704 = vshrl.u32 %v689, 16
        %v706 = vrot.slane %v704, 7
        %v707 = vshll.u32 %v689, 16
        %v709 = vor.u32 %v706, %v707
        %v710 = vsel %vm694, %v702, %v709
        %v711 = vrot.slane %v706, 4
        %v713 = vshrl.u32 %v690, 16
        %v715 = vrot.slane %v713, 7
        %v716 = vshll.u32 %v690, 16
        %v718 = vor.u32 %v715, %v716
        %v719 = vsel %vm694, %v711, %v718
        %v720 = vrot.slane %v715, 4
        %v722 = vshrl.u32 %v691, 16
        %v724 = vrot.slane %v722, 7
        %v725 = vshll.u32 %v691, 16
        %v727 = vor.u32 %v724, %v725
        %v728 = vsel %vm694, %v720, %v727
        %s733 = smul.u32 %s681, 4
        %s734 = smul.addr %s733, 4
        %s735 = scalar_lea.vmem [#allocation2], %s734
        %vm736 = vcmask 257024
        %vm737 = vsmask.f32 7938
        %vm738 = vmand %vm736, %vm737
        %v739 = vld [vmem:[%s735] sm:$0xf]
        %v740 = vsel %vm738, %v701, %v739
        %741 = vst [vmem:[%s735] sm:$0xf] %v740
        %742 = vst.msk [vmem:[%s735 + $0x4] sm:$0xf] %vm388, %v710
        %743 = vst.msk [vmem:[%s735 + $0x8] sm:$0xf] %vm388, %v719
        %vm744 = vcmask 256000
        %vm745 = vsmask.f32 2304
        %vm746 = vmand %vm744, %vm745
        %v747 = vld [vmem:[%s735 + $0xc] sm:$0x7]
        %v748 = vsel %vm746, %v728, %v747
        %749 = vst [vmem:[%s735 + $0xc] sm:$0x7] %v748
      $region69: #{net_forward.2} parent=63 // loop_footer
        %s580 = sadd.s32 1, %s576
      $region70: #{net_forward.2} parent=63 // loop_footer_branch
        %575 = sbr.rel target = $region66
      $region71: #{net_forward.2} parent=63 // loop_exit
        _
      loop: start=0, step=1, limit=14
      $region72: #{net_forward.2} parent=63 // loop_pre_header
        _
      $region73: #{net_forward.2} parent=63 // loop_header
        %s751 = sphi 0, %s755
        %p752 = scmp.ge.s32.totalorder %s751, 14
      $region74: #{net_forward.2} parent=63 // loop_header_branch
        %754 = sbr.rel (%p752) target = $region78
      $region75: #{net_forward.2} parent=63 // loop_body
        %s756 = smul.u32 %s751, 2
        %s757 = smul.u32 %s756, 4
        %s758 = smul.addr %s757, 4
        %s759 = scalar_lea.vmem [#allocation2], %s758
        %v760 = vld [vmem:[%s759] sm:$0xf]
        %v761 = vld [vmem:[%s759 + $0x4] sm:$0xf]
        %v762 = vld [vmem:[%s759 + $0x8] sm:$0xf]
        %v763 = vld [vmem:[%s759 + $0xc] sm:$0x3]
        %v764 = vld [vmem:[%s759] sm:$0xe]
        %v765 = vld [vmem:[%s759 + $0xc] sm:$0x7]
        %s766 = sadd.s32 %s756, 1
        %s767 = smul.u32 %s766, 4
        %s768 = smul.addr %s767, 4
        %s769 = scalar_lea.vmem [#allocation2], %s768
        %v770 = vld [vmem:[%s769] sm:$0xf]
        %v771 = vld [vmem:[%s769 + $0x4] sm:$0xf]
        %v772 = vld [vmem:[%s769 + $0x8] sm:$0xf]
        %v773 = vld [vmem:[%s769 + $0xc] sm:$0x3]
        %v774 = vld [vmem:[%s769] sm:$0xe]
        %v775 = vld [vmem:[%s769 + $0xc] sm:$0x7]
        %s776 = sadd.s32 %s756, 2
        %s777 = smul.u32 %s776, 4
        %s778 = smul.addr %s777, 4
        %s779 = scalar_lea.vmem [#allocation2], %s778
        %v780 = vld [vmem:[%s779] sm:$0xf]
        %v781 = vld [vmem:[%s779 + $0x4] sm:$0xf]
        %v782 = vld [vmem:[%s779 + $0x8] sm:$0xf]
        %v783 = vld [vmem:[%s779 + $0xc] sm:$0x3]
        %v784 = vld [vmem:[%s779] sm:$0xe]
        %v785 = vld [vmem:[%s779 + $0xc] sm:$0x7]
        %s786 = sadd.s32 %s756, 3
        %s787 = smul.u32 %s786, 4
        %s788 = smul.addr %s787, 4
        %s789 = scalar_lea.vmem [#allocation2], %s788
        %v790 = vld [vmem:[%s789] sm:$0xf]
        %v791 = vld [vmem:[%s789 + $0x4] sm:$0xf]
        %v792 = vld [vmem:[%s789 + $0x8] sm:$0xf]
        %v793 = vld [vmem:[%s789 + $0xc] sm:$0x3]
        %v794 = vld [vmem:[%s789] sm:$0xe]
        %v795 = vld [vmem:[%s789 + $0xc] sm:$0x7]
        %v800 = vunpack.c.l.b16 %v760
        %v801 = vunpack.c.l.b16 %v761
        %v802 = vunpack.c.l.b16 %v762
        %v803 = vunpack.c.l.b16 %v763
        %v804 = vpack.c.b16 %v801, %v800
        %v805 = vpack.c.b16 %v803, %v802
        %vm806 = vsmask.f32 7424
        %v808 = vshrl.u32 %v804, 16
        %v810 = vshll.u32 %v804, 16
        %v812 = vrot.slane %v810, 1
        %v813 = vor.u32 %v808, %v812
        %v815 = vshll.u32 %v805, 16
        %v817 = vrot.slane %v815, 1
        %v818 = vsel %vm806, %v813, %v817
        %v819 = vshrl.u32 %v805, 16
        %v821 = vor.u32 %v819, %v817
        %822 = vrot.lane.b32.xlu0 %v818, 32
        %v823 = vpop.permute.xlu0 %822
        %824 = vrot.lane.b32.xlu0 %v821, 32
        %v825 = vpop.permute.xlu0 %824
        %v828 = vunpack.c.l.b16 %v764
        %v829 = vunpack.c.l.b16 %v765
        %v830 = vpack.c.b16 %v801, %v828
        %v831 = vpack.c.b16 %v829, %v802
        %vm832 = vcmask 1046528
        %v833 = vrot.slane %v830, 1
        %v834 = vrot.slane %v831, 1
        %v835 = vsel %vm832, %v833, %v834
        %836 = vrot.lane.b32.xlu0 %v835, 64
        %v837 = vpop.permute.xlu0 %836
        %838 = vrot.lane.b32.xlu0 %v834, 64
        %v839 = vpop.permute.xlu0 %838
        %vm840 = vsmask.f32 6400
        %v842 = vshrl.u32 %v830, 16
        %v844 = vrot.slane %v842, 1
        %v845 = vshll.u32 %v830, 16
        %v847 = vrot.slane %v845, 2
        %v848 = vor.u32 %v844, %v847
        %v850 = vshrl.u32 %v831, 16
        %v852 = vrot.slane %v850, 1
        %v853 = vshll.u32 %v831, 16
        %v855 = vrot.slane %v853, 2
        %v856 = vor.u32 %v852, %v855
        %v857 = vsel %vm840, %v848, %v856
        %858 = vrot.lane.b32.xlu0 %v857, 96
        %v859 = vpop.permute.xlu0 %858
        %860 = vrot.lane.b32.xlu0 %v856, 96
        %v861 = vpop.permute.xlu0 %860
        %v866 = vunpack.c.l.b16 %v770
        %v867 = vunpack.c.l.b16 %v771
        %v868 = vunpack.c.l.b16 %v772
        %v869 = vunpack.c.l.b16 %v773
        %v870 = vpack.c.b16 %v867, %v866
        %v871 = vpack.c.b16 %v869, %v868
        %v873 = vshrl.u32 %v870, 16
        %v875 = vshll.u32 %v870, 16
        %v877 = vrot.slane %v875, 1
        %v878 = vor.u32 %v873, %v877
        %v880 = vshll.u32 %v871, 16
        %v882 = vrot.slane %v880, 1
        %v883 = vsel %vm806, %v878, %v882
        %v884 = vshrl.u32 %v871, 16
        %v886 = vor.u32 %v884, %v882
        %887 = vrot.lane.b32.xlu0 %v883, 32
        %v888 = vpop.permute.xlu0 %887
        %889 = vrot.lane.b32.xlu0 %v886, 32
        %v890 = vpop.permute.xlu0 %889
        %v893 = vunpack.c.l.b16 %v774
        %v894 = vunpack.c.l.b16 %v775
        %v895 = vpack.c.b16 %v867, %v893
        %v896 = vpack.c.b16 %v894, %v868
        %v897 = vrot.slane %v895, 1
        %v898 = vrot.slane %v896, 1
        %v899 = vsel %vm832, %v897, %v898
        %900 = vrot.lane.b32.xlu0 %v899, 64
        %v901 = vpop.permute.xlu0 %900
        %902 = vrot.lane.b32.xlu0 %v898, 64
        %v903 = vpop.permute.xlu0 %902
        %v905 = vshrl.u32 %v895, 16
        %v907 = vrot.slane %v905, 1
        %v908 = vshll.u32 %v895, 16
        %v910 = vrot.slane %v908, 2
        %v911 = vor.u32 %v907, %v910
        %v913 = vshrl.u32 %v896, 16
        %v915 = vrot.slane %v913, 1
        %v916 = vshll.u32 %v896, 16
        %v918 = vrot.slane %v916, 2
        %v919 = vor.u32 %v915, %v918
        %v920 = vsel %vm840, %v911, %v919
        %921 = vrot.lane.b32.xlu0 %v920, 96
        %v922 = vpop.permute.xlu0 %921
        %923 = vrot.lane.b32.xlu0 %v919, 96
        %v924 = vpop.permute.xlu0 %923
        %v929 = vunpack.c.l.b16 %v780
        %v930 = vunpack.c.l.b16 %v781
        %v931 = vunpack.c.l.b16 %v782
        %v932 = vunpack.c.l.b16 %v783
        %v933 = vpack.c.b16 %v930, %v929
        %v934 = vpack.c.b16 %v932, %v931
        %v936 = vshrl.u32 %v933, 16
        %v938 = vshll.u32 %v933, 16
        %v940 = vrot.slane %v938, 1
        %v941 = vor.u32 %v936, %v940
        %v943 = vshll.u32 %v934, 16
        %v945 = vrot.slane %v943, 1
        %v946 = vsel %vm806, %v941, %v945
        %v947 = vshrl.u32 %v934, 16
        %v949 = vor.u32 %v947, %v945
        %950 = vrot.lane.b32.xlu0 %v946, 32
        %v951 = vpop.permute.xlu0 %950
        %952 = vrot.lane.b32.xlu0 %v949, 32
        %v953 = vpop.permute.xlu0 %952
        %v956 = vunpack.c.l.b16 %v784
        %v957 = vunpack.c.l.b16 %v785
        %v958 = vpack.c.b16 %v930, %v956
        %v959 = vpack.c.b16 %v957, %v931
        %v960 = vrot.slane %v958, 1
        %v961 = vrot.slane %v959, 1
        %v962 = vsel %vm832, %v960, %v961
        %963 = vrot.lane.b32.xlu0 %v962, 64
        %v964 = vpop.permute.xlu0 %963
        %965 = vrot.lane.b32.xlu0 %v961, 64
        %v966 = vpop.permute.xlu0 %965
        %v968 = vshrl.u32 %v958, 16
        %v970 = vrot.slane %v968, 1
        %v971 = vshll.u32 %v958, 16
        %v973 = vrot.slane %v971, 2
        %v974 = vor.u32 %v970, %v973
        %v976 = vshrl.u32 %v959, 16
        %v978 = vrot.slane %v976, 1
        %v979 = vshll.u32 %v959, 16
        %v981 = vrot.slane %v979, 2
        %v982 = vor.u32 %v978, %v981
        %v983 = vsel %vm840, %v974, %v982
        %984 = vrot.lane.b32.xlu0 %v983, 96
        %v985 = vpop.permute.xlu0 %984
        %986 = vrot.lane.b32.xlu0 %v982, 96
        %v987 = vpop.permute.xlu0 %986
        %v992 = vunpack.c.l.b16 %v790
        %v993 = vunpack.c.l.b16 %v791
        %v994 = vunpack.c.l.b16 %v792
        %v995 = vunpack.c.l.b16 %v793
        %v996 = vpack.c.b16 %v993, %v992
        %v997 = vpack.c.b16 %v995, %v994
        %v999 = vshrl.u32 %v996, 16
        %v1001 = vshll.u32 %v996, 16
        %v1003 = vrot.slane %v1001, 1
        %v1004 = vor.u32 %v999, %v1003
        %v1006 = vshll.u32 %v997, 16
        %v1008 = vrot.slane %v1006, 1
        %v1009 = vsel %vm806, %v1004, %v1008
        %v1010 = vshrl.u32 %v997, 16
        %v1012 = vor.u32 %v1010, %v1008
        %1013 = vrot.lane.b32.xlu0 %v1009, 32
        %v1014 = vpop.permute.xlu0 %1013
        %1015 = vrot.lane.b32.xlu0 %v1012, 32
        %v1016 = vpop.permute.xlu0 %1015
        %v1019 = vunpack.c.l.b16 %v794
        %v1020 = vunpack.c.l.b16 %v795
        %v1021 = vpack.c.b16 %v993, %v1019
        %v1022 = vpack.c.b16 %v1020, %v994
        %v1023 = vrot.slane %v1021, 1
        %v1024 = vrot.slane %v1022, 1
        %v1025 = vsel %vm832, %v1023, %v1024
        %1026 = vrot.lane.b32.xlu0 %v1025, 64
        %v1027 = vpop.permute.xlu0 %1026
        %1028 = vrot.lane.b32.xlu0 %v1024, 64
        %v1029 = vpop.permute.xlu0 %1028
        %v1031 = vshrl.u32 %v1021, 16
        %v1033 = vrot.slane %v1031, 1
        %v1034 = vshll.u32 %v1021, 16
        %v1036 = vrot.slane %v1034, 2
        %v1037 = vor.u32 %v1033, %v1036
        %v1039 = vshrl.u32 %v1022, 16
        %v1041 = vrot.slane %v1039, 1
        %v1042 = vshll.u32 %v1022, 16
        %v1044 = vrot.slane %v1042, 2
        %v1045 = vor.u32 %v1041, %v1044
        %v1046 = vsel %vm840, %v1037, %v1045
        %1047 = vrot.lane.b32.xlu0 %v1046, 96
        %v1048 = vpop.permute.xlu0 %1047
        %1049 = vrot.lane.b32.xlu0 %v1045, 96
        %v1050 = vpop.permute.xlu0 %1049
        %vm1051 = vcmask 261120
        %v1053 = vsel %vm1051, %v804, %v823
        %v1055 = vsel %vm1051, %v805, %v825
        %vm1056 = vcmask 523264
        %v1058 = vsel %vm1056, %v1053, %v837
        %v1060 = vsel %vm1056, %v1055, %v839
        %vm1061 = vcmask 785408
        %v1063 = vsel %vm1061, %v1058, %v859
        %v1066 = vsel %vm1061, %v1060, %v861
        %v1069 = vsel %vm1051, %v870, %v888
        %v1071 = vsel %vm1051, %v871, %v890
        %v1073 = vsel %vm1056, %v1069, %v901
        %v1075 = vsel %vm1056, %v1071, %v903
        %v1077 = vsel %vm1061, %v1073, %v922
        %v1080 = vsel %vm1061, %v1075, %v924
        %v1083 = vsel %vm1051, %v933, %v951
        %v1085 = vsel %vm1051, %v934, %v953
        %v1087 = vsel %vm1056, %v1083, %v964
        %v1089 = vsel %vm1056, %v1085, %v966
        %v1091 = vsel %vm1061, %v1087, %v985
        %v1094 = vsel %vm1061, %v1089, %v987
        %v1097 = vsel %vm1051, %v996, %v1014
        %v1099 = vsel %vm1051, %v997, %v1016
        %v1101 = vsel %vm1056, %v1097, %v1027
        %v1103 = vsel %vm1056, %v1099, %v1029
        %v1105 = vsel %vm1061, %v1101, %v1048
        %v1108 = vsel %vm1061, %v1103, %v1050
        %v1110 = vld [vmem:[%s3] sm:$0xf]
        %v1111 = vld [vmem:[%s3 + $0x4] sm:$0xf]
        %v1112 = vld [vmem:[%s3 + $0x8] sm:$0xf]
        %v1113 = vld [vmem:[%s3 + $0xc] sm:$0xf]
        %v1114 = vld [vmem:[%s3 + $0x10] sm:$0xf]
        %v1115 = vld [vmem:[%s3 + $0x14] sm:$0xf]
        %v1116 = vld [vmem:[%s3 + $0x18] sm:$0xf]
        %v1117 = vld [vmem:[%s3 + $0x1c] sm:$0xf]
        %v1118 = vld [vmem:[%s3 + $0x20] sm:$0xf]
        %v1119 = vld [vmem:[%s3 + $0x24] sm:$0xf]
        %v1120 = vld [vmem:[%s3 + $0x28] sm:$0xf]
        %v1121 = vld [vmem:[%s3 + $0x2c] sm:$0xf]
        %v1122 = vld [vmem:[%s3 + $0x30] sm:$0xf]
        %v1123 = vld [vmem:[%s3 + $0x34] sm:$0xf]
        %v1124 = vld [vmem:[%s3 + $0x38] sm:$0xf]
        %v1125 = vld [vmem:[%s3 + $0x3c] sm:$0xf]
        %v1126 = vld [vmem:[%s3 + $0x40] sm:$0xf]
        %v1127 = vld [vmem:[%s3 + $0x44] sm:$0xf]
        %v1128 = vld [vmem:[%s3 + $0x48] sm:$0xf]
        %v1129 = vld [vmem:[%s3 + $0x4c] sm:$0xf]
        %v1130 = vld [vmem:[%s3 + $0x50] sm:$0xf]
        %v1131 = vld [vmem:[%s3 + $0x54] sm:$0xf]
        %v1132 = vld [vmem:[%s3 + $0x58] sm:$0xf]
        %v1133 = vld [vmem:[%s3 + $0x5c] sm:$0xf]
        %v1134 = vld [vmem:[%s3 + $0x60] sm:$0xf]
        %v1135 = vld [vmem:[%s3 + $0x64] sm:$0xf]
        %v1136 = vld [vmem:[%s3 + $0x68] sm:$0xf]
        %v1137 = vld [vmem:[%s3 + $0x6c] sm:$0xf]
        %v1138 = vld [vmem:[%s3 + $0x70] sm:$0xf]
        %v1139 = vld [vmem:[%s3 + $0x74] sm:$0xf]
        %v1140 = vld [vmem:[%s3 + $0x78] sm:$0xf]
        %v1141 = vld [vmem:[%s3 + $0x7c] sm:$0xf]
        %v1142 = vld [vmem:[%s3 + $0x80] sm:$0xf]
        %v1143 = vld [vmem:[%s3 + $0x84] sm:$0xf]
        %v1144 = vld [vmem:[%s3 + $0x88] sm:$0xf]
        %v1145 = vld [vmem:[%s3 + $0x8c] sm:$0xf]
        %v1146 = vld [vmem:[%s3 + $0x90] sm:$0xf]
        %v1147 = vld [vmem:[%s3 + $0x94] sm:$0xf]
        %v1148 = vld [vmem:[%s3 + $0x98] sm:$0xf]
        %v1149 = vld [vmem:[%s3 + $0x9c] sm:$0xf]
        %v1150 = vld [vmem:[%s3 + $0xa0] sm:$0xf]
        %v1151 = vld [vmem:[%s3 + $0xa4] sm:$0xf]
        %v1152 = vld [vmem:[%s3 + $0xa8] sm:$0xf]
        %v1153 = vld [vmem:[%s3 + $0xac] sm:$0xf]
        %v1154 = vld [vmem:[%s3 + $0xb0] sm:$0xf]
        %v1155 = vld [vmem:[%s3 + $0xb4] sm:$0xf]
        %v1156 = vld [vmem:[%s3 + $0xb8] sm:$0xf]
        %v1157 = vld [vmem:[%s3 + $0xbc] sm:$0xf]
        %v1158 = vld [vmem:[%s3 + $0xc0] sm:$0xf]
        %v1159 = vld [vmem:[%s3 + $0xc4] sm:$0xf]
        %v1160 = vld [vmem:[%s3 + $0xc8] sm:$0xf]
        %v1161 = vld [vmem:[%s3 + $0xcc] sm:$0xf]
        %v1162 = vld [vmem:[%s3 + $0xd0] sm:$0xf]
        %v1163 = vld [vmem:[%s3 + $0xd4] sm:$0xf]
        %v1164 = vld [vmem:[%s3 + $0xd8] sm:$0xf]
        %v1165 = vld [vmem:[%s3 + $0xdc] sm:$0xf]
        %v1166 = vld [vmem:[%s3 + $0xe0] sm:$0xf]
        %v1167 = vld [vmem:[%s3 + $0xe4] sm:$0xf]
        %v1168 = vld [vmem:[%s3 + $0xe8] sm:$0xf]
        %v1169 = vld [vmem:[%s3 + $0xec] sm:$0xf]
        %v1170 = vld [vmem:[%s3 + $0xf0] sm:$0xf]
        %v1171 = vld [vmem:[%s3 + $0xf4] sm:$0xf]
        %v1172 = vld [vmem:[%s3 + $0xf8] sm:$0xf]
        %v1173 = vld [vmem:[%s3 + $0xfc] sm:$0xf]
        %v1238 = vunpack.c.l.b16 %v1110
        %v1239 = vunpack.c.l.b16 %v1111
        %v1240 = vunpack.c.l.b16 %v1112
        %v1241 = vunpack.c.l.b16 %v1113
        %v1242 = vunpack.c.l.b16 %v1114
        %v1243 = vunpack.c.l.b16 %v1115
        %v1244 = vunpack.c.l.b16 %v1116
        %v1245 = vunpack.c.l.b16 %v1117
        %v1246 = vunpack.c.l.b16 %v1118
        %v1247 = vunpack.c.l.b16 %v1119
        %v1248 = vunpack.c.l.b16 %v1120
        %v1249 = vunpack.c.l.b16 %v1121
        %v1250 = vunpack.c.l.b16 %v1122
        %v1251 = vunpack.c.l.b16 %v1123
        %v1252 = vunpack.c.l.b16 %v1124
        %v1253 = vunpack.c.l.b16 %v1125
        %v1254 = vunpack.c.l.b16 %v1126
        %v1255 = vunpack.c.l.b16 %v1127
        %v1256 = vunpack.c.l.b16 %v1128
        %v1257 = vunpack.c.l.b16 %v1129
        %v1258 = vunpack.c.l.b16 %v1130
        %v1259 = vunpack.c.l.b16 %v1131
        %v1260 = vunpack.c.l.b16 %v1132
        %v1261 = vunpack.c.l.b16 %v1133
        %v1262 = vunpack.c.l.b16 %v1134
        %v1263 = vunpack.c.l.b16 %v1135
        %v1264 = vunpack.c.l.b16 %v1136
        %v1265 = vunpack.c.l.b16 %v1137
        %v1266 = vunpack.c.l.b16 %v1138
        %v1267 = vunpack.c.l.b16 %v1139
        %v1268 = vunpack.c.l.b16 %v1140
        %v1269 = vunpack.c.l.b16 %v1141
        %v1270 = vunpack.c.l.b16 %v1142
        %v1271 = vunpack.c.l.b16 %v1143
        %v1272 = vunpack.c.l.b16 %v1144
        %v1273 = vunpack.c.l.b16 %v1145
        %v1274 = vunpack.c.l.b16 %v1146
        %v1275 = vunpack.c.l.b16 %v1147
        %v1276 = vunpack.c.l.b16 %v1148
        %v1277 = vunpack.c.l.b16 %v1149
        %v1278 = vunpack.c.l.b16 %v1150
        %v1279 = vunpack.c.l.b16 %v1151
        %v1280 = vunpack.c.l.b16 %v1152
        %v1281 = vunpack.c.l.b16 %v1153
        %v1282 = vunpack.c.l.b16 %v1154
        %v1283 = vunpack.c.l.b16 %v1155
        %v1284 = vunpack.c.l.b16 %v1156
        %v1285 = vunpack.c.l.b16 %v1157
        %v1286 = vunpack.c.l.b16 %v1158
        %v1287 = vunpack.c.l.b16 %v1159
        %v1288 = vunpack.c.l.b16 %v1160
        %v1289 = vunpack.c.l.b16 %v1161
        %v1290 = vunpack.c.l.b16 %v1162
        %v1291 = vunpack.c.l.b16 %v1163
        %v1292 = vunpack.c.l.b16 %v1164
        %v1293 = vunpack.c.l.b16 %v1165
        %v1294 = vunpack.c.l.b16 %v1166
        %v1295 = vunpack.c.l.b16 %v1167
        %v1296 = vunpack.c.l.b16 %v1168
        %v1297 = vunpack.c.l.b16 %v1169
        %v1298 = vunpack.c.l.b16 %v1170
        %v1299 = vunpack.c.l.b16 %v1171
        %v1300 = vunpack.c.l.b16 %v1172
        %v1301 = vunpack.c.l.b16 %v1173
        %v1302 = vpack.c.b16 %v1239, %v1238
        %v1303 = vpack.c.b16 %v1241, %v1240
        %v1304 = vpack.c.b16 %v1243, %v1242
        %v1305 = vpack.c.b16 %v1245, %v1244
        %v1306 = vpack.c.b16 %v1247, %v1246
        %v1307 = vpack.c.b16 %v1249, %v1248
        %v1308 = vpack.c.b16 %v1251, %v1250
        %v1309 = vpack.c.b16 %v1253, %v1252
        %v1310 = vpack.c.b16 %v1255, %v1254
        %v1311 = vpack.c.b16 %v1257, %v1256
        %v1312 = vpack.c.b16 %v1259, %v1258
        %v1313 = vpack.c.b16 %v1261, %v1260
        %v1314 = vpack.c.b16 %v1263, %v1262
        %v1315 = vpack.c.b16 %v1265, %v1264
        %v1316 = vpack.c.b16 %v1267, %v1266
        %v1317 = vpack.c.b16 %v1269, %v1268
        %v1318 = vpack.c.b16 %v1271, %v1270
        %v1319 = vpack.c.b16 %v1273, %v1272
        %v1320 = vpack.c.b16 %v1275, %v1274
        %v1321 = vpack.c.b16 %v1277, %v1276
        %v1322 = vpack.c.b16 %v1279, %v1278
        %v1323 = vpack.c.b16 %v1281, %v1280
        %v1324 = vpack.c.b16 %v1283, %v1282
        %v1325 = vpack.c.b16 %v1285, %v1284
        %v1326 = vpack.c.b16 %v1287, %v1286
        %v1327 = vpack.c.b16 %v1289, %v1288
        %v1328 = vpack.c.b16 %v1291, %v1290
        %v1329 = vpack.c.b16 %v1293, %v1292
        %v1330 = vpack.c.b16 %v1295, %v1294
        %v1331 = vpack.c.b16 %v1297, %v1296
        %v1332 = vpack.c.b16 %v1299, %v1298
        %v1333 = vpack.c.b16 %v1301, %v1300
        %1366 = vmatprep.subr.bf16.mxu0 0
        %1367 = vmatpush1.bf16.msra.mxu0 %v1309
        %1368 = vmatprep.subr.bf16.mxu0 0
        %1369 = vmatpush1.bf16.msra.mxu0 %v1308
        %1370 = vmatprep.subr.bf16.mxu0 0
        %1371 = vmatpush1.bf16.msra.mxu0 %v1307
        %1372 = vmatprep.subr.bf16.mxu0 0
        %1373 = vmatpush1.bf16.msra.mxu0 %v1306
        %1374 = vmatprep.subr.bf16.mxu0 0
        %1375 = vmatpush1.bf16.msra.mxu0 %v1305
        %1376 = vmatprep.subr.bf16.mxu0 0
        %1377 = vmatpush1.bf16.msra.mxu0 %v1304
        %1378 = vmatprep.subr.bf16.mxu0 0
        %1379 = vmatpush1.bf16.msra.mxu0 %v1303
        %1380 = vmatprep.subr.bf16.mxu0 0
        %1381 = vmatpush1.bf16.msra.mxu0 %v1302
        %1382 = vmatprep.subr.bf16.mxu0 0
        %1383 = vmatpush2.bf16.msra.mxu0 %v1317
        %1384 = vmatprep.subr.bf16.mxu0 0
        %1385 = vmatpush2.bf16.msra.mxu0 %v1316
        %1386 = vmatprep.subr.bf16.mxu0 0
        %1387 = vmatpush2.bf16.msra.mxu0 %v1315
        %1388 = vmatprep.subr.bf16.mxu0 0
        %1389 = vmatpush2.bf16.msra.mxu0 %v1314
        %1390 = vmatprep.subr.bf16.mxu0 0
        %1391 = vmatpush2.bf16.msra.mxu0 %v1313
        %1392 = vmatprep.subr.bf16.mxu0 0
        %1393 = vmatpush2.bf16.msra.mxu0 %v1312
        %1394 = vmatprep.subr.bf16.mxu0 0
        %1395 = vmatpush2.bf16.msra.mxu0 %v1311
        %1396 = vmatprep.subr.bf16.mxu0 0
        %1397 = vmatpush2.bf16.msra.mxu0 %v1310
        %1398 = vmatprep.mubr.bf16.mxu0 %v1077
        %1399 = vmatmul.mubr.bf16.gmra.mxu0 %v1063
        %v1400 = vpop.f32.mrf.mxu0
        %v1401 = vadd.f32 0.0, %v1400
        %v1402 = vpop.f32.mrf.mxu0
        %v1403 = vpop.f32.mrf.mxu0
        %v1404 = vadd.f32 0.0, %v1403
        %v1405 = vpop.f32.mrf.mxu0
        %1406 = vmatprep.mubr.bf16.mxu0 %v1080
        %1407 = vmatmul.mubr.bf16.gmra.mxu0 %v1066
        %v1408 = vpop.f32.mrf.mxu0
        %v1409 = vadd.f32 0.0, %v1408
        %v1410 = vpop.f32.mrf.mxu0
        %v1411 = vpop.f32.mrf.mxu0
        %v1412 = vadd.f32 0.0, %v1411
        %v1413 = vpop.f32.mrf.mxu0
        %1414 = vdwg.mxu0
        %1415 = vmatprep.subr.bf16.mxu0 0
        %1416 = vmatpush1.bf16.msra.mxu0 %v1325
        %1417 = vmatprep.subr.bf16.mxu0 0
        %1418 = vmatpush1.bf16.msra.mxu0 %v1324
        %1419 = vmatprep.subr.bf16.mxu0 0
        %1420 = vmatpush1.bf16.msra.mxu0 %v1323
        %1421 = vmatprep.subr.bf16.mxu0 0
        %1422 = vmatpush1.bf16.msra.mxu0 %v1322
        %1423 = vmatprep.subr.bf16.mxu0 0
        %1424 = vmatpush1.bf16.msra.mxu0 %v1321
        %1425 = vmatprep.subr.bf16.mxu0 0
        %1426 = vmatpush1.bf16.msra.mxu0 %v1320
        %1427 = vmatprep.subr.bf16.mxu0 0
        %1428 = vmatpush1.bf16.msra.mxu0 %v1319
        %1429 = vmatprep.subr.bf16.mxu0 0
        %1430 = vmatpush1.bf16.msra.mxu0 %v1318
        %1431 = vmatprep.subr.bf16.mxu0 0
        %1432 = vmatpush2.bf16.msra.mxu0 %v1333
        %1433 = vmatprep.subr.bf16.mxu0 0
        %1434 = vmatpush2.bf16.msra.mxu0 %v1332
        %1435 = vmatprep.subr.bf16.mxu0 0
        %1436 = vmatpush2.bf16.msra.mxu0 %v1331
        %1437 = vmatprep.subr.bf16.mxu0 0
        %1438 = vmatpush2.bf16.msra.mxu0 %v1330
        %1439 = vmatprep.subr.bf16.mxu0 0
        %1440 = vmatpush2.bf16.msra.mxu0 %v1329
        %1441 = vmatprep.subr.bf16.mxu0 0
        %1442 = vmatpush2.bf16.msra.mxu0 %v1328
        %1443 = vmatprep.subr.bf16.mxu0 0
        %1444 = vmatpush2.bf16.msra.mxu0 %v1327
        %1445 = vmatprep.subr.bf16.mxu0 0
        %1446 = vmatpush2.bf16.msra.mxu0 %v1326
        %1447 = vmatprep.mubr.bf16.mxu0 %v1105
        %1448 = vmatmul.mubr.bf16.gmra.mxu0 %v1091
        %v1449 = vpop.f32.mrf.mxu0
        %v1450 = vadd.f32 %v1401, %v1449
        %v1451 = vpop.f32.mrf.mxu0
        %v1452 = vpop.f32.mrf.mxu0
        %v1453 = vadd.f32 %v1404, %v1452
        %v1454 = vpop.f32.mrf.mxu0
        %1455 = vmatprep.mubr.bf16.mxu0 %v1108
        %1456 = vmatmul.mubr.bf16.gmra.mxu0 %v1094
        %v1457 = vpop.f32.mrf.mxu0
        %v1458 = vadd.f32 %v1409, %v1457
        %v1459 = vpop.f32.mrf.mxu0
        %v1460 = vpop.f32.mrf.mxu0
        %v1461 = vadd.f32 %v1412, %v1460
        %v1462 = vpop.f32.mrf.mxu0
        %1463 = vdwg.mxu0
        %v1464 = vld [vmem:[%s9] sm:$0xff]
        %v1465 = vld [vmem:[%s9 + $0x8] sm:$0x3f]
        %v1466 = vld [vmem:[%s4] sm:$0x1]
        %v1468 = vlaneseq
        %v1469 = vshrl.u32 %v1468, 7
        %v1470 = vsub.s32 0, %v1469
        %v1471 = vrot.slane %v1466, %v1470
        %vm1473 = vcmask 220160
        %v1475 = vsel %vm1473, %v1464, 0
        %v1478 = vsel %vm1473, %v1465, 0
        %vm1480 = vcmask 1042432
        %v1482 = vsel %vm1480, %v1461, 0
        %1484 = vmatprep.subr.mxu0 0.0
        %1485 = vmatpush1.msra.mxu0 0.0
        %1486 = vmatprep.subr.mxu0 0.0
        %1487 = vmatpush1.msra.mxu0 0.0
        %1488 = vmatprep.subr.mxu0 0.0
        %1489 = vmatpush1.msra.mxu0 0.0
        %1490 = vmatprep.subr.mxu0 0.0
        %1491 = vmatpush1.msra.mxu0 0.0
        %1492 = vmatprep.subr.mxu0 0.0
        %1493 = vmatpush1.msra.mxu0 0.0
        %1494 = vmatprep.subr.mxu0 0.0
        %1495 = vmatpush1.msra.mxu0 0.0
        %1496 = vmatprep.subr.mxu0 0.0
        %1497 = vmatpush1.msra.mxu0 0.0
        %1498 = vmatprep.subr.mxu0 0.0
        %1499 = vmatpush1.msra.mxu0 0.0
        %1500 = vmatprep.subr.mxu0 0.0
        %1501 = vmatpush1.msra.mxu0 0.0
        %1502 = vmatprep.subr.mxu0 0.0
        %1503 = vmatpush1.msra.mxu0 0.0
        %1504 = vmatprep.subr.mxu0 0.0
        %1505 = vmatpush1.msra.mxu0 0.0
        %1506 = vmatprep.subr.mxu0 0.0
        %1507 = vmatpush1.msra.mxu0 0.0
        %1508 = vmatprep.subr.mxu0 0.0
        %1509 = vmatpush1.msra.mxu0 %v1482
        %1510 = vmatprep.subr.mxu0 0.0
        %1511 = vmatpush1.msra.mxu0 %v1458
        %1512 = vmatprep.subr.mxu0 0.0
        %1513 = vmatpush1.msra.mxu0 %v1453
        %1514 = vmatprep.subr.mxu0 0.0
        %1515 = vmatpush1.msra.mxu0 %v1450
        %1516 = vmatprep.subr.mxu0 0.0
        %1517 = vmatpush2.msra.mxu0 0.0
        %1518 = vmatprep.subr.mxu0 0.0
        %1519 = vmatpush2.msra.mxu0 0.0
        %1520 = vmatprep.subr.mxu0 0.0
        %1521 = vmatpush2.msra.mxu0 0.0
        %1522 = vmatprep.subr.mxu0 0.0
        %1523 = vmatpush2.msra.mxu0 0.0
        %1524 = vmatprep.subr.mxu0 0.0
        %1525 = vmatpush2.msra.mxu0 0.0
        %1526 = vmatprep.subr.mxu0 0.0
        %1527 = vmatpush2.msra.mxu0 0.0
        %1528 = vmatprep.subr.mxu0 0.0
        %1529 = vmatpush2.msra.mxu0 0.0
        %1530 = vmatprep.subr.mxu0 0.0
        %1531 = vmatpush2.msra.mxu0 0.0
        %1532 = vmatprep.subr.mxu0 0.0
        %1533 = vmatpush2.msra.mxu0 0.0
        %1534 = vmatprep.subr.mxu0 0.0
        %1535 = vmatpush2.msra.mxu0 0.0
        %1536 = vmatprep.subr.mxu0 0.0
        %1537 = vmatpush2.msra.mxu0 0.0
        %1538 = vmatprep.subr.mxu0 0.0
        %1539 = vmatpush2.msra.mxu0 0.0
        %1540 = vmatprep.subr.mxu0 0.0
        %1541 = vmatpush2.msra.mxu0 0.0
        %1542 = vmatprep.subr.mxu0 0.0
        %1543 = vmatpush2.msra.mxu0 0.0
        %1544 = vmatprep.subr.mxu0 0.0
        %1545 = vmatpush2.msra.mxu0 0.0
        %1546 = vmatprep.subr.mxu0 0.0
        %1547 = vmatpush2.msra.mxu0 0.0
        %1548 = vmatprep.mubr.f32.mxu0 0.0
        %1549 = vmatmul.mubr.f32.gmra.mxu0 %v1475
        %v1550 = vpop.f32.mrf.mxu0
        %v1551 = vadd.f32 %v1471, %v1550
        %v1552 = vpop.f32.mrf.mxu0
        %1553 = vmatprep.mubr.f32.mxu0 0.0
        %1554 = vmatmul.mubr.f32.gmra.mxu0 %v1478
        %v1555 = vpop.f32.mrf.mxu0
        %v1556 = vadd.f32 %v1471, %v1555
        %v1557 = vpop.f32.mrf.mxu0
        %1558 = vdwg.mxu0
        %v1559 = vmax.f32 %v1551, 0.0
        %v1560 = vmax.f32 %v1556, 0.0
        %v1561 = vpack.c.bf16 %v1560, %v1559
        %s1562 = sadd.s32 %s751, 1
        %v1564 = vunpack.c.l.b16 %v1561
        %v1565 = vunpack.c.h.b16 %v1561
        %v1566 = vpack.c.b16 %v1564, %v1564
        %v1567 = vpack.c.b16 %v1565, %v1565
        %vm1568 = vsmask.f32 256
        %vm1569 = vsmask.f32 4368
        %vm1570 = vmor %vm1568, %vm1569
        %v1572 = vshrl.u32 %v1566, 16
        %v1574 = vrot.slane %v1572, 7
        %v1575 = vshll.u32 %v1566, 16
        %v1577 = vor.u32 %v1574, %v1575
        %v1578 = vrot.slane %v1574, 4
        %v1580 = vshrl.u32 %v1567, 16
        %v1582 = vrot.slane %v1580, 7
        %v1583 = vshll.u32 %v1567, 16
        %v1585 = vor.u32 %v1582, %v1583
        %v1586 = vsel %vm1570, %v1578, %v1585
        %s1589 = smul.u32 %s1562, 2
        %s1590 = smul.addr %s1589, 4
        %s1591 = scalar_lea.vmem [#allocation3], %s1590
        %vm1592 = vcmask 257024
        %vm1593 = vsmask.f32 7938
        %vm1594 = vmand %vm1592, %vm1593
        %v1595 = vld [vmem:[%s1591] sm:$0xf]
        %v1596 = vsel %vm1594, %v1577, %v1595
        %1597 = vst [vmem:[%s1591] sm:$0xf] %v1596
        %vm1598 = vsmask.f32 3328
        %vm1599 = vmand %vm1592, %vm1598
        %v1600 = vld [vmem:[%s1591 + $0x4] sm:$0xf]
        %v1601 = vsel %vm1599, %v1586, %v1600
        %1602 = vst [vmem:[%s1591 + $0x4] sm:$0xf] %v1601
      $region76: #{net_forward.2} parent=63 // loop_footer
        %s755 = sadd.s32 1, %s751
      $region77: #{net_forward.2} parent=63 // loop_footer_branch
        %750 = sbr.rel target = $region73
      $region78: #{net_forward.2} parent=63 // loop_exit
        _
      loop: start=0, step=1, limit=14
      $region79: #{net_forward.2} parent=63 // loop_pre_header
        _
      $region80: #{net_forward.2} parent=63 // loop_header
        %s1604 = sphi 0, %s1608
        %p1605 = scmp.ge.s32.totalorder %s1604, 14
      $region81: #{net_forward.2} parent=63 // loop_header_branch
        %1607 = sbr.rel (%p1605) target = $region85
      $region82: #{net_forward.2} parent=63 // loop_body
        %s1609 = smul.u32 %s1604, 2
        %s1610 = smul.addr %s1609, 4
        %s1611 = scalar_lea.vmem [#allocation3], %s1610
        %v1612 = vld [vmem:[%s1611] sm:$0xf]
        %v1613 = vld [vmem:[%s1611 + $0x4] sm:$0x7]
        %v1614 = vld [vmem:[%s1611 + $0x4] sm:$0xf]
        %v1615 = vld [vmem:[%s1611] sm:$0xe]
        %s1616 = sadd.s32 %s1604, 1
        %s1617 = smul.u32 %s1616, 2
        %s1618 = smul.addr %s1617, 4
        %s1619 = scalar_lea.vmem [#allocation3], %s1618
        %v1620 = vld [vmem:[%s1619] sm:$0xf]
        %v1621 = vld [vmem:[%s1619 + $0x4] sm:$0x7]
        %v1622 = vld [vmem:[%s1619 + $0x4] sm:$0xf]
        %v1623 = vld [vmem:[%s1619] sm:$0xe]
        %s1624 = sadd.s32 %s1604, 2
        %s1625 = smul.u32 %s1624, 2
        %s1626 = smul.addr %s1625, 4
        %s1627 = scalar_lea.vmem [#allocation3], %s1626
        %v1628 = vld [vmem:[%s1627] sm:$0xf]
        %v1629 = vld [vmem:[%s1627 + $0x4] sm:$0x7]
        %v1630 = vld [vmem:[%s1627 + $0x4] sm:$0xf]
        %v1631 = vld [vmem:[%s1627] sm:$0xe]
        %v1634 = vunpack.c.l.b16 %v1612
        %v1635 = vunpack.c.l.b16 %v1613
        %v1636 = vpack.c.b16 %v1635, %v1634
        %v1638 = vunpack.c.l.b16 %v1614
        %v1639 = vpack.c.b16 %v1638, %v1634
        %v1641 = vshrl.u32 %v1639, 16
        %v1643 = vshll.u32 %v1639, 16
        %v1645 = vrot.slane %v1643, 1
        %v1646 = vor.u32 %v1641, %v1645
        %1647 = vrot.lane.b32.xlu0 %v1646, 32
        %v1648 = vpop.permute.xlu0 %1647
        %v1650 = vunpack.c.l.b16 %v1615
        %v1651 = vpack.c.b16 %v1638, %v1650
        %v1652 = vrot.slane %v1651, 1
        %1653 = vrot.lane.b32.xlu0 %v1652, 64
        %v1654 = vpop.permute.xlu0 %1653
        %v1657 = vunpack.c.l.b16 %v1620
        %v1658 = vunpack.c.l.b16 %v1621
        %v1659 = vpack.c.b16 %v1658, %v1657
        %1660 = vrot.lane.b32.xlu0 %v1659, 96
        %v1661 = vpop.permute.xlu0 %1660
        %v1663 = vunpack.c.l.b16 %v1622
        %v1664 = vpack.c.b16 %v1663, %v1657
        %v1666 = vshrl.u32 %v1664, 16
        %v1668 = vshll.u32 %v1664, 16
        %v1670 = vrot.slane %v1668, 1
        %v1671 = vor.u32 %v1666, %v1670
        %v1673 = vunpack.c.l.b16 %v1623
        %v1674 = vpack.c.b16 %v1663, %v1673
        %v1675 = vrot.slane %v1674, 1
        %1676 = vrot.lane.b32.xlu0 %v1675, 32
        %v1677 = vpop.permute.xlu0 %1676
        %v1680 = vunpack.c.l.b16 %v1628
        %v1681 = vunpack.c.l.b16 %v1629
        %v1682 = vpack.c.b16 %v1681, %v1680
        %1683 = vrot.lane.b32.xlu0 %v1682, 64
        %v1684 = vpop.permute.xlu0 %1683
        %v1686 = vunpack.c.l.b16 %v1630
        %v1687 = vpack.c.b16 %v1686, %v1680
        %v1689 = vshrl.u32 %v1687, 16
        %v1691 = vshll.u32 %v1687, 16
        %v1693 = vrot.slane %v1691, 1
        %v1694 = vor.u32 %v1689, %v1693
        %1695 = vrot.lane.b32.xlu0 %v1694, 96
        %v1696 = vpop.permute.xlu0 %1695
        %v1698 = vunpack.c.l.b16 %v1631
        %v1699 = vpack.c.b16 %v1686, %v1698
        %v1700 = vrot.slane %v1699, 1
        %vm1701 = vcmask 261120
        %v1704 = vsel %vm1701, %v1636, %v1648
        %vm1705 = vcmask 523264
        %v1707 = vsel %vm1705, %v1704, %v1654
        %vm1708 = vcmask 785408
        %v1710 = vsel %vm1708, %v1707, %v1661
        %v1714 = vsel %vm1701, %v1671, %v1677
        %v1716 = vsel %vm1705, %v1714, %v1684
        %v1718 = vsel %vm1708, %v1716, %v1696
        %v1720 = vld [vmem:[%s5] sm:$0xf]
        %v1721 = vld [vmem:[%s5 + $0x4] sm:$0xf]
        %v1722 = vld [vmem:[%s5 + $0x8] sm:$0xf]
        %v1723 = vld [vmem:[%s5 + $0xc] sm:$0xf]
        %v1724 = vld [vmem:[%s5 + $0x10] sm:$0xf]
        %v1725 = vld [vmem:[%s5 + $0x14] sm:$0xf]
        %v1726 = vld [vmem:[%s5 + $0x18] sm:$0xf]
        %v1727 = vld [vmem:[%s5 + $0x1c] sm:$0xf]
        %v1728 = vld [vmem:[%s5 + $0x20] sm:$0xf]
        %v1729 = vld [vmem:[%s5 + $0x24] sm:$0xf]
        %v1730 = vld [vmem:[%s5 + $0x28] sm:$0xf]
        %v1731 = vld [vmem:[%s5 + $0x2c] sm:$0xf]
        %v1732 = vld [vmem:[%s5 + $0x30] sm:$0xf]
        %v1733 = vld [vmem:[%s5 + $0x34] sm:$0xf]
        %v1734 = vld [vmem:[%s5 + $0x38] sm:$0xf]
        %v1735 = vld [vmem:[%s5 + $0x3c] sm:$0xf]
        %v1736 = vld [vmem:[%s5 + $0x40] sm:$0xf]
        %v1737 = vld [vmem:[%s5 + $0x44] sm:$0xf]
        %v1738 = vld [vmem:[%s5 + $0x48] sm:$0xf]
        %v1739 = vld [vmem:[%s5 + $0x4c] sm:$0xf]
        %v1740 = vld [vmem:[%s5 + $0x50] sm:$0xf]
        %v1741 = vld [vmem:[%s5 + $0x54] sm:$0xf]
        %v1742 = vld [vmem:[%s5 + $0x58] sm:$0xf]
        %v1743 = vld [vmem:[%s5 + $0x5c] sm:$0xf]
        %v1744 = vld [vmem:[%s5 + $0x60] sm:$0xf]
        %v1745 = vld [vmem:[%s5 + $0x64] sm:$0xf]
        %v1746 = vld [vmem:[%s5 + $0x68] sm:$0xf]
        %v1747 = vld [vmem:[%s5 + $0x6c] sm:$0xf]
        %v1748 = vld [vmem:[%s5 + $0x70] sm:$0xf]
        %v1749 = vld [vmem:[%s5 + $0x74] sm:$0xf]
        %v1750 = vld [vmem:[%s5 + $0x78] sm:$0xf]
        %v1751 = vld [vmem:[%s5 + $0x7c] sm:$0xf]
        %v1752 = vld [vmem:[%s5 + $0x80] sm:$0xf]
        %v1753 = vld [vmem:[%s5 + $0x84] sm:$0xf]
        %v1754 = vld [vmem:[%s5 + $0x88] sm:$0xf]
        %v1755 = vld [vmem:[%s5 + $0x8c] sm:$0xf]
        %v1756 = vld [vmem:[%s6] sm:$0x1]
        %v1758 = vlaneseq
        %v1759 = vshrl.u32 %v1758, 7
        %v1760 = vsub.s32 0, %v1759
        %v1761 = vrot.slane %v1756, %v1760
        %v1799 = vunpack.c.l.b16 %v1720
        %v1800 = vunpack.c.l.b16 %v1721
        %v1801 = vunpack.c.l.b16 %v1722
        %v1802 = vunpack.c.l.b16 %v1723
        %v1803 = vunpack.c.l.b16 %v1724
        %v1804 = vunpack.c.l.b16 %v1725
        %v1805 = vunpack.c.l.b16 %v1726
        %v1806 = vunpack.c.l.b16 %v1727
        %v1807 = vunpack.c.l.b16 %v1728
        %v1808 = vunpack.c.l.b16 %v1729
        %v1809 = vunpack.c.l.b16 %v1730
        %v1810 = vunpack.c.l.b16 %v1731
        %v1811 = vunpack.c.l.b16 %v1732
        %v1812 = vunpack.c.l.b16 %v1733
        %v1813 = vunpack.c.l.b16 %v1734
        %v1814 = vunpack.c.l.b16 %v1735
        %v1815 = vunpack.c.l.b16 %v1736
        %v1816 = vunpack.c.l.b16 %v1737
        %v1817 = vunpack.c.l.b16 %v1738
        %v1818 = vunpack.c.l.b16 %v1739
        %v1819 = vunpack.c.l.b16 %v1740
        %v1820 = vunpack.c.l.b16 %v1741
        %v1821 = vunpack.c.l.b16 %v1742
        %v1822 = vunpack.c.l.b16 %v1743
        %v1823 = vunpack.c.l.b16 %v1744
        %v1824 = vunpack.c.l.b16 %v1745
        %v1825 = vunpack.c.l.b16 %v1746
        %v1826 = vunpack.c.l.b16 %v1747
        %v1827 = vunpack.c.l.b16 %v1748
        %v1828 = vunpack.c.l.b16 %v1749
        %v1829 = vunpack.c.l.b16 %v1750
        %v1830 = vunpack.c.l.b16 %v1751
        %v1831 = vunpack.c.l.b16 %v1752
        %v1832 = vunpack.c.l.b16 %v1753
        %v1833 = vunpack.c.l.b16 %v1754
        %v1834 = vunpack.c.l.b16 %v1755
        %v1835 = vpack.c.b16 %v1800, %v1799
        %v1836 = vpack.c.b16 %v1802, %v1801
        %v1837 = vpack.c.b16 %v1804, %v1803
        %v1838 = vpack.c.b16 %v1806, %v1805
        %v1839 = vpack.c.b16 %v1808, %v1807
        %v1840 = vpack.c.b16 %v1810, %v1809
        %v1841 = vpack.c.b16 %v1812, %v1811
        %v1842 = vpack.c.b16 %v1814, %v1813
        %v1843 = vpack.c.b16 %v1816, %v1815
        %v1844 = vpack.c.b16 %v1818, %v1817
        %v1845 = vpack.c.b16 %v1820, %v1819
        %v1846 = vpack.c.b16 %v1822, %v1821
        %v1847 = vpack.c.b16 %v1824, %v1823
        %v1848 = vpack.c.b16 %v1826, %v1825
        %v1849 = vpack.c.b16 %v1828, %v1827
        %v1850 = vpack.c.b16 %v1830, %v1829
        %v1851 = vpack.c.b16 %v1832, %v1831
        %v1852 = vpack.c.b16 %v1834, %v1833
        %v1872 = vsel %vm1701, %v1700, 0
        %1874 = vmatprep.subr.bf16.mxu0 0
        %1875 = vmatpush1.bf16.msra.mxu0 %v1842
        %1876 = vmatprep.subr.bf16.mxu0 0
        %1877 = vmatpush1.bf16.msra.mxu0 %v1841
        %1878 = vmatprep.subr.bf16.mxu0 0
        %1879 = vmatpush1.bf16.msra.mxu0 %v1840
        %1880 = vmatprep.subr.bf16.mxu0 0
        %1881 = vmatpush1.bf16.msra.mxu0 %v1839
        %1882 = vmatprep.subr.bf16.mxu0 0
        %1883 = vmatpush1.bf16.msra.mxu0 %v1838
        %1884 = vmatprep.subr.bf16.mxu0 0
        %1885 = vmatpush1.bf16.msra.mxu0 %v1837
        %1886 = vmatprep.subr.bf16.mxu0 0
        %1887 = vmatpush1.bf16.msra.mxu0 %v1836
        %1888 = vmatprep.subr.bf16.mxu0 0
        %1889 = vmatpush1.bf16.msra.mxu0 %v1835
        %1890 = vmatprep.subr.bf16.mxu0 0
        %1891 = vmatpush2.bf16.msra.mxu0 %v1850
        %1892 = vmatprep.subr.bf16.mxu0 0
        %1893 = vmatpush2.bf16.msra.mxu0 %v1849
        %1894 = vmatprep.subr.bf16.mxu0 0
        %1895 = vmatpush2.bf16.msra.mxu0 %v1848
        %1896 = vmatprep.subr.bf16.mxu0 0
        %1897 = vmatpush2.bf16.msra.mxu0 %v1847
        %1898 = vmatprep.subr.bf16.mxu0 0
        %1899 = vmatpush2.bf16.msra.mxu0 %v1846
        %1900 = vmatprep.subr.bf16.mxu0 0
        %1901 = vmatpush2.bf16.msra.mxu0 %v1845
        %1902 = vmatprep.subr.bf16.mxu0 0
        %1903 = vmatpush2.bf16.msra.mxu0 %v1844
        %1904 = vmatprep.subr.bf16.mxu0 0
        %1905 = vmatpush2.bf16.msra.mxu0 %v1843
        %1906 = vmatprep.mubr.bf16.mxu0 %v1718
        %1907 = vmatmul.mubr.bf16.gmra.mxu0 %v1710
        %v1908 = vpop.f32.mrf.mxu0
        %v1909 = vadd.f32 %v1761, %v1908
        %v1910 = vpop.f32.mrf.mxu0
        %v1911 = vpop.f32.mrf.mxu0
        %v1912 = vadd.f32 %v1761, %v1911
        %v1913 = vpop.f32.mrf.mxu0
        %1914 = vdwg.mxu0
        %1915 = vmatprep.subr.bf16.mxu0 0
        %1916 = vmatpush1.bf16.msra.mxu0 0
        %1917 = vmatprep.subr.bf16.mxu0 0
        %1918 = vmatpush1.bf16.msra.mxu0 0
        %1919 = vmatprep.subr.bf16.mxu0 0
        %1920 = vmatpush1.bf16.msra.mxu0 0
        %1921 = vmatprep.subr.bf16.mxu0 0
        %1922 = vmatpush1.bf16.msra.mxu0 0
        %1923 = vmatprep.subr.bf16.mxu0 0
        %1924 = vmatpush1.bf16.msra.mxu0 0
        %1925 = vmatprep.subr.bf16.mxu0 0
        %1926 = vmatpush1.bf16.msra.mxu0 0
        %1927 = vmatprep.subr.bf16.mxu0 0
        %1928 = vmatpush1.bf16.msra.mxu0 %v1852
        %1929 = vmatprep.subr.bf16.mxu0 0
        %1930 = vmatpush1.bf16.msra.mxu0 %v1851
        %1931 = vmatprep.subr.bf16.mxu0 0
        %1932 = vmatpush2.bf16.msra.mxu0 0
        %1933 = vmatprep.subr.bf16.mxu0 0
        %1934 = vmatpush2.bf16.msra.mxu0 0
        %1935 = vmatprep.subr.bf16.mxu0 0
        %1936 = vmatpush2.bf16.msra.mxu0 0
        %1937 = vmatprep.subr.bf16.mxu0 0
        %1938 = vmatpush2.bf16.msra.mxu0 0
        %1939 = vmatprep.subr.bf16.mxu0 0
        %1940 = vmatpush2.bf16.msra.mxu0 0
        %1941 = vmatprep.subr.bf16.mxu0 0
        %1942 = vmatpush2.bf16.msra.mxu0 0
        %1943 = vmatprep.subr.bf16.mxu0 0
        %1944 = vmatpush2.bf16.msra.mxu0 0
        %1945 = vmatprep.subr.bf16.mxu0 0
        %1946 = vmatpush2.bf16.msra.mxu0 0
        %1947 = vmatprep.mubr.bf16.mxu0 0
        %1948 = vmatmul.mubr.bf16.gmra.mxu0 %v1872
        %v1949 = vpop.f32.mrf.mxu0
        %v1950 = vadd.f32 %v1909, %v1949
        %v1951 = vpop.f32.mrf.mxu0
        %v1952 = vpop.f32.mrf.mxu0
        %v1953 = vadd.f32 %v1912, %v1952
        %v1954 = vpop.f32.mrf.mxu0
        %1955 = vdwg.mxu0
        %v1956 = vmax.f32 %v1950, 0.0
        %v1957 = vmax.f32 %v1953, 0.0
        %v1958 = vpack.c.bf16 %v1957, %v1956
        %v1960 = vunpack.c.l.b16 %v1958
        %v1961 = vunpack.c.h.b16 %v1958
        %v1962 = vpack.c.b16 %v1960, %v1960
        %v1963 = vpack.c.b16 %v1961, %v1961
        %vm1964 = vsmask.f32 256
        %vm1965 = vsmask.f32 4368
        %vm1966 = vmor %vm1964, %vm1965
        %v1968 = vshrl.u32 %v1962, 16
        %v1970 = vrot.slane %v1968, 7
        %v1971 = vshll.u32 %v1962, 16
        %v1973 = vor.u32 %v1970, %v1971
        %v1974 = vrot.slane %v1970, 4
        %v1976 = vshrl.u32 %v1963, 16
        %v1978 = vrot.slane %v1976, 7
        %v1979 = vshll.u32 %v1963, 16
        %v1981 = vor.u32 %v1978, %v1979
        %v1982 = vsel %vm1966, %v1974, %v1981
        %s1985 = smul.addr %s1617, 4
        %s1986 = scalar_lea.vmem [#allocation4], %s1985
        %vm1987 = vcmask 519168
        %vm1988 = vsmask.f32 7938
        %vm1989 = vmand %vm1987, %vm1988
        %v1990 = vld [vmem:[%s1986] sm:$0xf]
        %v1991 = vsel %vm1989, %v1973, %v1990
        %1992 = vst [vmem:[%s1986] sm:$0xf] %v1991
        %vm1993 = vsmask.f32 3328
        %vm1994 = vmand %vm1987, %vm1993
        %v1995 = vld [vmem:[%s1986 + $0x4] sm:$0xf]
        %v1996 = vsel %vm1994, %v1982, %v1995
        %1997 = vst [vmem:[%s1986 + $0x4] sm:$0xf] %v1996
      $region83: #{net_forward.2} parent=63 // loop_footer
        %s1608 = sadd.s32 1, %s1604
      $region84: #{net_forward.2} parent=63 // loop_footer_branch
        %1603 = sbr.rel target = $region80
      $region85: #{net_forward.2} parent=63 // loop_exit
        _
      loop: start=0, step=1, limit=7
      $region86: #{net_forward.2} parent=63 // loop_pre_header
        _
      $region87: #{net_forward.2} parent=63 // loop_header
        %s1999 = sphi 0, %s2003
        %p2000 = scmp.ge.s32.totalorder %s1999, 7
      $region88: #{net_forward.2} parent=63 // loop_header_branch
        %2002 = sbr.rel (%p2000) target = $region92
      $region89: #{net_forward.2} parent=63 // loop_body
        %s2004 = smul.u32 %s1999, 2
        %s2005 = smul.u32 %s2004, 2
        %s2006 = smul.addr %s2005, 4
        %s2007 = scalar_lea.vmem [#allocation4], %s2006
        %v2008 = vld [vmem:[%s2007] sm:$0xf]
        %v2009 = vld [vmem:[%s2007 + $0x4] sm:$0x7]
        %v2010 = vld [vmem:[%s2007] sm:$0xe]
        %v2011 = vld [vmem:[%s2007 + $0x4] sm:$0xf]
        %s2012 = sadd.s32 %s2004, 1
        %s2013 = smul.u32 %s2012, 2
        %s2014 = smul.addr %s2013, 4
        %s2015 = scalar_lea.vmem [#allocation4], %s2014
        %v2016 = vld [vmem:[%s2015] sm:$0xf]
        %v2017 = vld [vmem:[%s2015 + $0x4] sm:$0x7]
        %v2018 = vld [vmem:[%s2015] sm:$0xe]
        %v2019 = vld [vmem:[%s2015 + $0x4] sm:$0xf]
        %s2020 = sadd.s32 %s2004, 2
        %s2021 = smul.u32 %s2020, 2
        %s2022 = smul.addr %s2021, 4
        %s2023 = scalar_lea.vmem [#allocation4], %s2022
        %v2024 = vld [vmem:[%s2023] sm:$0xf]
        %v2025 = vld [vmem:[%s2023 + $0x4] sm:$0x7]
        %v2026 = vld [vmem:[%s2023] sm:$0xe]
        %v2027 = vld [vmem:[%s2023 + $0x4] sm:$0xf]
        %s2028 = sadd.s32 %s2004, 3
        %s2029 = smul.u32 %s2028, 2
        %s2030 = smul.addr %s2029, 4
        %s2031 = scalar_lea.vmem [#allocation4], %s2030
        %v2032 = vld [vmem:[%s2031] sm:$0xf]
        %v2033 = vld [vmem:[%s2031 + $0x4] sm:$0x7]
        %v2034 = vld [vmem:[%s2031] sm:$0xe]
        %v2035 = vld [vmem:[%s2031 + $0x4] sm:$0xf]
        %v2038 = vunpack.c.l.b16 %v2008
        %v2039 = vunpack.c.l.b16 %v2009
        %v2040 = vpack.c.b16 %v2039, %v2038
        %v2042 = vshrl.u32 %v2040, 16
        %v2044 = vshll.u32 %v2040, 16
        %v2046 = vrot.slane %v2044, 1
        %v2047 = vor.u32 %v2042, %v2046
        %2048 = vrot.lane.b32.xlu0 %v2047, 64
        %v2049 = vpop.permute.xlu0 %2048
        %v2052 = vunpack.c.l.b16 %v2010
        %v2053 = vunpack.c.l.b16 %v2011
        %v2054 = vpack.c.b16 %v2053, %v2052
        %v2055 = vrot.slane %v2054, 1
        %v2057 = vshrl.u32 %v2054, 16
        %v2059 = vrot.slane %v2057, 1
        %v2060 = vshll.u32 %v2054, 16
        %v2062 = vrot.slane %v2060, 2
        %v2063 = vor.u32 %v2059, %v2062
        %2064 = vrot.lane.b32.xlu0 %v2063, 64
        %v2065 = vpop.permute.xlu0 %2064
        %v2068 = vunpack.c.l.b16 %v2016
        %v2069 = vunpack.c.l.b16 %v2017
        %v2070 = vpack.c.b16 %v2069, %v2068
        %v2072 = vshrl.u32 %v2070, 16
        %v2074 = vshll.u32 %v2070, 16
        %v2076 = vrot.slane %v2074, 1
        %v2077 = vor.u32 %v2072, %v2076
        %2078 = vrot.lane.b32.xlu0 %v2077, 64
        %v2079 = vpop.permute.xlu0 %2078
        %v2082 = vunpack.c.l.b16 %v2018
        %v2083 = vunpack.c.l.b16 %v2019
        %v2084 = vpack.c.b16 %v2083, %v2082
        %v2085 = vrot.slane %v2084, 1
        %v2087 = vshrl.u32 %v2084, 16
        %v2089 = vrot.slane %v2087, 1
        %v2090 = vshll.u32 %v2084, 16
        %v2092 = vrot.slane %v2090, 2
        %v2093 = vor.u32 %v2089, %v2092
        %2094 = vrot.lane.b32.xlu0 %v2093, 64
        %v2095 = vpop.permute.xlu0 %2094
        %v2098 = vunpack.c.l.b16 %v2024
        %v2099 = vunpack.c.l.b16 %v2025
        %v2100 = vpack.c.b16 %v2099, %v2098
        %v2102 = vshrl.u32 %v2100, 16
        %v2104 = vshll.u32 %v2100, 16
        %v2106 = vrot.slane %v2104, 1
        %v2107 = vor.u32 %v2102, %v2106
        %2108 = vrot.lane.b32.xlu0 %v2107, 64
        %v2109 = vpop.permute.xlu0 %2108
        %v2112 = vunpack.c.l.b16 %v2026
        %v2113 = vunpack.c.l.b16 %v2027
        %v2114 = vpack.c.b16 %v2113, %v2112
        %v2115 = vrot.slane %v2114, 1
        %v2117 = vshrl.u32 %v2114, 16
        %v2119 = vrot.slane %v2117, 1
        %v2120 = vshll.u32 %v2114, 16
        %v2122 = vrot.slane %v2120, 2
        %v2123 = vor.u32 %v2119, %v2122
        %2124 = vrot.lane.b32.xlu0 %v2123, 64
        %v2125 = vpop.permute.xlu0 %2124
        %v2128 = vunpack.c.l.b16 %v2032
        %v2129 = vunpack.c.l.b16 %v2033
        %v2130 = vpack.c.b16 %v2129, %v2128
        %v2132 = vshrl.u32 %v2130, 16
        %v2134 = vshll.u32 %v2130, 16
        %v2136 = vrot.slane %v2134, 1
        %v2137 = vor.u32 %v2132, %v2136
        %2138 = vrot.lane.b32.xlu0 %v2137, 64
        %v2139 = vpop.permute.xlu0 %2138
        %v2142 = vunpack.c.l.b16 %v2034
        %v2143 = vunpack.c.l.b16 %v2035
        %v2144 = vpack.c.b16 %v2143, %v2142
        %v2145 = vrot.slane %v2144, 1
        %v2147 = vshrl.u32 %v2144, 16
        %v2149 = vrot.slane %v2147, 1
        %v2150 = vshll.u32 %v2144, 16
        %v2152 = vrot.slane %v2150, 2
        %v2153 = vor.u32 %v2149, %v2152
        %2154 = vrot.lane.b32.xlu0 %v2153, 64
        %v2155 = vpop.permute.xlu0 %2154
        %vm2156 = vcmask 523264
        %v2158 = vsel %vm2156, %v2040, %v2049
        %v2162 = vsel %vm2156, %v2055, %v2065
        %v2165 = vsel %vm2156, %v2070, %v2079
        %v2169 = vsel %vm2156, %v2085, %v2095
        %v2172 = vsel %vm2156, %v2100, %v2109
        %v2176 = vsel %vm2156, %v2115, %v2125
        %v2179 = vsel %vm2156, %v2130, %v2139
        %v2183 = vsel %vm2156, %v2145, %v2155
        %v2185 = vld [vmem:[%s7] sm:$0xf]
        %v2186 = vld [vmem:[%s7 + $0x4] sm:$0xf]
        %v2187 = vld [vmem:[%s7 + $0x8] sm:$0xf]
        %v2188 = vld [vmem:[%s7 + $0xc] sm:$0xf]
        %v2189 = vld [vmem:[%s7 + $0x10] sm:$0xf]
        %v2190 = vld [vmem:[%s7 + $0x14] sm:$0xf]
        %v2191 = vld [vmem:[%s7 + $0x18] sm:$0xf]
        %v2192 = vld [vmem:[%s7 + $0x1c] sm:$0xf]
        %v2193 = vld [vmem:[%s7 + $0x20] sm:$0xf]
        %v2194 = vld [vmem:[%s7 + $0x24] sm:$0xf]
        %v2195 = vld [vmem:[%s7 + $0x28] sm:$0xf]
        %v2196 = vld [vmem:[%s7 + $0x2c] sm:$0xf]
        %v2197 = vld [vmem:[%s7 + $0x30] sm:$0xf]
        %v2198 = vld [vmem:[%s7 + $0x34] sm:$0xf]
        %v2199 = vld [vmem:[%s7 + $0x38] sm:$0xf]
        %v2200 = vld [vmem:[%s7 + $0x3c] sm:$0xf]
        %v2201 = vld [vmem:[%s7 + $0x40] sm:$0xf]
        %v2202 = vld [vmem:[%s7 + $0x44] sm:$0xf]
        %v2203 = vld [vmem:[%s7 + $0x48] sm:$0xf]
        %v2204 = vld [vmem:[%s7 + $0x4c] sm:$0xf]
        %v2205 = vld [vmem:[%s7 + $0x50] sm:$0xf]
        %v2206 = vld [vmem:[%s7 + $0x54] sm:$0xf]
        %v2207 = vld [vmem:[%s7 + $0x58] sm:$0xf]
        %v2208 = vld [vmem:[%s7 + $0x5c] sm:$0xf]
        %v2209 = vld [vmem:[%s7 + $0x60] sm:$0xf]
        %v2210 = vld [vmem:[%s7 + $0x64] sm:$0xf]
        %v2211 = vld [vmem:[%s7 + $0x68] sm:$0xf]
        %v2212 = vld [vmem:[%s7 + $0x6c] sm:$0xf]
        %v2213 = vld [vmem:[%s7 + $0x70] sm:$0xf]
        %v2214 = vld [vmem:[%s7 + $0x74] sm:$0xf]
        %v2215 = vld [vmem:[%s7 + $0x78] sm:$0xf]
        %v2216 = vld [vmem:[%s7 + $0x7c] sm:$0xf]
        %v2217 = vld [vmem:[%s7 + $0x80] sm:$0xf]
        %v2218 = vld [vmem:[%s7 + $0x84] sm:$0xf]
        %v2219 = vld [vmem:[%s7 + $0x88] sm:$0xf]
        %v2220 = vld [vmem:[%s7 + $0x8c] sm:$0xf]
        %v2221 = vld [vmem:[%s7 + $0x90] sm:$0xf]
        %v2222 = vld [vmem:[%s7 + $0x94] sm:$0xf]
        %v2223 = vld [vmem:[%s7 + $0x98] sm:$0xf]
        %v2224 = vld [vmem:[%s7 + $0x9c] sm:$0xf]
        %v2225 = vld [vmem:[%s7 + $0xa0] sm:$0xf]
        %v2226 = vld [vmem:[%s7 + $0xa4] sm:$0xf]
        %v2227 = vld [vmem:[%s7 + $0xa8] sm:$0xf]
        %v2228 = vld [vmem:[%s7 + $0xac] sm:$0xf]
        %v2229 = vld [vmem:[%s7 + $0xb0] sm:$0xf]
        %v2230 = vld [vmem:[%s7 + $0xb4] sm:$0xf]
        %v2231 = vld [vmem:[%s7 + $0xb8] sm:$0xf]
        %v2232 = vld [vmem:[%s7 + $0xbc] sm:$0xf]
        %v2233 = vld [vmem:[%s7 + $0xc0] sm:$0xf]
        %v2234 = vld [vmem:[%s7 + $0xc4] sm:$0xf]
        %v2235 = vld [vmem:[%s7 + $0xc8] sm:$0xf]
        %v2236 = vld [vmem:[%s7 + $0xcc] sm:$0xf]
        %v2237 = vld [vmem:[%s7 + $0xd0] sm:$0xf]
        %v2238 = vld [vmem:[%s7 + $0xd4] sm:$0xf]
        %v2239 = vld [vmem:[%s7 + $0xd8] sm:$0xf]
        %v2240 = vld [vmem:[%s7 + $0xdc] sm:$0xf]
        %v2241 = vld [vmem:[%s7 + $0xe0] sm:$0xf]
        %v2242 = vld [vmem:[%s7 + $0xe4] sm:$0xf]
        %v2243 = vld [vmem:[%s7 + $0xe8] sm:$0xf]
        %v2244 = vld [vmem:[%s7 + $0xec] sm:$0xf]
        %v2245 = vld [vmem:[%s7 + $0xf0] sm:$0xf]
        %v2246 = vld [vmem:[%s7 + $0xf4] sm:$0xf]
        %v2247 = vld [vmem:[%s7 + $0xf8] sm:$0xf]
        %v2248 = vld [vmem:[%s7 + $0xfc] sm:$0xf]
        %v2249 = vld [vmem:[%s7 + $0x100] sm:$0xf]
        %v2250 = vld [vmem:[%s7 + $0x104] sm:$0xf]
        %v2251 = vld [vmem:[%s7 + $0x108] sm:$0xf]
        %v2252 = vld [vmem:[%s7 + $0x10c] sm:$0xf]
        %v2253 = vld [vmem:[%s7 + $0x110] sm:$0xf]
        %v2254 = vld [vmem:[%s7 + $0x114] sm:$0xf]
        %v2255 = vld [vmem:[%s7 + $0x118] sm:$0xf]
        %v2256 = vld [vmem:[%s7 + $0x11c] sm:$0xf]
        %v2257 = vld [vmem:[%s7 + $0x120] sm:$0xf]
        %v2258 = vld [vmem:[%s7 + $0x124] sm:$0xf]
        %v2259 = vld [vmem:[%s7 + $0x128] sm:$0xf]
        %v2260 = vld [vmem:[%s7 + $0x12c] sm:$0xf]
        %v2261 = vld [vmem:[%s7 + $0x130] sm:$0xf]
        %v2262 = vld [vmem:[%s7 + $0x134] sm:$0xf]
        %v2263 = vld [vmem:[%s7 + $0x138] sm:$0xf]
        %v2264 = vld [vmem:[%s7 + $0x13c] sm:$0xf]
        %v2265 = vld [vmem:[%s7 + $0x140] sm:$0xf]
        %v2266 = vld [vmem:[%s7 + $0x144] sm:$0xf]
        %v2267 = vld [vmem:[%s7 + $0x148] sm:$0xf]
        %v2268 = vld [vmem:[%s7 + $0x14c] sm:$0xf]
        %v2269 = vld [vmem:[%s7 + $0x150] sm:$0xf]
        %v2270 = vld [vmem:[%s7 + $0x154] sm:$0xf]
        %v2271 = vld [vmem:[%s7 + $0x158] sm:$0xf]
        %v2272 = vld [vmem:[%s7 + $0x15c] sm:$0xf]
        %v2273 = vld [vmem:[%s7 + $0x160] sm:$0xf]
        %v2274 = vld [vmem:[%s7 + $0x164] sm:$0xf]
        %v2275 = vld [vmem:[%s7 + $0x168] sm:$0xf]
        %v2276 = vld [vmem:[%s7 + $0x16c] sm:$0xf]
        %v2277 = vld [vmem:[%s7 + $0x170] sm:$0xf]
        %v2278 = vld [vmem:[%s7 + $0x174] sm:$0xf]
        %v2279 = vld [vmem:[%s7 + $0x178] sm:$0xf]
        %v2280 = vld [vmem:[%s7 + $0x17c] sm:$0xf]
        %v2281 = vld [vmem:[%s7 + $0x180] sm:$0xf]
        %v2282 = vld [vmem:[%s7 + $0x184] sm:$0xf]
        %v2283 = vld [vmem:[%s7 + $0x188] sm:$0xf]
        %v2284 = vld [vmem:[%s7 + $0x18c] sm:$0xf]
        %v2285 = vld [vmem:[%s7 + $0x190] sm:$0xf]
        %v2286 = vld [vmem:[%s7 + $0x194] sm:$0xf]
        %v2287 = vld [vmem:[%s7 + $0x198] sm:$0xf]
        %v2288 = vld [vmem:[%s7 + $0x19c] sm:$0xf]
        %v2289 = vld [vmem:[%s7 + $0x1a0] sm:$0xf]
        %v2290 = vld [vmem:[%s7 + $0x1a4] sm:$0xf]
        %v2291 = vld [vmem:[%s7 + $0x1a8] sm:$0xf]
        %v2292 = vld [vmem:[%s7 + $0x1ac] sm:$0xf]
        %v2293 = vld [vmem:[%s7 + $0x1b0] sm:$0xf]
        %v2294 = vld [vmem:[%s7 + $0x1b4] sm:$0xf]
        %v2295 = vld [vmem:[%s7 + $0x1b8] sm:$0xf]
        %v2296 = vld [vmem:[%s7 + $0x1bc] sm:$0xf]
        %v2297 = vld [vmem:[%s7 + $0x1c0] sm:$0xf]
        %v2298 = vld [vmem:[%s7 + $0x1c4] sm:$0xf]
        %v2299 = vld [vmem:[%s7 + $0x1c8] sm:$0xf]
        %v2300 = vld [vmem:[%s7 + $0x1cc] sm:$0xf]
        %v2301 = vld [vmem:[%s7 + $0x1d0] sm:$0xf]
        %v2302 = vld [vmem:[%s7 + $0x1d4] sm:$0xf]
        %v2303 = vld [vmem:[%s7 + $0x1d8] sm:$0xf]
        %v2304 = vld [vmem:[%s7 + $0x1dc] sm:$0xf]
        %v2305 = vld [vmem:[%s7 + $0x1e0] sm:$0xf]
        %v2306 = vld [vmem:[%s7 + $0x1e4] sm:$0xf]
        %v2307 = vld [vmem:[%s7 + $0x1e8] sm:$0xf]
        %v2308 = vld [vmem:[%s7 + $0x1ec] sm:$0xf]
        %v2309 = vld [vmem:[%s7 + $0x1f0] sm:$0xf]
        %v2310 = vld [vmem:[%s7 + $0x1f4] sm:$0xf]
        %v2311 = vld [vmem:[%s7 + $0x1f8] sm:$0xf]
        %v2312 = vld [vmem:[%s7 + $0x1fc] sm:$0xf]
        %v2441 = vunpack.c.l.b16 %v2185
        %v2442 = vunpack.c.l.b16 %v2186
        %v2443 = vunpack.c.l.b16 %v2187
        %v2444 = vunpack.c.l.b16 %v2188
        %v2445 = vunpack.c.l.b16 %v2189
        %v2446 = vunpack.c.l.b16 %v2190
        %v2447 = vunpack.c.l.b16 %v2191
        %v2448 = vunpack.c.l.b16 %v2192
        %v2449 = vunpack.c.l.b16 %v2193
        %v2450 = vunpack.c.l.b16 %v2194
        %v2451 = vunpack.c.l.b16 %v2195
        %v2452 = vunpack.c.l.b16 %v2196
        %v2453 = vunpack.c.l.b16 %v2197
        %v2454 = vunpack.c.l.b16 %v2198
        %v2455 = vunpack.c.l.b16 %v2199
        %v2456 = vunpack.c.l.b16 %v2200
        %v2457 = vunpack.c.l.b16 %v2201
        %v2458 = vunpack.c.l.b16 %v2202
        %v2459 = vunpack.c.l.b16 %v2203
        %v2460 = vunpack.c.l.b16 %v2204
        %v2461 = vunpack.c.l.b16 %v2205
        %v2462 = vunpack.c.l.b16 %v2206
        %v2463 = vunpack.c.l.b16 %v2207
        %v2464 = vunpack.c.l.b16 %v2208
        %v2465 = vunpack.c.l.b16 %v2209
        %v2466 = vunpack.c.l.b16 %v2210
        %v2467 = vunpack.c.l.b16 %v2211
        %v2468 = vunpack.c.l.b16 %v2212
        %v2469 = vunpack.c.l.b16 %v2213
        %v2470 = vunpack.c.l.b16 %v2214
        %v2471 = vunpack.c.l.b16 %v2215
        %v2472 = vunpack.c.l.b16 %v2216
        %v2473 = vunpack.c.l.b16 %v2217
        %v2474 = vunpack.c.l.b16 %v2218
        %v2475 = vunpack.c.l.b16 %v2219
        %v2476 = vunpack.c.l.b16 %v2220
        %v2477 = vunpack.c.l.b16 %v2221
        %v2478 = vunpack.c.l.b16 %v2222
        %v2479 = vunpack.c.l.b16 %v2223
        %v2480 = vunpack.c.l.b16 %v2224
        %v2481 = vunpack.c.l.b16 %v2225
        %v2482 = vunpack.c.l.b16 %v2226
        %v2483 = vunpack.c.l.b16 %v2227
        %v2484 = vunpack.c.l.b16 %v2228
        %v2485 = vunpack.c.l.b16 %v2229
        %v2486 = vunpack.c.l.b16 %v2230
        %v2487 = vunpack.c.l.b16 %v2231
        %v2488 = vunpack.c.l.b16 %v2232
        %v2489 = vunpack.c.l.b16 %v2233
        %v2490 = vunpack.c.l.b16 %v2234
        %v2491 = vunpack.c.l.b16 %v2235
        %v2492 = vunpack.c.l.b16 %v2236
        %v2493 = vunpack.c.l.b16 %v2237
        %v2494 = vunpack.c.l.b16 %v2238
        %v2495 = vunpack.c.l.b16 %v2239
        %v2496 = vunpack.c.l.b16 %v2240
        %v2497 = vunpack.c.l.b16 %v2241
        %v2498 = vunpack.c.l.b16 %v2242
        %v2499 = vunpack.c.l.b16 %v2243
        %v2500 = vunpack.c.l.b16 %v2244
        %v2501 = vunpack.c.l.b16 %v2245
        %v2502 = vunpack.c.l.b16 %v2246
        %v2503 = vunpack.c.l.b16 %v2247
        %v2504 = vunpack.c.l.b16 %v2248
        %v2505 = vunpack.c.l.b16 %v2249
        %v2506 = vunpack.c.l.b16 %v2250
        %v2507 = vunpack.c.l.b16 %v2251
        %v2508 = vunpack.c.l.b16 %v2252
        %v2509 = vunpack.c.l.b16 %v2253
        %v2510 = vunpack.c.l.b16 %v2254
        %v2511 = vunpack.c.l.b16 %v2255
        %v2512 = vunpack.c.l.b16 %v2256
        %v2513 = vunpack.c.l.b16 %v2257
        %v2514 = vunpack.c.l.b16 %v2258
        %v2515 = vunpack.c.l.b16 %v2259
        %v2516 = vunpack.c.l.b16 %v2260
        %v2517 = vunpack.c.l.b16 %v2261
        %v2518 = vunpack.c.l.b16 %v2262
        %v2519 = vunpack.c.l.b16 %v2263
        %v2520 = vunpack.c.l.b16 %v2264
        %v2521 = vunpack.c.l.b16 %v2265
        %v2522 = vunpack.c.l.b16 %v2266
        %v2523 = vunpack.c.l.b16 %v2267
        %v2524 = vunpack.c.l.b16 %v2268
        %v2525 = vunpack.c.l.b16 %v2269
        %v2526 = vunpack.c.l.b16 %v2270
        %v2527 = vunpack.c.l.b16 %v2271
        %v2528 = vunpack.c.l.b16 %v2272
        %v2529 = vunpack.c.l.b16 %v2273
        %v2530 = vunpack.c.l.b16 %v2274
        %v2531 = vunpack.c.l.b16 %v2275
        %v2532 = vunpack.c.l.b16 %v2276
        %v2533 = vunpack.c.l.b16 %v2277
        %v2534 = vunpack.c.l.b16 %v2278
        %v2535 = vunpack.c.l.b16 %v2279
        %v2536 = vunpack.c.l.b16 %v2280
        %v2537 = vunpack.c.l.b16 %v2281
        %v2538 = vunpack.c.l.b16 %v2282
        %v2539 = vunpack.c.l.b16 %v2283
        %v2540 = vunpack.c.l.b16 %v2284
        %v2541 = vunpack.c.l.b16 %v2285
        %v2542 = vunpack.c.l.b16 %v2286
        %v2543 = vunpack.c.l.b16 %v2287
        %v2544 = vunpack.c.l.b16 %v2288
        %v2545 = vunpack.c.l.b16 %v2289
        %v2546 = vunpack.c.l.b16 %v2290
        %v2547 = vunpack.c.l.b16 %v2291
        %v2548 = vunpack.c.l.b16 %v2292
        %v2549 = vunpack.c.l.b16 %v2293
        %v2550 = vunpack.c.l.b16 %v2294
        %v2551 = vunpack.c.l.b16 %v2295
        %v2552 = vunpack.c.l.b16 %v2296
        %v2553 = vunpack.c.l.b16 %v2297
        %v2554 = vunpack.c.l.b16 %v2298
        %v2555 = vunpack.c.l.b16 %v2299
        %v2556 = vunpack.c.l.b16 %v2300
        %v2557 = vunpack.c.l.b16 %v2301
        %v2558 = vunpack.c.l.b16 %v2302
        %v2559 = vunpack.c.l.b16 %v2303
        %v2560 = vunpack.c.l.b16 %v2304
        %v2561 = vunpack.c.l.b16 %v2305
        %v2562 = vunpack.c.l.b16 %v2306
        %v2563 = vunpack.c.l.b16 %v2307
        %v2564 = vunpack.c.l.b16 %v2308
        %v2565 = vunpack.c.l.b16 %v2309
        %v2566 = vunpack.c.l.b16 %v2310
        %v2567 = vunpack.c.l.b16 %v2311
        %v2568 = vunpack.c.l.b16 %v2312
        %v2569 = vpack.c.b16 %v2442, %v2441
        %v2570 = vpack.c.b16 %v2444, %v2443
        %v2571 = vpack.c.b16 %v2446, %v2445
        %v2572 = vpack.c.b16 %v2448, %v2447
        %v2573 = vpack.c.b16 %v2450, %v2449
        %v2574 = vpack.c.b16 %v2452, %v2451
        %v2575 = vpack.c.b16 %v2454, %v2453
        %v2576 = vpack.c.b16 %v2456, %v2455
        %v2577 = vpack.c.b16 %v2458, %v2457
        %v2578 = vpack.c.b16 %v2460, %v2459
        %v2579 = vpack.c.b16 %v2462, %v2461
        %v2580 = vpack.c.b16 %v2464, %v2463
        %v2581 = vpack.c.b16 %v2466, %v2465
        %v2582 = vpack.c.b16 %v2468, %v2467
        %v2583 = vpack.c.b16 %v2470, %v2469
        %v2584 = vpack.c.b16 %v2472, %v2471
        %v2585 = vpack.c.b16 %v2474, %v2473
        %v2586 = vpack.c.b16 %v2476, %v2475
        %v2587 = vpack.c.b16 %v2478, %v2477
        %v2588 = vpack.c.b16 %v2480, %v2479
        %v2589 = vpack.c.b16 %v2482, %v2481
        %v2590 = vpack.c.b16 %v2484, %v2483
        %v2591 = vpack.c.b16 %v2486, %v2485
        %v2592 = vpack.c.b16 %v2488, %v2487
        %v2593 = vpack.c.b16 %v2490, %v2489
        %v2594 = vpack.c.b16 %v2492, %v2491
        %v2595 = vpack.c.b16 %v2494, %v2493
        %v2596 = vpack.c.b16 %v2496, %v2495
        %v2597 = vpack.c.b16 %v2498, %v2497
        %v2598 = vpack.c.b16 %v2500, %v2499
        %v2599 = vpack.c.b16 %v2502, %v2501
        %v2600 = vpack.c.b16 %v2504, %v2503
        %v2601 = vpack.c.b16 %v2506, %v2505
        %v2602 = vpack.c.b16 %v2508, %v2507
        %v2603 = vpack.c.b16 %v2510, %v2509
        %v2604 = vpack.c.b16 %v2512, %v2511
        %v2605 = vpack.c.b16 %v2514, %v2513
        %v2606 = vpack.c.b16 %v2516, %v2515
        %v2607 = vpack.c.b16 %v2518, %v2517
        %v2608 = vpack.c.b16 %v2520, %v2519
        %v2609 = vpack.c.b16 %v2522, %v2521
        %v2610 = vpack.c.b16 %v2524, %v2523
        %v2611 = vpack.c.b16 %v2526, %v2525
        %v2612 = vpack.c.b16 %v2528, %v2527
        %v2613 = vpack.c.b16 %v2530, %v2529
        %v2614 = vpack.c.b16 %v2532, %v2531
        %v2615 = vpack.c.b16 %v2534, %v2533
        %v2616 = vpack.c.b16 %v2536, %v2535
        %v2617 = vpack.c.b16 %v2538, %v2537
        %v2618 = vpack.c.b16 %v2540, %v2539
        %v2619 = vpack.c.b16 %v2542, %v2541
        %v2620 = vpack.c.b16 %v2544, %v2543
        %v2621 = vpack.c.b16 %v2546, %v2545
        %v2622 = vpack.c.b16 %v2548, %v2547
        %v2623 = vpack.c.b16 %v2550, %v2549
        %v2624 = vpack.c.b16 %v2552, %v2551
        %v2625 = vpack.c.b16 %v2554, %v2553
        %v2626 = vpack.c.b16 %v2556, %v2555
        %v2627 = vpack.c.b16 %v2558, %v2557
        %v2628 = vpack.c.b16 %v2560, %v2559
        %v2629 = vpack.c.b16 %v2562, %v2561
        %v2630 = vpack.c.b16 %v2564, %v2563
        %v2631 = vpack.c.b16 %v2566, %v2565
        %v2632 = vpack.c.b16 %v2568, %v2567
        %2697 = vmatprep.subr.bf16.mxu0 0
        %2698 = vmatpush1.bf16.msra.mxu0 %v2576
        %2699 = vmatprep.subr.bf16.mxu0 0
        %2700 = vmatpush1.bf16.msra.mxu0 %v2575
        %2701 = vmatprep.subr.bf16.mxu0 0
        %2702 = vmatpush1.bf16.msra.mxu0 %v2574
        %2703 = vmatprep.subr.bf16.mxu0 0
        %2704 = vmatpush1.bf16.msra.mxu0 %v2573
        %2705 = vmatprep.subr.bf16.mxu0 0
        %2706 = vmatpush1.bf16.msra.mxu0 %v2572
        %2707 = vmatprep.subr.bf16.mxu0 0
        %2708 = vmatpush1.bf16.msra.mxu0 %v2571
        %2709 = vmatprep.subr.bf16.mxu0 0
        %2710 = vmatpush1.bf16.msra.mxu0 %v2570
        %2711 = vmatprep.subr.bf16.mxu0 0
        %2712 = vmatpush1.bf16.msra.mxu0 %v2569
        %2713 = vmatprep.subr.bf16.mxu0 0
        %2714 = vmatpush2.bf16.msra.mxu0 %v2584
        %2715 = vmatprep.subr.bf16.mxu0 0
        %2716 = vmatpush2.bf16.msra.mxu0 %v2583
        %2717 = vmatprep.subr.bf16.mxu0 0
        %2718 = vmatpush2.bf16.msra.mxu0 %v2582
        %2719 = vmatprep.subr.bf16.mxu0 0
        %2720 = vmatpush2.bf16.msra.mxu0 %v2581
        %2721 = vmatprep.subr.bf16.mxu0 0
        %2722 = vmatpush2.bf16.msra.mxu0 %v2580
        %2723 = vmatprep.subr.bf16.mxu0 0
        %2724 = vmatpush2.bf16.msra.mxu0 %v2579
        %2725 = vmatprep.subr.bf16.mxu0 0
        %2726 = vmatpush2.bf16.msra.mxu0 %v2578
        %2727 = vmatprep.subr.bf16.mxu0 0
        %2728 = vmatpush2.bf16.msra.mxu0 %v2577
        %2729 = vmatprep.mubr.bf16.mxu0 %v2162
        %2730 = vmatmul.mubr.bf16.gmra.mxu0 %v2158
        %v2731 = vpop.f32.mrf.mxu0
        %v2732 = vadd.f32 0.0, %v2731
        %v2733 = vpop.f32.mrf.mxu0
        %v2734 = vpop.f32.mrf.mxu0
        %v2735 = vadd.f32 0.0, %v2734
        %v2736 = vpop.f32.mrf.mxu0
        %2737 = vdwg.mxu0
        %2738 = vmatprep.subr.bf16.mxu0 0
        %2739 = vmatpush1.bf16.msra.mxu0 %v2592
        %2740 = vmatprep.subr.bf16.mxu0 0
        %2741 = vmatpush1.bf16.msra.mxu0 %v2591
        %2742 = vmatprep.subr.bf16.mxu0 0
        %2743 = vmatpush1.bf16.msra.mxu0 %v2590
        %2744 = vmatprep.subr.bf16.mxu0 0
        %2745 = vmatpush1.bf16.msra.mxu0 %v2589
        %2746 = vmatprep.subr.bf16.mxu0 0
        %2747 = vmatpush1.bf16.msra.mxu0 %v2588
        %2748 = vmatprep.subr.bf16.mxu0 0
        %2749 = vmatpush1.bf16.msra.mxu0 %v2587
        %2750 = vmatprep.subr.bf16.mxu0 0
        %2751 = vmatpush1.bf16.msra.mxu0 %v2586
        %2752 = vmatprep.subr.bf16.mxu0 0
        %2753 = vmatpush1.bf16.msra.mxu0 %v2585
        %2754 = vmatprep.subr.bf16.mxu0 0
        %2755 = vmatpush2.bf16.msra.mxu0 %v2600
        %2756 = vmatprep.subr.bf16.mxu0 0
        %2757 = vmatpush2.bf16.msra.mxu0 %v2599
        %2758 = vmatprep.subr.bf16.mxu0 0
        %2759 = vmatpush2.bf16.msra.mxu0 %v2598
        %2760 = vmatprep.subr.bf16.mxu0 0
        %2761 = vmatpush2.bf16.msra.mxu0 %v2597
        %2762 = vmatprep.subr.bf16.mxu0 0
        %2763 = vmatpush2.bf16.msra.mxu0 %v2596
        %2764 = vmatprep.subr.bf16.mxu0 0
        %2765 = vmatpush2.bf16.msra.mxu0 %v2595
        %2766 = vmatprep.subr.bf16.mxu0 0
        %2767 = vmatpush2.bf16.msra.mxu0 %v2594
        %2768 = vmatprep.subr.bf16.mxu0 0
        %2769 = vmatpush2.bf16.msra.mxu0 %v2593
        %2770 = vmatprep.mubr.bf16.mxu0 %v2169
        %2771 = vmatmul.mubr.bf16.gmra.mxu0 %v2165
        %v2772 = vpop.f32.mrf.mxu0
        %v2773 = vadd.f32 %v2732, %v2772
        %v2774 = vpop.f32.mrf.mxu0
        %v2775 = vpop.f32.mrf.mxu0
        %v2776 = vadd.f32 %v2735, %v2775
        %v2777 = vpop.f32.mrf.mxu0
        %2778 = vdwg.mxu0
        %2779 = vmatprep.subr.bf16.mxu0 0
        %2780 = vmatpush1.bf16.msra.mxu0 %v2608
        %2781 = vmatprep.subr.bf16.mxu0 0
        %2782 = vmatpush1.bf16.msra.mxu0 %v2607
        %2783 = vmatprep.subr.bf16.mxu0 0
        %2784 = vmatpush1.bf16.msra.mxu0 %v2606
        %2785 = vmatprep.subr.bf16.mxu0 0
        %2786 = vmatpush1.bf16.msra.mxu0 %v2605
        %2787 = vmatprep.subr.bf16.mxu0 0
        %2788 = vmatpush1.bf16.msra.mxu0 %v2604
        %2789 = vmatprep.subr.bf16.mxu0 0
        %2790 = vmatpush1.bf16.msra.mxu0 %v2603
        %2791 = vmatprep.subr.bf16.mxu0 0
        %2792 = vmatpush1.bf16.msra.mxu0 %v2602
        %2793 = vmatprep.subr.bf16.mxu0 0
        %2794 = vmatpush1.bf16.msra.mxu0 %v2601
        %2795 = vmatprep.subr.bf16.mxu0 0
        %2796 = vmatpush2.bf16.msra.mxu0 %v2616
        %2797 = vmatprep.subr.bf16.mxu0 0
        %2798 = vmatpush2.bf16.msra.mxu0 %v2615
        %2799 = vmatprep.subr.bf16.mxu0 0
        %2800 = vmatpush2.bf16.msra.mxu0 %v2614
        %2801 = vmatprep.subr.bf16.mxu0 0
        %2802 = vmatpush2.bf16.msra.mxu0 %v2613
        %2803 = vmatprep.subr.bf16.mxu0 0
        %2804 = vmatpush2.bf16.msra.mxu0 %v2612
        %2805 = vmatprep.subr.bf16.mxu0 0
        %2806 = vmatpush2.bf16.msra.mxu0 %v2611
        %2807 = vmatprep.subr.bf16.mxu0 0
        %2808 = vmatpush2.bf16.msra.mxu0 %v2610
        %2809 = vmatprep.subr.bf16.mxu0 0
        %2810 = vmatpush2.bf16.msra.mxu0 %v2609
        %2811 = vmatprep.mubr.bf16.mxu0 %v2176
        %2812 = vmatmul.mubr.bf16.gmra.mxu0 %v2172
        %v2813 = vpop.f32.mrf.mxu0
        %v2814 = vadd.f32 %v2773, %v2813
        %v2815 = vpop.f32.mrf.mxu0
        %v2816 = vpop.f32.mrf.mxu0
        %v2817 = vadd.f32 %v2776, %v2816
        %v2818 = vpop.f32.mrf.mxu0
        %2819 = vdwg.mxu0
        %2820 = vmatprep.subr.bf16.mxu0 0
        %2821 = vmatpush1.bf16.msra.mxu0 %v2624
        %2822 = vmatprep.subr.bf16.mxu0 0
        %2823 = vmatpush1.bf16.msra.mxu0 %v2623
        %2824 = vmatprep.subr.bf16.mxu0 0
        %2825 = vmatpush1.bf16.msra.mxu0 %v2622
        %2826 = vmatprep.subr.bf16.mxu0 0
        %2827 = vmatpush1.bf16.msra.mxu0 %v2621
        %2828 = vmatprep.subr.bf16.mxu0 0
        %2829 = vmatpush1.bf16.msra.mxu0 %v2620
        %2830 = vmatprep.subr.bf16.mxu0 0
        %2831 = vmatpush1.bf16.msra.mxu0 %v2619
        %2832 = vmatprep.subr.bf16.mxu0 0
        %2833 = vmatpush1.bf16.msra.mxu0 %v2618
        %2834 = vmatprep.subr.bf16.mxu0 0
        %2835 = vmatpush1.bf16.msra.mxu0 %v2617
        %2836 = vmatprep.subr.bf16.mxu0 0
        %2837 = vmatpush2.bf16.msra.mxu0 %v2632
        %2838 = vmatprep.subr.bf16.mxu0 0
        %2839 = vmatpush2.bf16.msra.mxu0 %v2631
        %2840 = vmatprep.subr.bf16.mxu0 0
        %2841 = vmatpush2.bf16.msra.mxu0 %v2630
        %2842 = vmatprep.subr.bf16.mxu0 0
        %2843 = vmatpush2.bf16.msra.mxu0 %v2629
        %2844 = vmatprep.subr.bf16.mxu0 0
        %2845 = vmatpush2.bf16.msra.mxu0 %v2628
        %2846 = vmatprep.subr.bf16.mxu0 0
        %2847 = vmatpush2.bf16.msra.mxu0 %v2627
        %2848 = vmatprep.subr.bf16.mxu0 0
        %2849 = vmatpush2.bf16.msra.mxu0 %v2626
        %2850 = vmatprep.subr.bf16.mxu0 0
        %2851 = vmatpush2.bf16.msra.mxu0 %v2625
        %2852 = vmatprep.mubr.bf16.mxu0 %v2183
        %2853 = vmatmul.mubr.bf16.gmra.mxu0 %v2179
        %v2854 = vpop.f32.mrf.mxu0
        %v2855 = vadd.f32 %v2814, %v2854
        %v2856 = vpop.f32.mrf.mxu0
        %v2857 = vpop.f32.mrf.mxu0
        %v2858 = vadd.f32 %v2817, %v2857
        %v2859 = vpop.f32.mrf.mxu0
        %2860 = vdwg.mxu0
        %v2861 = vld [vmem:[%s10] sm:$0x7f]
        %v2862 = vld [vmem:[%s8] sm:$0x1]
        %v2864 = vlaneseq
        %v2865 = vshrl.u32 %v2864, 7
        %v2866 = vsub.s32 0, %v2865
        %v2867 = vrot.slane %v2862, %v2866
        %vm2869 = vcmask 105472
        %v2871 = vsel %vm2869, %v2861, 0
        %vm2873 = vcmask 1044480
        %v2875 = vsel %vm2873, %v2858, 0
        %2877 = vmatprep.subr.mxu0 0.0
        %2878 = vmatpush1.msra.mxu0 0.0
        %2879 = vmatprep.subr.mxu0 0.0
        %2880 = vmatpush1.msra.mxu0 0.0
        %2881 = vmatprep.subr.mxu0 0.0
        %2882 = vmatpush1.msra.mxu0 0.0
        %2883 = vmatprep.subr.mxu0 0.0
        %2884 = vmatpush1.msra.mxu0 0.0
        %2885 = vmatprep.subr.mxu0 0.0
        %2886 = vmatpush1.msra.mxu0 0.0
        %2887 = vmatprep.subr.mxu0 0.0
        %2888 = vmatpush1.msra.mxu0 0.0
        %2889 = vmatprep.subr.mxu0 0.0
        %2890 = vmatpush1.msra.mxu0 0.0
        %2891 = vmatprep.subr.mxu0 0.0
        %2892 = vmatpush1.msra.mxu0 0.0
        %2893 = vmatprep.subr.mxu0 0.0
        %2894 = vmatpush1.msra.mxu0 0.0
        %2895 = vmatprep.subr.mxu0 0.0
        %2896 = vmatpush1.msra.mxu0 0.0
        %2897 = vmatprep.subr.mxu0 0.0
        %2898 = vmatpush1.msra.mxu0 0.0
        %2899 = vmatprep.subr.mxu0 0.0
        %2900 = vmatpush1.msra.mxu0 0.0
        %2901 = vmatprep.subr.mxu0 0.0
        %2902 = vmatpush1.msra.mxu0 0.0
        %2903 = vmatprep.subr.mxu0 0.0
        %2904 = vmatpush1.msra.mxu0 0.0
        %2905 = vmatprep.subr.mxu0 0.0
        %2906 = vmatpush1.msra.mxu0 %v2875
        %2907 = vmatprep.subr.mxu0 0.0
        %2908 = vmatpush1.msra.mxu0 %v2855
        %2909 = vmatprep.subr.mxu0 0.0
        %2910 = vmatpush2.msra.mxu0 0.0
        %2911 = vmatprep.subr.mxu0 0.0
        %2912 = vmatpush2.msra.mxu0 0.0
        %2913 = vmatprep.subr.mxu0 0.0
        %2914 = vmatpush2.msra.mxu0 0.0
        %2915 = vmatprep.subr.mxu0 0.0
        %2916 = vmatpush2.msra.mxu0 0.0
        %2917 = vmatprep.subr.mxu0 0.0
        %2918 = vmatpush2.msra.mxu0 0.0
        %2919 = vmatprep.subr.mxu0 0.0
        %2920 = vmatpush2.msra.mxu0 0.0
        %2921 = vmatprep.subr.mxu0 0.0
        %2922 = vmatpush2.msra.mxu0 0.0
        %2923 = vmatprep.subr.mxu0 0.0
        %2924 = vmatpush2.msra.mxu0 0.0
        %2925 = vmatprep.subr.mxu0 0.0
        %2926 = vmatpush2.msra.mxu0 0.0
        %2927 = vmatprep.subr.mxu0 0.0
        %2928 = vmatpush2.msra.mxu0 0.0
        %2929 = vmatprep.subr.mxu0 0.0
        %2930 = vmatpush2.msra.mxu0 0.0
        %2931 = vmatprep.subr.mxu0 0.0
        %2932 = vmatpush2.msra.mxu0 0.0
        %2933 = vmatprep.subr.mxu0 0.0
        %2934 = vmatpush2.msra.mxu0 0.0
        %2935 = vmatprep.subr.mxu0 0.0
        %2936 = vmatpush2.msra.mxu0 0.0
        %2937 = vmatprep.subr.mxu0 0.0
        %2938 = vmatpush2.msra.mxu0 0.0
        %2939 = vmatprep.subr.mxu0 0.0
        %2940 = vmatpush2.msra.mxu0 0.0
        %2941 = vmatprep.mubr.f32.mxu0 0.0
        %2942 = vmatmul.mubr.f32.gmra.mxu0 %v2871
        %v2943 = vpop.f32.mrf.mxu0
        %v2944 = vadd.f32 %v2867, %v2943
        %v2945 = vpop.f32.mrf.mxu0
        %2946 = vdwg.mxu0
        %v2947 = vmax.f32 %v2944, 0.0
        %v2948 = vpack.c.bf16 %v2947, %v2947
        %s2949 = smul.addr %s1999, 4
        %s2950 = scalar_lea.vmem %s386, %s2949
        %vm2951 = vcmask 519168
        %vm2952 = vsmask.f32 3328
        %vm2953 = vmand %vm2951, %vm2952
        %v2954 = vld [vmem:[%s2950] sm:$0xf]
        %v2955 = vsel %vm2953, %v2948, %v2954
        %2956 = vst [vmem:[%s2950] sm:$0xf] %v2955
      $region90: #{net_forward.2} parent=63 // loop_footer
        %s2003 = sadd.s32 1, %s1999
      $region91: #{net_forward.2} parent=63 // loop_footer_branch
        %1998 = sbr.rel target = $region87
      $region92: #{net_forward.2} parent=63 // loop_exit
        _
      %p2957 = scmp.lt.s32.totalorder %s22, 1
      %s2958 = scalar_select %p2957, %s22, 1
      %s2959 = smul.addr %s2958, 7
      %s2960 = smul.addr %s2959, 4
      %s2961 = scalar_lea.vmem %s11, %s2960
      // Predicated region
      $region93: #{net_forward.2} parent=63 // pred_check
        %p2962 = pneg %p276
      $region94: #{net_forward.2} parent=63 // pred_check_branch
        %2964 = sbr.rel (%p2962) target = $region96
      $region95: #{net_forward.2} parent=63 // pred_region
        _
      $region96: #{net_forward.2} parent=63 // pred_fallthru
        _
    $region64: #{net_forward.2} parent=5 // pred_fallthru
      _
    %p2965 = scmp.le.s32.totalorder 2, %s17
    // Predicated region
    $region97: #{net_forward.2} parent=5 // pred_check
      %p2966 = pneg %p2965
    $region98: #{net_forward.2} parent=5 // pred_check_branch
      %2968 = sbr.rel (%p2966) target = $region100
    $region99: #{net_forward.2} parent=5 // pred_region
      %s2969 = ssub.s32 %s17, 2
      // Predicated region
      $region101: #{net_forward.2} parent=99 // pred_check
        %p2970 = pneg %p282
      $region102: #{net_forward.2} parent=99 // pred_check_branch
        %2972 = sbr.rel (%p2970) target = $region104
      $region103: #{net_forward.2} parent=99 // pred_region
        %p2973 = scmp.lt.s32.totalorder %s23, 1
        %s2974 = scalar_select %p2973, %s23, 1
        %s2975 = smul.addr %s2974, 7
        %s2976 = smul.addr %s2975, 4
        %s2977 = scalar_lea.vmem %s11, %s2976
      $region104: #{net_forward.2} parent=99 // pred_fallthru
        _
    $region100: #{net_forward.2} parent=5 // pred_fallthru
      _
  $region6: #{net_forward.2} parent=0 // loop_footer
    %s21 = sadd.s32 1, %s17
  $region7: #{net_forward.2} parent=0 // loop_footer_branch
    %16 = sbr.rel target = $region3
  $region8: #{net_forward.2} parent=0 // loop_exit
    _

// kernel: net_forward.3
$region0: #{net_forward.3}
  #allocation0 [shape = 'u32[]', space=smem, size = 0x4, offset = 0x4, fixed_abs, tag = 'smem constant byte address 0x4 - core index']
  #allocation1 [shape = 'u32[144,128]{1,0:T(1,128)}', space=vmem, size = 0x12000, scoped, tag = 'internal scratch']
  %s0 = inlined_call_operand.vmem [shape: bf16[2,3136], index: 0, kind: input, shape index: {}]
  %s1 = inlined_call_operand.vmem [shape: bf16[3136,512], index: 1, kind: input, shape index: {}]
  %s2 = inlined_call_operand.vmem [shape: f32[1,512], index: 2, kind: input, shape index: {}]
  %s3 = inlined_call_operand.vmem [shape: bf16[512,512], index: 3, kind: input, shape index: {}]
  %s4 = inlined_call_operand.vmem [shape: f32[1,512], index: 4, kind: input, shape index: {}]
  %s5 = inlined_call_operand.vmem [shape: bf16[512,128], index: 5, kind: input, shape index: {}]
  %s6 = inlined_call_operand.vmem [shape: f32[1,128], index: 6, kind: input, shape index: {}]
  %s7 = inlined_call_operand.hbm [shape: f32[2,128], index: 7, kind: output, shape index: {}]
  %s8 = sld [smem:[#allocation0]]
  $region38: #{net_forward.3} parent=0
    _
  %s10 = ssub.s32 1, %s8
  %s11 = scalar_select 0, %s10, %s8
  $region1: #{net_forward.3} parent=0
    #allocation2 [shape = 'u8[8192]{0}', space=vmem, size = 0x2000, scoped, tag = 'output window, operand 0, single buffered']
    #allocation3 [shape = 's32[1]{0}', space=sflag, size = 0x4, scoped, tag = 'scoped memory for net_forward.3']
    %12 = vsyncpa [#allocation3], 0
    // Predicated region
    $region2: #{net_forward.3} parent=1 // pred_check
      _
    $region3: #{net_forward.3} parent=1 // pred_check_branch
      %14 = sbr.rel (0) target = $region5
    $region4: #{net_forward.3} parent=1 // pred_region
      _
    $region5: #{net_forward.3} parent=1 // pred_fallthru
      _
    // Predicated region
    $region6: #{net_forward.3} parent=1 // pred_check
      _
    $region7: #{net_forward.3} parent=1 // pred_check_branch
      %16 = sbr.rel (0) target = $region9
    $region8: #{net_forward.3} parent=1 // pred_region
      _
    $region9: #{net_forward.3} parent=1 // pred_fallthru
      _
    // Predicated region
    $region10: #{net_forward.3} parent=1 // pred_check
      _
    $region11: #{net_forward.3} parent=1 // pred_check_branch
      %18 = sbr.rel (0) target = $region13
    $region12: #{net_forward.3} parent=1 // pred_region
      _
    $region13: #{net_forward.3} parent=1 // pred_fallthru
      _
    // Predicated region
    $region14: #{net_forward.3} parent=1 // pred_check
      _
    $region15: #{net_forward.3} parent=1 // pred_check_branch
      %20 = sbr.rel (0) target = $region17
    $region16: #{net_forward.3} parent=1 // pred_region
      _
    $region17: #{net_forward.3} parent=1 // pred_fallthru
      _
    // Predicated region
    $region18: #{net_forward.3} parent=1 // pred_check
      _
    $region19: #{net_forward.3} parent=1 // pred_check_branch
      %22 = sbr.rel (0) target = $region21
    $region20: #{net_forward.3} parent=1 // pred_region
      _
    $region21: #{net_forward.3} parent=1 // pred_fallthru
      _
    // Predicated region
    $region22: #{net_forward.3} parent=1 // pred_check
      _
    $region23: #{net_forward.3} parent=1 // pred_check_branch
      %24 = sbr.rel (0) target = $region25
    $region24: #{net_forward.3} parent=1 // pred_region
      _
    $region25: #{net_forward.3} parent=1 // pred_fallthru
      _
    // Predicated region
    $region26: #{net_forward.3} parent=1 // pred_check
      _
    $region27: #{net_forward.3} parent=1 // pred_check_branch
      %26 = sbr.rel (0) target = $region29
    $region28: #{net_forward.3} parent=1 // pred_region
      _
    $region29: #{net_forward.3} parent=1 // pred_fallthru
      _
    %v28 = vld [vmem:[%s0] sm:$0xff]
    %v29 = vld [vmem:[%s0 + $0x8] sm:$0xff]
    %v30 = vld [vmem:[%s0 + $0x10] sm:$0xff]
    %v31 = vld [vmem:[%s0 + $0x18] sm:$0x1]
    %v32 = vld [vmem:[%s0 + $0x19] sm:$0xff]
    %v33 = vld [vmem:[%s0 + $0x21] sm:$0xff]
    %v34 = vld [vmem:[%s0 + $0x29] sm:$0xff]
    %v35 = vld [vmem:[%s0 + $0x31] sm:$0x1]
    %v36 = vld [vmem:[%s0 + $0x32] sm:$0xff]
    %v37 = vld [vmem:[%s0 + $0x3a] sm:$0xff]
    %v38 = vld [vmem:[%s0 + $0x42] sm:$0xff]
    %v39 = vld [vmem:[%s0 + $0x4a] sm:$0x1]
    %v40 = vld [vmem:[%s0 + $0x4b] sm:$0xff]
    %v41 = vld [vmem:[%s0 + $0x53] sm:$0xff]
    %v42 = vld [vmem:[%s0 + $0x5b] sm:$0xff]
    %v43 = vld [vmem:[%s0 + $0x63] sm:$0x1]
    %v44 = vld [vmem:[%s0 + $0x64] sm:$0xff]
    %v45 = vld [vmem:[%s0 + $0x6c] sm:$0xff]
    %v46 = vld [vmem:[%s0 + $0x74] sm:$0xff]
    %v47 = vld [vmem:[%s0 + $0x7c] sm:$0x1]
    %v48 = vld [vmem:[%s0 + $0x7d] sm:$0xff]
    %v49 = vld [vmem:[%s0 + $0x85] sm:$0xff]
    %v50 = vld [vmem:[%s0 + $0x8d] sm:$0xff]
    %v51 = vld [vmem:[%s0 + $0x95] sm:$0x1]
    %v52 = vld [vmem:[%s0 + $0x96] sm:$0xff]
    %v53 = vld [vmem:[%s0 + $0x9e] sm:$0xff]
    %v54 = vld [vmem:[%s0 + $0xa6] sm:$0xff]
    %v55 = vld [vmem:[%s0 + $0xae] sm:$0x1]
    %v56 = vld [vmem:[%s0 + $0xaf] sm:$0xff]
    %v57 = vld [vmem:[%s0 + $0xb7] sm:$0xff]
    %v58 = vld [vmem:[%s0 + $0xbf] sm:$0xff]
    %v59 = vld [vmem:[%s0 + $0xc7] sm:$0x1]
    %v60 = vld [vmem:[%s1] sm:$0xff]
    %v61 = vld [vmem:[%s1 + $0x8] sm:$0xff]
    %v62 = vld [vmem:[%s1 + $0x10] sm:$0xff]
    %v63 = vld [vmem:[%s1 + $0x18] sm:$0xff]
    %v64 = vld [vmem:[%s1 + $0x20] sm:$0xff]
    %v65 = vld [vmem:[%s1 + $0x28] sm:$0xff]
    %v66 = vld [vmem:[%s1 + $0x30] sm:$0xff]
    %v67 = vld [vmem:[%s1 + $0x38] sm:$0xff]
    %v68 = vld [vmem:[%s1 + $0x40] sm:$0xff]
    %v69 = vld [vmem:[%s1 + $0x48] sm:$0xff]
    %v70 = vld [vmem:[%s1 + $0x50] sm:$0xff]
    %v71 = vld [vmem:[%s1 + $0x58] sm:$0xff]
    %v72 = vld [vmem:[%s1 + $0x60] sm:$0xff]
    %v73 = vld [vmem:[%s1 + $0x68] sm:$0xff]
    %v74 = vld [vmem:[%s1 + $0x70] sm:$0xff]
    %v75 = vld [vmem:[%s1 + $0x78] sm:$0xff]
    %v76 = vld [vmem:[%s1 + $0x80] sm:$0xff]
    %v77 = vld [vmem:[%s1 + $0x88] sm:$0xff]
    %v78 = vld [vmem:[%s1 + $0x90] sm:$0xff]
    %v79 = vld [vmem:[%s1 + $0x98] sm:$0xff]
    %v80 = vld [vmem:[%s1 + $0xa0] sm:$0xff]
    %v81 = vld [vmem:[%s1 + $0xa8] sm:$0xff]
    %v82 = vld [vmem:[%s1 + $0xb0] sm:$0xff]
    %v83 = vld [vmem:[%s1 + $0xb8] sm:$0xff]
    %v84 = vld [vmem:[%s1 + $0xc0] sm:$0xff]
    %v85 = vld [vmem:[%s1 + $0xc8] sm:$0xff]
    %v86 = vld [vmem:[%s1 + $0xd0] sm:$0xff]
    %v87 = vld [vmem:[%s1 + $0xd8] sm:$0xff]
    %v88 = vld [vmem:[%s1 + $0xe0] sm:$0xff]
    %v89 = vld [vmem:[%s1 + $0xe8] sm:$0xff]
    %v90 = vld [vmem:[%s1 + $0xf0] sm:$0xff]
    %v91 = vld [vmem:[%s1 + $0xf8] sm:$0xff]
    %v92 = vld [vmem:[%s1 + $0x100] sm:$0xff]
    %v93 = vld [vmem:[%s1 + $0x108] sm:$0xff]
    %v94 = vld [vmem:[%s1 + $0x110] sm:$0xff]
    %v95 = vld [vmem:[%s1 + $0x118] sm:$0xff]
    %v96 = vld [vmem:[%s1 + $0x120] sm:$0xff]
    %v97 = vld [vmem:[%s1 + $0x128] sm:$0xff]
    %v98 = vld [vmem:[%s1 + $0x130] sm:$0xff]
    %v99 = vld [vmem:[%s1 + $0x138] sm:$0xff]
    %v100 = vld [vmem:[%s1 + $0x140] sm:$0xff]
    %v101 = vld [vmem:[%s1 + $0x148] sm:$0xff]
    %v102 = vld [vmem:[%s1 + $0x150] sm:$0xff]
    %v103 = vld [vmem:[%s1 + $0x158] sm:$0xff]
    %v104 = vld [vmem:[%s1 + $0x160] sm:$0xff]
    %v105 = vld [vmem:[%s1 + $0x168] sm:$0xff]
    %v106 = vld [vmem:[%s1 + $0x170] sm:$0xff]
    %v107 = vld [vmem:[%s1 + $0x178] sm:$0xff]
    %v108 = vld [vmem:[%s1 + $0x180] sm:$0xff]
    %v109 = vld [vmem:[%s1 + $0x188] sm:$0xff]
    %v110 = vld [vmem:[%s1 + $0x190] sm:$0xff]
    %v111 = vld [vmem:[%s1 + $0x198] sm:$0xff]
    %v112 = vld [vmem:[%s1 + $0x1a0] sm:$0xff]
    %v113 = vld [vmem:[%s1 + $0x1a8] sm:$0xff]
    %v114 = vld [vmem:[%s1 + $0x1b0] sm:$0xff]
    %v115 = vld [vmem:[%s1 + $0x1b8] sm:$0xff]
    %v116 = vld [vmem:[%s1 + $0x1c0] sm:$0xff]
    %v117 = vld [vmem:[%s1 + $0x1c8] sm:$0xff]
    %v118 = vld [vmem:[%s1 + $0x1d0] sm:$0xff]
    %v119 = vld [vmem:[%s1 + $0x1d8] sm:$0xff]
    %v120 = vld [vmem:[%s1 + $0x1e0] sm:$0xff]
    %v121 = vld [vmem:[%s1 + $0x1e8] sm:$0xff]
    %v122 = vld [vmem:[%s1 + $0x1f0] sm:$0xff]
    %v123 = vld [vmem:[%s1 + $0x1f8] sm:$0xff]
    %v124 = vld [vmem:[%s1 + $0x200] sm:$0xff]
    %v125 = vld [vmem:[%s1 + $0x208] sm:$0xff]
    %v126 = vld [vmem:[%s1 + $0x210] sm:$0xff]
    %v127 = vld [vmem:[%s1 + $0x218] sm:$0xff]
    %v128 = vld [vmem:[%s1 + $0x220] sm:$0xff]
    %v129 = vld [vmem:[%s1 + $0x228] sm:$0xff]
    %v130 = vld [vmem:[%s1 + $0x230] sm:$0xff]
    %v131 = vld [vmem:[%s1 + $0x238] sm:$0xff]
    %v132 = vld [vmem:[%s1 + $0x240] sm:$0xff]
    %v133 = vld [vmem:[%s1 + $0x248] sm:$0xff]
    %v134 = vld [vmem:[%s1 + $0x250] sm:$0xff]
    %v135 = vld [vmem:[%s1 + $0x258] sm:$0xff]
    %v136 = vld [vmem:[%s1 + $0x260] sm:$0xff]
    %v137 = vld [vmem:[%s1 + $0x268] sm:$0xff]
    %v138 = vld [vmem:[%s1 + $0x270] sm:$0xff]
    %v139 = vld [vmem:[%s1 + $0x278] sm:$0xff]
    %v140 = vld [vmem:[%s1 + $0x280] sm:$0xff]
    %v141 = vld [vmem:[%s1 + $0x288] sm:$0xff]
    %v142 = vld [vmem:[%s1 + $0x290] sm:$0xff]
    %v143 = vld [vmem:[%s1 + $0x298] sm:$0xff]
    %v144 = vld [vmem:[%s1 + $0x2a0] sm:$0xff]
    %v145 = vld [vmem:[%s1 + $0x2a8] sm:$0xff]
    %v146 = vld [vmem:[%s1 + $0x2b0] sm:$0xff]
    %v147 = vld [vmem:[%s1 + $0x2b8] sm:$0xff]
    %v148 = vld [vmem:[%s1 + $0x2c0] sm:$0xff]
    %v149 = vld [vmem:[%s1 + $0x2c8] sm:$0xff]
    %v150 = vld [vmem:[%s1 + $0x2d0] sm:$0xff]
    %v151 = vld [vmem:[%s1 + $0x2d8] sm:$0xff]
    %v152 = vld [vmem:[%s1 + $0x2e0] sm:$0xff]
    %v153 = vld [vmem:[%s1 + $0x2e8] sm:$0xff]
    %v154 = vld [vmem:[%s1 + $0x2f0] sm:$0xff]
    %v155 = vld [vmem:[%s1 + $0x2f8] sm:$0xff]
    %v156 = vld [vmem:[%s1 + $0x300] sm:$0xff]
    %v157 = vld [vmem:[%s1 + $0x308] sm:$0xff]
    %v158 = vld [vmem:[%s1 + $0x310] sm:$0xff]
    %v159 = vld [vmem:[%s1 + $0x318] sm:$0xff]
    %v160 = vld [vmem:[%s1 + $0x320] sm:$0xff]
    %v161 = vld [vmem:[%s1 + $0x328] sm:$0xff]
    %v162 = vld [vmem:[%s1 + $0x330] sm:$0xff]
    %v163 = vld [vmem:[%s1 + $0x338] sm:$0xff]
    %v164 = vld [vmem:[%s1 + $0x340] sm:$0xff]
    %v165 = vld [vmem:[%s1 + $0x348] sm:$0xff]
    %v166 = vld [vmem:[%s1 + $0x350] sm:$0xff]
    %v167 = vld [vmem:[%s1 + $0x358] sm:$0xff]
    %v168 = vld [vmem:[%s1 + $0x360] sm:$0xff]
    %v169 = vld [vmem:[%s1 + $0x368] sm:$0xff]
    %v170 = vld [vmem:[%s1 + $0x370] sm:$0xff]
    %v171 = vld [vmem:[%s1 + $0x378] sm:$0xff]
    %v172 = vld [vmem:[%s1 + $0x380] sm:$0xff]
    %v173 = vld [vmem:[%s1 + $0x388] sm:$0xff]
    %v174 = vld [vmem:[%s1 + $0x390] sm:$0xff]
    %v175 = vld [vmem:[%s1 + $0x398] sm:$0xff]
    %v176 = vld [vmem:[%s1 + $0x3a0] sm:$0xff]
    %v177 = vld [vmem:[%s1 + $0x3a8] sm:$0xff]
    %v178 = vld [vmem:[%s1 + $0x3b0] sm:$0xff]
    %v179 = vld [vmem:[%s1 + $0x3b8] sm:$0xff]
    %v180 = vld [vmem:[%s1 + $0x3c0] sm:$0xff]
    %v181 = vld [vmem:[%s1 + $0x3c8] sm:$0xff]
    %v182 = vld [vmem:[%s1 + $0x3d0] sm:$0xff]
    %v183 = vld [vmem:[%s1 + $0x3d8] sm:$0xff]
    %v184 = vld [vmem:[%s1 + $0x3e0] sm:$0xff]
    %v185 = vld [vmem:[%s1 + $0x3e8] sm:$0xff]
    %v186 = vld [vmem:[%s1 + $0x3f0] sm:$0xff]
    %v187 = vld [vmem:[%s1 + $0x3f8] sm:$0xff]
    %v188 = vld [vmem:[%s1 + $0x400] sm:$0xff]
    %v189 = vld [vmem:[%s1 + $0x408] sm:$0xff]
    %v190 = vld [vmem:[%s1 + $0x410] sm:$0xff]
    %v191 = vld [vmem:[%s1 + $0x418] sm:$0xff]
    %v192 = vld [vmem:[%s1 + $0x420] sm:$0xff]
    %v193 = vld [vmem:[%s1 + $0x428] sm:$0xff]
    %v194 = vld [vmem:[%s1 + $0x430] sm:$0xff]
    %v195 = vld [vmem:[%s1 + $0x438] sm:$0xff]
    %v196 = vld [vmem:[%s1 + $0x440] sm:$0xff]
    %v197 = vld [vmem:[%s1 + $0x448] sm:$0xff]
    %v198 = vld [vmem:[%s1 + $0x450] sm:$0xff]
    %v199 = vld [vmem:[%s1 + $0x458] sm:$0xff]
    %v200 = vld [vmem:[%s1 + $0x460] sm:$0xff]
    %v201 = vld [vmem:[%s1 + $0x468] sm:$0xff]
    %v202 = vld [vmem:[%s1 + $0x470] sm:$0xff]
    %v203 = vld [vmem:[%s1 + $0x478] sm:$0xff]
    %v204 = vld [vmem:[%s1 + $0x480] sm:$0xff]
    %v205 = vld [vmem:[%s1 + $0x488] sm:$0xff]
    %v206 = vld [vmem:[%s1 + $0x490] sm:$0xff]
    %v207 = vld [vmem:[%s1 + $0x498] sm:$0xff]
    %v208 = vld [vmem:[%s1 + $0x4a0] sm:$0xff]
    %v209 = vld [vmem:[%s1 + $0x4a8] sm:$0xff]
    %v210 = vld [vmem:[%s1 + $0x4b0] sm:$0xff]
    %v211 = vld [vmem:[%s1 + $0x4b8] sm:$0xff]
    %v212 = vld [vmem:[%s1 + $0x4c0] sm:$0xff]
    %v213 = vld [vmem:[%s1 + $0x4c8] sm:$0xff]
    %v214 = vld [vmem:[%s1 + $0x4d0] sm:$0xff]
    %v215 = vld [vmem:[%s1 + $0x4d8] sm:$0xff]
    %v216 = vld [vmem:[%s1 + $0x4e0] sm:$0xff]
    %v217 = vld [vmem:[%s1 + $0x4e8] sm:$0xff]
    %v218 = vld [vmem:[%s1 + $0x4f0] sm:$0xff]
    %v219 = vld [vmem:[%s1 + $0x4f8] sm:$0xff]
    %v220 = vld [vmem:[%s1 + $0x500] sm:$0xff]
    %v221 = vld [vmem:[%s1 + $0x508] sm:$0xff]
    %v222 = vld [vmem:[%s1 + $0x510] sm:$0xff]
    %v223 = vld [vmem:[%s1 + $0x518] sm:$0xff]
    %v224 = vld [vmem:[%s1 + $0x520] sm:$0xff]
    %v225 = vld [vmem:[%s1 + $0x528] sm:$0xff]
    %v226 = vld [vmem:[%s1 + $0x530] sm:$0xff]
    %v227 = vld [vmem:[%s1 + $0x538] sm:$0xff]
    %v228 = vld [vmem:[%s1 + $0x540] sm:$0xff]
    %v229 = vld [vmem:[%s1 + $0x548] sm:$0xff]
    %v230 = vld [vmem:[%s1 + $0x550] sm:$0xff]
    %v231 = vld [vmem:[%s1 + $0x558] sm:$0xff]
    %v232 = vld [vmem:[%s1 + $0x560] sm:$0xff]
    %v233 = vld [vmem:[%s1 + $0x568] sm:$0xff]
    %v234 = vld [vmem:[%s1 + $0x570] sm:$0xff]
    %v235 = vld [vmem:[%s1 + $0x578] sm:$0xff]
    %v236 = vld [vmem:[%s1 + $0x580] sm:$0xff]
    %v237 = vld [vmem:[%s1 + $0x588] sm:$0xff]
    %v238 = vld [vmem:[%s1 + $0x590] sm:$0xff]
    %v239 = vld [vmem:[%s1 + $0x598] sm:$0xff]
    %v240 = vld [vmem:[%s1 + $0x5a0] sm:$0xff]
    %v241 = vld [vmem:[%s1 + $0x5a8] sm:$0xff]
    %v242 = vld [vmem:[%s1 + $0x5b0] sm:$0xff]
    %v243 = vld [vmem:[%s1 + $0x5b8] sm:$0xff]
    %v244 = vld [vmem:[%s1 + $0x5c0] sm:$0xff]
    %v245 = vld [vmem:[%s1 + $0x5c8] sm:$0xff]
    %v246 = vld [vmem:[%s1 + $0x5d0] sm:$0xff]
    %v247 = vld [vmem:[%s1 + $0x5d8] sm:$0xff]
    %v248 = vld [vmem:[%s1 + $0x5e0] sm:$0xff]
    %v249 = vld [vmem:[%s1 + $0x5e8] sm:$0xff]
    %v250 = vld [vmem:[%s1 + $0x5f0] sm:$0xff]
    %v251 = vld [vmem:[%s1 + $0x5f8] sm:$0xff]
    %v252 = vld [vmem:[%s1 + $0x600] sm:$0xff]
    %v253 = vld [vmem:[%s1 + $0x608] sm:$0xff]
    %v254 = vld [vmem:[%s1 + $0x610] sm:$0xff]
    %v255 = vld [vmem:[%s1 + $0x618] sm:$0xff]
    %v256 = vld [vmem:[%s1 + $0x620] sm:$0xff]
    %v257 = vld [vmem:[%s1 + $0x628] sm:$0xff]
    %v258 = vld [vmem:[%s1 + $0x630] sm:$0xff]
    %v259 = vld [vmem:[%s1 + $0x638] sm:$0xff]
    %v260 = vld [vmem:[%s1 + $0x640] sm:$0xff]
    %v261 = vld [vmem:[%s1 + $0x648] sm:$0xff]
    %v262 = vld [vmem:[%s1 + $0x650] sm:$0xff]
    %v263 = vld [vmem:[%s1 + $0x658] sm:$0xff]
    %v264 = vld [vmem:[%s1 + $0x660] sm:$0xff]
    %v265 = vld [vmem:[%s1 + $0x668] sm:$0xff]
    %v266 = vld [vmem:[%s1 + $0x670] sm:$0xff]
    %v267 = vld [vmem:[%s1 + $0x678] sm:$0xff]
    %v268 = vld [vmem:[%s1 + $0x680] sm:$0xff]
    %v269 = vld [vmem:[%s1 + $0x688] sm:$0xff]
    %v270 = vld [vmem:[%s1 + $0x690] sm:$0xff]
    %v271 = vld [vmem:[%s1 + $0x698] sm:$0xff]
    %v272 = vld [vmem:[%s1 + $0x6a0] sm:$0xff]
    %v273 = vld [vmem:[%s1 + $0x6a8] sm:$0xff]
    %v274 = vld [vmem:[%s1 + $0x6b0] sm:$0xff]
    %v275 = vld [vmem:[%s1 + $0x6b8] sm:$0xff]
    %v276 = vld [vmem:[%s1 + $0x6c0] sm:$0xff]
    %v277 = vld [vmem:[%s1 + $0x6c8] sm:$0xff]
    %v278 = vld [vmem:[%s1 + $0x6d0] sm:$0xff]
    %v279 = vld [vmem:[%s1 + $0x6d8] sm:$0xff]
    %v280 = vld [vmem:[%s1 + $0x6e0] sm:$0xff]
    %v281 = vld [vmem:[%s1 + $0x6e8] sm:$0xff]
    %v282 = vld [vmem:[%s1 + $0x6f0] sm:$0xff]
    %v283 = vld [vmem:[%s1 + $0x6f8] sm:$0xff]
    %v284 = vld [vmem:[%s1 + $0x700] sm:$0xff]
    %v285 = vld [vmem:[%s1 + $0x708] sm:$0xff]
    %v286 = vld [vmem:[%s1 + $0x710] sm:$0xff]
    %v287 = vld [vmem:[%s1 + $0x718] sm:$0xff]
    %v288 = vld [vmem:[%s1 + $0x720] sm:$0xff]
    %v289 = vld [vmem:[%s1 + $0x728] sm:$0xff]
    %v290 = vld [vmem:[%s1 + $0x730] sm:$0xff]
    %v291 = vld [vmem:[%s1 + $0x738] sm:$0xff]
    %v292 = vld [vmem:[%s1 + $0x740] sm:$0xff]
    %v293 = vld [vmem:[%s1 + $0x748] sm:$0xff]
    %v294 = vld [vmem:[%s1 + $0x750] sm:$0xff]
    %v295 = vld [vmem:[%s1 + $0x758] sm:$0xff]
    %v296 = vld [vmem:[%s1 + $0x760] sm:$0xff]
    %v297 = vld [vmem:[%s1 + $0x768] sm:$0xff]
    %v298 = vld [vmem:[%s1 + $0x770] sm:$0xff]
    %v299 = vld [vmem:[%s1 + $0x778] sm:$0xff]
    %v300 = vld [vmem:[%s1 + $0x780] sm:$0xff]
    %v301 = vld [vmem:[%s1 + $0x788] sm:$0xff]
    %v302 = vld [vmem:[%s1 + $0x790] sm:$0xff]
    %v303 = vld [vmem:[%s1 + $0x798] sm:$0xff]
    %v304 = vld [vmem:[%s1 + $0x7a0] sm:$0xff]
    %v305 = vld [vmem:[%s1 + $0x7a8] sm:$0xff]
    %v306 = vld [vmem:[%s1 + $0x7b0] sm:$0xff]
    %v307 = vld [vmem:[%s1 + $0x7b8] sm:$0xff]
    %v308 = vld [vmem:[%s1 + $0x7c0] sm:$0xff]
    %v309 = vld [vmem:[%s1 + $0x7c8] sm:$0xff]
    %v310 = vld [vmem:[%s1 + $0x7d0] sm:$0xff]
    %v311 = vld [vmem:[%s1 + $0x7d8] sm:$0xff]
    %v312 = vld [vmem:[%s1 + $0x7e0] sm:$0xff]
    %v313 = vld [vmem:[%s1 + $0x7e8] sm:$0xff]
    %v314 = vld [vmem:[%s1 + $0x7f0] sm:$0xff]
    %v315 = vld [vmem:[%s1 + $0x7f8] sm:$0xff]
    %v316 = vld [vmem:[%s1 + $0x800] sm:$0xff]
    %v317 = vld [vmem:[%s1 + $0x808] sm:$0xff]
    %v318 = vld [vmem:[%s1 + $0x810] sm:$0xff]
    %v319 = vld [vmem:[%s1 + $0x818] sm:$0xff]
    %v320 = vld [vmem:[%s1 + $0x820] sm:$0xff]
    %v321 = vld [vmem:[%s1 + $0x828] sm:$0xff]
    %v322 = vld [vmem:[%s1 + $0x830] sm:$0xff]
    %v323 = vld [vmem:[%s1 + $0x838] sm:$0xff]
    %v324 = vld [vmem:[%s1 + $0x840] sm:$0xff]
    %v325 = vld [vmem:[%s1 + $0x848] sm:$0xff]
    %v326 = vld [vmem:[%s1 + $0x850] sm:$0xff]
    %v327 = vld [vmem:[%s1 + $0x858] sm:$0xff]
    %v328 = vld [vmem:[%s1 + $0x860] sm:$0xff]
    %v329 = vld [vmem:[%s1 + $0x868] sm:$0xff]
    %v330 = vld [vmem:[%s1 + $0x870] sm:$0xff]
    %v331 = vld [vmem:[%s1 + $0x878] sm:$0xff]
    %v332 = vld [vmem:[%s1 + $0x880] sm:$0xff]
    %v333 = vld [vmem:[%s1 + $0x888] sm:$0xff]
    %v334 = vld [vmem:[%s1 + $0x890] sm:$0xff]
    %v335 = vld [vmem:[%s1 + $0x898] sm:$0xff]
    %v336 = vld [vmem:[%s1 + $0x8a0] sm:$0xff]
    %v337 = vld [vmem:[%s1 + $0x8a8] sm:$0xff]
    %v338 = vld [vmem:[%s1 + $0x8b0] sm:$0xff]
    %v339 = vld [vmem:[%s1 + $0x8b8] sm:$0xff]
    %v340 = vld [vmem:[%s1 + $0x8c0] sm:$0xff]
    %v341 = vld [vmem:[%s1 + $0x8c8] sm:$0xff]
    %v342 = vld [vmem:[%s1 + $0x8d0] sm:$0xff]
    %v343 = vld [vmem:[%s1 + $0x8d8] sm:$0xff]
    %v344 = vld [vmem:[%s1 + $0x8e0] sm:$0xff]
    %v345 = vld [vmem:[%s1 + $0x8e8] sm:$0xff]
    %v346 = vld [vmem:[%s1 + $0x8f0] sm:$0xff]
    %v347 = vld [vmem:[%s1 + $0x8f8] sm:$0xff]
    %v348 = vld [vmem:[%s1 + $0x900] sm:$0xff]
    %v349 = vld [vmem:[%s1 + $0x908] sm:$0xff]
    %v350 = vld [vmem:[%s1 + $0x910] sm:$0xff]
    %v351 = vld [vmem:[%s1 + $0x918] sm:$0xff]
    %v352 = vld [vmem:[%s1 + $0x920] sm:$0xff]
    %v353 = vld [vmem:[%s1 + $0x928] sm:$0xff]
    %v354 = vld [vmem:[%s1 + $0x930] sm:$0xff]
    %v355 = vld [vmem:[%s1 + $0x938] sm:$0xff]
    %v356 = vld [vmem:[%s1 + $0x940] sm:$0xff]
    %v357 = vld [vmem:[%s1 + $0x948] sm:$0xff]
    %v358 = vld [vmem:[%s1 + $0x950] sm:$0xff]
    %v359 = vld [vmem:[%s1 + $0x958] sm:$0xff]
    %v360 = vld [vmem:[%s1 + $0x960] sm:$0xff]
    %v361 = vld [vmem:[%s1 + $0x968] sm:$0xff]
    %v362 = vld [vmem:[%s1 + $0x970] sm:$0xff]
    %v363 = vld [vmem:[%s1 + $0x978] sm:$0xff]
    %v364 = vld [vmem:[%s1 + $0x980] sm:$0xff]
    %v365 = vld [vmem:[%s1 + $0x988] sm:$0xff]
    %v366 = vld [vmem:[%s1 + $0x990] sm:$0xff]
    %v367 = vld [vmem:[%s1 + $0x998] sm:$0xff]
    %v368 = vld [vmem:[%s1 + $0x9a0] sm:$0xff]
    %v369 = vld [vmem:[%s1 + $0x9a8] sm:$0xff]
    %v370 = vld [vmem:[%s1 + $0x9b0] sm:$0xff]
    %v371 = vld [vmem:[%s1 + $0x9b8] sm:$0xff]
    %v372 = vld [vmem:[%s1 + $0x9c0] sm:$0xff]
    %v373 = vld [vmem:[%s1 + $0x9c8] sm:$0xff]
    %v374 = vld [vmem:[%s1 + $0x9d0] sm:$0xff]
    %v375 = vld [vmem:[%s1 + $0x9d8] sm:$0xff]
    %v376 = vld [vmem:[%s1 + $0x9e0] sm:$0xff]
    %v377 = vld [vmem:[%s1 + $0x9e8] sm:$0xff]
    %v378 = vld [vmem:[%s1 + $0x9f0] sm:$0xff]
    %v379 = vld [vmem:[%s1 + $0x9f8] sm:$0xff]
    %v380 = vld [vmem:[%s1 + $0xa00] sm:$0xff]
    %v381 = vld [vmem:[%s1 + $0xa08] sm:$0xff]
    %v382 = vld [vmem:[%s1 + $0xa10] sm:$0xff]
    %v383 = vld [vmem:[%s1 + $0xa18] sm:$0xff]
    %v384 = vld [vmem:[%s1 + $0xa20] sm:$0xff]
    %v385 = vld [vmem:[%s1 + $0xa28] sm:$0xff]
    %v386 = vld [vmem:[%s1 + $0xa30] sm:$0xff]
    %v387 = vld [vmem:[%s1 + $0xa38] sm:$0xff]
    %v388 = vld [vmem:[%s1 + $0xa40] sm:$0xff]
    %v389 = vld [vmem:[%s1 + $0xa48] sm:$0xff]
    %v390 = vld [vmem:[%s1 + $0xa50] sm:$0xff]
    %v391 = vld [vmem:[%s1 + $0xa58] sm:$0xff]
    %v392 = vld [vmem:[%s1 + $0xa60] sm:$0xff]
    %v393 = vld [vmem:[%s1 + $0xa68] sm:$0xff]
    %v394 = vld [vmem:[%s1 + $0xa70] sm:$0xff]
    %v395 = vld [vmem:[%s1 + $0xa78] sm:$0xff]
    %v396 = vld [vmem:[%s1 + $0xa80] sm:$0xff]
    %v397 = vld [vmem:[%s1 + $0xa88] sm:$0xff]
    %v398 = vld [vmem:[%s1 + $0xa90] sm:$0xff]
    %v399 = vld [vmem:[%s1 + $0xa98] sm:$0xff]
    %v400 = vld [vmem:[%s1 + $0xaa0] sm:$0xff]
    %v401 = vld [vmem:[%s1 + $0xaa8] sm:$0xff]
    %v402 = vld [vmem:[%s1 + $0xab0] sm:$0xff]
    %v403 = vld [vmem:[%s1 + $0xab8] sm:$0xff]
    %v404 = vld [vmem:[%s1 + $0xac0] sm:$0xff]
    %v405 = vld [vmem:[%s1 + $0xac8] sm:$0xff]
    %v406 = vld [vmem:[%s1 + $0xad0] sm:$0xff]
    %v407 = vld [vmem:[%s1 + $0xad8] sm:$0xff]
    %v408 = vld [vmem:[%s1 + $0xae0] sm:$0xff]
    %v409 = vld [vmem:[%s1 + $0xae8] sm:$0xff]
    %v410 = vld [vmem:[%s1 + $0xaf0] sm:$0xff]
    %v411 = vld [vmem:[%s1 + $0xaf8] sm:$0xff]
    %v412 = vld [vmem:[%s1 + $0xb00] sm:$0xff]
    %v413 = vld [vmem:[%s1 + $0xb08] sm:$0xff]
    %v414 = vld [vmem:[%s1 + $0xb10] sm:$0xff]
    %v415 = vld [vmem:[%s1 + $0xb18] sm:$0xff]
    %v416 = vld [vmem:[%s1 + $0xb20] sm:$0xff]
    %v417 = vld [vmem:[%s1 + $0xb28] sm:$0xff]
    %v418 = vld [vmem:[%s1 + $0xb30] sm:$0xff]
    %v419 = vld [vmem:[%s1 + $0xb38] sm:$0xff]
    %v420 = vld [vmem:[%s1 + $0xb40] sm:$0xff]
    %v421 = vld [vmem:[%s1 + $0xb48] sm:$0xff]
    %v422 = vld [vmem:[%s1 + $0xb50] sm:$0xff]
    %v423 = vld [vmem:[%s1 + $0xb58] sm:$0xff]
    %v424 = vld [vmem:[%s1 + $0xb60] sm:$0xff]
    %v425 = vld [vmem:[%s1 + $0xb68] sm:$0xff]
    %v426 = vld [vmem:[%s1 + $0xb70] sm:$0xff]
    %v427 = vld [vmem:[%s1 + $0xb78] sm:$0xff]
    %v428 = vld [vmem:[%s1 + $0xb80] sm:$0xff]
    %v429 = vld [vmem:[%s1 + $0xb88] sm:$0xff]
    %v430 = vld [vmem:[%s1 + $0xb90] sm:$0xff]
    %v431 = vld [vmem:[%s1 + $0xb98] sm:$0xff]
    %v432 = vld [vmem:[%s1 + $0xba0] sm:$0xff]
    %v433 = vld [vmem:[%s1 + $0xba8] sm:$0xff]
    %v434 = vld [vmem:[%s1 + $0xbb0] sm:$0xff]
    %v435 = vld [vmem:[%s1 + $0xbb8] sm:$0xff]
    %v436 = vld [vmem:[%s1 + $0xbc0] sm:$0xff]
    %v437 = vld [vmem:[%s1 + $0xbc8] sm:$0xff]
    %v438 = vld [vmem:[%s1 + $0xbd0] sm:$0xff]
    %v439 = vld [vmem:[%s1 + $0xbd8] sm:$0xff]
    %v440 = vld [vmem:[%s1 + $0xbe0] sm:$0xff]
    %v441 = vld [vmem:[%s1 + $0xbe8] sm:$0xff]
    %v442 = vld [vmem:[%s1 + $0xbf0] sm:$0xff]
    %v443 = vld [vmem:[%s1 + $0xbf8] sm:$0xff]
    %v444 = vld [vmem:[%s1 + $0xc00] sm:$0xff]
    %v445 = vld [vmem:[%s1 + $0xc08] sm:$0xff]
    %v446 = vld [vmem:[%s1 + $0xc10] sm:$0xff]
    %v447 = vld [vmem:[%s1 + $0xc18] sm:$0xff]
    %v448 = vld [vmem:[%s1 + $0xc20] sm:$0xff]
    %v449 = vld [vmem:[%s1 + $0xc28] sm:$0xff]
    %v450 = vld [vmem:[%s1 + $0xc30] sm:$0xff]
    %v451 = vld [vmem:[%s1 + $0xc38] sm:$0xff]
    %v452 = vld [vmem:[%s1 + $0xc40] sm:$0xff]
    %v453 = vld [vmem:[%s1 + $0xc48] sm:$0xff]
    %v454 = vld [vmem:[%s1 + $0xc50] sm:$0xff]
    %v455 = vld [vmem:[%s1 + $0xc58] sm:$0xff]
    %v456 = vld [vmem:[%s1 + $0xc60] sm:$0xff]
    %v457 = vld [vmem:[%s1 + $0xc68] sm:$0xff]
    %v458 = vld [vmem:[%s1 + $0xc70] sm:$0xff]
    %v459 = vld [vmem:[%s1 + $0xc78] sm:$0xff]
    %v460 = vld [vmem:[%s1 + $0xc80] sm:$0xff]
    %v461 = vld [vmem:[%s1 + $0xc88] sm:$0xff]
    %v462 = vld [vmem:[%s1 + $0xc90] sm:$0xff]
    %v463 = vld [vmem:[%s1 + $0xc98] sm:$0xff]
    %v464 = vld [vmem:[%s1 + $0xca0] sm:$0xff]
    %v465 = vld [vmem:[%s1 + $0xca8] sm:$0xff]
    %v466 = vld [vmem:[%s1 + $0xcb0] sm:$0xff]
    %v467 = vld [vmem:[%s1 + $0xcb8] sm:$0xff]
    %v468 = vld [vmem:[%s1 + $0xcc0] sm:$0xff]
    %v469 = vld [vmem:[%s1 + $0xcc8] sm:$0xff]
    %v470 = vld [vmem:[%s1 + $0xcd0] sm:$0xff]
    %v471 = vld [vmem:[%s1 + $0xcd8] sm:$0xff]
    %v472 = vld [vmem:[%s1 + $0xce0] sm:$0xff]
    %v473 = vld [vmem:[%s1 + $0xce8] sm:$0xff]
    %v474 = vld [vmem:[%s1 + $0xcf0] sm:$0xff]
    %v475 = vld [vmem:[%s1 + $0xcf8] sm:$0xff]
    %v476 = vld [vmem:[%s1 + $0xd00] sm:$0xff]
    %v477 = vld [vmem:[%s1 + $0xd08] sm:$0xff]
    %v478 = vld [vmem:[%s1 + $0xd10] sm:$0xff]
    %v479 = vld [vmem:[%s1 + $0xd18] sm:$0xff]
    %v480 = vld [vmem:[%s1 + $0xd20] sm:$0xff]
    %v481 = vld [vmem:[%s1 + $0xd28] sm:$0xff]
    %v482 = vld [vmem:[%s1 + $0xd30] sm:$0xff]
    %v483 = vld [vmem:[%s1 + $0xd38] sm:$0xff]
    %v484 = vld [vmem:[%s1 + $0xd40] sm:$0xff]
    %v485 = vld [vmem:[%s1 + $0xd48] sm:$0xff]
    %v486 = vld [vmem:[%s1 + $0xd50] sm:$0xff]
    %v487 = vld [vmem:[%s1 + $0xd58] sm:$0xff]
    %v488 = vld [vmem:[%s1 + $0xd60] sm:$0xff]
    %v489 = vld [vmem:[%s1 + $0xd68] sm:$0xff]
    %v490 = vld [vmem:[%s1 + $0xd70] sm:$0xff]
    %v491 = vld [vmem:[%s1 + $0xd78] sm:$0xff]
    %v492 = vld [vmem:[%s1 + $0xd80] sm:$0xff]
    %v493 = vld [vmem:[%s1 + $0xd88] sm:$0xff]
    %v494 = vld [vmem:[%s1 + $0xd90] sm:$0xff]
    %v495 = vld [vmem:[%s1 + $0xd98] sm:$0xff]
    %v496 = vld [vmem:[%s1 + $0xda0] sm:$0xff]
    %v497 = vld [vmem:[%s1 + $0xda8] sm:$0xff]
    %v498 = vld [vmem:[%s1 + $0xdb0] sm:$0xff]
    %v499 = vld [vmem:[%s1 + $0xdb8] sm:$0xff]
    %v500 = vld [vmem:[%s1 + $0xdc0] sm:$0xff]
    %v501 = vld [vmem:[%s1 + $0xdc8] sm:$0xff]
    %v502 = vld [vmem:[%s1 + $0xdd0] sm:$0xff]
    %v503 = vld [vmem:[%s1 + $0xdd8] sm:$0xff]
    %v504 = vld [vmem:[%s1 + $0xde0] sm:$0xff]
    %v505 = vld [vmem:[%s1 + $0xde8] sm:$0xff]
    %v506 = vld [vmem:[%s1 + $0xdf0] sm:$0xff]
    %v507 = vld [vmem:[%s1 + $0xdf8] sm:$0xff]
    %v508 = vld [vmem:[%s1 + $0xe00] sm:$0xff]
    %v509 = vld [vmem:[%s1 + $0xe08] sm:$0xff]
    %v510 = vld [vmem:[%s1 + $0xe10] sm:$0xff]
    %v511 = vld [vmem:[%s1 + $0xe18] sm:$0xff]
    %v512 = vld [vmem:[%s1 + $0xe20] sm:$0xff]
    %v513 = vld [vmem:[%s1 + $0xe28] sm:$0xff]
    %v514 = vld [vmem:[%s1 + $0xe30] sm:$0xff]
    %v515 = vld [vmem:[%s1 + $0xe38] sm:$0xff]
    %v516 = vld [vmem:[%s1 + $0xe40] sm:$0xff]
    %v517 = vld [vmem:[%s1 + $0xe48] sm:$0xff]
    %v518 = vld [vmem:[%s1 + $0xe50] sm:$0xff]
    %v519 = vld [vmem:[%s1 + $0xe58] sm:$0xff]
    %v520 = vld [vmem:[%s1 + $0xe60] sm:$0xff]
    %v521 = vld [vmem:[%s1 + $0xe68] sm:$0xff]
    %v522 = vld [vmem:[%s1 + $0xe70] sm:$0xff]
    %v523 = vld [vmem:[%s1 + $0xe78] sm:$0xff]
    %v524 = vld [vmem:[%s1 + $0xe80] sm:$0xff]
    %v525 = vld [vmem:[%s1 + $0xe88] sm:$0xff]
    %v526 = vld [vmem:[%s1 + $0xe90] sm:$0xff]
    %v527 = vld [vmem:[%s1 + $0xe98] sm:$0xff]
    %v528 = vld [vmem:[%s1 + $0xea0] sm:$0xff]
    %v529 = vld [vmem:[%s1 + $0xea8] sm:$0xff]
    %v530 = vld [vmem:[%s1 + $0xeb0] sm:$0xff]
    %v531 = vld [vmem:[%s1 + $0xeb8] sm:$0xff]
    %v532 = vld [vmem:[%s1 + $0xec0] sm:$0xff]
    %v533 = vld [vmem:[%s1 + $0xec8] sm:$0xff]
    %v534 = vld [vmem:[%s1 + $0xed0] sm:$0xff]
    %v535 = vld [vmem:[%s1 + $0xed8] sm:$0xff]
    %v536 = vld [vmem:[%s1 + $0xee0] sm:$0xff]
    %v537 = vld [vmem:[%s1 + $0xee8] sm:$0xff]
    %v538 = vld [vmem:[%s1 + $0xef0] sm:$0xff]
    %v539 = vld [vmem:[%s1 + $0xef8] sm:$0xff]
    %v540 = vld [vmem:[%s1 + $0xf00] sm:$0xff]
    %v541 = vld [vmem:[%s1 + $0xf08] sm:$0xff]
    %v542 = vld [vmem:[%s1 + $0xf10] sm:$0xff]
    %v543 = vld [vmem:[%s1 + $0xf18] sm:$0xff]
    %v544 = vld [vmem:[%s1 + $0xf20] sm:$0xff]
    %v545 = vld [vmem:[%s1 + $0xf28] sm:$0xff]
    %v546 = vld [vmem:[%s1 + $0xf30] sm:$0xff]
    %v547 = vld [vmem:[%s1 + $0xf38] sm:$0xff]
    %v548 = vld [vmem:[%s1 + $0xf40] sm:$0xff]
    %v549 = vld [vmem:[%s1 + $0xf48] sm:$0xff]
    %v550 = vld [vmem:[%s1 + $0xf50] sm:$0xff]
    %v551 = vld [vmem:[%s1 + $0xf58] sm:$0xff]
    %v552 = vld [vmem:[%s1 + $0xf60] sm:$0xff]
    %v553 = vld [vmem:[%s1 + $0xf68] sm:$0xff]
    %v554 = vld [vmem:[%s1 + $0xf70] sm:$0xff]
    %v555 = vld [vmem:[%s1 + $0xf78] sm:$0xff]
    %v556 = vld [vmem:[%s1 + $0xf80] sm:$0xff]
    %v557 = vld [vmem:[%s1 + $0xf88] sm:$0xff]
    %v558 = vld [vmem:[%s1 + $0xf90] sm:$0xff]
    %v559 = vld [vmem:[%s1 + $0xf98] sm:$0xff]
    %v560 = vld [vmem:[%s1 + $0xfa0] sm:$0xff]
    %v561 = vld [vmem:[%s1 + $0xfa8] sm:$0xff]
    %v562 = vld [vmem:[%s1 + $0xfb0] sm:$0xff]
    %v563 = vld [vmem:[%s1 + $0xfb8] sm:$0xff]
    %v564 = vld [vmem:[%s1 + $0xfc0] sm:$0xff]
    %v565 = vld [vmem:[%s1 + $0xfc8] sm:$0xff]
    %v566 = vld [vmem:[%s1 + $0xfd0] sm:$0xff]
    %v567 = vld [vmem:[%s1 + $0xfd8] sm:$0xff]
    %v568 = vld [vmem:[%s1 + $0xfe0] sm:$0xff]
    %v569 = vld [vmem:[%s1 + $0xfe8] sm:$0xff]
    %v570 = vld [vmem:[%s1 + $0xff0] sm:$0xff]
    %v571 = vld [vmem:[%s1 + $0xff8] sm:$0xff]
    %v572 = vld [vmem:[%s1 + $0x1000] sm:$0xff]
    %v573 = vld [vmem:[%s1 + $0x1008] sm:$0xff]
    %v574 = vld [vmem:[%s1 + $0x1010] sm:$0xff]
    %v575 = vld [vmem:[%s1 + $0x1018] sm:$0xff]
    %v576 = vld [vmem:[%s1 + $0x1020] sm:$0xff]
    %v577 = vld [vmem:[%s1 + $0x1028] sm:$0xff]
    %v578 = vld [vmem:[%s1 + $0x1030] sm:$0xff]
    %v579 = vld [vmem:[%s1 + $0x1038] sm:$0xff]
    %v580 = vld [vmem:[%s1 + $0x1040] sm:$0xff]
    %v581 = vld [vmem:[%s1 + $0x1048] sm:$0xff]
    %v582 = vld [vmem:[%s1 + $0x1050] sm:$0xff]
    %v583 = vld [vmem:[%s1 + $0x1058] sm:$0xff]
    %v584 = vld [vmem:[%s1 + $0x1060] sm:$0xff]
    %v585 = vld [vmem:[%s1 + $0x1068] sm:$0xff]
    %v586 = vld [vmem:[%s1 + $0x1070] sm:$0xff]
    %v587 = vld [vmem:[%s1 + $0x1078] sm:$0xff]
    %v588 = vld [vmem:[%s1 + $0x1080] sm:$0xff]
    %v589 = vld [vmem:[%s1 + $0x1088] sm:$0xff]
    %v590 = vld [vmem:[%s1 + $0x1090] sm:$0xff]
    %v591 = vld [vmem:[%s1 + $0x1098] sm:$0xff]
    %v592 = vld [vmem:[%s1 + $0x10a0] sm:$0xff]
    %v593 = vld [vmem:[%s1 + $0x10a8] sm:$0xff]
    %v594 = vld [vmem:[%s1 + $0x10b0] sm:$0xff]
    %v595 = vld [vmem:[%s1 + $0x10b8] sm:$0xff]
    %v596 = vld [vmem:[%s1 + $0x10c0] sm:$0xff]
    %v597 = vld [vmem:[%s1 + $0x10c8] sm:$0xff]
    %v598 = vld [vmem:[%s1 + $0x10d0] sm:$0xff]
    %v599 = vld [vmem:[%s1 + $0x10d8] sm:$0xff]
    %v600 = vld [vmem:[%s1 + $0x10e0] sm:$0xff]
    %v601 = vld [vmem:[%s1 + $0x10e8] sm:$0xff]
    %v602 = vld [vmem:[%s1 + $0x10f0] sm:$0xff]
    %v603 = vld [vmem:[%s1 + $0x10f8] sm:$0xff]
    %v604 = vld [vmem:[%s1 + $0x1100] sm:$0xff]
    %v605 = vld [vmem:[%s1 + $0x1108] sm:$0xff]
    %v606 = vld [vmem:[%s1 + $0x1110] sm:$0xff]
    %v607 = vld [vmem:[%s1 + $0x1118] sm:$0xff]
    %v608 = vld [vmem:[%s1 + $0x1120] sm:$0xff]
    %v609 = vld [vmem:[%s1 + $0x1128] sm:$0xff]
    %v610 = vld [vmem:[%s1 + $0x1130] sm:$0xff]
    %v611 = vld [vmem:[%s1 + $0x1138] sm:$0xff]
    %v612 = vld [vmem:[%s1 + $0x1140] sm:$0xff]
    %v613 = vld [vmem:[%s1 + $0x1148] sm:$0xff]
    %v614 = vld [vmem:[%s1 + $0x1150] sm:$0xff]
    %v615 = vld [vmem:[%s1 + $0x1158] sm:$0xff]
    %v616 = vld [vmem:[%s1 + $0x1160] sm:$0xff]
    %v617 = vld [vmem:[%s1 + $0x1168] sm:$0xff]
    %v618 = vld [vmem:[%s1 + $0x1170] sm:$0xff]
    %v619 = vld [vmem:[%s1 + $0x1178] sm:$0xff]
    %v620 = vld [vmem:[%s1 + $0x1180] sm:$0xff]
    %v621 = vld [vmem:[%s1 + $0x1188] sm:$0xff]
    %v622 = vld [vmem:[%s1 + $0x1190] sm:$0xff]
    %v623 = vld [vmem:[%s1 + $0x1198] sm:$0xff]
    %v624 = vld [vmem:[%s1 + $0x11a0] sm:$0xff]
    %v625 = vld [vmem:[%s1 + $0x11a8] sm:$0xff]
    %v626 = vld [vmem:[%s1 + $0x11b0] sm:$0xff]
    %v627 = vld [vmem:[%s1 + $0x11b8] sm:$0xff]
    %v628 = vld [vmem:[%s1 + $0x11c0] sm:$0xff]
    %v629 = vld [vmem:[%s1 + $0x11c8] sm:$0xff]
    %v630 = vld [vmem:[%s1 + $0x11d0] sm:$0xff]
    %v631 = vld [vmem:[%s1 + $0x11d8] sm:$0xff]
    %v632 = vld [vmem:[%s1 + $0x11e0] sm:$0xff]
    %v633 = vld [vmem:[%s1 + $0x11e8] sm:$0xff]
    %v634 = vld [vmem:[%s1 + $0x11f0] sm:$0xff]
    %v635 = vld [vmem:[%s1 + $0x11f8] sm:$0xff]
    %v636 = vld [vmem:[%s1 + $0x1200] sm:$0xff]
    %v637 = vld [vmem:[%s1 + $0x1208] sm:$0xff]
    %v638 = vld [vmem:[%s1 + $0x1210] sm:$0xff]
    %v639 = vld [vmem:[%s1 + $0x1218] sm:$0xff]
    %v640 = vld [vmem:[%s1 + $0x1220] sm:$0xff]
    %v641 = vld [vmem:[%s1 + $0x1228] sm:$0xff]
    %v642 = vld [vmem:[%s1 + $0x1230] sm:$0xff]
    %v643 = vld [vmem:[%s1 + $0x1238] sm:$0xff]
    %v644 = vld [vmem:[%s1 + $0x1240] sm:$0xff]
    %v645 = vld [vmem:[%s1 + $0x1248] sm:$0xff]
    %v646 = vld [vmem:[%s1 + $0x1250] sm:$0xff]
    %v647 = vld [vmem:[%s1 + $0x1258] sm:$0xff]
    %v648 = vld [vmem:[%s1 + $0x1260] sm:$0xff]
    %v649 = vld [vmem:[%s1 + $0x1268] sm:$0xff]
    %v650 = vld [vmem:[%s1 + $0x1270] sm:$0xff]
    %v651 = vld [vmem:[%s1 + $0x1278] sm:$0xff]
    %v652 = vld [vmem:[%s1 + $0x1280] sm:$0xff]
    %v653 = vld [vmem:[%s1 + $0x1288] sm:$0xff]
    %v654 = vld [vmem:[%s1 + $0x1290] sm:$0xff]
    %v655 = vld [vmem:[%s1 + $0x1298] sm:$0xff]
    %v656 = vld [vmem:[%s1 + $0x12a0] sm:$0xff]
    %v657 = vld [vmem:[%s1 + $0x12a8] sm:$0xff]
    %v658 = vld [vmem:[%s1 + $0x12b0] sm:$0xff]
    %v659 = vld [vmem:[%s1 + $0x12b8] sm:$0xff]
    %v660 = vld [vmem:[%s1 + $0x12c0] sm:$0xff]
    %v661 = vld [vmem:[%s1 + $0x12c8] sm:$0xff]
    %v662 = vld [vmem:[%s1 + $0x12d0] sm:$0xff]
    %v663 = vld [vmem:[%s1 + $0x12d8] sm:$0xff]
    %v664 = vld [vmem:[%s1 + $0x12e0] sm:$0xff]
    %v665 = vld [vmem:[%s1 + $0x12e8] sm:$0xff]
    %v666 = vld [vmem:[%s1 + $0x12f0] sm:$0xff]
    %v667 = vld [vmem:[%s1 + $0x12f8] sm:$0xff]
    %v668 = vld [vmem:[%s1 + $0x1300] sm:$0xff]
    %v669 = vld [vmem:[%s1 + $0x1308] sm:$0xff]
    %v670 = vld [vmem:[%s1 + $0x1310] sm:$0xff]
    %v671 = vld [vmem:[%s1 + $0x1318] sm:$0xff]
    %v672 = vld [vmem:[%s1 + $0x1320] sm:$0xff]
    %v673 = vld [vmem:[%s1 + $0x1328] sm:$0xff]
    %v674 = vld [vmem:[%s1 + $0x1330] sm:$0xff]
    %v675 = vld [vmem:[%s1 + $0x1338] sm:$0xff]
    %v676 = vld [vmem:[%s1 + $0x1340] sm:$0xff]
    %v677 = vld [vmem:[%s1 + $0x1348] sm:$0xff]
    %v678 = vld [vmem:[%s1 + $0x1350] sm:$0xff]
    %v679 = vld [vmem:[%s1 + $0x1358] sm:$0xff]
    %v680 = vld [vmem:[%s1 + $0x1360] sm:$0xff]
    %v681 = vld [vmem:[%s1 + $0x1368] sm:$0xff]
    %v682 = vld [vmem:[%s1 + $0x1370] sm:$0xff]
    %v683 = vld [vmem:[%s1 + $0x1378] sm:$0xff]
    %v684 = vld [vmem:[%s1 + $0x1380] sm:$0xff]
    %v685 = vld [vmem:[%s1 + $0x1388] sm:$0xff]
    %v686 = vld [vmem:[%s1 + $0x1390] sm:$0xff]
    %v687 = vld [vmem:[%s1 + $0x1398] sm:$0xff]
    %v688 = vld [vmem:[%s1 + $0x13a0] sm:$0xff]
    %v689 = vld [vmem:[%s1 + $0x13a8] sm:$0xff]
    %v690 = vld [vmem:[%s1 + $0x13b0] sm:$0xff]
    %v691 = vld [vmem:[%s1 + $0x13b8] sm:$0xff]
    %v692 = vld [vmem:[%s1 + $0x13c0] sm:$0xff]
    %v693 = vld [vmem:[%s1 + $0x13c8] sm:$0xff]
    %v694 = vld [vmem:[%s1 + $0x13d0] sm:$0xff]
    %v695 = vld [vmem:[%s1 + $0x13d8] sm:$0xff]
    %v696 = vld [vmem:[%s1 + $0x13e0] sm:$0xff]
    %v697 = vld [vmem:[%s1 + $0x13e8] sm:$0xff]
    %v698 = vld [vmem:[%s1 + $0x13f0] sm:$0xff]
    %v699 = vld [vmem:[%s1 + $0x13f8] sm:$0xff]
    %v700 = vld [vmem:[%s1 + $0x1400] sm:$0xff]
    %v701 = vld [vmem:[%s1 + $0x1408] sm:$0xff]
    %v702 = vld [vmem:[%s1 + $0x1410] sm:$0xff]
    %v703 = vld [vmem:[%s1 + $0x1418] sm:$0xff]
    %v704 = vld [vmem:[%s1 + $0x1420] sm:$0xff]
    %v705 = vld [vmem:[%s1 + $0x1428] sm:$0xff]
    %v706 = vld [vmem:[%s1 + $0x1430] sm:$0xff]
    %v707 = vld [vmem:[%s1 + $0x1438] sm:$0xff]
    %v708 = vld [vmem:[%s1 + $0x1440] sm:$0xff]
    %v709 = vld [vmem:[%s1 + $0x1448] sm:$0xff]
    %v710 = vld [vmem:[%s1 + $0x1450] sm:$0xff]
    %v711 = vld [vmem:[%s1 + $0x1458] sm:$0xff]
    %v712 = vld [vmem:[%s1 + $0x1460] sm:$0xff]
    %v713 = vld [vmem:[%s1 + $0x1468] sm:$0xff]
    %v714 = vld [vmem:[%s1 + $0x1470] sm:$0xff]
    %v715 = vld [vmem:[%s1 + $0x1478] sm:$0xff]
    %v716 = vld [vmem:[%s1 + $0x1480] sm:$0xff]
    %v717 = vld [vmem:[%s1 + $0x1488] sm:$0xff]
    %v718 = vld [vmem:[%s1 + $0x1490] sm:$0xff]
    %v719 = vld [vmem:[%s1 + $0x1498] sm:$0xff]
    %v720 = vld [vmem:[%s1 + $0x14a0] sm:$0xff]
    %v721 = vld [vmem:[%s1 + $0x14a8] sm:$0xff]
    %v722 = vld [vmem:[%s1 + $0x14b0] sm:$0xff]
    %v723 = vld [vmem:[%s1 + $0x14b8] sm:$0xff]
    %v724 = vld [vmem:[%s1 + $0x14c0] sm:$0xff]
    %v725 = vld [vmem:[%s1 + $0x14c8] sm:$0xff]
    %v726 = vld [vmem:[%s1 + $0x14d0] sm:$0xff]
    %v727 = vld [vmem:[%s1 + $0x14d8] sm:$0xff]
    %v728 = vld [vmem:[%s1 + $0x14e0] sm:$0xff]
    %v729 = vld [vmem:[%s1 + $0x14e8] sm:$0xff]
    %v730 = vld [vmem:[%s1 + $0x14f0] sm:$0xff]
    %v731 = vld [vmem:[%s1 + $0x14f8] sm:$0xff]
    %v732 = vld [vmem:[%s1 + $0x1500] sm:$0xff]
    %v733 = vld [vmem:[%s1 + $0x1508] sm:$0xff]
    %v734 = vld [vmem:[%s1 + $0x1510] sm:$0xff]
    %v735 = vld [vmem:[%s1 + $0x1518] sm:$0xff]
    %v736 = vld [vmem:[%s1 + $0x1520] sm:$0xff]
    %v737 = vld [vmem:[%s1 + $0x1528] sm:$0xff]
    %v738 = vld [vmem:[%s1 + $0x1530] sm:$0xff]
    %v739 = vld [vmem:[%s1 + $0x1538] sm:$0xff]
    %v740 = vld [vmem:[%s1 + $0x1540] sm:$0xff]
    %v741 = vld [vmem:[%s1 + $0x1548] sm:$0xff]
    %v742 = vld [vmem:[%s1 + $0x1550] sm:$0xff]
    %v743 = vld [vmem:[%s1 + $0x1558] sm:$0xff]
    %v744 = vld [vmem:[%s1 + $0x1560] sm:$0xff]
    %v745 = vld [vmem:[%s1 + $0x1568] sm:$0xff]
    %v746 = vld [vmem:[%s1 + $0x1570] sm:$0xff]
    %v747 = vld [vmem:[%s1 + $0x1578] sm:$0xff]
    %v748 = vld [vmem:[%s1 + $0x1580] sm:$0xff]
    %v749 = vld [vmem:[%s1 + $0x1588] sm:$0xff]
    %v750 = vld [vmem:[%s1 + $0x1590] sm:$0xff]
    %v751 = vld [vmem:[%s1 + $0x1598] sm:$0xff]
    %v752 = vld [vmem:[%s1 + $0x15a0] sm:$0xff]
    %v753 = vld [vmem:[%s1 + $0x15a8] sm:$0xff]
    %v754 = vld [vmem:[%s1 + $0x15b0] sm:$0xff]
    %v755 = vld [vmem:[%s1 + $0x15b8] sm:$0xff]
    %v756 = vld [vmem:[%s1 + $0x15c0] sm:$0xff]
    %v757 = vld [vmem:[%s1 + $0x15c8] sm:$0xff]
    %v758 = vld [vmem:[%s1 + $0x15d0] sm:$0xff]
    %v759 = vld [vmem:[%s1 + $0x15d8] sm:$0xff]
    %v760 = vld [vmem:[%s1 + $0x15e0] sm:$0xff]
    %v761 = vld [vmem:[%s1 + $0x15e8] sm:$0xff]
    %v762 = vld [vmem:[%s1 + $0x15f0] sm:$0xff]
    %v763 = vld [vmem:[%s1 + $0x15f8] sm:$0xff]
    %v764 = vld [vmem:[%s1 + $0x1600] sm:$0xff]
    %v765 = vld [vmem:[%s1 + $0x1608] sm:$0xff]
    %v766 = vld [vmem:[%s1 + $0x1610] sm:$0xff]
    %v767 = vld [vmem:[%s1 + $0x1618] sm:$0xff]
    %v768 = vld [vmem:[%s1 + $0x1620] sm:$0xff]
    %v769 = vld [vmem:[%s1 + $0x1628] sm:$0xff]
    %v770 = vld [vmem:[%s1 + $0x1630] sm:$0xff]
    %v771 = vld [vmem:[%s1 + $0x1638] sm:$0xff]
    %v772 = vld [vmem:[%s1 + $0x1640] sm:$0xff]
    %v773 = vld [vmem:[%s1 + $0x1648] sm:$0xff]
    %v774 = vld [vmem:[%s1 + $0x1650] sm:$0xff]
    %v775 = vld [vmem:[%s1 + $0x1658] sm:$0xff]
    %v776 = vld [vmem:[%s1 + $0x1660] sm:$0xff]
    %v777 = vld [vmem:[%s1 + $0x1668] sm:$0xff]
    %v778 = vld [vmem:[%s1 + $0x1670] sm:$0xff]
    %v779 = vld [vmem:[%s1 + $0x1678] sm:$0xff]
    %v780 = vld [vmem:[%s1 + $0x1680] sm:$0xff]
    %v781 = vld [vmem:[%s1 + $0x1688] sm:$0xff]
    %v782 = vld [vmem:[%s1 + $0x1690] sm:$0xff]
    %v783 = vld [vmem:[%s1 + $0x1698] sm:$0xff]
    %v784 = vld [vmem:[%s1 + $0x16a0] sm:$0xff]
    %v785 = vld [vmem:[%s1 + $0x16a8] sm:$0xff]
    %v786 = vld [vmem:[%s1 + $0x16b0] sm:$0xff]
    %v787 = vld [vmem:[%s1 + $0x16b8] sm:$0xff]
    %v788 = vld [vmem:[%s1 + $0x16c0] sm:$0xff]
    %v789 = vld [vmem:[%s1 + $0x16c8] sm:$0xff]
    %v790 = vld [vmem:[%s1 + $0x16d0] sm:$0xff]
    %v791 = vld [vmem:[%s1 + $0x16d8] sm:$0xff]
    %v792 = vld [vmem:[%s1 + $0x16e0] sm:$0xff]
    %v793 = vld [vmem:[%s1 + $0x16e8] sm:$0xff]
    %v794 = vld [vmem:[%s1 + $0x16f0] sm:$0xff]
    %v795 = vld [vmem:[%s1 + $0x16f8] sm:$0xff]
    %v796 = vld [vmem:[%s1 + $0x1700] sm:$0xff]
    %v797 = vld [vmem:[%s1 + $0x1708] sm:$0xff]
    %v798 = vld [vmem:[%s1 + $0x1710] sm:$0xff]
    %v799 = vld [vmem:[%s1 + $0x1718] sm:$0xff]
    %v800 = vld [vmem:[%s1 + $0x1720] sm:$0xff]
    %v801 = vld [vmem:[%s1 + $0x1728] sm:$0xff]
    %v802 = vld [vmem:[%s1 + $0x1730] sm:$0xff]
    %v803 = vld [vmem:[%s1 + $0x1738] sm:$0xff]
    %v804 = vld [vmem:[%s1 + $0x1740] sm:$0xff]
    %v805 = vld [vmem:[%s1 + $0x1748] sm:$0xff]
    %v806 = vld [vmem:[%s1 + $0x1750] sm:$0xff]
    %v807 = vld [vmem:[%s1 + $0x1758] sm:$0xff]
    %v808 = vld [vmem:[%s1 + $0x1760] sm:$0xff]
    %v809 = vld [vmem:[%s1 + $0x1768] sm:$0xff]
    %v810 = vld [vmem:[%s1 + $0x1770] sm:$0xff]
    %v811 = vld [vmem:[%s1 + $0x1778] sm:$0xff]
    %v812 = vld [vmem:[%s1 + $0x1780] sm:$0xff]
    %v813 = vld [vmem:[%s1 + $0x1788] sm:$0xff]
    %v814 = vld [vmem:[%s1 + $0x1790] sm:$0xff]
    %v815 = vld [vmem:[%s1 + $0x1798] sm:$0xff]
    %v816 = vld [vmem:[%s1 + $0x17a0] sm:$0xff]
    %v817 = vld [vmem:[%s1 + $0x17a8] sm:$0xff]
    %v818 = vld [vmem:[%s1 + $0x17b0] sm:$0xff]
    %v819 = vld [vmem:[%s1 + $0x17b8] sm:$0xff]
    %v820 = vld [vmem:[%s1 + $0x17c0] sm:$0xff]
    %v821 = vld [vmem:[%s1 + $0x17c8] sm:$0xff]
    %v822 = vld [vmem:[%s1 + $0x17d0] sm:$0xff]
    %v823 = vld [vmem:[%s1 + $0x17d8] sm:$0xff]
    %v824 = vld [vmem:[%s1 + $0x17e0] sm:$0xff]
    %v825 = vld [vmem:[%s1 + $0x17e8] sm:$0xff]
    %v826 = vld [vmem:[%s1 + $0x17f0] sm:$0xff]
    %v827 = vld [vmem:[%s1 + $0x17f8] sm:$0xff]
    %v828 = vld [vmem:[%s1 + $0x1800] sm:$0xff]
    %v829 = vld [vmem:[%s1 + $0x1808] sm:$0xff]
    %v830 = vld [vmem:[%s1 + $0x1810] sm:$0xff]
    %v831 = vld [vmem:[%s1 + $0x1818] sm:$0xff]
    %v832 = vld [vmem:[%s1 + $0x1820] sm:$0xff]
    %v833 = vld [vmem:[%s1 + $0x1828] sm:$0xff]
    %v834 = vld [vmem:[%s1 + $0x1830] sm:$0xff]
    %v835 = vld [vmem:[%s1 + $0x1838] sm:$0xff]
    %v836 = vld [vmem:[%s1 + $0x1840] sm:$0xff]
    %v837 = vld [vmem:[%s1 + $0x1848] sm:$0xff]
    %v838 = vld [vmem:[%s1 + $0x1850] sm:$0xff]
    %v839 = vld [vmem:[%s1 + $0x1858] sm:$0xff]
    %v840 = vld [vmem:[%s1 + $0x1860] sm:$0xff]
    %v841 = vld [vmem:[%s1 + $0x1868] sm:$0xff]
    %v842 = vld [vmem:[%s1 + $0x1870] sm:$0xff]
    %v843 = vld [vmem:[%s1 + $0x1878] sm:$0xff]
    %v844 = vld [vmem:[%s2] sm:$0xf]
    %v846 = vlaneseq
    %v847 = vshrl.u32 %v846, 7
    %v848 = vsub.s32 0, %v847
    %v849 = vrot.slane %v844, %v848
    %v850 = vlaneseq
    %v851 = vshrl.u32 %v850, 7
    %v852 = vsub.s32 1, %v851
    %v853 = vrot.slane %v844, %v852
    %v854 = vlaneseq
    %v855 = vshrl.u32 %v854, 7
    %v856 = vsub.s32 2, %v855
    %v857 = vrot.slane %v844, %v856
    %v858 = vlaneseq
    %v859 = vshrl.u32 %v858, 7
    %v860 = vsub.s32 3, %v859
    %v861 = vrot.slane %v844, %v860
    %v898 = vcombine.low %v28, %v32
    %v899 = vcombine.high %v28, %v32
    %v900 = vcombine.low %v36, %v40
    %v901 = vcombine.high %v36, %v40
    %v902 = vcombine.low %v44, %v48
    %v903 = vcombine.high %v44, %v48
    %v904 = vcombine.low %v52, %v56
    %v905 = vcombine.high %v52, %v56
    %v907 = vunpack.c.l.s4 1966171168
    %v908 = vunpack.c.0.s8 %v907
    %v909 = vlaneseq
    %v910 = vshrl.u32 %v909, 7
    %v911 = vsub.s32 %v908, %v910
    %v912 = vrot.slane %v898, %v911
    %v914 = vunpack.c.l.s4 1966171168
    %v915 = vunpack.c.0.s8 %v914
    %v916 = vlaneseq
    %v917 = vshrl.u32 %v916, 7
    %v918 = vsub.s32 %v915, %v917
    %v919 = vrot.slane %v899, %v918
    %v921 = vunpack.c.l.s4 1966171168
    %v922 = vunpack.c.0.s8 %v921
    %v923 = vlaneseq
    %v924 = vshrl.u32 %v923, 7
    %v925 = vsub.s32 %v922, %v924
    %v926 = vrot.slane %v900, %v925
    %v928 = vunpack.c.l.s4 1966171168
    %v929 = vunpack.c.0.s8 %v928
    %v930 = vlaneseq
    %v931 = vshrl.u32 %v930, 7
    %v932 = vsub.s32 %v929, %v931
    %v933 = vrot.slane %v901, %v932
    %v935 = vunpack.c.l.s4 1966171168
    %v936 = vunpack.c.0.s8 %v935
    %v937 = vlaneseq
    %v938 = vshrl.u32 %v937, 7
    %v939 = vsub.s32 %v936, %v938
    %v940 = vrot.slane %v902, %v939
    %v942 = vunpack.c.l.s4 1966171168
    %v943 = vunpack.c.0.s8 %v942
    %v944 = vlaneseq
    %v945 = vshrl.u32 %v944, 7
    %v946 = vsub.s32 %v943, %v945
    %v947 = vrot.slane %v903, %v946
    %v949 = vunpack.c.l.s4 1966171168
    %v950 = vunpack.c.0.s8 %v949
    %v951 = vlaneseq
    %v952 = vshrl.u32 %v951, 7
    %v953 = vsub.s32 %v950, %v952
    %v954 = vrot.slane %v904, %v953
    %v956 = vunpack.c.l.s4 1966171168
    %v957 = vunpack.c.0.s8 %v956
    %v958 = vlaneseq
    %v959 = vshrl.u32 %v958, 7
    %v960 = vsub.s32 %v957, %v959
    %v961 = vrot.slane %v905, %v960
    %v962 = vcombine.low %v912, %v926
    %v963 = vcombine.high %v912, %v926
    %v964 = vcombine.low %v919, %v933
    %v965 = vcombine.high %v919, %v933
    %v966 = vcombine.low %v940, %v954
    %v967 = vcombine.high %v940, %v954
    %v968 = vcombine.low %v947, %v961
    %v969 = vcombine.high %v947, %v961
    %v971 = vunpack.c.l.s4 1966171168
    %v972 = vunpack.c.0.s8 %v971
    %v973 = vlaneseq
    %v974 = vshrl.u32 %v973, 7
    %v975 = vsub.s32 %v972, %v974
    %v976 = vrot.slane %v962, %v975
    %v978 = vunpack.c.l.s4 1966171168
    %v979 = vunpack.c.0.s8 %v978
    %v980 = vlaneseq
    %v981 = vshrl.u32 %v980, 7
    %v982 = vsub.s32 %v979, %v981
    %v983 = vrot.slane %v964, %v982
    %v985 = vunpack.c.l.s4 1966171168
    %v986 = vunpack.c.0.s8 %v985
    %v987 = vlaneseq
    %v988 = vshrl.u32 %v987, 7
    %v989 = vsub.s32 %v986, %v988
    %v990 = vrot.slane %v963, %v989
    %v992 = vunpack.c.l.s4 1966171168
    %v993 = vunpack.c.0.s8 %v992
    %v994 = vlaneseq
    %v995 = vshrl.u32 %v994, 7
    %v996 = vsub.s32 %v993, %v995
    %v997 = vrot.slane %v965, %v996
    %v999 = vunpack.c.l.s4 1966171168
    %v1000 = vunpack.c.0.s8 %v999
    %v1001 = vlaneseq
    %v1002 = vshrl.u32 %v1001, 7
    %v1003 = vsub.s32 %v1000, %v1002
    %v1004 = vrot.slane %v966, %v1003
    %v1006 = vunpack.c.l.s4 1966171168
    %v1007 = vunpack.c.0.s8 %v1006
    %v1008 = vlaneseq
    %v1009 = vshrl.u32 %v1008, 7
    %v1010 = vsub.s32 %v1007, %v1009
    %v1011 = vrot.slane %v968, %v1010
    %v1013 = vunpack.c.l.s4 1966171168
    %v1014 = vunpack.c.0.s8 %v1013
    %v1015 = vlaneseq
    %v1016 = vshrl.u32 %v1015, 7
    %v1017 = vsub.s32 %v1014, %v1016
    %v1018 = vrot.slane %v967, %v1017
    %v1020 = vunpack.c.l.s4 1966171168
    %v1021 = vunpack.c.0.s8 %v1020
    %v1022 = vlaneseq
    %v1023 = vshrl.u32 %v1022, 7
    %v1024 = vsub.s32 %v1021, %v1023
    %v1025 = vrot.slane %v969, %v1024
    %v1026 = vcombine.low %v976, %v1004
    %v1027 = vcombine.high %v976, %v1004
    %v1028 = vcombine.low %v983, %v1011
    %v1029 = vcombine.high %v983, %v1011
    %v1030 = vcombine.low %v990, %v1018
    %v1031 = vcombine.high %v990, %v1018
    %v1032 = vcombine.low %v997, %v1025
    %v1033 = vcombine.high %v997, %v1025
    %v1034 = vcombine.low %v29, %v33
    %v1035 = vcombine.high %v29, %v33
    %v1036 = vcombine.low %v37, %v41
    %v1037 = vcombine.high %v37, %v41
    %v1038 = vcombine.low %v45, %v49
    %v1039 = vcombine.high %v45, %v49
    %v1040 = vcombine.low %v53, %v57
    %v1041 = vcombine.high %v53, %v57
    %v1043 = vunpack.c.l.s4 1966171168
    %v1044 = vunpack.c.0.s8 %v1043
    %v1045 = vlaneseq
    %v1046 = vshrl.u32 %v1045, 7
    %v1047 = vsub.s32 %v1044, %v1046
    %v1048 = vrot.slane %v1034, %v1047
    %v1050 = vunpack.c.l.s4 1966171168
    %v1051 = vunpack.c.0.s8 %v1050
    %v1052 = vlaneseq
    %v1053 = vshrl.u32 %v1052, 7
    %v1054 = vsub.s32 %v1051, %v1053
    %v1055 = vrot.slane %v1035, %v1054
    %v1057 = vunpack.c.l.s4 1966171168
    %v1058 = vunpack.c.0.s8 %v1057
    %v1059 = vlaneseq
    %v1060 = vshrl.u32 %v1059, 7
    %v1061 = vsub.s32 %v1058, %v1060
    %v1062 = vrot.slane %v1036, %v1061
    %v1064 = vunpack.c.l.s4 1966171168
    %v1065 = vunpack.c.0.s8 %v1064
    %v1066 = vlaneseq
    %v1067 = vshrl.u32 %v1066, 7
    %v1068 = vsub.s32 %v1065, %v1067
    %v1069 = vrot.slane %v1037, %v1068
    %v1071 = vunpack.c.l.s4 1966171168
    %v1072 = vunpack.c.0.s8 %v1071
    %v1073 = vlaneseq
    %v1074 = vshrl.u32 %v1073, 7
    %v1075 = vsub.s32 %v1072, %v1074
    %v1076 = vrot.slane %v1038, %v1075
    %v1078 = vunpack.c.l.s4 1966171168
    %v1079 = vunpack.c.0.s8 %v1078
    %v1080 = vlaneseq
    %v1081 = vshrl.u32 %v1080, 7
    %v1082 = vsub.s32 %v1079, %v1081
    %v1083 = vrot.slane %v1039, %v1082
    %v1085 = vunpack.c.l.s4 1966171168
    %v1086 = vunpack.c.0.s8 %v1085
    %v1087 = vlaneseq
    %v1088 = vshrl.u32 %v1087, 7
    %v1089 = vsub.s32 %v1086, %v1088
    %v1090 = vrot.slane %v1040, %v1089
    %v1092 = vunpack.c.l.s4 1966171168
    %v1093 = vunpack.c.0.s8 %v1092
    %v1094 = vlaneseq
    %v1095 = vshrl.u32 %v1094, 7
    %v1096 = vsub.s32 %v1093, %v1095
    %v1097 = vrot.slane %v1041, %v1096
    %v1098 = vcombine.low %v1048, %v1062
    %v1099 = vcombine.high %v1048, %v1062
    %v1100 = vcombine.low %v1055, %v1069
    %v1101 = vcombine.high %v1055, %v1069
    %v1102 = vcombine.low %v1076, %v1090
    %v1103 = vcombine.high %v1076, %v1090
    %v1104 = vcombine.low %v1083, %v1097
    %v1105 = vcombine.high %v1083, %v1097
    %v1107 = vunpack.c.l.s4 1966171168
    %v1108 = vunpack.c.0.s8 %v1107
    %v1109 = vlaneseq
    %v1110 = vshrl.u32 %v1109, 7
    %v1111 = vsub.s32 %v1108, %v1110
    %v1112 = vrot.slane %v1098, %v1111
    %v1114 = vunpack.c.l.s4 1966171168
    %v1115 = vunpack.c.0.s8 %v1114
    %v1116 = vlaneseq
    %v1117 = vshrl.u32 %v1116, 7
    %v1118 = vsub.s32 %v1115, %v1117
    %v1119 = vrot.slane %v1100, %v1118
    %v1121 = vunpack.c.l.s4 1966171168
    %v1122 = vunpack.c.0.s8 %v1121
    %v1123 = vlaneseq
    %v1124 = vshrl.u32 %v1123, 7
    %v1125 = vsub.s32 %v1122, %v1124
    %v1126 = vrot.slane %v1099, %v1125
    %v1128 = vunpack.c.l.s4 1966171168
    %v1129 = vunpack.c.0.s8 %v1128
    %v1130 = vlaneseq
    %v1131 = vshrl.u32 %v1130, 7
    %v1132 = vsub.s32 %v1129, %v1131
    %v1133 = vrot.slane %v1101, %v1132
    %v1135 = vunpack.c.l.s4 1966171168
    %v1136 = vunpack.c.0.s8 %v1135
    %v1137 = vlaneseq
    %v1138 = vshrl.u32 %v1137, 7
    %v1139 = vsub.s32 %v1136, %v1138
    %v1140 = vrot.slane %v1102, %v1139
    %v1142 = vunpack.c.l.s4 1966171168
    %v1143 = vunpack.c.0.s8 %v1142
    %v1144 = vlaneseq
    %v1145 = vshrl.u32 %v1144, 7
    %v1146 = vsub.s32 %v1143, %v1145
    %v1147 = vrot.slane %v1104, %v1146
    %v1149 = vunpack.c.l.s4 1966171168
    %v1150 = vunpack.c.0.s8 %v1149
    %v1151 = vlaneseq
    %v1152 = vshrl.u32 %v1151, 7
    %v1153 = vsub.s32 %v1150, %v1152
    %v1154 = vrot.slane %v1103, %v1153
    %v1156 = vunpack.c.l.s4 1966171168
    %v1157 = vunpack.c.0.s8 %v1156
    %v1158 = vlaneseq
    %v1159 = vshrl.u32 %v1158, 7
    %v1160 = vsub.s32 %v1157, %v1159
    %v1161 = vrot.slane %v1105, %v1160
    %v1162 = vcombine.low %v1112, %v1140
    %v1163 = vcombine.high %v1112, %v1140
    %v1164 = vcombine.low %v1119, %v1147
    %v1165 = vcombine.high %v1119, %v1147
    %v1166 = vcombine.low %v1126, %v1154
    %v1167 = vcombine.high %v1126, %v1154
    %v1168 = vcombine.low %v1133, %v1161
    %v1169 = vcombine.high %v1133, %v1161
    %v1170 = vcombine.low %v30, %v34
    %v1171 = vcombine.high %v30, %v34
    %v1172 = vcombine.low %v38, %v42
    %v1173 = vcombine.high %v38, %v42
    %v1174 = vcombine.low %v46, %v50
    %v1175 = vcombine.high %v46, %v50
    %v1176 = vcombine.low %v54, %v58
    %v1177 = vcombine.high %v54, %v58
    %v1179 = vunpack.c.l.s4 1966171168
    %v1180 = vunpack.c.0.s8 %v1179
    %v1181 = vlaneseq
    %v1182 = vshrl.u32 %v1181, 7
    %v1183 = vsub.s32 %v1180, %v1182
    %v1184 = vrot.slane %v1170, %v1183
    %v1186 = vunpack.c.l.s4 1966171168
    %v1187 = vunpack.c.0.s8 %v1186
    %v1188 = vlaneseq
    %v1189 = vshrl.u32 %v1188, 7
    %v1190 = vsub.s32 %v1187, %v1189
    %v1191 = vrot.slane %v1171, %v1190
    %v1193 = vunpack.c.l.s4 1966171168
    %v1194 = vunpack.c.0.s8 %v1193
    %v1195 = vlaneseq
    %v1196 = vshrl.u32 %v1195, 7
    %v1197 = vsub.s32 %v1194, %v1196
    %v1198 = vrot.slane %v1172, %v1197
    %v1200 = vunpack.c.l.s4 1966171168
    %v1201 = vunpack.c.0.s8 %v1200
    %v1202 = vlaneseq
    %v1203 = vshrl.u32 %v1202, 7
    %v1204 = vsub.s32 %v1201, %v1203
    %v1205 = vrot.slane %v1173, %v1204
    %v1207 = vunpack.c.l.s4 1966171168
    %v1208 = vunpack.c.0.s8 %v1207
    %v1209 = vlaneseq
    %v1210 = vshrl.u32 %v1209, 7
    %v1211 = vsub.s32 %v1208, %v1210
    %v1212 = vrot.slane %v1174, %v1211
    %v1214 = vunpack.c.l.s4 1966171168
    %v1215 = vunpack.c.0.s8 %v1214
    %v1216 = vlaneseq
    %v1217 = vshrl.u32 %v1216, 7
    %v1218 = vsub.s32 %v1215, %v1217
    %v1219 = vrot.slane %v1175, %v1218
    %v1221 = vunpack.c.l.s4 1966171168
    %v1222 = vunpack.c.0.s8 %v1221
    %v1223 = vlaneseq
    %v1224 = vshrl.u32 %v1223, 7
    %v1225 = vsub.s32 %v1222, %v1224
    %v1226 = vrot.slane %v1176, %v1225
    %v1228 = vunpack.c.l.s4 1966171168
    %v1229 = vunpack.c.0.s8 %v1228
    %v1230 = vlaneseq
    %v1231 = vshrl.u32 %v1230, 7
    %v1232 = vsub.s32 %v1229, %v1231
    %v1233 = vrot.slane %v1177, %v1232
    %v1234 = vcombine.low %v1184, %v1198
    %v1235 = vcombine.high %v1184, %v1198
    %v1236 = vcombine.low %v1191, %v1205
    %v1237 = vcombine.high %v1191, %v1205
    %v1238 = vcombine.low %v1212, %v1226
    %v1239 = vcombine.high %v1212, %v1226
    %v1240 = vcombine.low %v1219, %v1233
    %v1241 = vcombine.high %v1219, %v1233
    %v1243 = vunpack.c.l.s4 1966171168
    %v1244 = vunpack.c.0.s8 %v1243
    %v1245 = vlaneseq
    %v1246 = vshrl.u32 %v1245, 7
    %v1247 = vsub.s32 %v1244, %v1246
    %v1248 = vrot.slane %v1234, %v1247
    %v1250 = vunpack.c.l.s4 1966171168
    %v1251 = vunpack.c.0.s8 %v1250
    %v1252 = vlaneseq
    %v1253 = vshrl.u32 %v1252, 7
    %v1254 = vsub.s32 %v1251, %v1253
    %v1255 = vrot.slane %v1236, %v1254
    %v1257 = vunpack.c.l.s4 1966171168
    %v1258 = vunpack.c.0.s8 %v1257
    %v1259 = vlaneseq
    %v1260 = vshrl.u32 %v1259, 7
    %v1261 = vsub.s32 %v1258, %v1260
    %v1262 = vrot.slane %v1235, %v1261
    %v1264 = vunpack.c.l.s4 1966171168
    %v1265 = vunpack.c.0.s8 %v1264
    %v1266 = vlaneseq
    %v1267 = vshrl.u32 %v1266, 7
    %v1268 = vsub.s32 %v1265, %v1267
    %v1269 = vrot.slane %v1237, %v1268
    %v1271 = vunpack.c.l.s4 1966171168
    %v1272 = vunpack.c.0.s8 %v1271
    %v1273 = vlaneseq
    %v1274 = vshrl.u32 %v1273, 7
    %v1275 = vsub.s32 %v1272, %v1274
    %v1276 = vrot.slane %v1238, %v1275
    %v1278 = vunpack.c.l.s4 1966171168
    %v1279 = vunpack.c.0.s8 %v1278
    %v1280 = vlaneseq
    %v1281 = vshrl.u32 %v1280, 7
    %v1282 = vsub.s32 %v1279, %v1281
    %v1283 = vrot.slane %v1240, %v1282
    %v1285 = vunpack.c.l.s4 1966171168
    %v1286 = vunpack.c.0.s8 %v1285
    %v1287 = vlaneseq
    %v1288 = vshrl.u32 %v1287, 7
    %v1289 = vsub.s32 %v1286, %v1288
    %v1290 = vrot.slane %v1239, %v1289
    %v1292 = vunpack.c.l.s4 1966171168
    %v1293 = vunpack.c.0.s8 %v1292
    %v1294 = vlaneseq
    %v1295 = vshrl.u32 %v1294, 7
    %v1296 = vsub.s32 %v1293, %v1295
    %v1297 = vrot.slane %v1241, %v1296
    %v1298 = vcombine.low %v1248, %v1276
    %v1299 = vcombine.high %v1248, %v1276
    %v1300 = vcombine.low %v1255, %v1283
    %v1301 = vcombine.high %v1255, %v1283
    %v1302 = vcombine.low %v1262, %v1290
    %v1303 = vcombine.high %v1262, %v1290
    %v1304 = vcombine.low %v1269, %v1297
    %v1305 = vcombine.high %v1269, %v1297
    %v1306 = vcombine.low %v31, %v35
    %v1307 = vcombine.low %v39, %v43
    %v1308 = vcombine.low %v47, %v51
    %v1309 = vcombine.low %v55, %v59
    %v1311 = vunpack.c.l.s4 1966171168
    %v1312 = vunpack.c.0.s8 %v1311
    %v1313 = vlaneseq
    %v1314 = vshrl.u32 %v1313, 7
    %v1315 = vsub.s32 %v1312, %v1314
    %v1316 = vrot.slane %v1306, %v1315
    %v1318 = vunpack.c.l.s4 1966171168
    %v1319 = vunpack.c.0.s8 %v1318
    %v1320 = vlaneseq
    %v1321 = vshrl.u32 %v1320, 7
    %v1322 = vsub.s32 %v1319, %v1321
    %v1323 = vrot.slane %v1307, %v1322
    %v1325 = vunpack.c.l.s4 1966171168
    %v1326 = vunpack.c.0.s8 %v1325
    %v1327 = vlaneseq
    %v1328 = vshrl.u32 %v1327, 7
    %v1329 = vsub.s32 %v1326, %v1328
    %v1330 = vrot.slane %v1308, %v1329
    %v1332 = vunpack.c.l.s4 1966171168
    %v1333 = vunpack.c.0.s8 %v1332
    %v1334 = vlaneseq
    %v1335 = vshrl.u32 %v1334, 7
    %v1336 = vsub.s32 %v1333, %v1335
    %v1337 = vrot.slane %v1309, %v1336
    %v1338 = vcombine.low %v1316, %v1323
    %v1339 = vcombine.low %v1330, %v1337
    %v1341 = vunpack.c.l.s4 1966171168
    %v1342 = vunpack.c.0.s8 %v1341
    %v1343 = vlaneseq
    %v1344 = vshrl.u32 %v1343, 7
    %v1345 = vsub.s32 %v1342, %v1344
    %v1346 = vrot.slane %v1338, %v1345
    %v1348 = vunpack.c.l.s4 1966171168
    %v1349 = vunpack.c.0.s8 %v1348
    %v1350 = vlaneseq
    %v1351 = vshrl.u32 %v1350, 7
    %v1352 = vsub.s32 %v1349, %v1351
    %v1353 = vrot.slane %v1339, %v1352
    %v1354 = vcombine.low %v1346, %v1353
    %v2163 = vunpack.c.l.b16 %v60
    %v2164 = vunpack.c.h.b16 %v60
    %v2165 = vunpack.c.l.b16 %v61
    %v2166 = vunpack.c.h.b16 %v61
    %v2167 = vunpack.c.l.b16 %v62
    %v2168 = vunpack.c.h.b16 %v62
    %v2169 = vunpack.c.l.b16 %v63
    %v2170 = vunpack.c.h.b16 %v63
    %v2171 = vunpack.c.l.b16 %v64
    %v2172 = vunpack.c.h.b16 %v64
    %v2173 = vunpack.c.l.b16 %v65
    %v2174 = vunpack.c.h.b16 %v65
    %v2175 = vunpack.c.l.b16 %v66
    %v2176 = vunpack.c.h.b16 %v66
    %v2177 = vunpack.c.l.b16 %v67
    %v2178 = vunpack.c.h.b16 %v67
    %v2179 = vunpack.c.l.b16 %v68
    %v2180 = vunpack.c.h.b16 %v68
    %v2181 = vunpack.c.l.b16 %v69
    %v2182 = vunpack.c.h.b16 %v69
    %v2183 = vunpack.c.l.b16 %v70
    %v2184 = vunpack.c.h.b16 %v70
    %v2185 = vunpack.c.l.b16 %v71
    %v2186 = vunpack.c.h.b16 %v71
    %v2187 = vunpack.c.l.b16 %v72
    %v2188 = vunpack.c.h.b16 %v72
    %v2189 = vunpack.c.l.b16 %v73
    %v2190 = vunpack.c.h.b16 %v73
    %v2191 = vunpack.c.l.b16 %v74
    %v2192 = vunpack.c.h.b16 %v74
    %v2193 = vunpack.c.l.b16 %v75
    %v2194 = vunpack.c.h.b16 %v75
    %v2195 = vunpack.c.l.b16 %v76
    %v2196 = vunpack.c.h.b16 %v76
    %v2197 = vunpack.c.l.b16 %v77
    %v2198 = vunpack.c.h.b16 %v77
    %v2199 = vunpack.c.l.b16 %v78
    %v2200 = vunpack.c.h.b16 %v78
    %v2201 = vunpack.c.l.b16 %v79
    %v2202 = vunpack.c.h.b16 %v79
    %v2203 = vunpack.c.l.b16 %v80
    %v2204 = vunpack.c.h.b16 %v80
    %v2205 = vunpack.c.l.b16 %v81
    %v2206 = vunpack.c.h.b16 %v81
    %v2207 = vunpack.c.l.b16 %v82
    %v2208 = vunpack.c.h.b16 %v82
    %v2209 = vunpack.c.l.b16 %v83
    %v2210 = vunpack.c.h.b16 %v83
    %v2211 = vunpack.c.l.b16 %v84
    %v2212 = vunpack.c.h.b16 %v84
    %v2213 = vunpack.c.l.b16 %v85
    %v2214 = vunpack.c.h.b16 %v85
    %v2215 = vunpack.c.l.b16 %v86
    %v2216 = vunpack.c.h.b16 %v86
    %v2217 = vunpack.c.l.b16 %v87
    %v2218 = vunpack.c.h.b16 %v87
    %v2219 = vunpack.c.l.b16 %v88
    %v2220 = vunpack.c.h.b16 %v88
    %v2221 = vunpack.c.l.b16 %v89
    %v2222 = vunpack.c.h.b16 %v89
    %v2223 = vunpack.c.l.b16 %v90
    %v2224 = vunpack.c.h.b16 %v90
    %v2225 = vunpack.c.l.b16 %v91
    %v2226 = vunpack.c.h.b16 %v91
    %v2227 = vunpack.c.l.b16 %v92
    %v2228 = vunpack.c.h.b16 %v92
    %v2229 = vunpack.c.l.b16 %v93
    %v2230 = vunpack.c.h.b16 %v93
    %v2231 = vunpack.c.l.b16 %v94
    %v2232 = vunpack.c.h.b16 %v94
    %v2233 = vunpack.c.l.b16 %v95
    %v2234 = vunpack.c.h.b16 %v95
    %v2235 = vunpack.c.l.b16 %v96
    %v2236 = vunpack.c.h.b16 %v96
    %v2237 = vunpack.c.l.b16 %v97
    %v2238 = vunpack.c.h.b16 %v97
    %v2239 = vunpack.c.l.b16 %v98
    %v2240 = vunpack.c.h.b16 %v98
    %v2241 = vunpack.c.l.b16 %v99
    %v2242 = vunpack.c.h.b16 %v99
    %v2243 = vunpack.c.l.b16 %v100
    %v2244 = vunpack.c.h.b16 %v100
    %v2245 = vunpack.c.l.b16 %v101
    %v2246 = vunpack.c.h.b16 %v101
    %v2247 = vunpack.c.l.b16 %v102
    %v2248 = vunpack.c.h.b16 %v102
    %v2249 = vunpack.c.l.b16 %v103
    %v2250 = vunpack.c.h.b16 %v103
    %v2251 = vunpack.c.l.b16 %v104
    %v2252 = vunpack.c.h.b16 %v104
    %v2253 = vunpack.c.l.b16 %v105
    %v2254 = vunpack.c.h.b16 %v105
    %v2255 = vunpack.c.l.b16 %v106
    %v2256 = vunpack.c.h.b16 %v106
    %v2257 = vunpack.c.l.b16 %v107
    %v2258 = vunpack.c.h.b16 %v107
    %v2259 = vunpack.c.l.b16 %v108
    %v2260 = vunpack.c.h.b16 %v108
    %v2261 = vunpack.c.l.b16 %v109
    %v2262 = vunpack.c.h.b16 %v109
    %v2263 = vunpack.c.l.b16 %v110
    %v2264 = vunpack.c.h.b16 %v110
    %v2265 = vunpack.c.l.b16 %v111
    %v2266 = vunpack.c.h.b16 %v111
    %v2267 = vunpack.c.l.b16 %v112
    %v2268 = vunpack.c.h.b16 %v112
    %v2269 = vunpack.c.l.b16 %v113
    %v2270 = vunpack.c.h.b16 %v113
    %v2271 = vunpack.c.l.b16 %v114
    %v2272 = vunpack.c.h.b16 %v114
    %v2273 = vunpack.c.l.b16 %v115
    %v2274 = vunpack.c.h.b16 %v115
    %v2275 = vunpack.c.l.b16 %v116
    %v2276 = vunpack.c.h.b16 %v116
    %v2277 = vunpack.c.l.b16 %v117
    %v2278 = vunpack.c.h.b16 %v117
    %v2279 = vunpack.c.l.b16 %v118
    %v2280 = vunpack.c.h.b16 %v118
    %v2281 = vunpack.c.l.b16 %v119
    %v2282 = vunpack.c.h.b16 %v119
    %v2283 = vunpack.c.l.b16 %v120
    %v2284 = vunpack.c.h.b16 %v120
    %v2285 = vunpack.c.l.b16 %v121
    %v2286 = vunpack.c.h.b16 %v121
    %v2287 = vunpack.c.l.b16 %v122
    %v2288 = vunpack.c.h.b16 %v122
    %v2289 = vunpack.c.l.b16 %v123
    %v2290 = vunpack.c.h.b16 %v123
    %v2291 = vunpack.c.l.b16 %v124
    %v2292 = vunpack.c.h.b16 %v124
    %v2293 = vunpack.c.l.b16 %v125
    %v2294 = vunpack.c.h.b16 %v125
    %v2295 = vunpack.c.l.b16 %v126
    %v2296 = vunpack.c.h.b16 %v126
    %v2297 = vunpack.c.l.b16 %v127
    %v2298 = vunpack.c.h.b16 %v127
    %v2299 = vunpack.c.l.b16 %v128
    %v2300 = vunpack.c.h.b16 %v128
    %v2301 = vunpack.c.l.b16 %v129
    %v2302 = vunpack.c.h.b16 %v129
    %v2303 = vunpack.c.l.b16 %v130
    %v2304 = vunpack.c.h.b16 %v130
    %v2305 = vunpack.c.l.b16 %v131
    %v2306 = vunpack.c.h.b16 %v131
    %v2307 = vunpack.c.l.b16 %v132
    %v2308 = vunpack.c.h.b16 %v132
    %v2309 = vunpack.c.l.b16 %v133
    %v2310 = vunpack.c.h.b16 %v133
    %v2311 = vunpack.c.l.b16 %v134
    %v2312 = vunpack.c.h.b16 %v134
    %v2313 = vunpack.c.l.b16 %v135
    %v2314 = vunpack.c.h.b16 %v135
    %v2315 = vunpack.c.l.b16 %v136
    %v2316 = vunpack.c.h.b16 %v136
    %v2317 = vunpack.c.l.b16 %v137
    %v2318 = vunpack.c.h.b16 %v137
    %v2319 = vunpack.c.l.b16 %v138
    %v2320 = vunpack.c.h.b16 %v138
    %v2321 = vunpack.c.l.b16 %v139
    %v2322 = vunpack.c.h.b16 %v139
    %v2323 = vunpack.c.l.b16 %v140
    %v2324 = vunpack.c.h.b16 %v140
    %v2325 = vunpack.c.l.b16 %v141
    %v2326 = vunpack.c.h.b16 %v141
    %v2327 = vunpack.c.l.b16 %v142
    %v2328 = vunpack.c.h.b16 %v142
    %v2329 = vunpack.c.l.b16 %v143
    %v2330 = vunpack.c.h.b16 %v143
    %v2331 = vunpack.c.l.b16 %v144
    %v2332 = vunpack.c.h.b16 %v144
    %v2333 = vunpack.c.l.b16 %v145
    %v2334 = vunpack.c.h.b16 %v145
    %v2335 = vunpack.c.l.b16 %v146
    %v2336 = vunpack.c.h.b16 %v146
    %v2337 = vunpack.c.l.b16 %v147
    %v2338 = vunpack.c.h.b16 %v147
    %v2339 = vunpack.c.l.b16 %v148
    %v2340 = vunpack.c.h.b16 %v148
    %v2341 = vunpack.c.l.b16 %v149
    %v2342 = vunpack.c.h.b16 %v149
    %v2343 = vunpack.c.l.b16 %v150
    %v2344 = vunpack.c.h.b16 %v150
    %v2345 = vunpack.c.l.b16 %v151
    %v2346 = vunpack.c.h.b16 %v151
    %v2347 = vunpack.c.l.b16 %v152
    %v2348 = vunpack.c.h.b16 %v152
    %v2349 = vunpack.c.l.b16 %v153
    %v2350 = vunpack.c.h.b16 %v153
    %v2351 = vunpack.c.l.b16 %v154
    %v2352 = vunpack.c.h.b16 %v154
    %v2353 = vunpack.c.l.b16 %v155
    %v2354 = vunpack.c.h.b16 %v155
    %v2355 = vunpack.c.l.b16 %v156
    %v2356 = vunpack.c.h.b16 %v156
    %v2357 = vunpack.c.l.b16 %v157
    %v2358 = vunpack.c.h.b16 %v157
    %v2359 = vunpack.c.l.b16 %v158
    %v2360 = vunpack.c.h.b16 %v158
    %v2361 = vunpack.c.l.b16 %v159
    %v2362 = vunpack.c.h.b16 %v159
    %v2363 = vunpack.c.l.b16 %v160
    %v2364 = vunpack.c.h.b16 %v160
    %v2365 = vunpack.c.l.b16 %v161
    %v2366 = vunpack.c.h.b16 %v161
    %v2367 = vunpack.c.l.b16 %v162
    %v2368 = vunpack.c.h.b16 %v162
    %v2369 = vunpack.c.l.b16 %v163
    %v2370 = vunpack.c.h.b16 %v163
    %v2371 = vunpack.c.l.b16 %v164
    %v2372 = vunpack.c.h.b16 %v164
    %v2373 = vunpack.c.l.b16 %v165
    %v2374 = vunpack.c.h.b16 %v165
    %v2375 = vunpack.c.l.b16 %v166
    %v2376 = vunpack.c.h.b16 %v166
    %v2377 = vunpack.c.l.b16 %v167
    %v2378 = vunpack.c.h.b16 %v167
    %v2379 = vunpack.c.l.b16 %v168
    %v2380 = vunpack.c.h.b16 %v168
    %v2381 = vunpack.c.l.b16 %v169
    %v2382 = vunpack.c.h.b16 %v169
    %v2383 = vunpack.c.l.b16 %v170
    %v2384 = vunpack.c.h.b16 %v170
    %v2385 = vunpack.c.l.b16 %v171
    %v2386 = vunpack.c.h.b16 %v171
    %v2387 = vunpack.c.l.b16 %v172
    %v2388 = vunpack.c.h.b16 %v172
    %v2389 = vunpack.c.l.b16 %v173
    %v2390 = vunpack.c.h.b16 %v173
    %v2391 = vunpack.c.l.b16 %v174
    %v2392 = vunpack.c.h.b16 %v174
    %v2393 = vunpack.c.l.b16 %v175
    %v2394 = vunpack.c.h.b16 %v175
    %v2395 = vunpack.c.l.b16 %v176
    %v2396 = vunpack.c.h.b16 %v176
    %v2397 = vunpack.c.l.b16 %v177
    %v2398 = vunpack.c.h.b16 %v177
    %v2399 = vunpack.c.l.b16 %v178
    %v2400 = vunpack.c.h.b16 %v178
    %v2401 = vunpack.c.l.b16 %v179
    %v2402 = vunpack.c.h.b16 %v179
    %v2403 = vunpack.c.l.b16 %v180
    %v2404 = vunpack.c.h.b16 %v180
    %v2405 = vunpack.c.l.b16 %v181
    %v2406 = vunpack.c.h.b16 %v181
    %v2407 = vunpack.c.l.b16 %v182
    %v2408 = vunpack.c.h.b16 %v182
    %v2409 = vunpack.c.l.b16 %v183
    %v2410 = vunpack.c.h.b16 %v183
    %v2411 = vunpack.c.l.b16 %v184
    %v2412 = vunpack.c.h.b16 %v184
    %v2413 = vunpack.c.l.b16 %v185
    %v2414 = vunpack.c.h.b16 %v185
    %v2415 = vunpack.c.l.b16 %v186
    %v2416 = vunpack.c.h.b16 %v186
    %v2417 = vunpack.c.l.b16 %v187
    %v2418 = vunpack.c.h.b16 %v187
    %v2419 = vunpack.c.l.b16 %v188
    %v2420 = vunpack.c.h.b16 %v188
    %v2421 = vunpack.c.l.b16 %v189
    %v2422 = vunpack.c.h.b16 %v189
    %v2423 = vunpack.c.l.b16 %v190
    %v2424 = vunpack.c.h.b16 %v190
    %v2425 = vunpack.c.l.b16 %v191
    %v2426 = vunpack.c.h.b16 %v191
    %v2427 = vunpack.c.l.b16 %v192
    %v2428 = vunpack.c.h.b16 %v192
    %v2429 = vunpack.c.l.b16 %v193
    %v2430 = vunpack.c.h.b16 %v193
    %v2431 = vunpack.c.l.b16 %v194
    %v2432 = vunpack.c.h.b16 %v194
    %v2433 = vunpack.c.l.b16 %v195
    %v2434 = vunpack.c.h.b16 %v195
    %v2435 = vunpack.c.l.b16 %v196
    %v2436 = vunpack.c.h.b16 %v196
    %v2437 = vunpack.c.l.b16 %v197
    %v2438 = vunpack.c.h.b16 %v197
    %v2439 = vunpack.c.l.b16 %v198
    %v2440 = vunpack.c.h.b16 %v198
    %v2441 = vunpack.c.l.b16 %v199
    %v2442 = vunpack.c.h.b16 %v199
    %v2443 = vunpack.c.l.b16 %v200
    %v2444 = vunpack.c.h.b16 %v200
    %v2445 = vunpack.c.l.b16 %v201
    %v2446 = vunpack.c.h.b16 %v201
    %v2447 = vunpack.c.l.b16 %v202
    %v2448 = vunpack.c.h.b16 %v202
    %v2449 = vunpack.c.l.b16 %v203
    %v2450 = vunpack.c.h.b16 %v203
    %v2451 = vunpack.c.l.b16 %v204
    %v2452 = vunpack.c.h.b16 %v204
    %v2453 = vunpack.c.l.b16 %v205
    %v2454 = vunpack.c.h.b16 %v205
    %v2455 = vunpack.c.l.b16 %v206
    %v2456 = vunpack.c.h.b16 %v206
    %v2457 = vunpack.c.l.b16 %v207
    %v2458 = vunpack.c.h.b16 %v207
    %v2459 = vunpack.c.l.b16 %v208
    %v2460 = vunpack.c.h.b16 %v208
    %v2461 = vunpack.c.l.b16 %v209
    %v2462 = vunpack.c.h.b16 %v209
    %v2463 = vunpack.c.l.b16 %v210
    %v2464 = vunpack.c.h.b16 %v210
    %v2465 = vunpack.c.l.b16 %v211
    %v2466 = vunpack.c.h.b16 %v211
    %v2467 = vunpack.c.l.b16 %v212
    %v2468 = vunpack.c.h.b16 %v212
    %v2469 = vunpack.c.l.b16 %v213
    %v2470 = vunpack.c.h.b16 %v213
    %v2471 = vunpack.c.l.b16 %v214
    %v2472 = vunpack.c.h.b16 %v214
    %v2473 = vunpack.c.l.b16 %v215
    %v2474 = vunpack.c.h.b16 %v215
    %v2475 = vunpack.c.l.b16 %v216
    %v2476 = vunpack.c.h.b16 %v216
    %v2477 = vunpack.c.l.b16 %v217
    %v2478 = vunpack.c.h.b16 %v217
    %v2479 = vunpack.c.l.b16 %v218
    %v2480 = vunpack.c.h.b16 %v218
    %v2481 = vunpack.c.l.b16 %v219
    %v2482 = vunpack.c.h.b16 %v219
    %v2483 = vunpack.c.l.b16 %v220
    %v2484 = vunpack.c.h.b16 %v220
    %v2485 = vunpack.c.l.b16 %v221
    %v2486 = vunpack.c.h.b16 %v221
    %v2487 = vunpack.c.l.b16 %v222
    %v2488 = vunpack.c.h.b16 %v222
    %v2489 = vunpack.c.l.b16 %v223
    %v2490 = vunpack.c.h.b16 %v223
    %v2491 = vunpack.c.l.b16 %v224
    %v2492 = vunpack.c.h.b16 %v224
    %v2493 = vunpack.c.l.b16 %v225
    %v2494 = vunpack.c.h.b16 %v225
    %v2495 = vunpack.c.l.b16 %v226
    %v2496 = vunpack.c.h.b16 %v226
    %v2497 = vunpack.c.l.b16 %v227
    %v2498 = vunpack.c.h.b16 %v227
    %v2499 = vunpack.c.l.b16 %v228
    %v2500 = vunpack.c.h.b16 %v228
    %v2501 = vunpack.c.l.b16 %v229
    %v2502 = vunpack.c.h.b16 %v229
    %v2503 = vunpack.c.l.b16 %v230
    %v2504 = vunpack.c.h.b16 %v230
    %v2505 = vunpack.c.l.b16 %v231
    %v2506 = vunpack.c.h.b16 %v231
    %v2507 = vunpack.c.l.b16 %v232
    %v2508 = vunpack.c.h.b16 %v232
    %v2509 = vunpack.c.l.b16 %v233
    %v2510 = vunpack.c.h.b16 %v233
    %v2511 = vunpack.c.l.b16 %v234
    %v2512 = vunpack.c.h.b16 %v234
    %v2513 = vunpack.c.l.b16 %v235
    %v2514 = vunpack.c.h.b16 %v235
    %v2515 = vunpack.c.l.b16 %v236
    %v2516 = vunpack.c.h.b16 %v236
    %v2517 = vunpack.c.l.b16 %v237
    %v2518 = vunpack.c.h.b16 %v237
    %v2519 = vunpack.c.l.b16 %v238
    %v2520 = vunpack.c.h.b16 %v238
    %v2521 = vunpack.c.l.b16 %v239
    %v2522 = vunpack.c.h.b16 %v239
    %v2523 = vunpack.c.l.b16 %v240
    %v2524 = vunpack.c.h.b16 %v240
    %v2525 = vunpack.c.l.b16 %v241
    %v2526 = vunpack.c.h.b16 %v241
    %v2527 = vunpack.c.l.b16 %v242
    %v2528 = vunpack.c.h.b16 %v242
    %v2529 = vunpack.c.l.b16 %v243
    %v2530 = vunpack.c.h.b16 %v243
    %v2531 = vunpack.c.l.b16 %v244
    %v2532 = vunpack.c.h.b16 %v244
    %v2533 = vunpack.c.l.b16 %v245
    %v2534 = vunpack.c.h.b16 %v245
    %v2535 = vunpack.c.l.b16 %v246
    %v2536 = vunpack.c.h.b16 %v246
    %v2537 = vunpack.c.l.b16 %v247
    %v2538 = vunpack.c.h.b16 %v247
    %v2539 = vunpack.c.l.b16 %v248
    %v2540 = vunpack.c.h.b16 %v248
    %v2541 = vunpack.c.l.b16 %v249
    %v2542 = vunpack.c.h.b16 %v249
    %v2543 = vunpack.c.l.b16 %v250
    %v2544 = vunpack.c.h.b16 %v250
    %v2545 = vunpack.c.l.b16 %v251
    %v2546 = vunpack.c.h.b16 %v251
    %v2547 = vunpack.c.l.b16 %v252
    %v2548 = vunpack.c.h.b16 %v252
    %v2549 = vunpack.c.l.b16 %v253
    %v2550 = vunpack.c.h.b16 %v253
    %v2551 = vunpack.c.l.b16 %v254
    %v2552 = vunpack.c.h.b16 %v254
    %v2553 = vunpack.c.l.b16 %v255
    %v2554 = vunpack.c.h.b16 %v255
    %v2555 = vunpack.c.l.b16 %v256
    %v2556 = vunpack.c.h.b16 %v256
    %v2557 = vunpack.c.l.b16 %v257
    %v2558 = vunpack.c.h.b16 %v257
    %v2559 = vunpack.c.l.b16 %v258
    %v2560 = vunpack.c.h.b16 %v258
    %v2561 = vunpack.c.l.b16 %v259
    %v2562 = vunpack.c.h.b16 %v259
    %v2563 = vunpack.c.l.b16 %v260
    %v2564 = vunpack.c.h.b16 %v260
    %v2565 = vunpack.c.l.b16 %v261
    %v2566 = vunpack.c.h.b16 %v261
    %v2567 = vunpack.c.l.b16 %v262
    %v2568 = vunpack.c.h.b16 %v262
    %v2569 = vunpack.c.l.b16 %v263
    %v2570 = vunpack.c.h.b16 %v263
    %v2571 = vunpack.c.l.b16 %v264
    %v2572 = vunpack.c.h.b16 %v264
    %v2573 = vunpack.c.l.b16 %v265
    %v2574 = vunpack.c.h.b16 %v265
    %v2575 = vunpack.c.l.b16 %v266
    %v2576 = vunpack.c.h.b16 %v266
    %v2577 = vunpack.c.l.b16 %v267
    %v2578 = vunpack.c.h.b16 %v267
    %v2579 = vunpack.c.l.b16 %v268
    %v2580 = vunpack.c.h.b16 %v268
    %v2581 = vunpack.c.l.b16 %v269
    %v2582 = vunpack.c.h.b16 %v269
    %v2583 = vunpack.c.l.b16 %v270
    %v2584 = vunpack.c.h.b16 %v270
    %v2585 = vunpack.c.l.b16 %v271
    %v2586 = vunpack.c.h.b16 %v271
    %v2587 = vunpack.c.l.b16 %v272
    %v2588 = vunpack.c.h.b16 %v272
    %v2589 = vunpack.c.l.b16 %v273
    %v2590 = vunpack.c.h.b16 %v273
    %v2591 = vunpack.c.l.b16 %v274
    %v2592 = vunpack.c.h.b16 %v274
    %v2593 = vunpack.c.l.b16 %v275
    %v2594 = vunpack.c.h.b16 %v275
    %v2595 = vunpack.c.l.b16 %v276
    %v2596 = vunpack.c.h.b16 %v276
    %v2597 = vunpack.c.l.b16 %v277
    %v2598 = vunpack.c.h.b16 %v277
    %v2599 = vunpack.c.l.b16 %v278
    %v2600 = vunpack.c.h.b16 %v278
    %v2601 = vunpack.c.l.b16 %v279
    %v2602 = vunpack.c.h.b16 %v279
    %v2603 = vunpack.c.l.b16 %v280
    %v2604 = vunpack.c.h.b16 %v280
    %v2605 = vunpack.c.l.b16 %v281
    %v2606 = vunpack.c.h.b16 %v281
    %v2607 = vunpack.c.l.b16 %v282
    %v2608 = vunpack.c.h.b16 %v282
    %v2609 = vunpack.c.l.b16 %v283
    %v2610 = vunpack.c.h.b16 %v283
    %v2611 = vunpack.c.l.b16 %v284
    %v2612 = vunpack.c.h.b16 %v284
    %v2613 = vunpack.c.l.b16 %v285
    %v2614 = vunpack.c.h.b16 %v285
    %v2615 = vunpack.c.l.b16 %v286
    %v2616 = vunpack.c.h.b16 %v286
    %v2617 = vunpack.c.l.b16 %v287
    %v2618 = vunpack.c.h.b16 %v287
    %v2619 = vunpack.c.l.b16 %v288
    %v2620 = vunpack.c.h.b16 %v288
    %v2621 = vunpack.c.l.b16 %v289
    %v2622 = vunpack.c.h.b16 %v289
    %v2623 = vunpack.c.l.b16 %v290
    %v2624 = vunpack.c.h.b16 %v290
    %v2625 = vunpack.c.l.b16 %v291
    %v2626 = vunpack.c.h.b16 %v291
    %v2627 = vunpack.c.l.b16 %v292
    %v2628 = vunpack.c.h.b16 %v292
    %v2629 = vunpack.c.l.b16 %v293
    %v2630 = vunpack.c.h.b16 %v293
    %v2631 = vunpack.c.l.b16 %v294
    %v2632 = vunpack.c.h.b16 %v294
    %v2633 = vunpack.c.l.b16 %v295
    %v2634 = vunpack.c.h.b16 %v295
    %v2635 = vunpack.c.l.b16 %v296
    %v2636 = vunpack.c.h.b16 %v296
    %v2637 = vunpack.c.l.b16 %v297
    %v2638 = vunpack.c.h.b16 %v297
    %v2639 = vunpack.c.l.b16 %v298
    %v2640 = vunpack.c.h.b16 %v298
    %v2641 = vunpack.c.l.b16 %v299
    %v2642 = vunpack.c.h.b16 %v299
    %v2643 = vunpack.c.l.b16 %v300
    %v2644 = vunpack.c.h.b16 %v300
    %v2645 = vunpack.c.l.b16 %v301
    %v2646 = vunpack.c.h.b16 %v301
    %v2647 = vunpack.c.l.b16 %v302
    %v2648 = vunpack.c.h.b16 %v302
    %v2649 = vunpack.c.l.b16 %v303
    %v2650 = vunpack.c.h.b16 %v303
    %v2651 = vunpack.c.l.b16 %v304
    %v2652 = vunpack.c.h.b16 %v304
    %v2653 = vunpack.c.l.b16 %v305
    %v2654 = vunpack.c.h.b16 %v305
    %v2655 = vunpack.c.l.b16 %v306
    %v2656 = vunpack.c.h.b16 %v306
    %v2657 = vunpack.c.l.b16 %v307
    %v2658 = vunpack.c.h.b16 %v307
    %v2659 = vunpack.c.l.b16 %v308
    %v2660 = vunpack.c.h.b16 %v308
    %v2661 = vunpack.c.l.b16 %v309
    %v2662 = vunpack.c.h.b16 %v309
    %v2663 = vunpack.c.l.b16 %v310
    %v2664 = vunpack.c.h.b16 %v310
    %v2665 = vunpack.c.l.b16 %v311
    %v2666 = vunpack.c.h.b16 %v311
    %v2667 = vunpack.c.l.b16 %v312
    %v2668 = vunpack.c.h.b16 %v312
    %v2669 = vunpack.c.l.b16 %v313
    %v2670 = vunpack.c.h.b16 %v313
    %v2671 = vunpack.c.l.b16 %v314
    %v2672 = vunpack.c.h.b16 %v314
    %v2673 = vunpack.c.l.b16 %v315
    %v2674 = vunpack.c.h.b16 %v315
    %v2675 = vunpack.c.l.b16 %v316
    %v2676 = vunpack.c.h.b16 %v316
    %v2677 = vunpack.c.l.b16 %v317
    %v2678 = vunpack.c.h.b16 %v317
    %v2679 = vunpack.c.l.b16 %v318
    %v2680 = vunpack.c.h.b16 %v318
    %v2681 = vunpack.c.l.b16 %v319
    %v2682 = vunpack.c.h.b16 %v319
    %v2683 = vunpack.c.l.b16 %v320
    %v2684 = vunpack.c.h.b16 %v320
    %v2685 = vunpack.c.l.b16 %v321
    %v2686 = vunpack.c.h.b16 %v321
    %v2687 = vunpack.c.l.b16 %v322
    %v2688 = vunpack.c.h.b16 %v322
    %v2689 = vunpack.c.l.b16 %v323
    %v2690 = vunpack.c.h.b16 %v323
    %v2691 = vunpack.c.l.b16 %v324
    %v2692 = vunpack.c.h.b16 %v324
    %v2693 = vunpack.c.l.b16 %v325
    %v2694 = vunpack.c.h.b16 %v325
    %v2695 = vunpack.c.l.b16 %v326
    %v2696 = vunpack.c.h.b16 %v326
    %v2697 = vunpack.c.l.b16 %v327
    %v2698 = vunpack.c.h.b16 %v327
    %v2699 = vunpack.c.l.b16 %v328
    %v2700 = vunpack.c.h.b16 %v328
    %v2701 = vunpack.c.l.b16 %v329
    %v2702 = vunpack.c.h.b16 %v329
    %v2703 = vunpack.c.l.b16 %v330
    %v2704 = vunpack.c.h.b16 %v330
    %v2705 = vunpack.c.l.b16 %v331
    %v2706 = vunpack.c.h.b16 %v331
    %v2707 = vunpack.c.l.b16 %v332
    %v2708 = vunpack.c.h.b16 %v332
    %v2709 = vunpack.c.l.b16 %v333
    %v2710 = vunpack.c.h.b16 %v333
    %v2711 = vunpack.c.l.b16 %v334
    %v2712 = vunpack.c.h.b16 %v334
    %v2713 = vunpack.c.l.b16 %v335
    %v2714 = vunpack.c.h.b16 %v335
    %v2715 = vunpack.c.l.b16 %v336
    %v2716 = vunpack.c.h.b16 %v336
    %v2717 = vunpack.c.l.b16 %v337
    %v2718 = vunpack.c.h.b16 %v337
    %v2719 = vunpack.c.l.b16 %v338
    %v2720 = vunpack.c.h.b16 %v338
    %v2721 = vunpack.c.l.b16 %v339
    %v2722 = vunpack.c.h.b16 %v339
    %v2723 = vunpack.c.l.b16 %v340
    %v2724 = vunpack.c.h.b16 %v340
    %v2725 = vunpack.c.l.b16 %v341
    %v2726 = vunpack.c.h.b16 %v341
    %v2727 = vunpack.c.l.b16 %v342
    %v2728 = vunpack.c.h.b16 %v342
    %v2729 = vunpack.c.l.b16 %v343
    %v2730 = vunpack.c.h.b16 %v343
    %v2731 = vunpack.c.l.b16 %v344
    %v2732 = vunpack.c.h.b16 %v344
    %v2733 = vunpack.c.l.b16 %v345
    %v2734 = vunpack.c.h.b16 %v345
    %v2735 = vunpack.c.l.b16 %v346
    %v2736 = vunpack.c.h.b16 %v346
    %v2737 = vunpack.c.l.b16 %v347
    %v2738 = vunpack.c.h.b16 %v347
    %v2739 = vunpack.c.l.b16 %v348
    %v2740 = vunpack.c.h.b16 %v348
    %v2741 = vunpack.c.l.b16 %v349
    %v2742 = vunpack.c.h.b16 %v349
    %v2743 = vunpack.c.l.b16 %v350
    %v2744 = vunpack.c.h.b16 %v350
    %v2745 = vunpack.c.l.b16 %v351
    %v2746 = vunpack.c.h.b16 %v351
    %v2747 = vunpack.c.l.b16 %v352
    %v2748 = vunpack.c.h.b16 %v352
    %v2749 = vunpack.c.l.b16 %v353
    %v2750 = vunpack.c.h.b16 %v353
    %v2751 = vunpack.c.l.b16 %v354
    %v2752 = vunpack.c.h.b16 %v354
    %v2753 = vunpack.c.l.b16 %v355
    %v2754 = vunpack.c.h.b16 %v355
    %v2755 = vunpack.c.l.b16 %v356
    %v2756 = vunpack.c.h.b16 %v356
    %v2757 = vunpack.c.l.b16 %v357
    %v2758 = vunpack.c.h.b16 %v357
    %v2759 = vunpack.c.l.b16 %v358
    %v2760 = vunpack.c.h.b16 %v358
    %v2761 = vunpack.c.l.b16 %v359
    %v2762 = vunpack.c.h.b16 %v359
    %v2763 = vunpack.c.l.b16 %v360
    %v2764 = vunpack.c.h.b16 %v360
    %v2765 = vunpack.c.l.b16 %v361
    %v2766 = vunpack.c.h.b16 %v361
    %v2767 = vunpack.c.l.b16 %v362
    %v2768 = vunpack.c.h.b16 %v362
    %v2769 = vunpack.c.l.b16 %v363
    %v2770 = vunpack.c.h.b16 %v363
    %v2771 = vunpack.c.l.b16 %v364
    %v2772 = vunpack.c.h.b16 %v364
    %v2773 = vunpack.c.l.b16 %v365
    %v2774 = vunpack.c.h.b16 %v365
    %v2775 = vunpack.c.l.b16 %v366
    %v2776 = vunpack.c.h.b16 %v366
    %v2777 = vunpack.c.l.b16 %v367
    %v2778 = vunpack.c.h.b16 %v367
    %v2779 = vunpack.c.l.b16 %v368
    %v2780 = vunpack.c.h.b16 %v368
    %v2781 = vunpack.c.l.b16 %v369
    %v2782 = vunpack.c.h.b16 %v369
    %v2783 = vunpack.c.l.b16 %v370
    %v2784 = vunpack.c.h.b16 %v370
    %v2785 = vunpack.c.l.b16 %v371
    %v2786 = vunpack.c.h.b16 %v371
    %v2787 = vunpack.c.l.b16 %v372
    %v2788 = vunpack.c.h.b16 %v372
    %v2789 = vunpack.c.l.b16 %v373
    %v2790 = vunpack.c.h.b16 %v373
    %v2791 = vunpack.c.l.b16 %v374
    %v2792 = vunpack.c.h.b16 %v374
    %v2793 = vunpack.c.l.b16 %v375
    %v2794 = vunpack.c.h.b16 %v375
    %v2795 = vunpack.c.l.b16 %v376
    %v2796 = vunpack.c.h.b16 %v376
    %v2797 = vunpack.c.l.b16 %v377
    %v2798 = vunpack.c.h.b16 %v377
    %v2799 = vunpack.c.l.b16 %v378
    %v2800 = vunpack.c.h.b16 %v378
    %v2801 = vunpack.c.l.b16 %v379
    %v2802 = vunpack.c.h.b16 %v379
    %v2803 = vunpack.c.l.b16 %v380
    %v2804 = vunpack.c.h.b16 %v380
    %v2805 = vunpack.c.l.b16 %v381
    %v2806 = vunpack.c.h.b16 %v381
    %v2807 = vunpack.c.l.b16 %v382
    %v2808 = vunpack.c.h.b16 %v382
    %v2809 = vunpack.c.l.b16 %v383
    %v2810 = vunpack.c.h.b16 %v383
    %v2811 = vunpack.c.l.b16 %v384
    %v2812 = vunpack.c.h.b16 %v384
    %v2813 = vunpack.c.l.b16 %v385
    %v2814 = vunpack.c.h.b16 %v385
    %v2815 = vunpack.c.l.b16 %v386
    %v2816 = vunpack.c.h.b16 %v386
    %v2817 = vunpack.c.l.b16 %v387
    %v2818 = vunpack.c.h.b16 %v387
    %v2819 = vunpack.c.l.b16 %v388
    %v2820 = vunpack.c.h.b16 %v388
    %v2821 = vunpack.c.l.b16 %v389
    %v2822 = vunpack.c.h.b16 %v389
    %v2823 = vunpack.c.l.b16 %v390
    %v2824 = vunpack.c.h.b16 %v390
    %v2825 = vunpack.c.l.b16 %v391
    %v2826 = vunpack.c.h.b16 %v391
    %v2827 = vunpack.c.l.b16 %v392
    %v2828 = vunpack.c.h.b16 %v392
    %v2829 = vunpack.c.l.b16 %v393
    %v2830 = vunpack.c.h.b16 %v393
    %v2831 = vunpack.c.l.b16 %v394
    %v2832 = vunpack.c.h.b16 %v394
    %v2833 = vunpack.c.l.b16 %v395
    %v2834 = vunpack.c.h.b16 %v395
    %v2835 = vunpack.c.l.b16 %v396
    %v2836 = vunpack.c.h.b16 %v396
    %v2837 = vunpack.c.l.b16 %v397
    %v2838 = vunpack.c.h.b16 %v397
    %v2839 = vunpack.c.l.b16 %v398
    %v2840 = vunpack.c.h.b16 %v398
    %v2841 = vunpack.c.l.b16 %v399
    %v2842 = vunpack.c.h.b16 %v399
    %v2843 = vunpack.c.l.b16 %v400
    %v2844 = vunpack.c.h.b16 %v400
    %v2845 = vunpack.c.l.b16 %v401
    %v2846 = vunpack.c.h.b16 %v401
    %v2847 = vunpack.c.l.b16 %v402
    %v2848 = vunpack.c.h.b16 %v402
    %v2849 = vunpack.c.l.b16 %v403
    %v2850 = vunpack.c.h.b16 %v403
    %v2851 = vunpack.c.l.b16 %v404
    %v2852 = vunpack.c.h.b16 %v404
    %v2853 = vunpack.c.l.b16 %v405
    %v2854 = vunpack.c.h.b16 %v405
    %v2855 = vunpack.c.l.b16 %v406
    %v2856 = vunpack.c.h.b16 %v406
    %v2857 = vunpack.c.l.b16 %v407
    %v2858 = vunpack.c.h.b16 %v407
    %v2859 = vunpack.c.l.b16 %v408
    %v2860 = vunpack.c.h.b16 %v408
    %v2861 = vunpack.c.l.b16 %v409
    %v2862 = vunpack.c.h.b16 %v409
    %v2863 = vunpack.c.l.b16 %v410
    %v2864 = vunpack.c.h.b16 %v410
    %v2865 = vunpack.c.l.b16 %v411
    %v2866 = vunpack.c.h.b16 %v411
    %v2867 = vunpack.c.l.b16 %v412
    %v2868 = vunpack.c.h.b16 %v412
    %v2869 = vunpack.c.l.b16 %v413
    %v2870 = vunpack.c.h.b16 %v413
    %v2871 = vunpack.c.l.b16 %v414
    %v2872 = vunpack.c.h.b16 %v414
    %v2873 = vunpack.c.l.b16 %v415
    %v2874 = vunpack.c.h.b16 %v415
    %v2875 = vunpack.c.l.b16 %v416
    %v2876 = vunpack.c.h.b16 %v416
    %v2877 = vunpack.c.l.b16 %v417
    %v2878 = vunpack.c.h.b16 %v417
    %v2879 = vunpack.c.l.b16 %v418
    %v2880 = vunpack.c.h.b16 %v418
    %v2881 = vunpack.c.l.b16 %v419
    %v2882 = vunpack.c.h.b16 %v419
    %v2883 = vunpack.c.l.b16 %v420
    %v2884 = vunpack.c.h.b16 %v420
    %v2885 = vunpack.c.l.b16 %v421
    %v2886 = vunpack.c.h.b16 %v421
    %v2887 = vunpack.c.l.b16 %v422
    %v2888 = vunpack.c.h.b16 %v422
    %v2889 = vunpack.c.l.b16 %v423
    %v2890 = vunpack.c.h.b16 %v423
    %v2891 = vunpack.c.l.b16 %v424
    %v2892 = vunpack.c.h.b16 %v424
    %v2893 = vunpack.c.l.b16 %v425
    %v2894 = vunpack.c.h.b16 %v425
    %v2895 = vunpack.c.l.b16 %v426
    %v2896 = vunpack.c.h.b16 %v426
    %v2897 = vunpack.c.l.b16 %v427
    %v2898 = vunpack.c.h.b16 %v427
    %v2899 = vunpack.c.l.b16 %v428
    %v2900 = vunpack.c.h.b16 %v428
    %v2901 = vunpack.c.l.b16 %v429
    %v2902 = vunpack.c.h.b16 %v429
    %v2903 = vunpack.c.l.b16 %v430
    %v2904 = vunpack.c.h.b16 %v430
    %v2905 = vunpack.c.l.b16 %v431
    %v2906 = vunpack.c.h.b16 %v431
    %v2907 = vunpack.c.l.b16 %v432
    %v2908 = vunpack.c.h.b16 %v432
    %v2909 = vunpack.c.l.b16 %v433
    %v2910 = vunpack.c.h.b16 %v433
    %v2911 = vunpack.c.l.b16 %v434
    %v2912 = vunpack.c.h.b16 %v434
    %v2913 = vunpack.c.l.b16 %v435
    %v2914 = vunpack.c.h.b16 %v435
    %v2915 = vunpack.c.l.b16 %v436
    %v2916 = vunpack.c.h.b16 %v436
    %v2917 = vunpack.c.l.b16 %v437
    %v2918 = vunpack.c.h.b16 %v437
    %v2919 = vunpack.c.l.b16 %v438
    %v2920 = vunpack.c.h.b16 %v438
    %v2921 = vunpack.c.l.b16 %v439
    %v2922 = vunpack.c.h.b16 %v439
    %v2923 = vunpack.c.l.b16 %v440
    %v2924 = vunpack.c.h.b16 %v440
    %v2925 = vunpack.c.l.b16 %v441
    %v2926 = vunpack.c.h.b16 %v441
    %v2927 = vunpack.c.l.b16 %v442
    %v2928 = vunpack.c.h.b16 %v442
    %v2929 = vunpack.c.l.b16 %v443
    %v2930 = vunpack.c.h.b16 %v443
    %v2931 = vunpack.c.l.b16 %v444
    %v2932 = vunpack.c.h.b16 %v444
    %v2933 = vunpack.c.l.b16 %v445
    %v2934 = vunpack.c.h.b16 %v445
    %v2935 = vunpack.c.l.b16 %v446
    %v2936 = vunpack.c.h.b16 %v446
    %v2937 = vunpack.c.l.b16 %v447
    %v2938 = vunpack.c.h.b16 %v447
    %v2939 = vunpack.c.l.b16 %v448
    %v2940 = vunpack.c.h.b16 %v448
    %v2941 = vunpack.c.l.b16 %v449
    %v2942 = vunpack.c.h.b16 %v449
    %v2943 = vunpack.c.l.b16 %v450
    %v2944 = vunpack.c.h.b16 %v450
    %v2945 = vunpack.c.l.b16 %v451
    %v2946 = vunpack.c.h.b16 %v451
    %v2947 = vunpack.c.l.b16 %v452
    %v2948 = vunpack.c.h.b16 %v452
    %v2949 = vunpack.c.l.b16 %v453
    %v2950 = vunpack.c.h.b16 %v453
    %v2951 = vunpack.c.l.b16 %v454
    %v2952 = vunpack.c.h.b16 %v454
    %v2953 = vunpack.c.l.b16 %v455
    %v2954 = vunpack.c.h.b16 %v455
    %v2955 = vunpack.c.l.b16 %v456
    %v2956 = vunpack.c.h.b16 %v456
    %v2957 = vunpack.c.l.b16 %v457
    %v2958 = vunpack.c.h.b16 %v457
    %v2959 = vunpack.c.l.b16 %v458
    %v2960 = vunpack.c.h.b16 %v458
    %v2961 = vunpack.c.l.b16 %v459
    %v2962 = vunpack.c.h.b16 %v459
    %v2963 = vunpack.c.l.b16 %v460
    %v2964 = vunpack.c.h.b16 %v460
    %v2965 = vunpack.c.l.b16 %v461
    %v2966 = vunpack.c.h.b16 %v461
    %v2967 = vunpack.c.l.b16 %v462
    %v2968 = vunpack.c.h.b16 %v462
    %v2969 = vunpack.c.l.b16 %v463
    %v2970 = vunpack.c.h.b16 %v463
    %v2971 = vunpack.c.l.b16 %v464
    %v2972 = vunpack.c.h.b16 %v464
    %v2973 = vunpack.c.l.b16 %v465
    %v2974 = vunpack.c.h.b16 %v465
    %v2975 = vunpack.c.l.b16 %v466
    %v2976 = vunpack.c.h.b16 %v466
    %v2977 = vunpack.c.l.b16 %v467
    %v2978 = vunpack.c.h.b16 %v467
    %v2979 = vunpack.c.l.b16 %v468
    %v2980 = vunpack.c.h.b16 %v468
    %v2981 = vunpack.c.l.b16 %v469
    %v2982 = vunpack.c.h.b16 %v469
    %v2983 = vunpack.c.l.b16 %v470
    %v2984 = vunpack.c.h.b16 %v470
    %v2985 = vunpack.c.l.b16 %v471
    %v2986 = vunpack.c.h.b16 %v471
    %v2987 = vunpack.c.l.b16 %v472
    %v2988 = vunpack.c.h.b16 %v472
    %v2989 = vunpack.c.l.b16 %v473
    %v2990 = vunpack.c.h.b16 %v473
    %v2991 = vunpack.c.l.b16 %v474
    %v2992 = vunpack.c.h.b16 %v474
    %v2993 = vunpack.c.l.b16 %v475
    %v2994 = vunpack.c.h.b16 %v475
    %v2995 = vunpack.c.l.b16 %v476
    %v2996 = vunpack.c.h.b16 %v476
    %v2997 = vunpack.c.l.b16 %v477
    %v2998 = vunpack.c.h.b16 %v477
    %v2999 = vunpack.c.l.b16 %v478
    %v3000 = vunpack.c.h.b16 %v478
    %v3001 = vunpack.c.l.b16 %v479
    %v3002 = vunpack.c.h.b16 %v479
    %v3003 = vunpack.c.l.b16 %v480
    %v3004 = vunpack.c.h.b16 %v480
    %v3005 = vunpack.c.l.b16 %v481
    %v3006 = vunpack.c.h.b16 %v481
    %v3007 = vunpack.c.l.b16 %v482
    %v3008 = vunpack.c.h.b16 %v482
    %v3009 = vunpack.c.l.b16 %v483
    %v3010 = vunpack.c.h.b16 %v483
    %v3011 = vunpack.c.l.b16 %v484
    %v3012 = vunpack.c.h.b16 %v484
    %v3013 = vunpack.c.l.b16 %v485
    %v3014 = vunpack.c.h.b16 %v485
    %v3015 = vunpack.c.l.b16 %v486
    %v3016 = vunpack.c.h.b16 %v486
    %v3017 = vunpack.c.l.b16 %v487
    %v3018 = vunpack.c.h.b16 %v487
    %v3019 = vunpack.c.l.b16 %v488
    %v3020 = vunpack.c.h.b16 %v488
    %v3021 = vunpack.c.l.b16 %v489
    %v3022 = vunpack.c.h.b16 %v489
    %v3023 = vunpack.c.l.b16 %v490
    %v3024 = vunpack.c.h.b16 %v490
    %v3025 = vunpack.c.l.b16 %v491
    %v3026 = vunpack.c.h.b16 %v491
    %v3027 = vunpack.c.l.b16 %v492
    %v3028 = vunpack.c.h.b16 %v492
    %v3029 = vunpack.c.l.b16 %v493
    %v3030 = vunpack.c.h.b16 %v493
    %v3031 = vunpack.c.l.b16 %v494
    %v3032 = vunpack.c.h.b16 %v494
    %v3033 = vunpack.c.l.b16 %v495
    %v3034 = vunpack.c.h.b16 %v495
    %v3035 = vunpack.c.l.b16 %v496
    %v3036 = vunpack.c.h.b16 %v496
    %v3037 = vunpack.c.l.b16 %v497
    %v3038 = vunpack.c.h.b16 %v497
    %v3039 = vunpack.c.l.b16 %v498
    %v3040 = vunpack.c.h.b16 %v498
    %v3041 = vunpack.c.l.b16 %v499
    %v3042 = vunpack.c.h.b16 %v499
    %v3043 = vunpack.c.l.b16 %v500
    %v3044 = vunpack.c.h.b16 %v500
    %v3045 = vunpack.c.l.b16 %v501
    %v3046 = vunpack.c.h.b16 %v501
    %v3047 = vunpack.c.l.b16 %v502
    %v3048 = vunpack.c.h.b16 %v502
    %v3049 = vunpack.c.l.b16 %v503
    %v3050 = vunpack.c.h.b16 %v503
    %v3051 = vunpack.c.l.b16 %v504
    %v3052 = vunpack.c.h.b16 %v504
    %v3053 = vunpack.c.l.b16 %v505
    %v3054 = vunpack.c.h.b16 %v505
    %v3055 = vunpack.c.l.b16 %v506
    %v3056 = vunpack.c.h.b16 %v506
    %v3057 = vunpack.c.l.b16 %v507
    %v3058 = vunpack.c.h.b16 %v507
    %v3059 = vunpack.c.l.b16 %v508
    %v3060 = vunpack.c.h.b16 %v508
    %v3061 = vunpack.c.l.b16 %v509
    %v3062 = vunpack.c.h.b16 %v509
    %v3063 = vunpack.c.l.b16 %v510
    %v3064 = vunpack.c.h.b16 %v510
    %v3065 = vunpack.c.l.b16 %v511
    %v3066 = vunpack.c.h.b16 %v511
    %v3067 = vunpack.c.l.b16 %v512
    %v3068 = vunpack.c.h.b16 %v512
    %v3069 = vunpack.c.l.b16 %v513
    %v3070 = vunpack.c.h.b16 %v513
    %v3071 = vunpack.c.l.b16 %v514
    %v3072 = vunpack.c.h.b16 %v514
    %v3073 = vunpack.c.l.b16 %v515
    %v3074 = vunpack.c.h.b16 %v515
    %v3075 = vunpack.c.l.b16 %v516
    %v3076 = vunpack.c.h.b16 %v516
    %v3077 = vunpack.c.l.b16 %v517
    %v3078 = vunpack.c.h.b16 %v517
    %v3079 = vunpack.c.l.b16 %v518
    %v3080 = vunpack.c.h.b16 %v518
    %v3081 = vunpack.c.l.b16 %v519
    %v3082 = vunpack.c.h.b16 %v519
    %v3083 = vunpack.c.l.b16 %v520
    %v3084 = vunpack.c.h.b16 %v520
    %v3085 = vunpack.c.l.b16 %v521
    %v3086 = vunpack.c.h.b16 %v521
    %v3087 = vunpack.c.l.b16 %v522
    %v3088 = vunpack.c.h.b16 %v522
    %v3089 = vunpack.c.l.b16 %v523
    %v3090 = vunpack.c.h.b16 %v523
    %v3091 = vunpack.c.l.b16 %v524
    %v3092 = vunpack.c.h.b16 %v524
    %v3093 = vunpack.c.l.b16 %v525
    %v3094 = vunpack.c.h.b16 %v525
    %v3095 = vunpack.c.l.b16 %v526
    %v3096 = vunpack.c.h.b16 %v526
    %v3097 = vunpack.c.l.b16 %v527
    %v3098 = vunpack.c.h.b16 %v527
    %v3099 = vunpack.c.l.b16 %v528
    %v3100 = vunpack.c.h.b16 %v528
    %v3101 = vunpack.c.l.b16 %v529
    %v3102 = vunpack.c.h.b16 %v529
    %v3103 = vunpack.c.l.b16 %v530
    %v3104 = vunpack.c.h.b16 %v530
    %v3105 = vunpack.c.l.b16 %v531
    %v3106 = vunpack.c.h.b16 %v531
    %v3107 = vunpack.c.l.b16 %v532
    %v3108 = vunpack.c.h.b16 %v532
    %v3109 = vunpack.c.l.b16 %v533
    %v3110 = vunpack.c.h.b16 %v533
    %v3111 = vunpack.c.l.b16 %v534
    %v3112 = vunpack.c.h.b16 %v534
    %v3113 = vunpack.c.l.b16 %v535
    %v3114 = vunpack.c.h.b16 %v535
    %v3115 = vunpack.c.l.b16 %v536
    %v3116 = vunpack.c.h.b16 %v536
    %v3117 = vunpack.c.l.b16 %v537
    %v3118 = vunpack.c.h.b16 %v537
    %v3119 = vunpack.c.l.b16 %v538
    %v3120 = vunpack.c.h.b16 %v538
    %v3121 = vunpack.c.l.b16 %v539
    %v3122 = vunpack.c.h.b16 %v539
    %v3123 = vunpack.c.l.b16 %v540
    %v3124 = vunpack.c.h.b16 %v540
    %v3125 = vunpack.c.l.b16 %v541
    %v3126 = vunpack.c.h.b16 %v541
    %v3127 = vunpack.c.l.b16 %v542
    %v3128 = vunpack.c.h.b16 %v542
    %v3129 = vunpack.c.l.b16 %v543
    %v3130 = vunpack.c.h.b16 %v543
    %v3131 = vunpack.c.l.b16 %v544
    %v3132 = vunpack.c.h.b16 %v544
    %v3133 = vunpack.c.l.b16 %v545
    %v3134 = vunpack.c.h.b16 %v545
    %v3135 = vunpack.c.l.b16 %v546
    %v3136 = vunpack.c.h.b16 %v546
    %v3137 = vunpack.c.l.b16 %v547
    %v3138 = vunpack.c.h.b16 %v547
    %v3139 = vunpack.c.l.b16 %v548
    %v3140 = vunpack.c.h.b16 %v548
    %v3141 = vunpack.c.l.b16 %v549
    %v3142 = vunpack.c.h.b16 %v549
    %v3143 = vunpack.c.l.b16 %v550
    %v3144 = vunpack.c.h.b16 %v550
    %v3145 = vunpack.c.l.b16 %v551
    %v3146 = vunpack.c.h.b16 %v551
    %v3147 = vunpack.c.l.b16 %v552
    %v3148 = vunpack.c.h.b16 %v552
    %v3149 = vunpack.c.l.b16 %v553
    %v3150 = vunpack.c.h.b16 %v553
    %v3151 = vunpack.c.l.b16 %v554
    %v3152 = vunpack.c.h.b16 %v554
    %v3153 = vunpack.c.l.b16 %v555
    %v3154 = vunpack.c.h.b16 %v555
    %v3155 = vunpack.c.l.b16 %v556
    %v3156 = vunpack.c.h.b16 %v556
    %v3157 = vunpack.c.l.b16 %v557
    %v3158 = vunpack.c.h.b16 %v557
    %v3159 = vunpack.c.l.b16 %v558
    %v3160 = vunpack.c.h.b16 %v558
    %v3161 = vunpack.c.l.b16 %v559
    %v3162 = vunpack.c.h.b16 %v559
    %v3163 = vunpack.c.l.b16 %v560
    %v3164 = vunpack.c.h.b16 %v560
    %v3165 = vunpack.c.l.b16 %v561
    %v3166 = vunpack.c.h.b16 %v561
    %v3167 = vunpack.c.l.b16 %v562
    %v3168 = vunpack.c.h.b16 %v562
    %v3169 = vunpack.c.l.b16 %v563
    %v3170 = vunpack.c.h.b16 %v563
    %v3171 = vunpack.c.l.b16 %v564
    %v3172 = vunpack.c.h.b16 %v564
    %v3173 = vunpack.c.l.b16 %v565
    %v3174 = vunpack.c.h.b16 %v565
    %v3175 = vunpack.c.l.b16 %v566
    %v3176 = vunpack.c.h.b16 %v566
    %v3177 = vunpack.c.l.b16 %v567
    %v3178 = vunpack.c.h.b16 %v567
    %v3179 = vunpack.c.l.b16 %v568
    %v3180 = vunpack.c.h.b16 %v568
    %v3181 = vunpack.c.l.b16 %v569
    %v3182 = vunpack.c.h.b16 %v569
    %v3183 = vunpack.c.l.b16 %v570
    %v3184 = vunpack.c.h.b16 %v570
    %v3185 = vunpack.c.l.b16 %v571
    %v3186 = vunpack.c.h.b16 %v571
    %v3187 = vunpack.c.l.b16 %v572
    %v3188 = vunpack.c.h.b16 %v572
    %v3189 = vunpack.c.l.b16 %v573
    %v3190 = vunpack.c.h.b16 %v573
    %v3191 = vunpack.c.l.b16 %v574
    %v3192 = vunpack.c.h.b16 %v574
    %v3193 = vunpack.c.l.b16 %v575
    %v3194 = vunpack.c.h.b16 %v575
    %v3195 = vunpack.c.l.b16 %v576
    %v3196 = vunpack.c.h.b16 %v576
    %v3197 = vunpack.c.l.b16 %v577
    %v3198 = vunpack.c.h.b16 %v577
    %v3199 = vunpack.c.l.b16 %v578
    %v3200 = vunpack.c.h.b16 %v578
    %v3201 = vunpack.c.l.b16 %v579
    %v3202 = vunpack.c.h.b16 %v579
    %v3203 = vunpack.c.l.b16 %v580
    %v3204 = vunpack.c.h.b16 %v580
    %v3205 = vunpack.c.l.b16 %v581
    %v3206 = vunpack.c.h.b16 %v581
    %v3207 = vunpack.c.l.b16 %v582
    %v3208 = vunpack.c.h.b16 %v582
    %v3209 = vunpack.c.l.b16 %v583
    %v3210 = vunpack.c.h.b16 %v583
    %v3211 = vunpack.c.l.b16 %v584
    %v3212 = vunpack.c.h.b16 %v584
    %v3213 = vunpack.c.l.b16 %v585
    %v3214 = vunpack.c.h.b16 %v585
    %v3215 = vunpack.c.l.b16 %v586
    %v3216 = vunpack.c.h.b16 %v586
    %v3217 = vunpack.c.l.b16 %v587
    %v3218 = vunpack.c.h.b16 %v587
    %v3219 = vunpack.c.l.b16 %v588
    %v3220 = vunpack.c.h.b16 %v588
    %v3221 = vunpack.c.l.b16 %v589
    %v3222 = vunpack.c.h.b16 %v589
    %v3223 = vunpack.c.l.b16 %v590
    %v3224 = vunpack.c.h.b16 %v590
    %v3225 = vunpack.c.l.b16 %v591
    %v3226 = vunpack.c.h.b16 %v591
    %v3227 = vunpack.c.l.b16 %v592
    %v3228 = vunpack.c.h.b16 %v592
    %v3229 = vunpack.c.l.b16 %v593
    %v3230 = vunpack.c.h.b16 %v593
    %v3231 = vunpack.c.l.b16 %v594
    %v3232 = vunpack.c.h.b16 %v594
    %v3233 = vunpack.c.l.b16 %v595
    %v3234 = vunpack.c.h.b16 %v595
    %v3235 = vunpack.c.l.b16 %v596
    %v3236 = vunpack.c.h.b16 %v596
    %v3237 = vunpack.c.l.b16 %v597
    %v3238 = vunpack.c.h.b16 %v597
    %v3239 = vunpack.c.l.b16 %v598
    %v3240 = vunpack.c.h.b16 %v598
    %v3241 = vunpack.c.l.b16 %v599
    %v3242 = vunpack.c.h.b16 %v599
    %v3243 = vunpack.c.l.b16 %v600
    %v3244 = vunpack.c.h.b16 %v600
    %v3245 = vunpack.c.l.b16 %v601
    %v3246 = vunpack.c.h.b16 %v601
    %v3247 = vunpack.c.l.b16 %v602
    %v3248 = vunpack.c.h.b16 %v602
    %v3249 = vunpack.c.l.b16 %v603
    %v3250 = vunpack.c.h.b16 %v603
    %v3251 = vunpack.c.l.b16 %v604
    %v3252 = vunpack.c.h.b16 %v604
    %v3253 = vunpack.c.l.b16 %v605
    %v3254 = vunpack.c.h.b16 %v605
    %v3255 = vunpack.c.l.b16 %v606
    %v3256 = vunpack.c.h.b16 %v606
    %v3257 = vunpack.c.l.b16 %v607
    %v3258 = vunpack.c.h.b16 %v607
    %v3259 = vunpack.c.l.b16 %v608
    %v3260 = vunpack.c.h.b16 %v608
    %v3261 = vunpack.c.l.b16 %v609
    %v3262 = vunpack.c.h.b16 %v609
    %v3263 = vunpack.c.l.b16 %v610
    %v3264 = vunpack.c.h.b16 %v610
    %v3265 = vunpack.c.l.b16 %v611
    %v3266 = vunpack.c.h.b16 %v611
    %v3267 = vunpack.c.l.b16 %v612
    %v3268 = vunpack.c.h.b16 %v612
    %v3269 = vunpack.c.l.b16 %v613
    %v3270 = vunpack.c.h.b16 %v613
    %v3271 = vunpack.c.l.b16 %v614
    %v3272 = vunpack.c.h.b16 %v614
    %v3273 = vunpack.c.l.b16 %v615
    %v3274 = vunpack.c.h.b16 %v615
    %v3275 = vunpack.c.l.b16 %v616
    %v3276 = vunpack.c.h.b16 %v616
    %v3277 = vunpack.c.l.b16 %v617
    %v3278 = vunpack.c.h.b16 %v617
    %v3279 = vunpack.c.l.b16 %v618
    %v3280 = vunpack.c.h.b16 %v618
    %v3281 = vunpack.c.l.b16 %v619
    %v3282 = vunpack.c.h.b16 %v619
    %v3283 = vunpack.c.l.b16 %v620
    %v3284 = vunpack.c.h.b16 %v620
    %v3285 = vunpack.c.l.b16 %v621
    %v3286 = vunpack.c.h.b16 %v621
    %v3287 = vunpack.c.l.b16 %v622
    %v3288 = vunpack.c.h.b16 %v622
    %v3289 = vunpack.c.l.b16 %v623
    %v3290 = vunpack.c.h.b16 %v623
    %v3291 = vunpack.c.l.b16 %v624
    %v3292 = vunpack.c.h.b16 %v624
    %v3293 = vunpack.c.l.b16 %v625
    %v3294 = vunpack.c.h.b16 %v625
    %v3295 = vunpack.c.l.b16 %v626
    %v3296 = vunpack.c.h.b16 %v626
    %v3297 = vunpack.c.l.b16 %v627
    %v3298 = vunpack.c.h.b16 %v627
    %v3299 = vunpack.c.l.b16 %v628
    %v3300 = vunpack.c.h.b16 %v628
    %v3301 = vunpack.c.l.b16 %v629
    %v3302 = vunpack.c.h.b16 %v629
    %v3303 = vunpack.c.l.b16 %v630
    %v3304 = vunpack.c.h.b16 %v630
    %v3305 = vunpack.c.l.b16 %v631
    %v3306 = vunpack.c.h.b16 %v631
    %v3307 = vunpack.c.l.b16 %v632
    %v3308 = vunpack.c.h.b16 %v632
    %v3309 = vunpack.c.l.b16 %v633
    %v3310 = vunpack.c.h.b16 %v633
    %v3311 = vunpack.c.l.b16 %v634
    %v3312 = vunpack.c.h.b16 %v634
    %v3313 = vunpack.c.l.b16 %v635
    %v3314 = vunpack.c.h.b16 %v635
    %v3315 = vunpack.c.l.b16 %v636
    %v3316 = vunpack.c.h.b16 %v636
    %v3317 = vunpack.c.l.b16 %v637
    %v3318 = vunpack.c.h.b16 %v637
    %v3319 = vunpack.c.l.b16 %v638
    %v3320 = vunpack.c.h.b16 %v638
    %v3321 = vunpack.c.l.b16 %v639
    %v3322 = vunpack.c.h.b16 %v639
    %v3323 = vunpack.c.l.b16 %v640
    %v3324 = vunpack.c.h.b16 %v640
    %v3325 = vunpack.c.l.b16 %v641
    %v3326 = vunpack.c.h.b16 %v641
    %v3327 = vunpack.c.l.b16 %v642
    %v3328 = vunpack.c.h.b16 %v642
    %v3329 = vunpack.c.l.b16 %v643
    %v3330 = vunpack.c.h.b16 %v643
    %v3331 = vunpack.c.l.b16 %v644
    %v3332 = vunpack.c.h.b16 %v644
    %v3333 = vunpack.c.l.b16 %v645
    %v3334 = vunpack.c.h.b16 %v645
    %v3335 = vunpack.c.l.b16 %v646
    %v3336 = vunpack.c.h.b16 %v646
    %v3337 = vunpack.c.l.b16 %v647
    %v3338 = vunpack.c.h.b16 %v647
    %v3339 = vunpack.c.l.b16 %v648
    %v3340 = vunpack.c.h.b16 %v648
    %v3341 = vunpack.c.l.b16 %v649
    %v3342 = vunpack.c.h.b16 %v649
    %v3343 = vunpack.c.l.b16 %v650
    %v3344 = vunpack.c.h.b16 %v650
    %v3345 = vunpack.c.l.b16 %v651
    %v3346 = vunpack.c.h.b16 %v651
    %v3347 = vunpack.c.l.b16 %v652
    %v3348 = vunpack.c.h.b16 %v652
    %v3349 = vunpack.c.l.b16 %v653
    %v3350 = vunpack.c.h.b16 %v653
    %v3351 = vunpack.c.l.b16 %v654
    %v3352 = vunpack.c.h.b16 %v654
    %v3353 = vunpack.c.l.b16 %v655
    %v3354 = vunpack.c.h.b16 %v655
    %v3355 = vunpack.c.l.b16 %v656
    %v3356 = vunpack.c.h.b16 %v656
    %v3357 = vunpack.c.l.b16 %v657
    %v3358 = vunpack.c.h.b16 %v657
    %v3359 = vunpack.c.l.b16 %v658
    %v3360 = vunpack.c.h.b16 %v658
    %v3361 = vunpack.c.l.b16 %v659
    %v3362 = vunpack.c.h.b16 %v659
    %v3363 = vunpack.c.l.b16 %v660
    %v3364 = vunpack.c.h.b16 %v660
    %v3365 = vunpack.c.l.b16 %v661
    %v3366 = vunpack.c.h.b16 %v661
    %v3367 = vunpack.c.l.b16 %v662
    %v3368 = vunpack.c.h.b16 %v662
    %v3369 = vunpack.c.l.b16 %v663
    %v3370 = vunpack.c.h.b16 %v663
    %v3371 = vunpack.c.l.b16 %v664
    %v3372 = vunpack.c.h.b16 %v664
    %v3373 = vunpack.c.l.b16 %v665
    %v3374 = vunpack.c.h.b16 %v665
    %v3375 = vunpack.c.l.b16 %v666
    %v3376 = vunpack.c.h.b16 %v666
    %v3377 = vunpack.c.l.b16 %v667
    %v3378 = vunpack.c.h.b16 %v667
    %v3379 = vunpack.c.l.b16 %v668
    %v3380 = vunpack.c.h.b16 %v668
    %v3381 = vunpack.c.l.b16 %v669
    %v3382 = vunpack.c.h.b16 %v669
    %v3383 = vunpack.c.l.b16 %v670
    %v3384 = vunpack.c.h.b16 %v670
    %v3385 = vunpack.c.l.b16 %v671
    %v3386 = vunpack.c.h.b16 %v671
    %v3387 = vunpack.c.l.b16 %v672
    %v3388 = vunpack.c.h.b16 %v672
    %v3389 = vunpack.c.l.b16 %v673
    %v3390 = vunpack.c.h.b16 %v673
    %v3391 = vunpack.c.l.b16 %v674
    %v3392 = vunpack.c.h.b16 %v674
    %v3393 = vunpack.c.l.b16 %v675
    %v3394 = vunpack.c.h.b16 %v675
    %v3395 = vunpack.c.l.b16 %v676
    %v3396 = vunpack.c.h.b16 %v676
    %v3397 = vunpack.c.l.b16 %v677
    %v3398 = vunpack.c.h.b16 %v677
    %v3399 = vunpack.c.l.b16 %v678
    %v3400 = vunpack.c.h.b16 %v678
    %v3401 = vunpack.c.l.b16 %v679
    %v3402 = vunpack.c.h.b16 %v679
    %v3403 = vunpack.c.l.b16 %v680
    %v3404 = vunpack.c.h.b16 %v680
    %v3405 = vunpack.c.l.b16 %v681
    %v3406 = vunpack.c.h.b16 %v681
    %v3407 = vunpack.c.l.b16 %v682
    %v3408 = vunpack.c.h.b16 %v682
    %v3409 = vunpack.c.l.b16 %v683
    %v3410 = vunpack.c.h.b16 %v683
    %v3411 = vunpack.c.l.b16 %v684
    %v3412 = vunpack.c.h.b16 %v684
    %v3413 = vunpack.c.l.b16 %v685
    %v3414 = vunpack.c.h.b16 %v685
    %v3415 = vunpack.c.l.b16 %v686
    %v3416 = vunpack.c.h.b16 %v686
    %v3417 = vunpack.c.l.b16 %v687
    %v3418 = vunpack.c.h.b16 %v687
    %v3419 = vunpack.c.l.b16 %v688
    %v3420 = vunpack.c.h.b16 %v688
    %v3421 = vunpack.c.l.b16 %v689
    %v3422 = vunpack.c.h.b16 %v689
    %v3423 = vunpack.c.l.b16 %v690
    %v3424 = vunpack.c.h.b16 %v690
    %v3425 = vunpack.c.l.b16 %v691
    %v3426 = vunpack.c.h.b16 %v691
    %v3427 = vunpack.c.l.b16 %v692
    %v3428 = vunpack.c.h.b16 %v692
    %v3429 = vunpack.c.l.b16 %v693
    %v3430 = vunpack.c.h.b16 %v693
    %v3431 = vunpack.c.l.b16 %v694
    %v3432 = vunpack.c.h.b16 %v694
    %v3433 = vunpack.c.l.b16 %v695
    %v3434 = vunpack.c.h.b16 %v695
    %v3435 = vunpack.c.l.b16 %v696
    %v3436 = vunpack.c.h.b16 %v696
    %v3437 = vunpack.c.l.b16 %v697
    %v3438 = vunpack.c.h.b16 %v697
    %v3439 = vunpack.c.l.b16 %v698
    %v3440 = vunpack.c.h.b16 %v698
    %v3441 = vunpack.c.l.b16 %v699
    %v3442 = vunpack.c.h.b16 %v699
    %v3443 = vunpack.c.l.b16 %v700
    %v3444 = vunpack.c.h.b16 %v700
    %v3445 = vunpack.c.l.b16 %v701
    %v3446 = vunpack.c.h.b16 %v701
    %v3447 = vunpack.c.l.b16 %v702
    %v3448 = vunpack.c.h.b16 %v702
    %v3449 = vunpack.c.l.b16 %v703
    %v3450 = vunpack.c.h.b16 %v703
    %v3451 = vunpack.c.l.b16 %v704
    %v3452 = vunpack.c.h.b16 %v704
    %v3453 = vunpack.c.l.b16 %v705
    %v3454 = vunpack.c.h.b16 %v705
    %v3455 = vunpack.c.l.b16 %v706
    %v3456 = vunpack.c.h.b16 %v706
    %v3457 = vunpack.c.l.b16 %v707
    %v3458 = vunpack.c.h.b16 %v707
    %v3459 = vunpack.c.l.b16 %v708
    %v3460 = vunpack.c.h.b16 %v708
    %v3461 = vunpack.c.l.b16 %v709
    %v3462 = vunpack.c.h.b16 %v709
    %v3463 = vunpack.c.l.b16 %v710
    %v3464 = vunpack.c.h.b16 %v710
    %v3465 = vunpack.c.l.b16 %v711
    %v3466 = vunpack.c.h.b16 %v711
    %v3467 = vunpack.c.l.b16 %v712
    %v3468 = vunpack.c.h.b16 %v712
    %v3469 = vunpack.c.l.b16 %v713
    %v3470 = vunpack.c.h.b16 %v713
    %v3471 = vunpack.c.l.b16 %v714
    %v3472 = vunpack.c.h.b16 %v714
    %v3473 = vunpack.c.l.b16 %v715
    %v3474 = vunpack.c.h.b16 %v715
    %v3475 = vunpack.c.l.b16 %v716
    %v3476 = vunpack.c.h.b16 %v716
    %v3477 = vunpack.c.l.b16 %v717
    %v3478 = vunpack.c.h.b16 %v717
    %v3479 = vunpack.c.l.b16 %v718
    %v3480 = vunpack.c.h.b16 %v718
    %v3481 = vunpack.c.l.b16 %v719
    %v3482 = vunpack.c.h.b16 %v719
    %v3483 = vunpack.c.l.b16 %v720
    %v3484 = vunpack.c.h.b16 %v720
    %v3485 = vunpack.c.l.b16 %v721
    %v3486 = vunpack.c.h.b16 %v721
    %v3487 = vunpack.c.l.b16 %v722
    %v3488 = vunpack.c.h.b16 %v722
    %v3489 = vunpack.c.l.b16 %v723
    %v3490 = vunpack.c.h.b16 %v723
    %v3491 = vunpack.c.l.b16 %v724
    %v3492 = vunpack.c.h.b16 %v724
    %v3493 = vunpack.c.l.b16 %v725
    %v3494 = vunpack.c.h.b16 %v725
    %v3495 = vunpack.c.l.b16 %v726
    %v3496 = vunpack.c.h.b16 %v726
    %v3497 = vunpack.c.l.b16 %v727
    %v3498 = vunpack.c.h.b16 %v727
    %v3499 = vunpack.c.l.b16 %v728
    %v3500 = vunpack.c.h.b16 %v728
    %v3501 = vunpack.c.l.b16 %v729
    %v3502 = vunpack.c.h.b16 %v729
    %v3503 = vunpack.c.l.b16 %v730
    %v3504 = vunpack.c.h.b16 %v730
    %v3505 = vunpack.c.l.b16 %v731
    %v3506 = vunpack.c.h.b16 %v731
    %v3507 = vunpack.c.l.b16 %v732
    %v3508 = vunpack.c.h.b16 %v732
    %v3509 = vunpack.c.l.b16 %v733
    %v3510 = vunpack.c.h.b16 %v733
    %v3511 = vunpack.c.l.b16 %v734
    %v3512 = vunpack.c.h.b16 %v734
    %v3513 = vunpack.c.l.b16 %v735
    %v3514 = vunpack.c.h.b16 %v735
    %v3515 = vunpack.c.l.b16 %v736
    %v3516 = vunpack.c.h.b16 %v736
    %v3517 = vunpack.c.l.b16 %v737
    %v3518 = vunpack.c.h.b16 %v737
    %v3519 = vunpack.c.l.b16 %v738
    %v3520 = vunpack.c.h.b16 %v738
    %v3521 = vunpack.c.l.b16 %v739
    %v3522 = vunpack.c.h.b16 %v739
    %v3523 = vunpack.c.l.b16 %v740
    %v3524 = vunpack.c.h.b16 %v740
    %v3525 = vunpack.c.l.b16 %v741
    %v3526 = vunpack.c.h.b16 %v741
    %v3527 = vunpack.c.l.b16 %v742
    %v3528 = vunpack.c.h.b16 %v742
    %v3529 = vunpack.c.l.b16 %v743
    %v3530 = vunpack.c.h.b16 %v743
    %v3531 = vunpack.c.l.b16 %v744
    %v3532 = vunpack.c.h.b16 %v744
    %v3533 = vunpack.c.l.b16 %v745
    %v3534 = vunpack.c.h.b16 %v745
    %v3535 = vunpack.c.l.b16 %v746
    %v3536 = vunpack.c.h.b16 %v746
    %v3537 = vunpack.c.l.b16 %v747
    %v3538 = vunpack.c.h.b16 %v747
    %v3539 = vunpack.c.l.b16 %v748
    %v3540 = vunpack.c.h.b16 %v748
    %v3541 = vunpack.c.l.b16 %v749
    %v3542 = vunpack.c.h.b16 %v749
    %v3543 = vunpack.c.l.b16 %v750
    %v3544 = vunpack.c.h.b16 %v750
    %v3545 = vunpack.c.l.b16 %v751
    %v3546 = vunpack.c.h.b16 %v751
    %v3547 = vunpack.c.l.b16 %v752
    %v3548 = vunpack.c.h.b16 %v752
    %v3549 = vunpack.c.l.b16 %v753
    %v3550 = vunpack.c.h.b16 %v753
    %v3551 = vunpack.c.l.b16 %v754
    %v3552 = vunpack.c.h.b16 %v754
    %v3553 = vunpack.c.l.b16 %v755
    %v3554 = vunpack.c.h.b16 %v755
    %v3555 = vunpack.c.l.b16 %v756
    %v3556 = vunpack.c.h.b16 %v756
    %v3557 = vunpack.c.l.b16 %v757
    %v3558 = vunpack.c.h.b16 %v757
    %v3559 = vunpack.c.l.b16 %v758
    %v3560 = vunpack.c.h.b16 %v758
    %v3561 = vunpack.c.l.b16 %v759
    %v3562 = vunpack.c.h.b16 %v759
    %v3563 = vunpack.c.l.b16 %v760
    %v3564 = vunpack.c.h.b16 %v760
    %v3565 = vunpack.c.l.b16 %v761
    %v3566 = vunpack.c.h.b16 %v761
    %v3567 = vunpack.c.l.b16 %v762
    %v3568 = vunpack.c.h.b16 %v762
    %v3569 = vunpack.c.l.b16 %v763
    %v3570 = vunpack.c.h.b16 %v763
    %v3571 = vunpack.c.l.b16 %v764
    %v3572 = vunpack.c.h.b16 %v764
    %v3573 = vunpack.c.l.b16 %v765
    %v3574 = vunpack.c.h.b16 %v765
    %v3575 = vunpack.c.l.b16 %v766
    %v3576 = vunpack.c.h.b16 %v766
    %v3577 = vunpack.c.l.b16 %v767
    %v3578 = vunpack.c.h.b16 %v767
    %v3579 = vunpack.c.l.b16 %v768
    %v3580 = vunpack.c.h.b16 %v768
    %v3581 = vunpack.c.l.b16 %v769
    %v3582 = vunpack.c.h.b16 %v769
    %v3583 = vunpack.c.l.b16 %v770
    %v3584 = vunpack.c.h.b16 %v770
    %v3585 = vunpack.c.l.b16 %v771
    %v3586 = vunpack.c.h.b16 %v771
    %v3587 = vunpack.c.l.b16 %v772
    %v3588 = vunpack.c.h.b16 %v772
    %v3589 = vunpack.c.l.b16 %v773
    %v3590 = vunpack.c.h.b16 %v773
    %v3591 = vunpack.c.l.b16 %v774
    %v3592 = vunpack.c.h.b16 %v774
    %v3593 = vunpack.c.l.b16 %v775
    %v3594 = vunpack.c.h.b16 %v775
    %v3595 = vunpack.c.l.b16 %v776
    %v3596 = vunpack.c.h.b16 %v776
    %v3597 = vunpack.c.l.b16 %v777
    %v3598 = vunpack.c.h.b16 %v777
    %v3599 = vunpack.c.l.b16 %v778
    %v3600 = vunpack.c.h.b16 %v778
    %v3601 = vunpack.c.l.b16 %v779
    %v3602 = vunpack.c.h.b16 %v779
    %v3603 = vunpack.c.l.b16 %v780
    %v3604 = vunpack.c.h.b16 %v780
    %v3605 = vunpack.c.l.b16 %v781
    %v3606 = vunpack.c.h.b16 %v781
    %v3607 = vunpack.c.l.b16 %v782
    %v3608 = vunpack.c.h.b16 %v782
    %v3609 = vunpack.c.l.b16 %v783
    %v3610 = vunpack.c.h.b16 %v783
    %v3611 = vunpack.c.l.b16 %v784
    %v3612 = vunpack.c.h.b16 %v784
    %v3613 = vunpack.c.l.b16 %v785
    %v3614 = vunpack.c.h.b16 %v785
    %v3615 = vunpack.c.l.b16 %v786
    %v3616 = vunpack.c.h.b16 %v786
    %v3617 = vunpack.c.l.b16 %v787
    %v3618 = vunpack.c.h.b16 %v787
    %v3619 = vunpack.c.l.b16 %v788
    %v3620 = vunpack.c.h.b16 %v788
    %v3621 = vunpack.c.l.b16 %v789
    %v3622 = vunpack.c.h.b16 %v789
    %v3623 = vunpack.c.l.b16 %v790
    %v3624 = vunpack.c.h.b16 %v790
    %v3625 = vunpack.c.l.b16 %v791
    %v3626 = vunpack.c.h.b16 %v791
    %v3627 = vunpack.c.l.b16 %v792
    %v3628 = vunpack.c.h.b16 %v792
    %v3629 = vunpack.c.l.b16 %v793
    %v3630 = vunpack.c.h.b16 %v793
    %v3631 = vunpack.c.l.b16 %v794
    %v3632 = vunpack.c.h.b16 %v794
    %v3633 = vunpack.c.l.b16 %v795
    %v3634 = vunpack.c.h.b16 %v795
    %v3635 = vunpack.c.l.b16 %v796
    %v3636 = vunpack.c.h.b16 %v796
    %v3637 = vunpack.c.l.b16 %v797
    %v3638 = vunpack.c.h.b16 %v797
    %v3639 = vunpack.c.l.b16 %v798
    %v3640 = vunpack.c.h.b16 %v798
    %v3641 = vunpack.c.l.b16 %v799
    %v3642 = vunpack.c.h.b16 %v799
    %v3643 = vunpack.c.l.b16 %v800
    %v3644 = vunpack.c.h.b16 %v800
    %v3645 = vunpack.c.l.b16 %v801
    %v3646 = vunpack.c.h.b16 %v801
    %v3647 = vunpack.c.l.b16 %v802
    %v3648 = vunpack.c.h.b16 %v802
    %v3649 = vunpack.c.l.b16 %v803
    %v3650 = vunpack.c.h.b16 %v803
    %v3651 = vunpack.c.l.b16 %v804
    %v3652 = vunpack.c.h.b16 %v804
    %v3653 = vunpack.c.l.b16 %v805
    %v3654 = vunpack.c.h.b16 %v805
    %v3655 = vunpack.c.l.b16 %v806
    %v3656 = vunpack.c.h.b16 %v806
    %v3657 = vunpack.c.l.b16 %v807
    %v3658 = vunpack.c.h.b16 %v807
    %v3659 = vunpack.c.l.b16 %v808
    %v3660 = vunpack.c.h.b16 %v808
    %v3661 = vunpack.c.l.b16 %v809
    %v3662 = vunpack.c.h.b16 %v809
    %v3663 = vunpack.c.l.b16 %v810
    %v3664 = vunpack.c.h.b16 %v810
    %v3665 = vunpack.c.l.b16 %v811
    %v3666 = vunpack.c.h.b16 %v811
    %v3667 = vunpack.c.l.b16 %v812
    %v3668 = vunpack.c.h.b16 %v812
    %v3669 = vunpack.c.l.b16 %v813
    %v3670 = vunpack.c.h.b16 %v813
    %v3671 = vunpack.c.l.b16 %v814
    %v3672 = vunpack.c.h.b16 %v814
    %v3673 = vunpack.c.l.b16 %v815
    %v3674 = vunpack.c.h.b16 %v815
    %v3675 = vunpack.c.l.b16 %v816
    %v3676 = vunpack.c.h.b16 %v816
    %v3677 = vunpack.c.l.b16 %v817
    %v3678 = vunpack.c.h.b16 %v817
    %v3679 = vunpack.c.l.b16 %v818
    %v3680 = vunpack.c.h.b16 %v818
    %v3681 = vunpack.c.l.b16 %v819
    %v3682 = vunpack.c.h.b16 %v819
    %v3683 = vunpack.c.l.b16 %v820
    %v3684 = vunpack.c.h.b16 %v820
    %v3685 = vunpack.c.l.b16 %v821
    %v3686 = vunpack.c.h.b16 %v821
    %v3687 = vunpack.c.l.b16 %v822
    %v3688 = vunpack.c.h.b16 %v822
    %v3689 = vunpack.c.l.b16 %v823
    %v3690 = vunpack.c.h.b16 %v823
    %v3691 = vunpack.c.l.b16 %v824
    %v3692 = vunpack.c.h.b16 %v824
    %v3693 = vunpack.c.l.b16 %v825
    %v3694 = vunpack.c.h.b16 %v825
    %v3695 = vunpack.c.l.b16 %v826
    %v3696 = vunpack.c.h.b16 %v826
    %v3697 = vunpack.c.l.b16 %v827
    %v3698 = vunpack.c.h.b16 %v827
    %v3699 = vunpack.c.l.b16 %v828
    %v3700 = vunpack.c.h.b16 %v828
    %v3701 = vunpack.c.l.b16 %v829
    %v3702 = vunpack.c.h.b16 %v829
    %v3703 = vunpack.c.l.b16 %v830
    %v3704 = vunpack.c.h.b16 %v830
    %v3705 = vunpack.c.l.b16 %v831
    %v3706 = vunpack.c.h.b16 %v831
    %v3707 = vunpack.c.l.b16 %v832
    %v3708 = vunpack.c.h.b16 %v832
    %v3709 = vunpack.c.l.b16 %v833
    %v3710 = vunpack.c.h.b16 %v833
    %v3711 = vunpack.c.l.b16 %v834
    %v3712 = vunpack.c.h.b16 %v834
    %v3713 = vunpack.c.l.b16 %v835
    %v3714 = vunpack.c.h.b16 %v835
    %v3715 = vunpack.c.l.b16 %v836
    %v3716 = vunpack.c.h.b16 %v836
    %v3717 = vunpack.c.l.b16 %v837
    %v3718 = vunpack.c.h.b16 %v837
    %v3719 = vunpack.c.l.b16 %v838
    %v3720 = vunpack.c.h.b16 %v838
    %v3721 = vunpack.c.l.b16 %v839
    %v3722 = vunpack.c.h.b16 %v839
    %v3723 = vunpack.c.l.b16 %v840
    %v3724 = vunpack.c.h.b16 %v840
    %v3725 = vunpack.c.l.b16 %v841
    %v3726 = vunpack.c.h.b16 %v841
    %v3727 = vunpack.c.l.b16 %v842
    %v3728 = vunpack.c.h.b16 %v842
    %v3729 = vunpack.c.l.b16 %v843
    %v3730 = vunpack.c.h.b16 %v843
    %v3731 = vpack.c.b16 %v2167, %v2163
    %v3732 = vpack.c.b16 %v2168, %v2164
    %v3733 = vpack.c.b16 %v2169, %v2165
    %v3734 = vpack.c.b16 %v2170, %v2166
    %v3735 = vpack.c.b16 %v2175, %v2171
    %v3736 = vpack.c.b16 %v2176, %v2172
    %v3737 = vpack.c.b16 %v2177, %v2173
    %v3738 = vpack.c.b16 %v2178, %v2174
    %v3739 = vpack.c.b16 %v2183, %v2179
    %v3740 = vpack.c.b16 %v2184, %v2180
    %v3741 = vpack.c.b16 %v2185, %v2181
    %v3742 = vpack.c.b16 %v2186, %v2182
    %v3743 = vpack.c.b16 %v2191, %v2187
    %v3744 = vpack.c.b16 %v2192, %v2188
    %v3745 = vpack.c.b16 %v2193, %v2189
    %v3746 = vpack.c.b16 %v2194, %v2190
    %v3747 = vpack.c.b16 %v2199, %v2195
    %v3748 = vpack.c.b16 %v2200, %v2196
    %v3749 = vpack.c.b16 %v2201, %v2197
    %v3750 = vpack.c.b16 %v2202, %v2198
    %v3751 = vpack.c.b16 %v2207, %v2203
    %v3752 = vpack.c.b16 %v2208, %v2204
    %v3753 = vpack.c.b16 %v2209, %v2205
    %v3754 = vpack.c.b16 %v2210, %v2206
    %v3755 = vpack.c.b16 %v2215, %v2211
    %v3756 = vpack.c.b16 %v2216, %v2212
    %v3757 = vpack.c.b16 %v2217, %v2213
    %v3758 = vpack.c.b16 %v2218, %v2214
    %v3759 = vpack.c.b16 %v2223, %v2219
    %v3760 = vpack.c.b16 %v2224, %v2220
    %v3761 = vpack.c.b16 %v2225, %v2221
    %v3762 = vpack.c.b16 %v2226, %v2222
    %v3763 = vpack.c.b16 %v2231, %v2227
    %v3764 = vpack.c.b16 %v2232, %v2228
    %v3765 = vpack.c.b16 %v2233, %v2229
    %v3766 = vpack.c.b16 %v2234, %v2230
    %v3767 = vpack.c.b16 %v2239, %v2235
    %v3768 = vpack.c.b16 %v2240, %v2236
    %v3769 = vpack.c.b16 %v2241, %v2237
    %v3770 = vpack.c.b16 %v2242, %v2238
    %v3771 = vpack.c.b16 %v2247, %v2243
    %v3772 = vpack.c.b16 %v2248, %v2244
    %v3773 = vpack.c.b16 %v2249, %v2245
    %v3774 = vpack.c.b16 %v2250, %v2246
    %v3775 = vpack.c.b16 %v2255, %v2251
    %v3776 = vpack.c.b16 %v2256, %v2252
    %v3777 = vpack.c.b16 %v2257, %v2253
    %v3778 = vpack.c.b16 %v2258, %v2254
    %v3779 = vpack.c.b16 %v2263, %v2259
    %v3780 = vpack.c.b16 %v2264, %v2260
    %v3781 = vpack.c.b16 %v2265, %v2261
    %v3782 = vpack.c.b16 %v2266, %v2262
    %v3783 = vpack.c.b16 %v2271, %v2267
    %v3784 = vpack.c.b16 %v2272, %v2268
    %v3785 = vpack.c.b16 %v2273, %v2269
    %v3786 = vpack.c.b16 %v2274, %v2270
    %v3787 = vpack.c.b16 %v2279, %v2275
    %v3788 = vpack.c.b16 %v2280, %v2276
    %v3789 = vpack.c.b16 %v2281, %v2277
    %v3790 = vpack.c.b16 %v2282, %v2278
    %v3791 = vpack.c.b16 %v2287, %v2283
    %v3792 = vpack.c.b16 %v2288, %v2284
    %v3793 = vpack.c.b16 %v2289, %v2285
    %v3794 = vpack.c.b16 %v2290, %v2286
    %v3795 = vpack.c.b16 %v2295, %v2291
    %v3796 = vpack.c.b16 %v2296, %v2292
    %v3797 = vpack.c.b16 %v2297, %v2293
    %v3798 = vpack.c.b16 %v2298, %v2294
    %v3799 = vpack.c.b16 %v2303, %v2299
    %v3800 = vpack.c.b16 %v2304, %v2300
    %v3801 = vpack.c.b16 %v2305, %v2301
    %v3802 = vpack.c.b16 %v2306, %v2302
    %v3803 = vpack.c.b16 %v2311, %v2307
    %v3804 = vpack.c.b16 %v2312, %v2308
    %v3805 = vpack.c.b16 %v2313, %v2309
    %v3806 = vpack.c.b16 %v2314, %v2310
    %v3807 = vpack.c.b16 %v2319, %v2315
    %v3808 = vpack.c.b16 %v2320, %v2316
    %v3809 = vpack.c.b16 %v2321, %v2317
    %v3810 = vpack.c.b16 %v2322, %v2318
    %v3811 = vpack.c.b16 %v2327, %v2323
    %v3812 = vpack.c.b16 %v2328, %v2324
    %v3813 = vpack.c.b16 %v2329, %v2325
    %v3814 = vpack.c.b16 %v2330, %v2326
    %v3815 = vpack.c.b16 %v2335, %v2331
    %v3816 = vpack.c.b16 %v2336, %v2332
    %v3817 = vpack.c.b16 %v2337, %v2333
    %v3818 = vpack.c.b16 %v2338, %v2334
    %v3819 = vpack.c.b16 %v2343, %v2339
    %v3820 = vpack.c.b16 %v2344, %v2340
    %v3821 = vpack.c.b16 %v2345, %v2341
    %v3822 = vpack.c.b16 %v2346, %v2342
    %v3823 = vpack.c.b16 %v2351, %v2347
    %v3824 = vpack.c.b16 %v2352, %v2348
    %v3825 = vpack.c.b16 %v2353, %v2349
    %v3826 = vpack.c.b16 %v2354, %v2350
    %v3827 = vpack.c.b16 %v2359, %v2355
    %v3828 = vpack.c.b16 %v2360, %v2356
    %v3829 = vpack.c.b16 %v2361, %v2357
    %v3830 = vpack.c.b16 %v2362, %v2358
    %v3831 = vpack.c.b16 %v2367, %v2363
    %v3832 = vpack.c.b16 %v2368, %v2364
    %v3833 = vpack.c.b16 %v2369, %v2365
    %v3834 = vpack.c.b16 %v2370, %v2366
    %v3835 = vpack.c.b16 %v2375, %v2371
    %v3836 = vpack.c.b16 %v2376, %v2372
    %v3837 = vpack.c.b16 %v2377, %v2373
    %v3838 = vpack.c.b16 %v2378, %v2374
    %v3839 = vpack.c.b16 %v2383, %v2379
    %v3840 = vpack.c.b16 %v2384, %v2380
    %v3841 = vpack.c.b16 %v2385, %v2381
    %v3842 = vpack.c.b16 %v2386, %v2382
    %v3843 = vpack.c.b16 %v2391, %v2387
    %v3844 = vpack.c.b16 %v2392, %v2388
    %v3845 = vpack.c.b16 %v2393, %v2389
    %v3846 = vpack.c.b16 %v2394, %v2390
    %v3847 = vpack.c.b16 %v2399, %v2395
    %v3848 = vpack.c.b16 %v2400, %v2396
    %v3849 = vpack.c.b16 %v2401, %v2397
    %v3850 = vpack.c.b16 %v2402, %v2398
    %v3851 = vpack.c.b16 %v2407, %v2403
    %v3852 = vpack.c.b16 %v2408, %v2404
    %v3853 = vpack.c.b16 %v2409, %v2405
    %v3854 = vpack.c.b16 %v2410, %v2406
    %v3855 = vpack.c.b16 %v2415, %v2411
    %v3856 = vpack.c.b16 %v2416, %v2412
    %v3857 = vpack.c.b16 %v2417, %v2413
    %v3858 = vpack.c.b16 %v2418, %v2414
    %v3859 = vpack.c.b16 %v2423, %v2419
    %v3860 = vpack.c.b16 %v2424, %v2420
    %v3861 = vpack.c.b16 %v2425, %v2421
    %v3862 = vpack.c.b16 %v2426, %v2422
    %v3863 = vpack.c.b16 %v2431, %v2427
    %v3864 = vpack.c.b16 %v2432, %v2428
    %v3865 = vpack.c.b16 %v2433, %v2429
    %v3866 = vpack.c.b16 %v2434, %v2430
    %v3867 = vpack.c.b16 %v2439, %v2435
    %v3868 = vpack.c.b16 %v2440, %v2436
    %v3869 = vpack.c.b16 %v2441, %v2437
    %v3870 = vpack.c.b16 %v2442, %v2438
    %v3871 = vpack.c.b16 %v2447, %v2443
    %v3872 = vpack.c.b16 %v2448, %v2444
    %v3873 = vpack.c.b16 %v2449, %v2445
    %v3874 = vpack.c.b16 %v2450, %v2446
    %v3875 = vpack.c.b16 %v2455, %v2451
    %v3876 = vpack.c.b16 %v2456, %v2452
    %v3877 = vpack.c.b16 %v2457, %v2453
    %v3878 = vpack.c.b16 %v2458, %v2454
    %v3879 = vpack.c.b16 %v2463, %v2459
    %v3880 = vpack.c.b16 %v2464, %v2460
    %v3881 = vpack.c.b16 %v2465, %v2461
    %v3882 = vpack.c.b16 %v2466, %v2462
    %v3883 = vpack.c.b16 %v2471, %v2467
    %v3884 = vpack.c.b16 %v2472, %v2468
    %v3885 = vpack.c.b16 %v2473, %v2469
    %v3886 = vpack.c.b16 %v2474, %v2470
    %v3887 = vpack.c.b16 %v2479, %v2475
    %v3888 = vpack.c.b16 %v2480, %v2476
    %v3889 = vpack.c.b16 %v2481, %v2477
    %v3890 = vpack.c.b16 %v2482, %v2478
    %v3891 = vpack.c.b16 %v2487, %v2483
    %v3892 = vpack.c.b16 %v2488, %v2484
    %v3893 = vpack.c.b16 %v2489, %v2485
    %v3894 = vpack.c.b16 %v2490, %v2486
    %v3895 = vpack.c.b16 %v2495, %v2491
    %v3896 = vpack.c.b16 %v2496, %v2492
    %v3897 = vpack.c.b16 %v2497, %v2493
    %v3898 = vpack.c.b16 %v2498, %v2494
    %v3899 = vpack.c.b16 %v2503, %v2499
    %v3900 = vpack.c.b16 %v2504, %v2500
    %v3901 = vpack.c.b16 %v2505, %v2501
    %v3902 = vpack.c.b16 %v2506, %v2502
    %v3903 = vpack.c.b16 %v2511, %v2507
    %v3904 = vpack.c.b16 %v2512, %v2508
    %v3905 = vpack.c.b16 %v2513, %v2509
    %v3906 = vpack.c.b16 %v2514, %v2510
    %v3907 = vpack.c.b16 %v2519, %v2515
    %v3908 = vpack.c.b16 %v2520, %v2516
    %v3909 = vpack.c.b16 %v2521, %v2517
    %v3910 = vpack.c.b16 %v2522, %v2518
    %v3911 = vpack.c.b16 %v2527, %v2523
    %v3912 = vpack.c.b16 %v2528, %v2524
    %v3913 = vpack.c.b16 %v2529, %v2525
    %v3914 = vpack.c.b16 %v2530, %v2526
    %v3915 = vpack.c.b16 %v2535, %v2531
    %v3916 = vpack.c.b16 %v2536, %v2532
    %v3917 = vpack.c.b16 %v2537, %v2533
    %v3918 = vpack.c.b16 %v2538, %v2534
    %v3919 = vpack.c.b16 %v2543, %v2539
    %v3920 = vpack.c.b16 %v2544, %v2540
    %v3921 = vpack.c.b16 %v2545, %v2541
    %v3922 = vpack.c.b16 %v2546, %v2542
    %v3923 = vpack.c.b16 %v2551, %v2547
    %v3924 = vpack.c.b16 %v2552, %v2548
    %v3925 = vpack.c.b16 %v2553, %v2549
    %v3926 = vpack.c.b16 %v2554, %v2550
    %v3927 = vpack.c.b16 %v2559, %v2555
    %v3928 = vpack.c.b16 %v2560, %v2556
    %v3929 = vpack.c.b16 %v2561, %v2557
    %v3930 = vpack.c.b16 %v2562, %v2558
    %v3931 = vpack.c.b16 %v2567, %v2563
    %v3932 = vpack.c.b16 %v2568, %v2564
    %v3933 = vpack.c.b16 %v2569, %v2565
    %v3934 = vpack.c.b16 %v2570, %v2566
    %v3935 = vpack.c.b16 %v2575, %v2571
    %v3936 = vpack.c.b16 %v2576, %v2572
    %v3937 = vpack.c.b16 %v2577, %v2573
    %v3938 = vpack.c.b16 %v2578, %v2574
    %v3939 = vpack.c.b16 %v2583, %v2579
    %v3940 = vpack.c.b16 %v2584, %v2580
    %v3941 = vpack.c.b16 %v2585, %v2581
    %v3942 = vpack.c.b16 %v2586, %v2582
    %v3943 = vpack.c.b16 %v2591, %v2587
    %v3944 = vpack.c.b16 %v2592, %v2588
    %v3945 = vpack.c.b16 %v2593, %v2589
    %v3946 = vpack.c.b16 %v2594, %v2590
    %v3947 = vpack.c.b16 %v2599, %v2595
    %v3948 = vpack.c.b16 %v2600, %v2596
    %v3949 = vpack.c.b16 %v2601, %v2597
    %v3950 = vpack.c.b16 %v2602, %v2598
    %v3951 = vpack.c.b16 %v2607, %v2603
    %v3952 = vpack.c.b16 %v2608, %v2604
    %v3953 = vpack.c.b16 %v2609, %v2605
    %v3954 = vpack.c.b16 %v2610, %v2606
    %v3955 = vpack.c.b16 %v2615, %v2611
    %v3956 = vpack.c.b16 %v2616, %v2612
    %v3957 = vpack.c.b16 %v2617, %v2613
    %v3958 = vpack.c.b16 %v2618, %v2614
    %v3959 = vpack.c.b16 %v2623, %v2619
    %v3960 = vpack.c.b16 %v2624, %v2620
    %v3961 = vpack.c.b16 %v2625, %v2621
    %v3962 = vpack.c.b16 %v2626, %v2622
    %v3963 = vpack.c.b16 %v2631, %v2627
    %v3964 = vpack.c.b16 %v2632, %v2628
    %v3965 = vpack.c.b16 %v2633, %v2629
    %v3966 = vpack.c.b16 %v2634, %v2630
    %v3967 = vpack.c.b16 %v2639, %v2635
    %v3968 = vpack.c.b16 %v2640, %v2636
    %v3969 = vpack.c.b16 %v2641, %v2637
    %v3970 = vpack.c.b16 %v2642, %v2638
    %v3971 = vpack.c.b16 %v2647, %v2643
    %v3972 = vpack.c.b16 %v2648, %v2644
    %v3973 = vpack.c.b16 %v2649, %v2645
    %v3974 = vpack.c.b16 %v2650, %v2646
    %v3975 = vpack.c.b16 %v2655, %v2651
    %v3976 = vpack.c.b16 %v2656, %v2652
    %v3977 = vpack.c.b16 %v2657, %v2653
    %v3978 = vpack.c.b16 %v2658, %v2654
    %v3979 = vpack.c.b16 %v2663, %v2659
    %v3980 = vpack.c.b16 %v2664, %v2660
    %v3981 = vpack.c.b16 %v2665, %v2661
    %v3982 = vpack.c.b16 %v2666, %v2662
    %v3983 = vpack.c.b16 %v2671, %v2667
    %v3984 = vpack.c.b16 %v2672, %v2668
    %v3985 = vpack.c.b16 %v2673, %v2669
    %v3986 = vpack.c.b16 %v2674, %v2670
    %v3987 = vpack.c.b16 %v2679, %v2675
    %v3988 = vpack.c.b16 %v2680, %v2676
    %v3989 = vpack.c.b16 %v2681, %v2677
    %v3990 = vpack.c.b16 %v2682, %v2678
    %v3991 = vpack.c.b16 %v2687, %v2683
    %v3992 = vpack.c.b16 %v2688, %v2684
    %v3993 = vpack.c.b16 %v2689, %v2685
    %v3994 = vpack.c.b16 %v2690, %v2686
    %v3995 = vpack.c.b16 %v2695, %v2691
    %v3996 = vpack.c.b16 %v2696, %v2692
    %v3997 = vpack.c.b16 %v2697, %v2693
    %v3998 = vpack.c.b16 %v2698, %v2694
    %v3999 = vpack.c.b16 %v2703, %v2699
    %v4000 = vpack.c.b16 %v2704, %v2700
    %v4001 = vpack.c.b16 %v2705, %v2701
    %v4002 = vpack.c.b16 %v2706, %v2702
    %v4003 = vpack.c.b16 %v2711, %v2707
    %v4004 = vpack.c.b16 %v2712, %v2708
    %v4005 = vpack.c.b16 %v2713, %v2709
    %v4006 = vpack.c.b16 %v2714, %v2710
    %v4007 = vpack.c.b16 %v2719, %v2715
    %v4008 = vpack.c.b16 %v2720, %v2716
    %v4009 = vpack.c.b16 %v2721, %v2717
    %v4010 = vpack.c.b16 %v2722, %v2718
    %v4011 = vpack.c.b16 %v2727, %v2723
    %v4012 = vpack.c.b16 %v2728, %v2724
    %v4013 = vpack.c.b16 %v2729, %v2725
    %v4014 = vpack.c.b16 %v2730, %v2726
    %v4015 = vpack.c.b16 %v2735, %v2731
    %v4016 = vpack.c.b16 %v2736, %v2732
    %v4017 = vpack.c.b16 %v2737, %v2733
    %v4018 = vpack.c.b16 %v2738, %v2734
    %v4019 = vpack.c.b16 %v2743, %v2739
    %v4020 = vpack.c.b16 %v2744, %v2740
    %v4021 = vpack.c.b16 %v2745, %v2741
    %v4022 = vpack.c.b16 %v2746, %v2742
    %v4023 = vpack.c.b16 %v2751, %v2747
    %v4024 = vpack.c.b16 %v2752, %v2748
    %v4025 = vpack.c.b16 %v2753, %v2749
    %v4026 = vpack.c.b16 %v2754, %v2750
    %v4027 = vpack.c.b16 %v2759, %v2755
    %v4028 = vpack.c.b16 %v2760, %v2756
    %v4029 = vpack.c.b16 %v2761, %v2757
    %v4030 = vpack.c.b16 %v2762, %v2758
    %v4031 = vpack.c.b16 %v2767, %v2763
    %v4032 = vpack.c.b16 %v2768, %v2764
    %v4033 = vpack.c.b16 %v2769, %v2765
    %v4034 = vpack.c.b16 %v2770, %v2766
    %v4035 = vpack.c.b16 %v2775, %v2771
    %v4036 = vpack.c.b16 %v2776, %v2772
    %v4037 = vpack.c.b16 %v2777, %v2773
    %v4038 = vpack.c.b16 %v2778, %v2774
    %v4039 = vpack.c.b16 %v2783, %v2779
    %v4040 = vpack.c.b16 %v2784, %v2780
    %v4041 = vpack.c.b16 %v2785, %v2781
    %v4042 = vpack.c.b16 %v2786, %v2782
    %v4043 = vpack.c.b16 %v2791, %v2787
    %v4044 = vpack.c.b16 %v2792, %v2788
    %v4045 = vpack.c.b16 %v2793, %v2789
    %v4046 = vpack.c.b16 %v2794, %v2790
    %v4047 = vpack.c.b16 %v2799, %v2795
    %v4048 = vpack.c.b16 %v2800, %v2796
    %v4049 = vpack.c.b16 %v2801, %v2797
    %v4050 = vpack.c.b16 %v2802, %v2798
    %v4051 = vpack.c.b16 %v2807, %v2803
    %v4052 = vpack.c.b16 %v2808, %v2804
    %v4053 = vpack.c.b16 %v2809, %v2805
    %v4054 = vpack.c.b16 %v2810, %v2806
    %v4055 = vpack.c.b16 %v2815, %v2811
    %v4056 = vpack.c.b16 %v2816, %v2812
    %v4057 = vpack.c.b16 %v2817, %v2813
    %v4058 = vpack.c.b16 %v2818, %v2814
    %v4059 = vpack.c.b16 %v2823, %v2819
    %v4060 = vpack.c.b16 %v2824, %v2820
    %v4061 = vpack.c.b16 %v2825, %v2821
    %v4062 = vpack.c.b16 %v2826, %v2822
    %v4063 = vpack.c.b16 %v2831, %v2827
    %v4064 = vpack.c.b16 %v2832, %v2828
    %v4065 = vpack.c.b16 %v2833, %v2829
    %v4066 = vpack.c.b16 %v2834, %v2830
    %v4067 = vpack.c.b16 %v2839, %v2835
    %v4068 = vpack.c.b16 %v2840, %v2836
    %v4069 = vpack.c.b16 %v2841, %v2837
    %v4070 = vpack.c.b16 %v2842, %v2838
    %v4071 = vpack.c.b16 %v2847, %v2843
    %v4072 = vpack.c.b16 %v2848, %v2844
    %v4073 = vpack.c.b16 %v2849, %v2845
    %v4074 = vpack.c.b16 %v2850, %v2846
    %v4075 = vpack.c.b16 %v2855, %v2851
    %v4076 = vpack.c.b16 %v2856, %v2852
    %v4077 = vpack.c.b16 %v2857, %v2853
    %v4078 = vpack.c.b16 %v2858, %v2854
    %v4079 = vpack.c.b16 %v2863, %v2859
    %v4080 = vpack.c.b16 %v2864, %v2860
    %v4081 = vpack.c.b16 %v2865, %v2861
    %v4082 = vpack.c.b16 %v2866, %v2862
    %v4083 = vpack.c.b16 %v2871, %v2867
    %v4084 = vpack.c.b16 %v2872, %v2868
    %v4085 = vpack.c.b16 %v2873, %v2869
    %v4086 = vpack.c.b16 %v2874, %v2870
    %v4087 = vpack.c.b16 %v2879, %v2875
    %v4088 = vpack.c.b16 %v2880, %v2876
    %v4089 = vpack.c.b16 %v2881, %v2877
    %v4090 = vpack.c.b16 %v2882, %v2878
    %v4091 = vpack.c.b16 %v2887, %v2883
    %v4092 = vpack.c.b16 %v2888, %v2884
    %v4093 = vpack.c.b16 %v2889, %v2885
    %v4094 = vpack.c.b16 %v2890, %v2886
    %v4095 = vpack.c.b16 %v2895, %v2891
    %v4096 = vpack.c.b16 %v2896, %v2892
    %v4097 = vpack.c.b16 %v2897, %v2893
    %v4098 = vpack.c.b16 %v2898, %v2894
    %v4099 = vpack.c.b16 %v2903, %v2899
    %v4100 = vpack.c.b16 %v2904, %v2900
    %v4101 = vpack.c.b16 %v2905, %v2901
    %v4102 = vpack.c.b16 %v2906, %v2902
    %v4103 = vpack.c.b16 %v2911, %v2907
    %v4104 = vpack.c.b16 %v2912, %v2908
    %v4105 = vpack.c.b16 %v2913, %v2909
    %v4106 = vpack.c.b16 %v2914, %v2910
    %v4107 = vpack.c.b16 %v2919, %v2915
    %v4108 = vpack.c.b16 %v2920, %v2916
    %v4109 = vpack.c.b16 %v2921, %v2917
    %v4110 = vpack.c.b16 %v2922, %v2918
    %v4111 = vpack.c.b16 %v2927, %v2923
    %v4112 = vpack.c.b16 %v2928, %v2924
    %v4113 = vpack.c.b16 %v2929, %v2925
    %v4114 = vpack.c.b16 %v2930, %v2926
    %v4115 = vpack.c.b16 %v2935, %v2931
    %v4116 = vpack.c.b16 %v2936, %v2932
    %v4117 = vpack.c.b16 %v2937, %v2933
    %v4118 = vpack.c.b16 %v2938, %v2934
    %v4119 = vpack.c.b16 %v2943, %v2939
    %v4120 = vpack.c.b16 %v2944, %v2940
    %v4121 = vpack.c.b16 %v2945, %v2941
    %v4122 = vpack.c.b16 %v2946, %v2942
    %v4123 = vpack.c.b16 %v2951, %v2947
    %v4124 = vpack.c.b16 %v2952, %v2948
    %v4125 = vpack.c.b16 %v2953, %v2949
    %v4126 = vpack.c.b16 %v2954, %v2950
    %v4127 = vpack.c.b16 %v2959, %v2955
    %v4128 = vpack.c.b16 %v2960, %v2956
    %v4129 = vpack.c.b16 %v2961, %v2957
    %v4130 = vpack.c.b16 %v2962, %v2958
    %v4131 = vpack.c.b16 %v2967, %v2963
    %v4132 = vpack.c.b16 %v2968, %v2964
    %v4133 = vpack.c.b16 %v2969, %v2965
    %v4134 = vpack.c.b16 %v2970, %v2966
    %v4135 = vpack.c.b16 %v2975, %v2971
    %v4136 = vpack.c.b16 %v2976, %v2972
    %v4137 = vpack.c.b16 %v2977, %v2973
    %v4138 = vpack.c.b16 %v2978, %v2974
    %v4139 = vpack.c.b16 %v2983, %v2979
    %v4140 = vpack.c.b16 %v2984, %v2980
    %v4141 = vpack.c.b16 %v2985, %v2981
    %v4142 = vpack.c.b16 %v2986, %v2982
    %v4143 = vpack.c.b16 %v2991, %v2987
    %v4144 = vpack.c.b16 %v2992, %v2988
    %v4145 = vpack.c.b16 %v2993, %v2989
    %v4146 = vpack.c.b16 %v2994, %v2990
    %v4147 = vpack.c.b16 %v2999, %v2995
    %v4148 = vpack.c.b16 %v3000, %v2996
    %v4149 = vpack.c.b16 %v3001, %v2997
    %v4150 = vpack.c.b16 %v3002, %v2998
    %v4151 = vpack.c.b16 %v3007, %v3003
    %v4152 = vpack.c.b16 %v3008, %v3004
    %v4153 = vpack.c.b16 %v3009, %v3005
    %v4154 = vpack.c.b16 %v3010, %v3006
    %v4155 = vpack.c.b16 %v3015, %v3011
    %v4156 = vpack.c.b16 %v3016, %v3012
    %v4157 = vpack.c.b16 %v3017, %v3013
    %v4158 = vpack.c.b16 %v3018, %v3014
    %v4159 = vpack.c.b16 %v3023, %v3019
    %v4160 = vpack.c.b16 %v3024, %v3020
    %v4161 = vpack.c.b16 %v3025, %v3021
    %v4162 = vpack.c.b16 %v3026, %v3022
    %v4163 = vpack.c.b16 %v3031, %v3027
    %v4164 = vpack.c.b16 %v3032, %v3028
    %v4165 = vpack.c.b16 %v3033, %v3029
    %v4166 = vpack.c.b16 %v3034, %v3030
    %v4167 = vpack.c.b16 %v3039, %v3035
    %v4168 = vpack.c.b16 %v3040, %v3036
    %v4169 = vpack.c.b16 %v3041, %v3037
    %v4170 = vpack.c.b16 %v3042, %v3038
    %v4171 = vpack.c.b16 %v3047, %v3043
    %v4172 = vpack.c.b16 %v3048, %v3044
    %v4173 = vpack.c.b16 %v3049, %v3045
    %v4174 = vpack.c.b16 %v3050, %v3046
    %v4175 = vpack.c.b16 %v3055, %v3051
    %v4176 = vpack.c.b16 %v3056, %v3052
    %v4177 = vpack.c.b16 %v3057, %v3053
    %v4178 = vpack.c.b16 %v3058, %v3054
    %v4179 = vpack.c.b16 %v3063, %v3059
    %v4180 = vpack.c.b16 %v3064, %v3060
    %v4181 = vpack.c.b16 %v3065, %v3061
    %v4182 = vpack.c.b16 %v3066, %v3062
    %v4183 = vpack.c.b16 %v3071, %v3067
    %v4184 = vpack.c.b16 %v3072, %v3068
    %v4185 = vpack.c.b16 %v3073, %v3069
    %v4186 = vpack.c.b16 %v3074, %v3070
    %v4187 = vpack.c.b16 %v3079, %v3075
    %v4188 = vpack.c.b16 %v3080, %v3076
    %v4189 = vpack.c.b16 %v3081, %v3077
    %v4190 = vpack.c.b16 %v3082, %v3078
    %v4191 = vpack.c.b16 %v3087, %v3083
    %v4192 = vpack.c.b16 %v3088, %v3084
    %v4193 = vpack.c.b16 %v3089, %v3085
    %v4194 = vpack.c.b16 %v3090, %v3086
    %v4195 = vpack.c.b16 %v3095, %v3091
    %v4196 = vpack.c.b16 %v3096, %v3092
    %v4197 = vpack.c.b16 %v3097, %v3093
    %v4198 = vpack.c.b16 %v3098, %v3094
    %v4199 = vpack.c.b16 %v3103, %v3099
    %v4200 = vpack.c.b16 %v3104, %v3100
    %v4201 = vpack.c.b16 %v3105, %v3101
    %v4202 = vpack.c.b16 %v3106, %v3102
    %v4203 = vpack.c.b16 %v3111, %v3107
    %v4204 = vpack.c.b16 %v3112, %v3108
    %v4205 = vpack.c.b16 %v3113, %v3109
    %v4206 = vpack.c.b16 %v3114, %v3110
    %v4207 = vpack.c.b16 %v3119, %v3115
    %v4208 = vpack.c.b16 %v3120, %v3116
    %v4209 = vpack.c.b16 %v3121, %v3117
    %v4210 = vpack.c.b16 %v3122, %v3118
    %v4211 = vpack.c.b16 %v3127, %v3123
    %v4212 = vpack.c.b16 %v3128, %v3124
    %v4213 = vpack.c.b16 %v3129, %v3125
    %v4214 = vpack.c.b16 %v3130, %v3126
    %v4215 = vpack.c.b16 %v3135, %v3131
    %v4216 = vpack.c.b16 %v3136, %v3132
    %v4217 = vpack.c.b16 %v3137, %v3133
    %v4218 = vpack.c.b16 %v3138, %v3134
    %v4219 = vpack.c.b16 %v3143, %v3139
    %v4220 = vpack.c.b16 %v3144, %v3140
    %v4221 = vpack.c.b16 %v3145, %v3141
    %v4222 = vpack.c.b16 %v3146, %v3142
    %v4223 = vpack.c.b16 %v3151, %v3147
    %v4224 = vpack.c.b16 %v3152, %v3148
    %v4225 = vpack.c.b16 %v3153, %v3149
    %v4226 = vpack.c.b16 %v3154, %v3150
    %v4227 = vpack.c.b16 %v3159, %v3155
    %v4228 = vpack.c.b16 %v3160, %v3156
    %v4229 = vpack.c.b16 %v3161, %v3157
    %v4230 = vpack.c.b16 %v3162, %v3158
    %v4231 = vpack.c.b16 %v3167, %v3163
    %v4232 = vpack.c.b16 %v3168, %v3164
    %v4233 = vpack.c.b16 %v3169, %v3165
    %v4234 = vpack.c.b16 %v3170, %v3166
    %v4235 = vpack.c.b16 %v3175, %v3171
    %v4236 = vpack.c.b16 %v3176, %v3172
    %v4237 = vpack.c.b16 %v3177, %v3173
    %v4238 = vpack.c.b16 %v3178, %v3174
    %v4239 = vpack.c.b16 %v3183, %v3179
    %v4240 = vpack.c.b16 %v3184, %v3180
    %v4241 = vpack.c.b16 %v3185, %v3181
    %v4242 = vpack.c.b16 %v3186, %v3182
    %v4243 = vpack.c.b16 %v3191, %v3187
    %v4244 = vpack.c.b16 %v3192, %v3188
    %v4245 = vpack.c.b16 %v3193, %v3189
    %v4246 = vpack.c.b16 %v3194, %v3190
    %v4247 = vpack.c.b16 %v3199, %v3195
    %v4248 = vpack.c.b16 %v3200, %v3196
    %v4249 = vpack.c.b16 %v3201, %v3197
    %v4250 = vpack.c.b16 %v3202, %v3198
    %v4251 = vpack.c.b16 %v3207, %v3203
    %v4252 = vpack.c.b16 %v3208, %v3204
    %v4253 = vpack.c.b16 %v3209, %v3205
    %v4254 = vpack.c.b16 %v3210, %v3206
    %v4255 = vpack.c.b16 %v3215, %v3211
    %v4256 = vpack.c.b16 %v3216, %v3212
    %v4257 = vpack.c.b16 %v3217, %v3213
    %v4258 = vpack.c.b16 %v3218, %v3214
    %v4259 = vpack.c.b16 %v3223, %v3219
    %v4260 = vpack.c.b16 %v3224, %v3220
    %v4261 = vpack.c.b16 %v3225, %v3221
    %v4262 = vpack.c.b16 %v3226, %v3222
    %v4263 = vpack.c.b16 %v3231, %v3227
    %v4264 = vpack.c.b16 %v3232, %v3228
    %v4265 = vpack.c.b16 %v3233, %v3229
    %v4266 = vpack.c.b16 %v3234, %v3230
    %v4267 = vpack.c.b16 %v3239, %v3235
    %v4268 = vpack.c.b16 %v3240, %v3236
    %v4269 = vpack.c.b16 %v3241, %v3237
    %v4270 = vpack.c.b16 %v3242, %v3238
    %v4271 = vpack.c.b16 %v3247, %v3243
    %v4272 = vpack.c.b16 %v3248, %v3244
    %v4273 = vpack.c.b16 %v3249, %v3245
    %v4274 = vpack.c.b16 %v3250, %v3246
    %v4275 = vpack.c.b16 %v3255, %v3251
    %v4276 = vpack.c.b16 %v3256, %v3252
    %v4277 = vpack.c.b16 %v3257, %v3253
    %v4278 = vpack.c.b16 %v3258, %v3254
    %v4279 = vpack.c.b16 %v3263, %v3259
    %v4280 = vpack.c.b16 %v3264, %v3260
    %v4281 = vpack.c.b16 %v3265, %v3261
    %v4282 = vpack.c.b16 %v3266, %v3262
    %v4283 = vpack.c.b16 %v3271, %v3267
    %v4284 = vpack.c.b16 %v3272, %v3268
    %v4285 = vpack.c.b16 %v3273, %v3269
    %v4286 = vpack.c.b16 %v3274, %v3270
    %v4287 = vpack.c.b16 %v3279, %v3275
    %v4288 = vpack.c.b16 %v3280, %v3276
    %v4289 = vpack.c.b16 %v3281, %v3277
    %v4290 = vpack.c.b16 %v3282, %v3278
    %v4291 = vpack.c.b16 %v3287, %v3283
    %v4292 = vpack.c.b16 %v3288, %v3284
    %v4293 = vpack.c.b16 %v3289, %v3285
    %v4294 = vpack.c.b16 %v3290, %v3286
    %v4295 = vpack.c.b16 %v3295, %v3291
    %v4296 = vpack.c.b16 %v3296, %v3292
    %v4297 = vpack.c.b16 %v3297, %v3293
    %v4298 = vpack.c.b16 %v3298, %v3294
    %v4299 = vpack.c.b16 %v3303, %v3299
    %v4300 = vpack.c.b16 %v3304, %v3300
    %v4301 = vpack.c.b16 %v3305, %v3301
    %v4302 = vpack.c.b16 %v3306, %v3302
    %v4303 = vpack.c.b16 %v3311, %v3307
    %v4304 = vpack.c.b16 %v3312, %v3308
    %v4305 = vpack.c.b16 %v3313, %v3309
    %v4306 = vpack.c.b16 %v3314, %v3310
    %v4307 = vpack.c.b16 %v3319, %v3315
    %v4308 = vpack.c.b16 %v3320, %v3316
    %v4309 = vpack.c.b16 %v3321, %v3317
    %v4310 = vpack.c.b16 %v3322, %v3318
    %v4311 = vpack.c.b16 %v3327, %v3323
    %v4312 = vpack.c.b16 %v3328, %v3324
    %v4313 = vpack.c.b16 %v3329, %v3325
    %v4314 = vpack.c.b16 %v3330, %v3326
    %v4315 = vpack.c.b16 %v3335, %v3331
    %v4316 = vpack.c.b16 %v3336, %v3332
    %v4317 = vpack.c.b16 %v3337, %v3333
    %v4318 = vpack.c.b16 %v3338, %v3334
    %v4319 = vpack.c.b16 %v3343, %v3339
    %v4320 = vpack.c.b16 %v3344, %v3340
    %v4321 = vpack.c.b16 %v3345, %v3341
    %v4322 = vpack.c.b16 %v3346, %v3342
    %v4323 = vpack.c.b16 %v3351, %v3347
    %v4324 = vpack.c.b16 %v3352, %v3348
    %v4325 = vpack.c.b16 %v3353, %v3349
    %v4326 = vpack.c.b16 %v3354, %v3350
    %v4327 = vpack.c.b16 %v3359, %v3355
    %v4328 = vpack.c.b16 %v3360, %v3356
    %v4329 = vpack.c.b16 %v3361, %v3357
    %v4330 = vpack.c.b16 %v3362, %v3358
    %v4331 = vpack.c.b16 %v3367, %v3363
    %v4332 = vpack.c.b16 %v3368, %v3364
    %v4333 = vpack.c.b16 %v3369, %v3365
    %v4334 = vpack.c.b16 %v3370, %v3366
    %v4335 = vpack.c.b16 %v3375, %v3371
    %v4336 = vpack.c.b16 %v3376, %v3372
    %v4337 = vpack.c.b16 %v3377, %v3373
    %v4338 = vpack.c.b16 %v3378, %v3374
    %v4339 = vpack.c.b16 %v3383, %v3379
    %v4340 = vpack.c.b16 %v3384, %v3380
    %v4341 = vpack.c.b16 %v3385, %v3381
    %v4342 = vpack.c.b16 %v3386, %v3382
    %v4343 = vpack.c.b16 %v3391, %v3387
    %v4344 = vpack.c.b16 %v3392, %v3388
    %v4345 = vpack.c.b16 %v3393, %v3389
    %v4346 = vpack.c.b16 %v3394, %v3390
    %v4347 = vpack.c.b16 %v3399, %v3395
    %v4348 = vpack.c.b16 %v3400, %v3396
    %v4349 = vpack.c.b16 %v3401, %v3397
    %v4350 = vpack.c.b16 %v3402, %v3398
    %v4351 = vpack.c.b16 %v3407, %v3403
    %v4352 = vpack.c.b16 %v3408, %v3404
    %v4353 = vpack.c.b16 %v3409, %v3405
    %v4354 = vpack.c.b16 %v3410, %v3406
    %v4355 = vpack.c.b16 %v3415, %v3411
    %v4356 = vpack.c.b16 %v3416, %v3412
    %v4357 = vpack.c.b16 %v3417, %v3413
    %v4358 = vpack.c.b16 %v3418, %v3414
    %v4359 = vpack.c.b16 %v3423, %v3419
    %v4360 = vpack.c.b16 %v3424, %v3420
    %v4361 = vpack.c.b16 %v3425, %v3421
    %v4362 = vpack.c.b16 %v3426, %v3422
    %v4363 = vpack.c.b16 %v3431, %v3427
    %v4364 = vpack.c.b16 %v3432, %v3428
    %v4365 = vpack.c.b16 %v3433, %v3429
    %v4366 = vpack.c.b16 %v3434, %v3430
    %v4367 = vpack.c.b16 %v3439, %v3435
    %v4368 = vpack.c.b16 %v3440, %v3436
    %v4369 = vpack.c.b16 %v3441, %v3437
    %v4370 = vpack.c.b16 %v3442, %v3438
    %v4371 = vpack.c.b16 %v3447, %v3443
    %v4372 = vpack.c.b16 %v3448, %v3444
    %v4373 = vpack.c.b16 %v3449, %v3445
    %v4374 = vpack.c.b16 %v3450, %v3446
    %v4375 = vpack.c.b16 %v3455, %v3451
    %v4376 = vpack.c.b16 %v3456, %v3452
    %v4377 = vpack.c.b16 %v3457, %v3453
    %v4378 = vpack.c.b16 %v3458, %v3454
    %v4379 = vpack.c.b16 %v3463, %v3459
    %v4380 = vpack.c.b16 %v3464, %v3460
    %v4381 = vpack.c.b16 %v3465, %v3461
    %v4382 = vpack.c.b16 %v3466, %v3462
    %v4383 = vpack.c.b16 %v3471, %v3467
    %v4384 = vpack.c.b16 %v3472, %v3468
    %v4385 = vpack.c.b16 %v3473, %v3469
    %v4386 = vpack.c.b16 %v3474, %v3470
    %v4387 = vpack.c.b16 %v3479, %v3475
    %v4388 = vpack.c.b16 %v3480, %v3476
    %v4389 = vpack.c.b16 %v3481, %v3477
    %v4390 = vpack.c.b16 %v3482, %v3478
    %v4391 = vpack.c.b16 %v3487, %v3483
    %v4392 = vpack.c.b16 %v3488, %v3484
    %v4393 = vpack.c.b16 %v3489, %v3485
    %v4394 = vpack.c.b16 %v3490, %v3486
    %v4395 = vpack.c.b16 %v3495, %v3491
    %v4396 = vpack.c.b16 %v3496, %v3492
    %v4397 = vpack.c.b16 %v3497, %v3493
    %v4398 = vpack.c.b16 %v3498, %v3494
    %v4399 = vpack.c.b16 %v3503, %v3499
    %v4400 = vpack.c.b16 %v3504, %v3500
    %v4401 = vpack.c.b16 %v3505, %v3501
    %v4402 = vpack.c.b16 %v3506, %v3502
    %v4403 = vpack.c.b16 %v3511, %v3507
    %v4404 = vpack.c.b16 %v3512, %v3508
    %v4405 = vpack.c.b16 %v3513, %v3509
    %v4406 = vpack.c.b16 %v3514, %v3510
    %v4407 = vpack.c.b16 %v3519, %v3515
    %v4408 = vpack.c.b16 %v3520, %v3516
    %v4409 = vpack.c.b16 %v3521, %v3517
    %v4410 = vpack.c.b16 %v3522, %v3518
    %v4411 = vpack.c.b16 %v3527, %v3523
    %v4412 = vpack.c.b16 %v3528, %v3524
    %v4413 = vpack.c.b16 %v3529, %v3525
    %v4414 = vpack.c.b16 %v3530, %v3526
    %v4415 = vpack.c.b16 %v3535, %v3531
    %v4416 = vpack.c.b16 %v3536, %v3532
    %v4417 = vpack.c.b16 %v3537, %v3533
    %v4418 = vpack.c.b16 %v3538, %v3534
    %v4419 = vpack.c.b16 %v3543, %v3539
    %v4420 = vpack.c.b16 %v3544, %v3540
    %v4421 = vpack.c.b16 %v3545, %v3541
    %v4422 = vpack.c.b16 %v3546, %v3542
    %v4423 = vpack.c.b16 %v3551, %v3547
    %v4424 = vpack.c.b16 %v3552, %v3548
    %v4425 = vpack.c.b16 %v3553, %v3549
    %v4426 = vpack.c.b16 %v3554, %v3550
    %v4427 = vpack.c.b16 %v3559, %v3555
    %v4428 = vpack.c.b16 %v3560, %v3556
    %v4429 = vpack.c.b16 %v3561, %v3557
    %v4430 = vpack.c.b16 %v3562, %v3558
    %v4431 = vpack.c.b16 %v3567, %v3563
    %v4432 = vpack.c.b16 %v3568, %v3564
    %v4433 = vpack.c.b16 %v3569, %v3565
    %v4434 = vpack.c.b16 %v3570, %v3566
    %v4435 = vpack.c.b16 %v3575, %v3571
    %v4436 = vpack.c.b16 %v3576, %v3572
    %v4437 = vpack.c.b16 %v3577, %v3573
    %v4438 = vpack.c.b16 %v3578, %v3574
    %v4439 = vpack.c.b16 %v3583, %v3579
    %v4440 = vpack.c.b16 %v3584, %v3580
    %v4441 = vpack.c.b16 %v3585, %v3581
    %v4442 = vpack.c.b16 %v3586, %v3582
    %v4443 = vpack.c.b16 %v3591, %v3587
    %v4444 = vpack.c.b16 %v3592, %v3588
    %v4445 = vpack.c.b16 %v3593, %v3589
    %v4446 = vpack.c.b16 %v3594, %v3590
    %v4447 = vpack.c.b16 %v3599, %v3595
    %v4448 = vpack.c.b16 %v3600, %v3596
    %v4449 = vpack.c.b16 %v3601, %v3597
    %v4450 = vpack.c.b16 %v3602, %v3598
    %v4451 = vpack.c.b16 %v3607, %v3603
    %v4452 = vpack.c.b16 %v3608, %v3604
    %v4453 = vpack.c.b16 %v3609, %v3605
    %v4454 = vpack.c.b16 %v3610, %v3606
    %v4455 = vpack.c.b16 %v3615, %v3611
    %v4456 = vpack.c.b16 %v3616, %v3612
    %v4457 = vpack.c.b16 %v3617, %v3613
    %v4458 = vpack.c.b16 %v3618, %v3614
    %v4459 = vpack.c.b16 %v3623, %v3619
    %v4460 = vpack.c.b16 %v3624, %v3620
    %v4461 = vpack.c.b16 %v3625, %v3621
    %v4462 = vpack.c.b16 %v3626, %v3622
    %v4463 = vpack.c.b16 %v3631, %v3627
    %v4464 = vpack.c.b16 %v3632, %v3628
    %v4465 = vpack.c.b16 %v3633, %v3629
    %v4466 = vpack.c.b16 %v3634, %v3630
    %v4467 = vpack.c.b16 %v3639, %v3635
    %v4468 = vpack.c.b16 %v3640, %v3636
    %v4469 = vpack.c.b16 %v3641, %v3637
    %v4470 = vpack.c.b16 %v3642, %v3638
    %v4471 = vpack.c.b16 %v3647, %v3643
    %v4472 = vpack.c.b16 %v3648, %v3644
    %v4473 = vpack.c.b16 %v3649, %v3645
    %v4474 = vpack.c.b16 %v3650, %v3646
    %v4475 = vpack.c.b16 %v3655, %v3651
    %v4476 = vpack.c.b16 %v3656, %v3652
    %v4477 = vpack.c.b16 %v3657, %v3653
    %v4478 = vpack.c.b16 %v3658, %v3654
    %v4479 = vpack.c.b16 %v3663, %v3659
    %v4480 = vpack.c.b16 %v3664, %v3660
    %v4481 = vpack.c.b16 %v3665, %v3661
    %v4482 = vpack.c.b16 %v3666, %v3662
    %v4483 = vpack.c.b16 %v3671, %v3667
    %v4484 = vpack.c.b16 %v3672, %v3668
    %v4485 = vpack.c.b16 %v3673, %v3669
    %v4486 = vpack.c.b16 %v3674, %v3670
    %v4487 = vpack.c.b16 %v3679, %v3675
    %v4488 = vpack.c.b16 %v3680, %v3676
    %v4489 = vpack.c.b16 %v3681, %v3677
    %v4490 = vpack.c.b16 %v3682, %v3678
    %v4491 = vpack.c.b16 %v3687, %v3683
    %v4492 = vpack.c.b16 %v3688, %v3684
    %v4493 = vpack.c.b16 %v3689, %v3685
    %v4494 = vpack.c.b16 %v3690, %v3686
    %v4495 = vpack.c.b16 %v3695, %v3691
    %v4496 = vpack.c.b16 %v3696, %v3692
    %v4497 = vpack.c.b16 %v3697, %v3693
    %v4498 = vpack.c.b16 %v3698, %v3694
    %v4499 = vpack.c.b16 %v3703, %v3699
    %v4500 = vpack.c.b16 %v3704, %v3700
    %v4501 = vpack.c.b16 %v3705, %v3701
    %v4502 = vpack.c.b16 %v3706, %v3702
    %v4503 = vpack.c.b16 %v3711, %v3707
    %v4504 = vpack.c.b16 %v3712, %v3708
    %v4505 = vpack.c.b16 %v3713, %v3709
    %v4506 = vpack.c.b16 %v3714, %v3710
    %v4507 = vpack.c.b16 %v3719, %v3715
    %v4508 = vpack.c.b16 %v3720, %v3716
    %v4509 = vpack.c.b16 %v3721, %v3717
    %v4510 = vpack.c.b16 %v3722, %v3718
    %v4511 = vpack.c.b16 %v3727, %v3723
    %v4512 = vpack.c.b16 %v3728, %v3724
    %v4513 = vpack.c.b16 %v3729, %v3725
    %v4514 = vpack.c.b16 %v3730, %v3726
    %vm5299 = vcmask 523264
    %v5301 = vsel %vm5299, %v1354, 0
    %5303 = vmatprep.subr.bf16.mxu0 %v3760
    %5304 = vmatpush1.bf16.msra.mxu0 %v3759
    %5305 = vmatprep.subr.bf16.mxu0 %v3756
    %5306 = vmatpush1.bf16.msra.mxu0 %v3755
    %5307 = vmatprep.subr.bf16.mxu0 %v3752
    %5308 = vmatpush1.bf16.msra.mxu0 %v3751
    %5309 = vmatprep.subr.bf16.mxu0 %v3748
    %5310 = vmatpush1.bf16.msra.mxu0 %v3747
    %5311 = vmatprep.subr.bf16.mxu0 %v3744
    %5312 = vmatpush1.bf16.msra.mxu0 %v3743
    %5313 = vmatprep.subr.bf16.mxu0 %v3740
    %5314 = vmatpush1.bf16.msra.mxu0 %v3739
    %5315 = vmatprep.subr.bf16.mxu0 %v3736
    %5316 = vmatpush1.bf16.msra.mxu0 %v3735
    %5317 = vmatprep.subr.bf16.mxu0 %v3732
    %5318 = vmatpush1.bf16.msra.mxu0 %v3731
    %5319 = vmatprep.subr.bf16.mxu0 %v3792
    %5320 = vmatpush2.bf16.msra.mxu0 %v3791
    %5321 = vmatprep.subr.bf16.mxu0 %v3788
    %5322 = vmatpush2.bf16.msra.mxu0 %v3787
    %5323 = vmatprep.subr.bf16.mxu0 %v3784
    %5324 = vmatpush2.bf16.msra.mxu0 %v3783
    %5325 = vmatprep.subr.bf16.mxu0 %v3780
    %5326 = vmatpush2.bf16.msra.mxu0 %v3779
    %5327 = vmatprep.subr.bf16.mxu0 %v3776
    %5328 = vmatpush2.bf16.msra.mxu0 %v3775
    %5329 = vmatprep.subr.bf16.mxu0 %v3772
    %5330 = vmatpush2.bf16.msra.mxu0 %v3771
    %5331 = vmatprep.subr.bf16.mxu0 %v3768
    %5332 = vmatpush2.bf16.msra.mxu0 %v3767
    %5333 = vmatprep.subr.bf16.mxu0 %v3764
    %5334 = vmatpush2.bf16.msra.mxu0 %v3763
    %5335 = vmatprep.mubr.bf16.mxu0 %v1030
    %5336 = vmatmul.mubr.bf16.gmra.mxu0 %v1026
    %v5337 = vpop.f32.mrf.mxu0
    %v5338 = vadd.f32 %v849, %v5337
    %v5339 = vpop.f32.mrf.mxu0
    %v5340 = vadd.f32 %v853, %v5339
    %v5341 = vpop.f32.mrf.mxu0
    %v5342 = vadd.f32 %v849, %v5341
    %v5343 = vpop.f32.mrf.mxu0
    %v5344 = vadd.f32 %v853, %v5343
    %5345 = vdwg.mxu0
    %5346 = vmatprep.subr.bf16.mxu0 %v3824
    %5347 = vmatpush1.bf16.msra.mxu0 %v3823
    %5348 = vmatprep.subr.bf16.mxu0 %v3820
    %5349 = vmatpush1.bf16.msra.mxu0 %v3819
    %5350 = vmatprep.subr.bf16.mxu0 %v3816
    %5351 = vmatpush1.bf16.msra.mxu0 %v3815
    %5352 = vmatprep.subr.bf16.mxu0 %v3812
    %5353 = vmatpush1.bf16.msra.mxu0 %v3811
    %5354 = vmatprep.subr.bf16.mxu0 %v3808
    %5355 = vmatpush1.bf16.msra.mxu0 %v3807
    %5356 = vmatprep.subr.bf16.mxu0 %v3804
    %5357 = vmatpush1.bf16.msra.mxu0 %v3803
    %5358 = vmatprep.subr.bf16.mxu0 %v3800
    %5359 = vmatpush1.bf16.msra.mxu0 %v3799
    %5360 = vmatprep.subr.bf16.mxu0 %v3796
    %5361 = vmatpush1.bf16.msra.mxu0 %v3795
    %5362 = vmatprep.subr.bf16.mxu0 %v3856
    %5363 = vmatpush2.bf16.msra.mxu0 %v3855
    %5364 = vmatprep.subr.bf16.mxu0 %v3852
    %5365 = vmatpush2.bf16.msra.mxu0 %v3851
    %5366 = vmatprep.subr.bf16.mxu0 %v3848
    %5367 = vmatpush2.bf16.msra.mxu0 %v3847
    %5368 = vmatprep.subr.bf16.mxu0 %v3844
    %5369 = vmatpush2.bf16.msra.mxu0 %v3843
    %5370 = vmatprep.subr.bf16.mxu0 %v3840
    %5371 = vmatpush2.bf16.msra.mxu0 %v3839
    %5372 = vmatprep.subr.bf16.mxu0 %v3836
    %5373 = vmatpush2.bf16.msra.mxu0 %v3835
    %5374 = vmatprep.subr.bf16.mxu0 %v3832
    %5375 = vmatpush2.bf16.msra.mxu0 %v3831
    %5376 = vmatprep.subr.bf16.mxu0 %v3828
    %5377 = vmatpush2.bf16.msra.mxu0 %v3827
    %5378 = vmatprep.mubr.bf16.mxu0 %v1031
    %5379 = vmatmul.mubr.bf16.gmra.mxu0 %v1027
    %v5380 = vpop.f32.mrf.mxu0
    %v5381 = vadd.f32 %v5338, %v5380
    %v5382 = vpop.f32.mrf.mxu0
    %v5383 = vadd.f32 %v5340, %v5382
    %v5384 = vpop.f32.mrf.mxu0
    %v5385 = vadd.f32 %v5342, %v5384
    %v5386 = vpop.f32.mrf.mxu0
    %v5387 = vadd.f32 %v5344, %v5386
    %5388 = vdwg.mxu0
    %5389 = vmatprep.subr.bf16.mxu0 %v3888
    %5390 = vmatpush1.bf16.msra.mxu0 %v3887
    %5391 = vmatprep.subr.bf16.mxu0 %v3884
    %5392 = vmatpush1.bf16.msra.mxu0 %v3883
    %5393 = vmatprep.subr.bf16.mxu0 %v3880
    %5394 = vmatpush1.bf16.msra.mxu0 %v3879
    %5395 = vmatprep.subr.bf16.mxu0 %v3876
    %5396 = vmatpush1.bf16.msra.mxu0 %v3875
    %5397 = vmatprep.subr.bf16.mxu0 %v3872
    %5398 = vmatpush1.bf16.msra.mxu0 %v3871
    %5399 = vmatprep.subr.bf16.mxu0 %v3868
    %5400 = vmatpush1.bf16.msra.mxu0 %v3867
    %5401 = vmatprep.subr.bf16.mxu0 %v3864
    %5402 = vmatpush1.bf16.msra.mxu0 %v3863
    %5403 = vmatprep.subr.bf16.mxu0 %v3860
    %5404 = vmatpush1.bf16.msra.mxu0 %v3859
    %5405 = vmatprep.subr.bf16.mxu0 %v3920
    %5406 = vmatpush2.bf16.msra.mxu0 %v3919
    %5407 = vmatprep.subr.bf16.mxu0 %v3916
    %5408 = vmatpush2.bf16.msra.mxu0 %v3915
    %5409 = vmatprep.subr.bf16.mxu0 %v3912
    %5410 = vmatpush2.bf16.msra.mxu0 %v3911
    %5411 = vmatprep.subr.bf16.mxu0 %v3908
    %5412 = vmatpush2.bf16.msra.mxu0 %v3907
    %5413 = vmatprep.subr.bf16.mxu0 %v3904
    %5414 = vmatpush2.bf16.msra.mxu0 %v3903
    %5415 = vmatprep.subr.bf16.mxu0 %v3900
    %5416 = vmatpush2.bf16.msra.mxu0 %v3899
    %5417 = vmatprep.subr.bf16.mxu0 %v3896
    %5418 = vmatpush2.bf16.msra.mxu0 %v3895
    %5419 = vmatprep.subr.bf16.mxu0 %v3892
    %5420 = vmatpush2.bf16.msra.mxu0 %v3891
    %5421 = vmatprep.mubr.bf16.mxu0 %v1032
    %5422 = vmatmul.mubr.bf16.gmra.mxu0 %v1028
    %v5423 = vpop.f32.mrf.mxu0
    %v5424 = vadd.f32 %v5381, %v5423
    %v5425 = vpop.f32.mrf.mxu0
    %v5426 = vadd.f32 %v5383, %v5425
    %v5427 = vpop.f32.mrf.mxu0
    %v5428 = vadd.f32 %v5385, %v5427
    %v5429 = vpop.f32.mrf.mxu0
    %v5430 = vadd.f32 %v5387, %v5429
    %5431 = vdwg.mxu0
    %5432 = vmatprep.subr.bf16.mxu0 %v3952
    %5433 = vmatpush1.bf16.msra.mxu0 %v3951
    %5434 = vmatprep.subr.bf16.mxu0 %v3948
    %5435 = vmatpush1.bf16.msra.mxu0 %v3947
    %5436 = vmatprep.subr.bf16.mxu0 %v3944
    %5437 = vmatpush1.bf16.msra.mxu0 %v3943
    %5438 = vmatprep.subr.bf16.mxu0 %v3940
    %5439 = vmatpush1.bf16.msra.mxu0 %v3939
    %5440 = vmatprep.subr.bf16.mxu0 %v3936
    %5441 = vmatpush1.bf16.msra.mxu0 %v3935
    %5442 = vmatprep.subr.bf16.mxu0 %v3932
    %5443 = vmatpush1.bf16.msra.mxu0 %v3931
    %5444 = vmatprep.subr.bf16.mxu0 %v3928
    %5445 = vmatpush1.bf16.msra.mxu0 %v3927
    %5446 = vmatprep.subr.bf16.mxu0 %v3924
    %5447 = vmatpush1.bf16.msra.mxu0 %v3923
    %5448 = vmatprep.subr.bf16.mxu0 %v3984
    %5449 = vmatpush2.bf16.msra.mxu0 %v3983
    %5450 = vmatprep.subr.bf16.mxu0 %v3980
    %5451 = vmatpush2.bf16.msra.mxu0 %v3979
    %5452 = vmatprep.subr.bf16.mxu0 %v3976
    %5453 = vmatpush2.bf16.msra.mxu0 %v3975
    %5454 = vmatprep.subr.bf16.mxu0 %v3972
    %5455 = vmatpush2.bf16.msra.mxu0 %v3971
    %5456 = vmatprep.subr.bf16.mxu0 %v3968
    %5457 = vmatpush2.bf16.msra.mxu0 %v3967
    %5458 = vmatprep.subr.bf16.mxu0 %v3964
    %5459 = vmatpush2.bf16.msra.mxu0 %v3963
    %5460 = vmatprep.subr.bf16.mxu0 %v3960
    %5461 = vmatpush2.bf16.msra.mxu0 %v3959
    %5462 = vmatprep.subr.bf16.mxu0 %v3956
    %5463 = vmatpush2.bf16.msra.mxu0 %v3955
    %5464 = vmatprep.mubr.bf16.mxu0 %v1033
    %5465 = vmatmul.mubr.bf16.gmra.mxu0 %v1029
    %v5466 = vpop.f32.mrf.mxu0
    %v5467 = vadd.f32 %v5424, %v5466
    %v5468 = vpop.f32.mrf.mxu0
    %v5469 = vadd.f32 %v5426, %v5468
    %v5470 = vpop.f32.mrf.mxu0
    %v5471 = vadd.f32 %v5428, %v5470
    %v5472 = vpop.f32.mrf.mxu0
    %v5473 = vadd.f32 %v5430, %v5472
    %5474 = vdwg.mxu0
    %5475 = vmatprep.subr.bf16.mxu0 %v4016
    %5476 = vmatpush1.bf16.msra.mxu0 %v4015
    %5477 = vmatprep.subr.bf16.mxu0 %v4012
    %5478 = vmatpush1.bf16.msra.mxu0 %v4011
    %5479 = vmatprep.subr.bf16.mxu0 %v4008
    %5480 = vmatpush1.bf16.msra.mxu0 %v4007
    %5481 = vmatprep.subr.bf16.mxu0 %v4004
    %5482 = vmatpush1.bf16.msra.mxu0 %v4003
    %5483 = vmatprep.subr.bf16.mxu0 %v4000
    %5484 = vmatpush1.bf16.msra.mxu0 %v3999
    %5485 = vmatprep.subr.bf16.mxu0 %v3996
    %5486 = vmatpush1.bf16.msra.mxu0 %v3995
    %5487 = vmatprep.subr.bf16.mxu0 %v3992
    %5488 = vmatpush1.bf16.msra.mxu0 %v3991
    %5489 = vmatprep.subr.bf16.mxu0 %v3988
    %5490 = vmatpush1.bf16.msra.mxu0 %v3987
    %5491 = vmatprep.subr.bf16.mxu0 %v4048
    %5492 = vmatpush2.bf16.msra.mxu0 %v4047
    %5493 = vmatprep.subr.bf16.mxu0 %v4044
    %5494 = vmatpush2.bf16.msra.mxu0 %v4043
    %5495 = vmatprep.subr.bf16.mxu0 %v4040
    %5496 = vmatpush2.bf16.msra.mxu0 %v4039
    %5497 = vmatprep.subr.bf16.mxu0 %v4036
    %5498 = vmatpush2.bf16.msra.mxu0 %v4035
    %5499 = vmatprep.subr.bf16.mxu0 %v4032
    %5500 = vmatpush2.bf16.msra.mxu0 %v4031
    %5501 = vmatprep.subr.bf16.mxu0 %v4028
    %5502 = vmatpush2.bf16.msra.mxu0 %v4027
    %5503 = vmatprep.subr.bf16.mxu0 %v4024
    %5504 = vmatpush2.bf16.msra.mxu0 %v4023
    %5505 = vmatprep.subr.bf16.mxu0 %v4020
    %5506 = vmatpush2.bf16.msra.mxu0 %v4019
    %5507 = vmatprep.mubr.bf16.mxu0 %v1166
    %5508 = vmatmul.mubr.bf16.gmra.mxu0 %v1162
    %v5509 = vpop.f32.mrf.mxu0
    %v5510 = vadd.f32 %v5467, %v5509
    %v5511 = vpop.f32.mrf.mxu0
    %v5512 = vadd.f32 %v5469, %v5511
    %v5513 = vpop.f32.mrf.mxu0
    %v5514 = vadd.f32 %v5471, %v5513
    %v5515 = vpop.f32.mrf.mxu0
    %v5516 = vadd.f32 %v5473, %v5515
    %5517 = vdwg.mxu0
    %5518 = vmatprep.subr.bf16.mxu0 %v4080
    %5519 = vmatpush1.bf16.msra.mxu0 %v4079
    %5520 = vmatprep.subr.bf16.mxu0 %v4076
    %5521 = vmatpush1.bf16.msra.mxu0 %v4075
    %5522 = vmatprep.subr.bf16.mxu0 %v4072
    %5523 = vmatpush1.bf16.msra.mxu0 %v4071
    %5524 = vmatprep.subr.bf16.mxu0 %v4068
    %5525 = vmatpush1.bf16.msra.mxu0 %v4067
    %5526 = vmatprep.subr.bf16.mxu0 %v4064
    %5527 = vmatpush1.bf16.msra.mxu0 %v4063
    %5528 = vmatprep.subr.bf16.mxu0 %v4060
    %5529 = vmatpush1.bf16.msra.mxu0 %v4059
    %5530 = vmatprep.subr.bf16.mxu0 %v4056
    %5531 = vmatpush1.bf16.msra.mxu0 %v4055
    %5532 = vmatprep.subr.bf16.mxu0 %v4052
    %5533 = vmatpush1.bf16.msra.mxu0 %v4051
    %5534 = vmatprep.subr.bf16.mxu0 %v4112
    %5535 = vmatpush2.bf16.msra.mxu0 %v4111
    %5536 = vmatprep.subr.bf16.mxu0 %v4108
    %5537 = vmatpush2.bf16.msra.mxu0 %v4107
    %5538 = vmatprep.subr.bf16.mxu0 %v4104
    %5539 = vmatpush2.bf16.msra.mxu0 %v4103
    %5540 = vmatprep.subr.bf16.mxu0 %v4100
    %5541 = vmatpush2.bf16.msra.mxu0 %v4099
    %5542 = vmatprep.subr.bf16.mxu0 %v4096
    %5543 = vmatpush2.bf16.msra.mxu0 %v4095
    %5544 = vmatprep.subr.bf16.mxu0 %v4092
    %5545 = vmatpush2.bf16.msra.mxu0 %v4091
    %5546 = vmatprep.subr.bf16.mxu0 %v4088
    %5547 = vmatpush2.bf16.msra.mxu0 %v4087
    %5548 = vmatprep.subr.bf16.mxu0 %v4084
    %5549 = vmatpush2.bf16.msra.mxu0 %v4083
    %5550 = vmatprep.mubr.bf16.mxu0 %v1167
    %5551 = vmatmul.mubr.bf16.gmra.mxu0 %v1163
    %v5552 = vpop.f32.mrf.mxu0
    %v5553 = vadd.f32 %v5510, %v5552
    %v5554 = vpop.f32.mrf.mxu0
    %v5555 = vadd.f32 %v5512, %v5554
    %v5556 = vpop.f32.mrf.mxu0
    %v5557 = vadd.f32 %v5514, %v5556
    %v5558 = vpop.f32.mrf.mxu0
    %v5559 = vadd.f32 %v5516, %v5558
    %5560 = vdwg.mxu0
    %5561 = vmatprep.subr.bf16.mxu0 %v4144
    %5562 = vmatpush1.bf16.msra.mxu0 %v4143
    %5563 = vmatprep.subr.bf16.mxu0 %v4140
    %5564 = vmatpush1.bf16.msra.mxu0 %v4139
    %5565 = vmatprep.subr.bf16.mxu0 %v4136
    %5566 = vmatpush1.bf16.msra.mxu0 %v4135
    %5567 = vmatprep.subr.bf16.mxu0 %v4132
    %5568 = vmatpush1.bf16.msra.mxu0 %v4131
    %5569 = vmatprep.subr.bf16.mxu0 %v4128
    %5570 = vmatpush1.bf16.msra.mxu0 %v4127
    %5571 = vmatprep.subr.bf16.mxu0 %v4124
    %5572 = vmatpush1.bf16.msra.mxu0 %v4123
    %5573 = vmatprep.subr.bf16.mxu0 %v4120
    %5574 = vmatpush1.bf16.msra.mxu0 %v4119
    %5575 = vmatprep.subr.bf16.mxu0 %v4116
    %5576 = vmatpush1.bf16.msra.mxu0 %v4115
    %5577 = vmatprep.subr.bf16.mxu0 %v4176
    %5578 = vmatpush2.bf16.msra.mxu0 %v4175
    %5579 = vmatprep.subr.bf16.mxu0 %v4172
    %5580 = vmatpush2.bf16.msra.mxu0 %v4171
    %5581 = vmatprep.subr.bf16.mxu0 %v4168
    %5582 = vmatpush2.bf16.msra.mxu0 %v4167
    %5583 = vmatprep.subr.bf16.mxu0 %v4164
    %5584 = vmatpush2.bf16.msra.mxu0 %v4163
    %5585 = vmatprep.subr.bf16.mxu0 %v4160
    %5586 = vmatpush2.bf16.msra.mxu0 %v4159
    %5587 = vmatprep.subr.bf16.mxu0 %v4156
    %5588 = vmatpush2.bf16.msra.mxu0 %v4155
    %5589 = vmatprep.subr.bf16.mxu0 %v4152
    %5590 = vmatpush2.bf16.msra.mxu0 %v4151
    %5591 = vmatprep.subr.bf16.mxu0 %v4148
    %5592 = vmatpush2.bf16.msra.mxu0 %v4147
    %5593 = vmatprep.mubr.bf16.mxu0 %v1168
    %5594 = vmatmul.mubr.bf16.gmra.mxu0 %v1164
    %v5595 = vpop.f32.mrf.mxu0
    %v5596 = vadd.f32 %v5553, %v5595
    %v5597 = vpop.f32.mrf.mxu0
    %v5598 = vadd.f32 %v5555, %v5597
    %v5599 = vpop.f32.mrf.mxu0
    %v5600 = vadd.f32 %v5557, %v5599
    %v5601 = vpop.f32.mrf.mxu0
    %v5602 = vadd.f32 %v5559, %v5601
    %5603 = vdwg.mxu0
    %5604 = vmatprep.subr.bf16.mxu0 %v4208
    %5605 = vmatpush1.bf16.msra.mxu0 %v4207
    %5606 = vmatprep.subr.bf16.mxu0 %v4204
    %5607 = vmatpush1.bf16.msra.mxu0 %v4203
    %5608 = vmatprep.subr.bf16.mxu0 %v4200
    %5609 = vmatpush1.bf16.msra.mxu0 %v4199
    %5610 = vmatprep.subr.bf16.mxu0 %v4196
    %5611 = vmatpush1.bf16.msra.mxu0 %v4195
    %5612 = vmatprep.subr.bf16.mxu0 %v4192
    %5613 = vmatpush1.bf16.msra.mxu0 %v4191
    %5614 = vmatprep.subr.bf16.mxu0 %v4188
    %5615 = vmatpush1.bf16.msra.mxu0 %v4187
    %5616 = vmatprep.subr.bf16.mxu0 %v4184
    %5617 = vmatpush1.bf16.msra.mxu0 %v4183
    %5618 = vmatprep.subr.bf16.mxu0 %v4180
    %5619 = vmatpush1.bf16.msra.mxu0 %v4179
    %5620 = vmatprep.subr.bf16.mxu0 %v4240
    %5621 = vmatpush2.bf16.msra.mxu0 %v4239
    %5622 = vmatprep.subr.bf16.mxu0 %v4236
    %5623 = vmatpush2.bf16.msra.mxu0 %v4235
    %5624 = vmatprep.subr.bf16.mxu0 %v4232
    %5625 = vmatpush2.bf16.msra.mxu0 %v4231
    %5626 = vmatprep.subr.bf16.mxu0 %v4228
    %5627 = vmatpush2.bf16.msra.mxu0 %v4227
    %5628 = vmatprep.subr.bf16.mxu0 %v4224
    %5629 = vmatpush2.bf16.msra.mxu0 %v4223
    %5630 = vmatprep.subr.bf16.mxu0 %v4220
    %5631 = vmatpush2.bf16.msra.mxu0 %v4219
    %5632 = vmatprep.subr.bf16.mxu0 %v4216
    %5633 = vmatpush2.bf16.msra.mxu0 %v4215
    %5634 = vmatprep.subr.bf16.mxu0 %v4212
    %5635 = vmatpush2.bf16.msra.mxu0 %v4211
    %5636 = vmatprep.mubr.bf16.mxu0 %v1169
    %5637 = vmatmul.mubr.bf16.gmra.mxu0 %v1165
    %v5638 = vpop.f32.mrf.mxu0
    %v5639 = vadd.f32 %v5596, %v5638
    %v5640 = vpop.f32.mrf.mxu0
    %v5641 = vadd.f32 %v5598, %v5640
    %v5642 = vpop.f32.mrf.mxu0
    %v5643 = vadd.f32 %v5600, %v5642
    %v5644 = vpop.f32.mrf.mxu0
    %v5645 = vadd.f32 %v5602, %v5644
    %5646 = vdwg.mxu0
    %5647 = vmatprep.subr.bf16.mxu0 %v4272
    %5648 = vmatpush1.bf16.msra.mxu0 %v4271
    %5649 = vmatprep.subr.bf16.mxu0 %v4268
    %5650 = vmatpush1.bf16.msra.mxu0 %v4267
    %5651 = vmatprep.subr.bf16.mxu0 %v4264
    %5652 = vmatpush1.bf16.msra.mxu0 %v4263
    %5653 = vmatprep.subr.bf16.mxu0 %v4260
    %5654 = vmatpush1.bf16.msra.mxu0 %v4259
    %5655 = vmatprep.subr.bf16.mxu0 %v4256
    %5656 = vmatpush1.bf16.msra.mxu0 %v4255
    %5657 = vmatprep.subr.bf16.mxu0 %v4252
    %5658 = vmatpush1.bf16.msra.mxu0 %v4251
    %5659 = vmatprep.subr.bf16.mxu0 %v4248
    %5660 = vmatpush1.bf16.msra.mxu0 %v4247
    %5661 = vmatprep.subr.bf16.mxu0 %v4244
    %5662 = vmatpush1.bf16.msra.mxu0 %v4243
    %5663 = vmatprep.subr.bf16.mxu0 %v4304
    %5664 = vmatpush2.bf16.msra.mxu0 %v4303
    %5665 = vmatprep.subr.bf16.mxu0 %v4300
    %5666 = vmatpush2.bf16.msra.mxu0 %v4299
    %5667 = vmatprep.subr.bf16.mxu0 %v4296
    %5668 = vmatpush2.bf16.msra.mxu0 %v4295
    %5669 = vmatprep.subr.bf16.mxu0 %v4292
    %5670 = vmatpush2.bf16.msra.mxu0 %v4291
    %5671 = vmatprep.subr.bf16.mxu0 %v4288
    %5672 = vmatpush2.bf16.msra.mxu0 %v4287
    %5673 = vmatprep.subr.bf16.mxu0 %v4284
    %5674 = vmatpush2.bf16.msra.mxu0 %v4283
    %5675 = vmatprep.subr.bf16.mxu0 %v4280
    %5676 = vmatpush2.bf16.msra.mxu0 %v4279
    %5677 = vmatprep.subr.bf16.mxu0 %v4276
    %5678 = vmatpush2.bf16.msra.mxu0 %v4275
    %5679 = vmatprep.mubr.bf16.mxu0 %v1302
    %5680 = vmatmul.mubr.bf16.gmra.mxu0 %v1298
    %v5681 = vpop.f32.mrf.mxu0
    %v5682 = vadd.f32 %v5639, %v5681
    %v5683 = vpop.f32.mrf.mxu0
    %v5684 = vadd.f32 %v5641, %v5683
    %v5685 = vpop.f32.mrf.mxu0
    %v5686 = vadd.f32 %v5643, %v5685
    %v5687 = vpop.f32.mrf.mxu0
    %v5688 = vadd.f32 %v5645, %v5687
    %5689 = vdwg.mxu0
    %5690 = vmatprep.subr.bf16.mxu0 %v4336
    %5691 = vmatpush1.bf16.msra.mxu0 %v4335
    %5692 = vmatprep.subr.bf16.mxu0 %v4332
    %5693 = vmatpush1.bf16.msra.mxu0 %v4331
    %5694 = vmatprep.subr.bf16.mxu0 %v4328
    %5695 = vmatpush1.bf16.msra.mxu0 %v4327
    %5696 = vmatprep.subr.bf16.mxu0 %v4324
    %5697 = vmatpush1.bf16.msra.mxu0 %v4323
    %5698 = vmatprep.subr.bf16.mxu0 %v4320
    %5699 = vmatpush1.bf16.msra.mxu0 %v4319
    %5700 = vmatprep.subr.bf16.mxu0 %v4316
    %5701 = vmatpush1.bf16.msra.mxu0 %v4315
    %5702 = vmatprep.subr.bf16.mxu0 %v4312
    %5703 = vmatpush1.bf16.msra.mxu0 %v4311
    %5704 = vmatprep.subr.bf16.mxu0 %v4308
    %5705 = vmatpush1.bf16.msra.mxu0 %v4307
    %5706 = vmatprep.subr.bf16.mxu0 %v4368
    %5707 = vmatpush2.bf16.msra.mxu0 %v4367
    %5708 = vmatprep.subr.bf16.mxu0 %v4364
    %5709 = vmatpush2.bf16.msra.mxu0 %v4363
    %5710 = vmatprep.subr.bf16.mxu0 %v4360
    %5711 = vmatpush2.bf16.msra.mxu0 %v4359
    %5712 = vmatprep.subr.bf16.mxu0 %v4356
    %5713 = vmatpush2.bf16.msra.mxu0 %v4355
    %5714 = vmatprep.subr.bf16.mxu0 %v4352
    %5715 = vmatpush2.bf16.msra.mxu0 %v4351
    %5716 = vmatprep.subr.bf16.mxu0 %v4348
    %5717 = vmatpush2.bf16.msra.mxu0 %v4347
    %5718 = vmatprep.subr.bf16.mxu0 %v4344
    %5719 = vmatpush2.bf16.msra.mxu0 %v4343
    %5720 = vmatprep.subr.bf16.mxu0 %v4340
    %5721 = vmatpush2.bf16.msra.mxu0 %v4339
    %5722 = vmatprep.mubr.bf16.mxu0 %v1303
    %5723 = vmatmul.mubr.bf16.gmra.mxu0 %v1299
    %v5724 = vpop.f32.mrf.mxu0
    %v5725 = vadd.f32 %v5682, %v5724
    %v5726 = vpop.f32.mrf.mxu0
    %v5727 = vadd.f32 %v5684, %v5726
    %v5728 = vpop.f32.mrf.mxu0
    %v5729 = vadd.f32 %v5686, %v5728
    %v5730 = vpop.f32.mrf.mxu0
    %v5731 = vadd.f32 %v5688, %v5730
    %5732 = vdwg.mxu0
    %5733 = vmatprep.subr.bf16.mxu0 %v4400
    %5734 = vmatpush1.bf16.msra.mxu0 %v4399
    %5735 = vmatprep.subr.bf16.mxu0 %v4396
    %5736 = vmatpush1.bf16.msra.mxu0 %v4395
    %5737 = vmatprep.subr.bf16.mxu0 %v4392
    %5738 = vmatpush1.bf16.msra.mxu0 %v4391
    %5739 = vmatprep.subr.bf16.mxu0 %v4388
    %5740 = vmatpush1.bf16.msra.mxu0 %v4387
    %5741 = vmatprep.subr.bf16.mxu0 %v4384
    %5742 = vmatpush1.bf16.msra.mxu0 %v4383
    %5743 = vmatprep.subr.bf16.mxu0 %v4380
    %5744 = vmatpush1.bf16.msra.mxu0 %v4379
    %5745 = vmatprep.subr.bf16.mxu0 %v4376
    %5746 = vmatpush1.bf16.msra.mxu0 %v4375
    %5747 = vmatprep.subr.bf16.mxu0 %v4372
    %5748 = vmatpush1.bf16.msra.mxu0 %v4371
    %5749 = vmatprep.subr.bf16.mxu0 %v4432
    %5750 = vmatpush2.bf16.msra.mxu0 %v4431
    %5751 = vmatprep.subr.bf16.mxu0 %v4428
    %5752 = vmatpush2.bf16.msra.mxu0 %v4427
    %5753 = vmatprep.subr.bf16.mxu0 %v4424
    %5754 = vmatpush2.bf16.msra.mxu0 %v4423
    %5755 = vmatprep.subr.bf16.mxu0 %v4420
    %5756 = vmatpush2.bf16.msra.mxu0 %v4419
    %5757 = vmatprep.subr.bf16.mxu0 %v4416
    %5758 = vmatpush2.bf16.msra.mxu0 %v4415
    %5759 = vmatprep.subr.bf16.mxu0 %v4412
    %5760 = vmatpush2.bf16.msra.mxu0 %v4411
    %5761 = vmatprep.subr.bf16.mxu0 %v4408
    %5762 = vmatpush2.bf16.msra.mxu0 %v4407
    %5763 = vmatprep.subr.bf16.mxu0 %v4404
    %5764 = vmatpush2.bf16.msra.mxu0 %v4403
    %5765 = vmatprep.mubr.bf16.mxu0 %v1304
    %5766 = vmatmul.mubr.bf16.gmra.mxu0 %v1300
    %v5767 = vpop.f32.mrf.mxu0
    %v5768 = vadd.f32 %v5725, %v5767
    %v5769 = vpop.f32.mrf.mxu0
    %v5770 = vadd.f32 %v5727, %v5769
    %v5771 = vpop.f32.mrf.mxu0
    %v5772 = vadd.f32 %v5729, %v5771
    %v5773 = vpop.f32.mrf.mxu0
    %v5774 = vadd.f32 %v5731, %v5773
    %5775 = vdwg.mxu0
    %5776 = vmatprep.subr.bf16.mxu0 %v4464
    %5777 = vmatpush1.bf16.msra.mxu0 %v4463
    %5778 = vmatprep.subr.bf16.mxu0 %v4460
    %5779 = vmatpush1.bf16.msra.mxu0 %v4459
    %5780 = vmatprep.subr.bf16.mxu0 %v4456
    %5781 = vmatpush1.bf16.msra.mxu0 %v4455
    %5782 = vmatprep.subr.bf16.mxu0 %v4452
    %5783 = vmatpush1.bf16.msra.mxu0 %v4451
    %5784 = vmatprep.subr.bf16.mxu0 %v4448
    %5785 = vmatpush1.bf16.msra.mxu0 %v4447
    %5786 = vmatprep.subr.bf16.mxu0 %v4444
    %5787 = vmatpush1.bf16.msra.mxu0 %v4443
    %5788 = vmatprep.subr.bf16.mxu0 %v4440
    %5789 = vmatpush1.bf16.msra.mxu0 %v4439
    %5790 = vmatprep.subr.bf16.mxu0 %v4436
    %5791 = vmatpush1.bf16.msra.mxu0 %v4435
    %5792 = vmatprep.subr.bf16.mxu0 %v4496
    %5793 = vmatpush2.bf16.msra.mxu0 %v4495
    %5794 = vmatprep.subr.bf16.mxu0 %v4492
    %5795 = vmatpush2.bf16.msra.mxu0 %v4491
    %5796 = vmatprep.subr.bf16.mxu0 %v4488
    %5797 = vmatpush2.bf16.msra.mxu0 %v4487
    %5798 = vmatprep.subr.bf16.mxu0 %v4484
    %5799 = vmatpush2.bf16.msra.mxu0 %v4483
    %5800 = vmatprep.subr.bf16.mxu0 %v4480
    %5801 = vmatpush2.bf16.msra.mxu0 %v4479
    %5802 = vmatprep.subr.bf16.mxu0 %v4476
    %5803 = vmatpush2.bf16.msra.mxu0 %v4475
    %5804 = vmatprep.subr.bf16.mxu0 %v4472
    %5805 = vmatpush2.bf16.msra.mxu0 %v4471
    %5806 = vmatprep.subr.bf16.mxu0 %v4468
    %5807 = vmatpush2.bf16.msra.mxu0 %v4467
    %5808 = vmatprep.mubr.bf16.mxu0 %v1305
    %5809 = vmatmul.mubr.bf16.gmra.mxu0 %v1301
    %v5810 = vpop.f32.mrf.mxu0
    %v5811 = vadd.f32 %v5768, %v5810
    %v5812 = vpop.f32.mrf.mxu0
    %v5813 = vadd.f32 %v5770, %v5812
    %v5814 = vpop.f32.mrf.mxu0
    %v5815 = vadd.f32 %v5772, %v5814
    %v5816 = vpop.f32.mrf.mxu0
    %v5817 = vadd.f32 %v5774, %v5816
    %5818 = vdwg.mxu0
    %5819 = vmatprep.subr.bf16.mxu0 0
    %5820 = vmatpush1.bf16.msra.mxu0 0
    %5821 = vmatprep.subr.bf16.mxu0 0
    %5822 = vmatpush1.bf16.msra.mxu0 0
    %5823 = vmatprep.subr.bf16.mxu0 0
    %5824 = vmatpush1.bf16.msra.mxu0 0
    %5825 = vmatprep.subr.bf16.mxu0 0
    %5826 = vmatpush1.bf16.msra.mxu0 0
    %5827 = vmatprep.subr.bf16.mxu0 %v4512
    %5828 = vmatpush1.bf16.msra.mxu0 %v4511
    %5829 = vmatprep.subr.bf16.mxu0 %v4508
    %5830 = vmatpush1.bf16.msra.mxu0 %v4507
    %5831 = vmatprep.subr.bf16.mxu0 %v4504
    %5832 = vmatpush1.bf16.msra.mxu0 %v4503
    %5833 = vmatprep.subr.bf16.mxu0 %v4500
    %5834 = vmatpush1.bf16.msra.mxu0 %v4499
    %5835 = vmatprep.subr.bf16.mxu0 0
    %5836 = vmatpush2.bf16.msra.mxu0 0
    %5837 = vmatprep.subr.bf16.mxu0 0
    %5838 = vmatpush2.bf16.msra.mxu0 0
    %5839 = vmatprep.subr.bf16.mxu0 0
    %5840 = vmatpush2.bf16.msra.mxu0 0
    %5841 = vmatprep.subr.bf16.mxu0 0
    %5842 = vmatpush2.bf16.msra.mxu0 0
    %5843 = vmatprep.subr.bf16.mxu0 0
    %5844 = vmatpush2.bf16.msra.mxu0 0
    %5845 = vmatprep.subr.bf16.mxu0 0
    %5846 = vmatpush2.bf16.msra.mxu0 0
    %5847 = vmatprep.subr.bf16.mxu0 0
    %5848 = vmatpush2.bf16.msra.mxu0 0
    %5849 = vmatprep.subr.bf16.mxu0 0
    %5850 = vmatpush2.bf16.msra.mxu0 0
    %5851 = vmatprep.mubr.bf16.mxu0 0
    %5852 = vmatmul.mubr.bf16.gmra.mxu0 %v5301
    %v5853 = vpop.f32.mrf.mxu0
    %v5854 = vadd.f32 %v5811, %v5853
    %v5855 = vpop.f32.mrf.mxu0
    %v5856 = vadd.f32 %v5813, %v5855
    %v5857 = vpop.f32.mrf.mxu0
    %v5858 = vadd.f32 %v5815, %v5857
    %v5859 = vpop.f32.mrf.mxu0
    %v5860 = vadd.f32 %v5817, %v5859
    %5861 = vdwg.mxu0
    %5862 = vmatprep.subr.bf16.mxu0 %v3762
    %5863 = vmatpush1.bf16.msra.mxu0 %v3761
    %5864 = vmatprep.subr.bf16.mxu0 %v3758
    %5865 = vmatpush1.bf16.msra.mxu0 %v3757
    %5866 = vmatprep.subr.bf16.mxu0 %v3754
    %5867 = vmatpush1.bf16.msra.mxu0 %v3753
    %5868 = vmatprep.subr.bf16.mxu0 %v3750
    %5869 = vmatpush1.bf16.msra.mxu0 %v3749
    %5870 = vmatprep.subr.bf16.mxu0 %v3746
    %5871 = vmatpush1.bf16.msra.mxu0 %v3745
    %5872 = vmatprep.subr.bf16.mxu0 %v3742
    %5873 = vmatpush1.bf16.msra.mxu0 %v3741
    %5874 = vmatprep.subr.bf16.mxu0 %v3738
    %5875 = vmatpush1.bf16.msra.mxu0 %v3737
    %5876 = vmatprep.subr.bf16.mxu0 %v3734
    %5877 = vmatpush1.bf16.msra.mxu0 %v3733
    %5878 = vmatprep.subr.bf16.mxu0 %v3794
    %5879 = vmatpush2.bf16.msra.mxu0 %v3793
    %5880 = vmatprep.subr.bf16.mxu0 %v3790
    %5881 = vmatpush2.bf16.msra.mxu0 %v3789
    %5882 = vmatprep.subr.bf16.mxu0 %v3786
    %5883 = vmatpush2.bf16.msra.mxu0 %v3785
    %5884 = vmatprep.subr.bf16.mxu0 %v3782
    %5885 = vmatpush2.bf16.msra.mxu0 %v3781
    %5886 = vmatprep.subr.bf16.mxu0 %v3778
    %5887 = vmatpush2.bf16.msra.mxu0 %v3777
    %5888 = vmatprep.subr.bf16.mxu0 %v3774
    %5889 = vmatpush2.bf16.msra.mxu0 %v3773
    %5890 = vmatprep.subr.bf16.mxu0 %v3770
    %5891 = vmatpush2.bf16.msra.mxu0 %v3769
    %5892 = vmatprep.subr.bf16.mxu0 %v3766
    %5893 = vmatpush2.bf16.msra.mxu0 %v3765
    %5894 = vmatprep.mubr.bf16.mxu0 %v1030
    %5895 = vmatmul.mubr.bf16.gmra.mxu0 %v1026
    %v5896 = vpop.f32.mrf.mxu0
    %v5897 = vadd.f32 %v857, %v5896
    %v5898 = vpop.f32.mrf.mxu0
    %v5899 = vadd.f32 %v861, %v5898
    %v5900 = vpop.f32.mrf.mxu0
    %v5901 = vadd.f32 %v857, %v5900
    %v5902 = vpop.f32.mrf.mxu0
    %v5903 = vadd.f32 %v861, %v5902
    %5904 = vdwg.mxu0
    %5905 = vmatprep.subr.bf16.mxu0 %v3826
    %5906 = vmatpush1.bf16.msra.mxu0 %v3825
    %5907 = vmatprep.subr.bf16.mxu0 %v3822
    %5908 = vmatpush1.bf16.msra.mxu0 %v3821
    %5909 = vmatprep.subr.bf16.mxu0 %v3818
    %5910 = vmatpush1.bf16.msra.mxu0 %v3817
    %5911 = vmatprep.subr.bf16.mxu0 %v3814
    %5912 = vmatpush1.bf16.msra.mxu0 %v3813
    %5913 = vmatprep.subr.bf16.mxu0 %v3810
    %5914 = vmatpush1.bf16.msra.mxu0 %v3809
    %5915 = vmatprep.subr.bf16.mxu0 %v3806
    %5916 = vmatpush1.bf16.msra.mxu0 %v3805
    %5917 = vmatprep.subr.bf16.mxu0 %v3802
    %5918 = vmatpush1.bf16.msra.mxu0 %v3801
    %5919 = vmatprep.subr.bf16.mxu0 %v3798
    %5920 = vmatpush1.bf16.msra.mxu0 %v3797
    %5921 = vmatprep.subr.bf16.mxu0 %v3858
    %5922 = vmatpush2.bf16.msra.mxu0 %v3857
    %5923 = vmatprep.subr.bf16.mxu0 %v3854
    %5924 = vmatpush2.bf16.msra.mxu0 %v3853
    %5925 = vmatprep.subr.bf16.mxu0 %v3850
    %5926 = vmatpush2.bf16.msra.mxu0 %v3849
    %5927 = vmatprep.subr.bf16.mxu0 %v3846
    %5928 = vmatpush2.bf16.msra.mxu0 %v3845
    %5929 = vmatprep.subr.bf16.mxu0 %v3842
    %5930 = vmatpush2.bf16.msra.mxu0 %v3841
    %5931 = vmatprep.subr.bf16.mxu0 %v3838
    %5932 = vmatpush2.bf16.msra.mxu0 %v3837
    %5933 = vmatprep.subr.bf16.mxu0 %v3834
    %5934 = vmatpush2.bf16.msra.mxu0 %v3833
    %5935 = vmatprep.subr.bf16.mxu0 %v3830
    %5936 = vmatpush2.bf16.msra.mxu0 %v3829
    %5937 = vmatprep.mubr.bf16.mxu0 %v1031
    %5938 = vmatmul.mubr.bf16.gmra.mxu0 %v1027
    %v5939 = vpop.f32.mrf.mxu0
    %v5940 = vadd.f32 %v5897, %v5939
    %v5941 = vpop.f32.mrf.mxu0
    %v5942 = vadd.f32 %v5899, %v5941
    %v5943 = vpop.f32.mrf.mxu0
    %v5944 = vadd.f32 %v5901, %v5943
    %v5945 = vpop.f32.mrf.mxu0
    %v5946 = vadd.f32 %v5903, %v5945
    %5947 = vdwg.mxu0
    %5948 = vmatprep.subr.bf16.mxu0 %v3890
    %5949 = vmatpush1.bf16.msra.mxu0 %v3889
    %5950 = vmatprep.subr.bf16.mxu0 %v3886
    %5951 = vmatpush1.bf16.msra.mxu0 %v3885
    %5952 = vmatprep.subr.bf16.mxu0 %v3882
    %5953 = vmatpush1.bf16.msra.mxu0 %v3881
    %5954 = vmatprep.subr.bf16.mxu0 %v3878
    %5955 = vmatpush1.bf16.msra.mxu0 %v3877
    %5956 = vmatprep.subr.bf16.mxu0 %v3874
    %5957 = vmatpush1.bf16.msra.mxu0 %v3873
    %5958 = vmatprep.subr.bf16.mxu0 %v3870
    %5959 = vmatpush1.bf16.msra.mxu0 %v3869
    %5960 = vmatprep.subr.bf16.mxu0 %v3866
    %5961 = vmatpush1.bf16.msra.mxu0 %v3865
    %5962 = vmatprep.subr.bf16.mxu0 %v3862
    %5963 = vmatpush1.bf16.msra.mxu0 %v3861
    %5964 = vmatprep.subr.bf16.mxu0 %v3922
    %5965 = vmatpush2.bf16.msra.mxu0 %v3921
    %5966 = vmatprep.subr.bf16.mxu0 %v3918
    %5967 = vmatpush2.bf16.msra.mxu0 %v3917
    %5968 = vmatprep.subr.bf16.mxu0 %v3914
    %5969 = vmatpush2.bf16.msra.mxu0 %v3913
    %5970 = vmatprep.subr.bf16.mxu0 %v3910
    %5971 = vmatpush2.bf16.msra.mxu0 %v3909
    %5972 = vmatprep.subr.bf16.mxu0 %v3906
    %5973 = vmatpush2.bf16.msra.mxu0 %v3905
    %5974 = vmatprep.subr.bf16.mxu0 %v3902
    %5975 = vmatpush2.bf16.msra.mxu0 %v3901
    %5976 = vmatprep.subr.bf16.mxu0 %v3898
    %5977 = vmatpush2.bf16.msra.mxu0 %v3897
    %5978 = vmatprep.subr.bf16.mxu0 %v3894
    %5979 = vmatpush2.bf16.msra.mxu0 %v3893
    %5980 = vmatprep.mubr.bf16.mxu0 %v1032
    %5981 = vmatmul.mubr.bf16.gmra.mxu0 %v1028
    %v5982 = vpop.f32.mrf.mxu0
    %v5983 = vadd.f32 %v5940, %v5982
    %v5984 = vpop.f32.mrf.mxu0
    %v5985 = vadd.f32 %v5942, %v5984
    %v5986 = vpop.f32.mrf.mxu0
    %v5987 = vadd.f32 %v5944, %v5986
    %v5988 = vpop.f32.mrf.mxu0
    %v5989 = vadd.f32 %v5946, %v5988
    %5990 = vdwg.mxu0
    %5991 = vmatprep.subr.bf16.mxu0 %v3954
    %5992 = vmatpush1.bf16.msra.mxu0 %v3953
    %5993 = vmatprep.subr.bf16.mxu0 %v3950
    %5994 = vmatpush1.bf16.msra.mxu0 %v3949
    %5995 = vmatprep.subr.bf16.mxu0 %v3946
    %5996 = vmatpush1.bf16.msra.mxu0 %v3945
    %5997 = vmatprep.subr.bf16.mxu0 %v3942
    %5998 = vmatpush1.bf16.msra.mxu0 %v3941
    %5999 = vmatprep.subr.bf16.mxu0 %v3938
    %6000 = vmatpush1.bf16.msra.mxu0 %v3937
    %6001 = vmatprep.subr.bf16.mxu0 %v3934
    %6002 = vmatpush1.bf16.msra.mxu0 %v3933
    %6003 = vmatprep.subr.bf16.mxu0 %v3930
    %6004 = vmatpush1.bf16.msra.mxu0 %v3929
    %6005 = vmatprep.subr.bf16.mxu0 %v3926
    %6006 = vmatpush1.bf16.msra.mxu0 %v3925
    %6007 = vmatprep.subr.bf16.mxu0 %v3986
    %6008 = vmatpush2.bf16.msra.mxu0 %v3985
    %6009 = vmatprep.subr.bf16.mxu0 %v3982
    %6010 = vmatpush2.bf16.msra.mxu0 %v3981
    %6011 = vmatprep.subr.bf16.mxu0 %v3978
    %6012 = vmatpush2.bf16.msra.mxu0 %v3977
    %6013 = vmatprep.subr.bf16.mxu0 %v3974
    %6014 = vmatpush2.bf16.msra.mxu0 %v3973
    %6015 = vmatprep.subr.bf16.mxu0 %v3970
    %6016 = vmatpush2.bf16.msra.mxu0 %v3969
    %6017 = vmatprep.subr.bf16.mxu0 %v3966
    %6018 = vmatpush2.bf16.msra.mxu0 %v3965
    %6019 = vmatprep.subr.bf16.mxu0 %v3962
    %6020 = vmatpush2.bf16.msra.mxu0 %v3961
    %6021 = vmatprep.subr.bf16.mxu0 %v3958
    %6022 = vmatpush2.bf16.msra.mxu0 %v3957
    %6023 = vmatprep.mubr.bf16.mxu0 %v1033
    %6024 = vmatmul.mubr.bf16.gmra.mxu0 %v1029
    %v6025 = vpop.f32.mrf.mxu0
    %v6026 = vadd.f32 %v5983, %v6025
    %v6027 = vpop.f32.mrf.mxu0
    %v6028 = vadd.f32 %v5985, %v6027
    %v6029 = vpop.f32.mrf.mxu0
    %v6030 = vadd.f32 %v5987, %v6029
    %v6031 = vpop.f32.mrf.mxu0
    %v6032 = vadd.f32 %v5989, %v6031
    %6033 = vdwg.mxu0
    %6034 = vmatprep.subr.bf16.mxu0 %v4018
    %6035 = vmatpush1.bf16.msra.mxu0 %v4017
    %6036 = vmatprep.subr.bf16.mxu0 %v4014
    %6037 = vmatpush1.bf16.msra.mxu0 %v4013
    %6038 = vmatprep.subr.bf16.mxu0 %v4010
    %6039 = vmatpush1.bf16.msra.mxu0 %v4009
    %6040 = vmatprep.subr.bf16.mxu0 %v4006
    %6041 = vmatpush1.bf16.msra.mxu0 %v4005
    %6042 = vmatprep.subr.bf16.mxu0 %v4002
    %6043 = vmatpush1.bf16.msra.mxu0 %v4001
    %6044 = vmatprep.subr.bf16.mxu0 %v3998
    %6045 = vmatpush1.bf16.msra.mxu0 %v3997
    %6046 = vmatprep.subr.bf16.mxu0 %v3994
    %6047 = vmatpush1.bf16.msra.mxu0 %v3993
    %6048 = vmatprep.subr.bf16.mxu0 %v3990
    %6049 = vmatpush1.bf16.msra.mxu0 %v3989
    %6050 = vmatprep.subr.bf16.mxu0 %v4050
    %6051 = vmatpush2.bf16.msra.mxu0 %v4049
    %6052 = vmatprep.subr.bf16.mxu0 %v4046
    %6053 = vmatpush2.bf16.msra.mxu0 %v4045
    %6054 = vmatprep.subr.bf16.mxu0 %v4042
    %6055 = vmatpush2.bf16.msra.mxu0 %v4041
    %6056 = vmatprep.subr.bf16.mxu0 %v4038
    %6057 = vmatpush2.bf16.msra.mxu0 %v4037
    %6058 = vmatprep.subr.bf16.mxu0 %v4034
    %6059 = vmatpush2.bf16.msra.mxu0 %v4033
    %6060 = vmatprep.subr.bf16.mxu0 %v4030
    %6061 = vmatpush2.bf16.msra.mxu0 %v4029
    %6062 = vmatprep.subr.bf16.mxu0 %v4026
    %6063 = vmatpush2.bf16.msra.mxu0 %v4025
    %6064 = vmatprep.subr.bf16.mxu0 %v4022
    %6065 = vmatpush2.bf16.msra.mxu0 %v4021
    %6066 = vmatprep.mubr.bf16.mxu0 %v1166
    %6067 = vmatmul.mubr.bf16.gmra.mxu0 %v1162
    %v6068 = vpop.f32.mrf.mxu0
    %v6069 = vadd.f32 %v6026, %v6068
    %v6070 = vpop.f32.mrf.mxu0
    %v6071 = vadd.f32 %v6028, %v6070
    %v6072 = vpop.f32.mrf.mxu0
    %v6073 = vadd.f32 %v6030, %v6072
    %v6074 = vpop.f32.mrf.mxu0
    %v6075 = vadd.f32 %v6032, %v6074
    %6076 = vdwg.mxu0
    %6077 = vmatprep.subr.bf16.mxu0 %v4082
    %6078 = vmatpush1.bf16.msra.mxu0 %v4081
    %6079 = vmatprep.subr.bf16.mxu0 %v4078
    %6080 = vmatpush1.bf16.msra.mxu0 %v4077
    %6081 = vmatprep.subr.bf16.mxu0 %v4074
    %6082 = vmatpush1.bf16.msra.mxu0 %v4073
    %6083 = vmatprep.subr.bf16.mxu0 %v4070
    %6084 = vmatpush1.bf16.msra.mxu0 %v4069
    %6085 = vmatprep.subr.bf16.mxu0 %v4066
    %6086 = vmatpush1.bf16.msra.mxu0 %v4065
    %6087 = vmatprep.subr.bf16.mxu0 %v4062
    %6088 = vmatpush1.bf16.msra.mxu0 %v4061
    %6089 = vmatprep.subr.bf16.mxu0 %v4058
    %6090 = vmatpush1.bf16.msra.mxu0 %v4057
    %6091 = vmatprep.subr.bf16.mxu0 %v4054
    %6092 = vmatpush1.bf16.msra.mxu0 %v4053
    %6093 = vmatprep.subr.bf16.mxu0 %v4114
    %6094 = vmatpush2.bf16.msra.mxu0 %v4113
    %6095 = vmatprep.subr.bf16.mxu0 %v4110
    %6096 = vmatpush2.bf16.msra.mxu0 %v4109
    %6097 = vmatprep.subr.bf16.mxu0 %v4106
    %6098 = vmatpush2.bf16.msra.mxu0 %v4105
    %6099 = vmatprep.subr.bf16.mxu0 %v4102
    %6100 = vmatpush2.bf16.msra.mxu0 %v4101
    %6101 = vmatprep.subr.bf16.mxu0 %v4098
    %6102 = vmatpush2.bf16.msra.mxu0 %v4097
    %6103 = vmatprep.subr.bf16.mxu0 %v4094
    %6104 = vmatpush2.bf16.msra.mxu0 %v4093
    %6105 = vmatprep.subr.bf16.mxu0 %v4090
    %6106 = vmatpush2.bf16.msra.mxu0 %v4089
    %6107 = vmatprep.subr.bf16.mxu0 %v4086
    %6108 = vmatpush2.bf16.msra.mxu0 %v4085
    %6109 = vmatprep.mubr.bf16.mxu0 %v1167
    %6110 = vmatmul.mubr.bf16.gmra.mxu0 %v1163
    %v6111 = vpop.f32.mrf.mxu0
    %v6112 = vadd.f32 %v6069, %v6111
    %v6113 = vpop.f32.mrf.mxu0
    %v6114 = vadd.f32 %v6071, %v6113
    %v6115 = vpop.f32.mrf.mxu0
    %v6116 = vadd.f32 %v6073, %v6115
    %v6117 = vpop.f32.mrf.mxu0
    %v6118 = vadd.f32 %v6075, %v6117
    %6119 = vdwg.mxu0
    %6120 = vmatprep.subr.bf16.mxu0 %v4146
    %6121 = vmatpush1.bf16.msra.mxu0 %v4145
    %6122 = vmatprep.subr.bf16.mxu0 %v4142
    %6123 = vmatpush1.bf16.msra.mxu0 %v4141
    %6124 = vmatprep.subr.bf16.mxu0 %v4138
    %6125 = vmatpush1.bf16.msra.mxu0 %v4137
    %6126 = vmatprep.subr.bf16.mxu0 %v4134
    %6127 = vmatpush1.bf16.msra.mxu0 %v4133
    %6128 = vmatprep.subr.bf16.mxu0 %v4130
    %6129 = vmatpush1.bf16.msra.mxu0 %v4129
    %6130 = vmatprep.subr.bf16.mxu0 %v4126
    %6131 = vmatpush1.bf16.msra.mxu0 %v4125
    %6132 = vmatprep.subr.bf16.mxu0 %v4122
    %6133 = vmatpush1.bf16.msra.mxu0 %v4121
    %6134 = vmatprep.subr.bf16.mxu0 %v4118
    %6135 = vmatpush1.bf16.msra.mxu0 %v4117
    %6136 = vmatprep.subr.bf16.mxu0 %v4178
    %6137 = vmatpush2.bf16.msra.mxu0 %v4177
    %6138 = vmatprep.subr.bf16.mxu0 %v4174
    %6139 = vmatpush2.bf16.msra.mxu0 %v4173
    %6140 = vmatprep.subr.bf16.mxu0 %v4170
    %6141 = vmatpush2.bf16.msra.mxu0 %v4169
    %6142 = vmatprep.subr.bf16.mxu0 %v4166
    %6143 = vmatpush2.bf16.msra.mxu0 %v4165
    %6144 = vmatprep.subr.bf16.mxu0 %v4162
    %6145 = vmatpush2.bf16.msra.mxu0 %v4161
    %6146 = vmatprep.subr.bf16.mxu0 %v4158
    %6147 = vmatpush2.bf16.msra.mxu0 %v4157
    %6148 = vmatprep.subr.bf16.mxu0 %v4154
    %6149 = vmatpush2.bf16.msra.mxu0 %v4153
    %6150 = vmatprep.subr.bf16.mxu0 %v4150
    %6151 = vmatpush2.bf16.msra.mxu0 %v4149
    %6152 = vmatprep.mubr.bf16.mxu0 %v1168
    %6153 = vmatmul.mubr.bf16.gmra.mxu0 %v1164
    %v6154 = vpop.f32.mrf.mxu0
    %v6155 = vadd.f32 %v6112, %v6154
    %v6156 = vpop.f32.mrf.mxu0
    %v6157 = vadd.f32 %v6114, %v6156
    %v6158 = vpop.f32.mrf.mxu0
    %v6159 = vadd.f32 %v6116, %v6158
    %v6160 = vpop.f32.mrf.mxu0
    %v6161 = vadd.f32 %v6118, %v6160
    %6162 = vdwg.mxu0
    %6163 = vmatprep.subr.bf16.mxu0 %v4210
    %6164 = vmatpush1.bf16.msra.mxu0 %v4209
    %6165 = vmatprep.subr.bf16.mxu0 %v4206
    %6166 = vmatpush1.bf16.msra.mxu0 %v4205
    %6167 = vmatprep.subr.bf16.mxu0 %v4202
    %6168 = vmatpush1.bf16.msra.mxu0 %v4201
    %6169 = vmatprep.subr.bf16.mxu0 %v4198
    %6170 = vmatpush1.bf16.msra.mxu0 %v4197
    %6171 = vmatprep.subr.bf16.mxu0 %v4194
    %6172 = vmatpush1.bf16.msra.mxu0 %v4193
    %6173 = vmatprep.subr.bf16.mxu0 %v4190
    %6174 = vmatpush1.bf16.msra.mxu0 %v4189
    %6175 = vmatprep.subr.bf16.mxu0 %v4186
    %6176 = vmatpush1.bf16.msra.mxu0 %v4185
    %6177 = vmatprep.subr.bf16.mxu0 %v4182
    %6178 = vmatpush1.bf16.msra.mxu0 %v4181
    %6179 = vmatprep.subr.bf16.mxu0 %v4242
    %6180 = vmatpush2.bf16.msra.mxu0 %v4241
    %6181 = vmatprep.subr.bf16.mxu0 %v4238
    %6182 = vmatpush2.bf16.msra.mxu0 %v4237
    %6183 = vmatprep.subr.bf16.mxu0 %v4234
    %6184 = vmatpush2.bf16.msra.mxu0 %v4233
    %6185 = vmatprep.subr.bf16.mxu0 %v4230
    %6186 = vmatpush2.bf16.msra.mxu0 %v4229
    %6187 = vmatprep.subr.bf16.mxu0 %v4226
    %6188 = vmatpush2.bf16.msra.mxu0 %v4225
    %6189 = vmatprep.subr.bf16.mxu0 %v4222
    %6190 = vmatpush2.bf16.msra.mxu0 %v4221
    %6191 = vmatprep.subr.bf16.mxu0 %v4218
    %6192 = vmatpush2.bf16.msra.mxu0 %v4217
    %6193 = vmatprep.subr.bf16.mxu0 %v4214
    %6194 = vmatpush2.bf16.msra.mxu0 %v4213
    %6195 = vmatprep.mubr.bf16.mxu0 %v1169
    %6196 = vmatmul.mubr.bf16.gmra.mxu0 %v1165
    %v6197 = vpop.f32.mrf.mxu0
    %v6198 = vadd.f32 %v6155, %v6197
    %v6199 = vpop.f32.mrf.mxu0
    %v6200 = vadd.f32 %v6157, %v6199
    %v6201 = vpop.f32.mrf.mxu0
    %v6202 = vadd.f32 %v6159, %v6201
    %v6203 = vpop.f32.mrf.mxu0
    %v6204 = vadd.f32 %v6161, %v6203
    %6205 = vdwg.mxu0
    %6206 = vmatprep.subr.bf16.mxu0 %v4274
    %6207 = vmatpush1.bf16.msra.mxu0 %v4273
    %6208 = vmatprep.subr.bf16.mxu0 %v4270
    %6209 = vmatpush1.bf16.msra.mxu0 %v4269
    %6210 = vmatprep.subr.bf16.mxu0 %v4266
    %6211 = vmatpush1.bf16.msra.mxu0 %v4265
    %6212 = vmatprep.subr.bf16.mxu0 %v4262
    %6213 = vmatpush1.bf16.msra.mxu0 %v4261
    %6214 = vmatprep.subr.bf16.mxu0 %v4258
    %6215 = vmatpush1.bf16.msra.mxu0 %v4257
    %6216 = vmatprep.subr.bf16.mxu0 %v4254
    %6217 = vmatpush1.bf16.msra.mxu0 %v4253
    %6218 = vmatprep.subr.bf16.mxu0 %v4250
    %6219 = vmatpush1.bf16.msra.mxu0 %v4249
    %6220 = vmatprep.subr.bf16.mxu0 %v4246
    %6221 = vmatpush1.bf16.msra.mxu0 %v4245
    %6222 = vmatprep.subr.bf16.mxu0 %v4306
    %6223 = vmatpush2.bf16.msra.mxu0 %v4305
    %6224 = vmatprep.subr.bf16.mxu0 %v4302
    %6225 = vmatpush2.bf16.msra.mxu0 %v4301
    %6226 = vmatprep.subr.bf16.mxu0 %v4298
    %6227 = vmatpush2.bf16.msra.mxu0 %v4297
    %6228 = vmatprep.subr.bf16.mxu0 %v4294
    %6229 = vmatpush2.bf16.msra.mxu0 %v4293
    %6230 = vmatprep.subr.bf16.mxu0 %v4290
    %6231 = vmatpush2.bf16.msra.mxu0 %v4289
    %6232 = vmatprep.subr.bf16.mxu0 %v4286
    %6233 = vmatpush2.bf16.msra.mxu0 %v4285
    %6234 = vmatprep.subr.bf16.mxu0 %v4282
    %6235 = vmatpush2.bf16.msra.mxu0 %v4281
    %6236 = vmatprep.subr.bf16.mxu0 %v4278
    %6237 = vmatpush2.bf16.msra.mxu0 %v4277
    %6238 = vmatprep.mubr.bf16.mxu0 %v1302
    %6239 = vmatmul.mubr.bf16.gmra.mxu0 %v1298
    %v6240 = vpop.f32.mrf.mxu0
    %v6241 = vadd.f32 %v6198, %v6240
    %v6242 = vpop.f32.mrf.mxu0
    %v6243 = vadd.f32 %v6200, %v6242
    %v6244 = vpop.f32.mrf.mxu0
    %v6245 = vadd.f32 %v6202, %v6244
    %v6246 = vpop.f32.mrf.mxu0
    %v6247 = vadd.f32 %v6204, %v6246
    %6248 = vdwg.mxu0
    %6249 = vmatprep.subr.bf16.mxu0 %v4338
    %6250 = vmatpush1.bf16.msra.mxu0 %v4337
    %6251 = vmatprep.subr.bf16.mxu0 %v4334
    %6252 = vmatpush1.bf16.msra.mxu0 %v4333
    %6253 = vmatprep.subr.bf16.mxu0 %v4330
    %6254 = vmatpush1.bf16.msra.mxu0 %v4329
    %6255 = vmatprep.subr.bf16.mxu0 %v4326
    %6256 = vmatpush1.bf16.msra.mxu0 %v4325
    %6257 = vmatprep.subr.bf16.mxu0 %v4322
    %6258 = vmatpush1.bf16.msra.mxu0 %v4321
    %6259 = vmatprep.subr.bf16.mxu0 %v4318
    %6260 = vmatpush1.bf16.msra.mxu0 %v4317
    %6261 = vmatprep.subr.bf16.mxu0 %v4314
    %6262 = vmatpush1.bf16.msra.mxu0 %v4313
    %6263 = vmatprep.subr.bf16.mxu0 %v4310
    %6264 = vmatpush1.bf16.msra.mxu0 %v4309
    %6265 = vmatprep.subr.bf16.mxu0 %v4370
    %6266 = vmatpush2.bf16.msra.mxu0 %v4369
    %6267 = vmatprep.subr.bf16.mxu0 %v4366
    %6268 = vmatpush2.bf16.msra.mxu0 %v4365
    %6269 = vmatprep.subr.bf16.mxu0 %v4362
    %6270 = vmatpush2.bf16.msra.mxu0 %v4361
    %6271 = vmatprep.subr.bf16.mxu0 %v4358
    %6272 = vmatpush2.bf16.msra.mxu0 %v4357
    %6273 = vmatprep.subr.bf16.mxu0 %v4354
    %6274 = vmatpush2.bf16.msra.mxu0 %v4353
    %6275 = vmatprep.subr.bf16.mxu0 %v4350
    %6276 = vmatpush2.bf16.msra.mxu0 %v4349
    %6277 = vmatprep.subr.bf16.mxu0 %v4346
    %6278 = vmatpush2.bf16.msra.mxu0 %v4345
    %6279 = vmatprep.subr.bf16.mxu0 %v4342
    %6280 = vmatpush2.bf16.msra.mxu0 %v4341
    %6281 = vmatprep.mubr.bf16.mxu0 %v1303
    %6282 = vmatmul.mubr.bf16.gmra.mxu0 %v1299
    %v6283 = vpop.f32.mrf.mxu0
    %v6284 = vadd.f32 %v6241, %v6283
    %v6285 = vpop.f32.mrf.mxu0
    %v6286 = vadd.f32 %v6243, %v6285
    %v6287 = vpop.f32.mrf.mxu0
    %v6288 = vadd.f32 %v6245, %v6287
    %v6289 = vpop.f32.mrf.mxu0
    %v6290 = vadd.f32 %v6247, %v6289
    %6291 = vdwg.mxu0
    %6292 = vmatprep.subr.bf16.mxu0 %v4402
    %6293 = vmatpush1.bf16.msra.mxu0 %v4401
    %6294 = vmatprep.subr.bf16.mxu0 %v4398
    %6295 = vmatpush1.bf16.msra.mxu0 %v4397
    %6296 = vmatprep.subr.bf16.mxu0 %v4394
    %6297 = vmatpush1.bf16.msra.mxu0 %v4393
    %6298 = vmatprep.subr.bf16.mxu0 %v4390
    %6299 = vmatpush1.bf16.msra.mxu0 %v4389
    %6300 = vmatprep.subr.bf16.mxu0 %v4386
    %6301 = vmatpush1.bf16.msra.mxu0 %v4385
    %6302 = vmatprep.subr.bf16.mxu0 %v4382
    %6303 = vmatpush1.bf16.msra.mxu0 %v4381
    %6304 = vmatprep.subr.bf16.mxu0 %v4378
    %6305 = vmatpush1.bf16.msra.mxu0 %v4377
    %6306 = vmatprep.subr.bf16.mxu0 %v4374
    %6307 = vmatpush1.bf16.msra.mxu0 %v4373
    %6308 = vmatprep.subr.bf16.mxu0 %v4434
    %6309 = vmatpush2.bf16.msra.mxu0 %v4433
    %6310 = vmatprep.subr.bf16.mxu0 %v4430
    %6311 = vmatpush2.bf16.msra.mxu0 %v4429
    %6312 = vmatprep.subr.bf16.mxu0 %v4426
    %6313 = vmatpush2.bf16.msra.mxu0 %v4425
    %6314 = vmatprep.subr.bf16.mxu0 %v4422
    %6315 = vmatpush2.bf16.msra.mxu0 %v4421
    %6316 = vmatprep.subr.bf16.mxu0 %v4418
    %6317 = vmatpush2.bf16.msra.mxu0 %v4417
    %6318 = vmatprep.subr.bf16.mxu0 %v4414
    %6319 = vmatpush2.bf16.msra.mxu0 %v4413
    %6320 = vmatprep.subr.bf16.mxu0 %v4410
    %6321 = vmatpush2.bf16.msra.mxu0 %v4409
    %6322 = vmatprep.subr.bf16.mxu0 %v4406
    %6323 = vmatpush2.bf16.msra.mxu0 %v4405
    %6324 = vmatprep.mubr.bf16.mxu0 %v1304
    %6325 = vmatmul.mubr.bf16.gmra.mxu0 %v1300
    %v6326 = vpop.f32.mrf.mxu0
    %v6327 = vadd.f32 %v6284, %v6326
    %v6328 = vpop.f32.mrf.mxu0
    %v6329 = vadd.f32 %v6286, %v6328
    %v6330 = vpop.f32.mrf.mxu0
    %v6331 = vadd.f32 %v6288, %v6330
    %v6332 = vpop.f32.mrf.mxu0
    %v6333 = vadd.f32 %v6290, %v6332
    %6334 = vdwg.mxu0
    %6335 = vmatprep.subr.bf16.mxu0 %v4466
    %6336 = vmatpush1.bf16.msra.mxu0 %v4465
    %6337 = vmatprep.subr.bf16.mxu0 %v4462
    %6338 = vmatpush1.bf16.msra.mxu0 %v4461
    %6339 = vmatprep.subr.bf16.mxu0 %v4458
    %6340 = vmatpush1.bf16.msra.mxu0 %v4457
    %6341 = vmatprep.subr.bf16.mxu0 %v4454
    %6342 = vmatpush1.bf16.msra.mxu0 %v4453
    %6343 = vmatprep.subr.bf16.mxu0 %v4450
    %6344 = vmatpush1.bf16.msra.mxu0 %v4449
    %6345 = vmatprep.subr.bf16.mxu0 %v4446
    %6346 = vmatpush1.bf16.msra.mxu0 %v4445
    %6347 = vmatprep.subr.bf16.mxu0 %v4442
    %6348 = vmatpush1.bf16.msra.mxu0 %v4441
    %6349 = vmatprep.subr.bf16.mxu0 %v4438
    %6350 = vmatpush1.bf16.msra.mxu0 %v4437
    %6351 = vmatprep.subr.bf16.mxu0 %v4498
    %6352 = vmatpush2.bf16.msra.mxu0 %v4497
    %6353 = vmatprep.subr.bf16.mxu0 %v4494
    %6354 = vmatpush2.bf16.msra.mxu0 %v4493
    %6355 = vmatprep.subr.bf16.mxu0 %v4490
    %6356 = vmatpush2.bf16.msra.mxu0 %v4489
    %6357 = vmatprep.subr.bf16.mxu0 %v4486
    %6358 = vmatpush2.bf16.msra.mxu0 %v4485
    %6359 = vmatprep.subr.bf16.mxu0 %v4482
    %6360 = vmatpush2.bf16.msra.mxu0 %v4481
    %6361 = vmatprep.subr.bf16.mxu0 %v4478
    %6362 = vmatpush2.bf16.msra.mxu0 %v4477
    %6363 = vmatprep.subr.bf16.mxu0 %v4474
    %6364 = vmatpush2.bf16.msra.mxu0 %v4473
    %6365 = vmatprep.subr.bf16.mxu0 %v4470
    %6366 = vmatpush2.bf16.msra.mxu0 %v4469
    %6367 = vmatprep.mubr.bf16.mxu0 %v1305
    %6368 = vmatmul.mubr.bf16.gmra.mxu0 %v1301
    %v6369 = vpop.f32.mrf.mxu0
    %v6370 = vadd.f32 %v6327, %v6369
    %v6371 = vpop.f32.mrf.mxu0
    %v6372 = vadd.f32 %v6329, %v6371
    %v6373 = vpop.f32.mrf.mxu0
    %v6374 = vadd.f32 %v6331, %v6373
    %v6375 = vpop.f32.mrf.mxu0
    %v6376 = vadd.f32 %v6333, %v6375
    %6377 = vdwg.mxu0
    %6378 = vmatprep.subr.bf16.mxu0 0
    %6379 = vmatpush1.bf16.msra.mxu0 0
    %6380 = vmatprep.subr.bf16.mxu0 0
    %6381 = vmatpush1.bf16.msra.mxu0 0
    %6382 = vmatprep.subr.bf16.mxu0 0
    %6383 = vmatpush1.bf16.msra.mxu0 0
    %6384 = vmatprep.subr.bf16.mxu0 0
    %6385 = vmatpush1.bf16.msra.mxu0 0
    %6386 = vmatprep.subr.bf16.mxu0 %v4514
    %6387 = vmatpush1.bf16.msra.mxu0 %v4513
    %6388 = vmatprep.subr.bf16.mxu0 %v4510
    %6389 = vmatpush1.bf16.msra.mxu0 %v4509
    %6390 = vmatprep.subr.bf16.mxu0 %v4506
    %6391 = vmatpush1.bf16.msra.mxu0 %v4505
    %6392 = vmatprep.subr.bf16.mxu0 %v4502
    %6393 = vmatpush1.bf16.msra.mxu0 %v4501
    %6394 = vmatprep.subr.bf16.mxu0 0
    %6395 = vmatpush2.bf16.msra.mxu0 0
    %6396 = vmatprep.subr.bf16.mxu0 0
    %6397 = vmatpush2.bf16.msra.mxu0 0
    %6398 = vmatprep.subr.bf16.mxu0 0
    %6399 = vmatpush2.bf16.msra.mxu0 0
    %6400 = vmatprep.subr.bf16.mxu0 0
    %6401 = vmatpush2.bf16.msra.mxu0 0
    %6402 = vmatprep.subr.bf16.mxu0 0
    %6403 = vmatpush2.bf16.msra.mxu0 0
    %6404 = vmatprep.subr.bf16.mxu0 0
    %6405 = vmatpush2.bf16.msra.mxu0 0
    %6406 = vmatprep.subr.bf16.mxu0 0
    %6407 = vmatpush2.bf16.msra.mxu0 0
    %6408 = vmatprep.subr.bf16.mxu0 0
    %6409 = vmatpush2.bf16.msra.mxu0 0
    %6410 = vmatprep.mubr.bf16.mxu0 0
    %6411 = vmatmul.mubr.bf16.gmra.mxu0 %v5301
    %v6412 = vpop.f32.mrf.mxu0
    %v6413 = vadd.f32 %v6370, %v6412
    %v6414 = vpop.f32.mrf.mxu0
    %v6415 = vadd.f32 %v6372, %v6414
    %v6416 = vpop.f32.mrf.mxu0
    %v6417 = vadd.f32 %v6374, %v6416
    %v6418 = vpop.f32.mrf.mxu0
    %v6419 = vadd.f32 %v6376, %v6418
    %6420 = vdwg.mxu0
    %v6421 = vmax.f32 %v5854, 0.0
    %v6422 = vmax.f32 %v5856, 0.0
    %v6423 = vmax.f32 %v6413, 0.0
    %v6424 = vmax.f32 %v6415, 0.0
    %v6425 = vmax.f32 %v5858, 0.0
    %v6426 = vmax.f32 %v5860, 0.0
    %v6427 = vmax.f32 %v6417, 0.0
    %v6428 = vmax.f32 %v6419, 0.0
    %v6429 = vpack.c.bf16 %v6425, %v6421
    %v6430 = vpack.c.bf16 %v6426, %v6422
    %v6431 = vpack.c.bf16 %v6427, %v6423
    %v6432 = vpack.c.bf16 %v6428, %v6424
    %v6433 = vld [vmem:[%s3] sm:$0xff]
    %v6434 = vld [vmem:[%s3 + $0x8] sm:$0xff]
    %v6435 = vld [vmem:[%s3 + $0x10] sm:$0xff]
    %v6436 = vld [vmem:[%s3 + $0x18] sm:$0xff]
    %v6437 = vld [vmem:[%s3 + $0x20] sm:$0xff]
    %v6438 = vld [vmem:[%s3 + $0x28] sm:$0xff]
    %v6439 = vld [vmem:[%s3 + $0x30] sm:$0xff]
    %v6440 = vld [vmem:[%s3 + $0x38] sm:$0xff]
    %v6441 = vld [vmem:[%s3 + $0x40] sm:$0xff]
    %v6442 = vld [vmem:[%s3 + $0x48] sm:$0xff]
    %v6443 = vld [vmem:[%s3 + $0x50] sm:$0xff]
    %v6444 = vld [vmem:[%s3 + $0x58] sm:$0xff]
    %v6445 = vld [vmem:[%s3 + $0x60] sm:$0xff]
    %v6446 = vld [vmem:[%s3 + $0x68] sm:$0xff]
    %v6447 = vld [vmem:[%s3 + $0x70] sm:$0xff]
    %v6448 = vld [vmem:[%s3 + $0x78] sm:$0xff]
    %v6449 = vld [vmem:[%s3 + $0x80] sm:$0xff]
    %v6450 = vld [vmem:[%s3 + $0x88] sm:$0xff]
    %v6451 = vld [vmem:[%s3 + $0x90] sm:$0xff]
    %v6452 = vld [vmem:[%s3 + $0x98] sm:$0xff]
    %v6453 = vld [vmem:[%s3 + $0xa0] sm:$0xff]
    %v6454 = vld [vmem:[%s3 + $0xa8] sm:$0xff]
    %v6455 = vld [vmem:[%s3 + $0xb0] sm:$0xff]
    %v6456 = vld [vmem:[%s3 + $0xb8] sm:$0xff]
    %v6457 = vld [vmem:[%s3 + $0xc0] sm:$0xff]
    %v6458 = vld [vmem:[%s3 + $0xc8] sm:$0xff]
    %v6459 = vld [vmem:[%s3 + $0xd0] sm:$0xff]
    %v6460 = vld [vmem:[%s3 + $0xd8] sm:$0xff]
    %v6461 = vld [vmem:[%s3 + $0xe0] sm:$0xff]
    %v6462 = vld [vmem:[%s3 + $0xe8] sm:$0xff]
    %v6463 = vld [vmem:[%s3 + $0xf0] sm:$0xff]
    %v6464 = vld [vmem:[%s3 + $0xf8] sm:$0xff]
    %v6465 = vld [vmem:[%s3 + $0x100] sm:$0xff]
    %v6466 = vld [vmem:[%s3 + $0x108] sm:$0xff]
    %v6467 = vld [vmem:[%s3 + $0x110] sm:$0xff]
    %v6468 = vld [vmem:[%s3 + $0x118] sm:$0xff]
    %v6469 = vld [vmem:[%s3 + $0x120] sm:$0xff]
    %v6470 = vld [vmem:[%s3 + $0x128] sm:$0xff]
    %v6471 = vld [vmem:[%s3 + $0x130] sm:$0xff]
    %v6472 = vld [vmem:[%s3 + $0x138] sm:$0xff]
    %v6473 = vld [vmem:[%s3 + $0x140] sm:$0xff]
    %v6474 = vld [vmem:[%s3 + $0x148] sm:$0xff]
    %v6475 = vld [vmem:[%s3 + $0x150] sm:$0xff]
    %v6476 = vld [vmem:[%s3 + $0x158] sm:$0xff]
    %v6477 = vld [vmem:[%s3 + $0x160] sm:$0xff]
    %v6478 = vld [vmem:[%s3 + $0x168] sm:$0xff]
    %v6479 = vld [vmem:[%s3 + $0x170] sm:$0xff]
    %v6480 = vld [vmem:[%s3 + $0x178] sm:$0xff]
    %v6481 = vld [vmem:[%s3 + $0x180] sm:$0xff]
    %v6482 = vld [vmem:[%s3 + $0x188] sm:$0xff]
    %v6483 = vld [vmem:[%s3 + $0x190] sm:$0xff]
    %v6484 = vld [vmem:[%s3 + $0x198] sm:$0xff]
    %v6485 = vld [vmem:[%s3 + $0x1a0] sm:$0xff]
    %v6486 = vld [vmem:[%s3 + $0x1a8] sm:$0xff]
    %v6487 = vld [vmem:[%s3 + $0x1b0] sm:$0xff]
    %v6488 = vld [vmem:[%s3 + $0x1b8] sm:$0xff]
    %v6489 = vld [vmem:[%s3 + $0x1c0] sm:$0xff]
    %v6490 = vld [vmem:[%s3 + $0x1c8] sm:$0xff]
    %v6491 = vld [vmem:[%s3 + $0x1d0] sm:$0xff]
    %v6492 = vld [vmem:[%s3 + $0x1d8] sm:$0xff]
    %v6493 = vld [vmem:[%s3 + $0x1e0] sm:$0xff]
    %v6494 = vld [vmem:[%s3 + $0x1e8] sm:$0xff]
    %v6495 = vld [vmem:[%s3 + $0x1f0] sm:$0xff]
    %v6496 = vld [vmem:[%s3 + $0x1f8] sm:$0xff]
    %v6497 = vld [vmem:[%s3 + $0x200] sm:$0xff]
    %v6498 = vld [vmem:[%s3 + $0x208] sm:$0xff]
    %v6499 = vld [vmem:[%s3 + $0x210] sm:$0xff]
    %v6500 = vld [vmem:[%s3 + $0x218] sm:$0xff]
    %v6501 = vld [vmem:[%s3 + $0x220] sm:$0xff]
    %v6502 = vld [vmem:[%s3 + $0x228] sm:$0xff]
    %v6503 = vld [vmem:[%s3 + $0x230] sm:$0xff]
    %v6504 = vld [vmem:[%s3 + $0x238] sm:$0xff]
    %v6505 = vld [vmem:[%s3 + $0x240] sm:$0xff]
    %v6506 = vld [vmem:[%s3 + $0x248] sm:$0xff]
    %v6507 = vld [vmem:[%s3 + $0x250] sm:$0xff]
    %v6508 = vld [vmem:[%s3 + $0x258] sm:$0xff]
    %v6509 = vld [vmem:[%s3 + $0x260] sm:$0xff]
    %v6510 = vld [vmem:[%s3 + $0x268] sm:$0xff]
    %v6511 = vld [vmem:[%s3 + $0x270] sm:$0xff]
    %v6512 = vld [vmem:[%s3 + $0x278] sm:$0xff]
    %v6513 = vld [vmem:[%s3 + $0x280] sm:$0xff]
    %v6514 = vld [vmem:[%s3 + $0x288] sm:$0xff]
    %v6515 = vld [vmem:[%s3 + $0x290] sm:$0xff]
    %v6516 = vld [vmem:[%s3 + $0x298] sm:$0xff]
    %v6517 = vld [vmem:[%s3 + $0x2a0] sm:$0xff]
    %v6518 = vld [vmem:[%s3 + $0x2a8] sm:$0xff]
    %v6519 = vld [vmem:[%s3 + $0x2b0] sm:$0xff]
    %v6520 = vld [vmem:[%s3 + $0x2b8] sm:$0xff]
    %v6521 = vld [vmem:[%s3 + $0x2c0] sm:$0xff]
    %v6522 = vld [vmem:[%s3 + $0x2c8] sm:$0xff]
    %v6523 = vld [vmem:[%s3 + $0x2d0] sm:$0xff]
    %v6524 = vld [vmem:[%s3 + $0x2d8] sm:$0xff]
    %v6525 = vld [vmem:[%s3 + $0x2e0] sm:$0xff]
    %v6526 = vld [vmem:[%s3 + $0x2e8] sm:$0xff]
    %v6527 = vld [vmem:[%s3 + $0x2f0] sm:$0xff]
    %v6528 = vld [vmem:[%s3 + $0x2f8] sm:$0xff]
    %v6529 = vld [vmem:[%s3 + $0x300] sm:$0xff]
    %v6530 = vld [vmem:[%s3 + $0x308] sm:$0xff]
    %v6531 = vld [vmem:[%s3 + $0x310] sm:$0xff]
    %v6532 = vld [vmem:[%s3 + $0x318] sm:$0xff]
    %v6533 = vld [vmem:[%s3 + $0x320] sm:$0xff]
    %v6534 = vld [vmem:[%s3 + $0x328] sm:$0xff]
    %v6535 = vld [vmem:[%s3 + $0x330] sm:$0xff]
    %v6536 = vld [vmem:[%s3 + $0x338] sm:$0xff]
    %v6537 = vld [vmem:[%s3 + $0x340] sm:$0xff]
    %v6538 = vld [vmem:[%s3 + $0x348] sm:$0xff]
    %v6539 = vld [vmem:[%s3 + $0x350] sm:$0xff]
    %v6540 = vld [vmem:[%s3 + $0x358] sm:$0xff]
    %v6541 = vld [vmem:[%s3 + $0x360] sm:$0xff]
    %v6542 = vld [vmem:[%s3 + $0x368] sm:$0xff]
    %v6543 = vld [vmem:[%s3 + $0x370] sm:$0xff]
    %v6544 = vld [vmem:[%s3 + $0x378] sm:$0xff]
    %v6545 = vld [vmem:[%s3 + $0x380] sm:$0xff]
    %v6546 = vld [vmem:[%s3 + $0x388] sm:$0xff]
    %v6547 = vld [vmem:[%s3 + $0x390] sm:$0xff]
    %v6548 = vld [vmem:[%s3 + $0x398] sm:$0xff]
    %v6549 = vld [vmem:[%s3 + $0x3a0] sm:$0xff]
    %v6550 = vld [vmem:[%s3 + $0x3a8] sm:$0xff]
    %v6551 = vld [vmem:[%s3 + $0x3b0] sm:$0xff]
    %v6552 = vld [vmem:[%s3 + $0x3b8] sm:$0xff]
    %v6553 = vld [vmem:[%s3 + $0x3c0] sm:$0xff]
    %v6554 = vld [vmem:[%s3 + $0x3c8] sm:$0xff]
    %v6555 = vld [vmem:[%s3 + $0x3d0] sm:$0xff]
    %v6556 = vld [vmem:[%s3 + $0x3d8] sm:$0xff]
    %v6557 = vld [vmem:[%s3 + $0x3e0] sm:$0xff]
    %v6558 = vld [vmem:[%s3 + $0x3e8] sm:$0xff]
    %v6559 = vld [vmem:[%s3 + $0x3f0] sm:$0xff]
    %v6560 = vld [vmem:[%s3 + $0x3f8] sm:$0xff]
    %v6561 = vld [vmem:[%s4] sm:$0xf]
    %v6563 = vlaneseq
    %v6564 = vshrl.u32 %v6563, 7
    %v6565 = vsub.s32 0, %v6564
    %v6566 = vrot.slane %v6561, %v6565
    %v6567 = vlaneseq
    %v6568 = vshrl.u32 %v6567, 7
    %v6569 = vsub.s32 1, %v6568
    %v6570 = vrot.slane %v6561, %v6569
    %v6571 = vlaneseq
    %v6572 = vshrl.u32 %v6571, 7
    %v6573 = vsub.s32 2, %v6572
    %v6574 = vrot.slane %v6561, %v6573
    %v6575 = vlaneseq
    %v6576 = vshrl.u32 %v6575, 7
    %v6577 = vsub.s32 3, %v6576
    %v6578 = vrot.slane %v6561, %v6577
    %v6711 = vunpack.c.l.b16 %v6433
    %v6712 = vunpack.c.h.b16 %v6433
    %v6713 = vunpack.c.l.b16 %v6434
    %v6714 = vunpack.c.h.b16 %v6434
    %v6715 = vunpack.c.l.b16 %v6435
    %v6716 = vunpack.c.h.b16 %v6435
    %v6717 = vunpack.c.l.b16 %v6436
    %v6718 = vunpack.c.h.b16 %v6436
    %v6719 = vunpack.c.l.b16 %v6437
    %v6720 = vunpack.c.h.b16 %v6437
    %v6721 = vunpack.c.l.b16 %v6438
    %v6722 = vunpack.c.h.b16 %v6438
    %v6723 = vunpack.c.l.b16 %v6439
    %v6724 = vunpack.c.h.b16 %v6439
    %v6725 = vunpack.c.l.b16 %v6440
    %v6726 = vunpack.c.h.b16 %v6440
    %v6727 = vunpack.c.l.b16 %v6441
    %v6728 = vunpack.c.h.b16 %v6441
    %v6729 = vunpack.c.l.b16 %v6442
    %v6730 = vunpack.c.h.b16 %v6442
    %v6731 = vunpack.c.l.b16 %v6443
    %v6732 = vunpack.c.h.b16 %v6443
    %v6733 = vunpack.c.l.b16 %v6444
    %v6734 = vunpack.c.h.b16 %v6444
    %v6735 = vunpack.c.l.b16 %v6445
    %v6736 = vunpack.c.h.b16 %v6445
    %v6737 = vunpack.c.l.b16 %v6446
    %v6738 = vunpack.c.h.b16 %v6446
    %v6739 = vunpack.c.l.b16 %v6447
    %v6740 = vunpack.c.h.b16 %v6447
    %v6741 = vunpack.c.l.b16 %v6448
    %v6742 = vunpack.c.h.b16 %v6448
    %v6743 = vunpack.c.l.b16 %v6449
    %v6744 = vunpack.c.h.b16 %v6449
    %v6745 = vunpack.c.l.b16 %v6450
    %v6746 = vunpack.c.h.b16 %v6450
    %v6747 = vunpack.c.l.b16 %v6451
    %v6748 = vunpack.c.h.b16 %v6451
    %v6749 = vunpack.c.l.b16 %v6452
    %v6750 = vunpack.c.h.b16 %v6452
    %v6751 = vunpack.c.l.b16 %v6453
    %v6752 = vunpack.c.h.b16 %v6453
    %v6753 = vunpack.c.l.b16 %v6454
    %v6754 = vunpack.c.h.b16 %v6454
    %v6755 = vunpack.c.l.b16 %v6455
    %v6756 = vunpack.c.h.b16 %v6455
    %v6757 = vunpack.c.l.b16 %v6456
    %v6758 = vunpack.c.h.b16 %v6456
    %v6759 = vunpack.c.l.b16 %v6457
    %v6760 = vunpack.c.h.b16 %v6457
    %v6761 = vunpack.c.l.b16 %v6458
    %v6762 = vunpack.c.h.b16 %v6458
    %v6763 = vunpack.c.l.b16 %v6459
    %v6764 = vunpack.c.h.b16 %v6459
    %v6765 = vunpack.c.l.b16 %v6460
    %v6766 = vunpack.c.h.b16 %v6460
    %v6767 = vunpack.c.l.b16 %v6461
    %v6768 = vunpack.c.h.b16 %v6461
    %v6769 = vunpack.c.l.b16 %v6462
    %v6770 = vunpack.c.h.b16 %v6462
    %v6771 = vunpack.c.l.b16 %v6463
    %v6772 = vunpack.c.h.b16 %v6463
    %v6773 = vunpack.c.l.b16 %v6464
    %v6774 = vunpack.c.h.b16 %v6464
    %v6775 = vunpack.c.l.b16 %v6465
    %v6776 = vunpack.c.h.b16 %v6465
    %v6777 = vunpack.c.l.b16 %v6466
    %v6778 = vunpack.c.h.b16 %v6466
    %v6779 = vunpack.c.l.b16 %v6467
    %v6780 = vunpack.c.h.b16 %v6467
    %v6781 = vunpack.c.l.b16 %v6468
    %v6782 = vunpack.c.h.b16 %v6468
    %v6783 = vunpack.c.l.b16 %v6469
    %v6784 = vunpack.c.h.b16 %v6469
    %v6785 = vunpack.c.l.b16 %v6470
    %v6786 = vunpack.c.h.b16 %v6470
    %v6787 = vunpack.c.l.b16 %v6471
    %v6788 = vunpack.c.h.b16 %v6471
    %v6789 = vunpack.c.l.b16 %v6472
    %v6790 = vunpack.c.h.b16 %v6472
    %v6791 = vunpack.c.l.b16 %v6473
    %v6792 = vunpack.c.h.b16 %v6473
    %v6793 = vunpack.c.l.b16 %v6474
    %v6794 = vunpack.c.h.b16 %v6474
    %v6795 = vunpack.c.l.b16 %v6475
    %v6796 = vunpack.c.h.b16 %v6475
    %v6797 = vunpack.c.l.b16 %v6476
    %v6798 = vunpack.c.h.b16 %v6476
    %v6799 = vunpack.c.l.b16 %v6477
    %v6800 = vunpack.c.h.b16 %v6477
    %v6801 = vunpack.c.l.b16 %v6478
    %v6802 = vunpack.c.h.b16 %v6478
    %v6803 = vunpack.c.l.b16 %v6479
    %v6804 = vunpack.c.h.b16 %v6479
    %v6805 = vunpack.c.l.b16 %v6480
    %v6806 = vunpack.c.h.b16 %v6480
    %v6807 = vunpack.c.l.b16 %v6481
    %v6808 = vunpack.c.h.b16 %v6481
    %v6809 = vunpack.c.l.b16 %v6482
    %v6810 = vunpack.c.h.b16 %v6482
    %v6811 = vunpack.c.l.b16 %v6483
    %v6812 = vunpack.c.h.b16 %v6483
    %v6813 = vunpack.c.l.b16 %v6484
    %v6814 = vunpack.c.h.b16 %v6484
    %v6815 = vunpack.c.l.b16 %v6485
    %v6816 = vunpack.c.h.b16 %v6485
    %v6817 = vunpack.c.l.b16 %v6486
    %v6818 = vunpack.c.h.b16 %v6486
    %v6819 = vunpack.c.l.b16 %v6487
    %v6820 = vunpack.c.h.b16 %v6487
    %v6821 = vunpack.c.l.b16 %v6488
    %v6822 = vunpack.c.h.b16 %v6488
    %v6823 = vunpack.c.l.b16 %v6489
    %v6824 = vunpack.c.h.b16 %v6489
    %v6825 = vunpack.c.l.b16 %v6490
    %v6826 = vunpack.c.h.b16 %v6490
    %v6827 = vunpack.c.l.b16 %v6491
    %v6828 = vunpack.c.h.b16 %v6491
    %v6829 = vunpack.c.l.b16 %v6492
    %v6830 = vunpack.c.h.b16 %v6492
    %v6831 = vunpack.c.l.b16 %v6493
    %v6832 = vunpack.c.h.b16 %v6493
    %v6833 = vunpack.c.l.b16 %v6494
    %v6834 = vunpack.c.h.b16 %v6494
    %v6835 = vunpack.c.l.b16 %v6495
    %v6836 = vunpack.c.h.b16 %v6495
    %v6837 = vunpack.c.l.b16 %v6496
    %v6838 = vunpack.c.h.b16 %v6496
    %v6839 = vunpack.c.l.b16 %v6497
    %v6840 = vunpack.c.h.b16 %v6497
    %v6841 = vunpack.c.l.b16 %v6498
    %v6842 = vunpack.c.h.b16 %v6498
    %v6843 = vunpack.c.l.b16 %v6499
    %v6844 = vunpack.c.h.b16 %v6499
    %v6845 = vunpack.c.l.b16 %v6500
    %v6846 = vunpack.c.h.b16 %v6500
    %v6847 = vunpack.c.l.b16 %v6501
    %v6848 = vunpack.c.h.b16 %v6501
    %v6849 = vunpack.c.l.b16 %v6502
    %v6850 = vunpack.c.h.b16 %v6502
    %v6851 = vunpack.c.l.b16 %v6503
    %v6852 = vunpack.c.h.b16 %v6503
    %v6853 = vunpack.c.l.b16 %v6504
    %v6854 = vunpack.c.h.b16 %v6504
    %v6855 = vunpack.c.l.b16 %v6505
    %v6856 = vunpack.c.h.b16 %v6505
    %v6857 = vunpack.c.l.b16 %v6506
    %v6858 = vunpack.c.h.b16 %v6506
    %v6859 = vunpack.c.l.b16 %v6507
    %v6860 = vunpack.c.h.b16 %v6507
    %v6861 = vunpack.c.l.b16 %v6508
    %v6862 = vunpack.c.h.b16 %v6508
    %v6863 = vunpack.c.l.b16 %v6509
    %v6864 = vunpack.c.h.b16 %v6509
    %v6865 = vunpack.c.l.b16 %v6510
    %v6866 = vunpack.c.h.b16 %v6510
    %v6867 = vunpack.c.l.b16 %v6511
    %v6868 = vunpack.c.h.b16 %v6511
    %v6869 = vunpack.c.l.b16 %v6512
    %v6870 = vunpack.c.h.b16 %v6512
    %v6871 = vunpack.c.l.b16 %v6513
    %v6872 = vunpack.c.h.b16 %v6513
    %v6873 = vunpack.c.l.b16 %v6514
    %v6874 = vunpack.c.h.b16 %v6514
    %v6875 = vunpack.c.l.b16 %v6515
    %v6876 = vunpack.c.h.b16 %v6515
    %v6877 = vunpack.c.l.b16 %v6516
    %v6878 = vunpack.c.h.b16 %v6516
    %v6879 = vunpack.c.l.b16 %v6517
    %v6880 = vunpack.c.h.b16 %v6517
    %v6881 = vunpack.c.l.b16 %v6518
    %v6882 = vunpack.c.h.b16 %v6518
    %v6883 = vunpack.c.l.b16 %v6519
    %v6884 = vunpack.c.h.b16 %v6519
    %v6885 = vunpack.c.l.b16 %v6520
    %v6886 = vunpack.c.h.b16 %v6520
    %v6887 = vunpack.c.l.b16 %v6521
    %v6888 = vunpack.c.h.b16 %v6521
    %v6889 = vunpack.c.l.b16 %v6522
    %v6890 = vunpack.c.h.b16 %v6522
    %v6891 = vunpack.c.l.b16 %v6523
    %v6892 = vunpack.c.h.b16 %v6523
    %v6893 = vunpack.c.l.b16 %v6524
    %v6894 = vunpack.c.h.b16 %v6524
    %v6895 = vunpack.c.l.b16 %v6525
    %v6896 = vunpack.c.h.b16 %v6525
    %v6897 = vunpack.c.l.b16 %v6526
    %v6898 = vunpack.c.h.b16 %v6526
    %v6899 = vunpack.c.l.b16 %v6527
    %v6900 = vunpack.c.h.b16 %v6527
    %v6901 = vunpack.c.l.b16 %v6528
    %v6902 = vunpack.c.h.b16 %v6528
    %v6903 = vunpack.c.l.b16 %v6529
    %v6904 = vunpack.c.h.b16 %v6529
    %v6905 = vunpack.c.l.b16 %v6530
    %v6906 = vunpack.c.h.b16 %v6530
    %v6907 = vunpack.c.l.b16 %v6531
    %v6908 = vunpack.c.h.b16 %v6531
    %v6909 = vunpack.c.l.b16 %v6532
    %v6910 = vunpack.c.h.b16 %v6532
    %v6911 = vunpack.c.l.b16 %v6533
    %v6912 = vunpack.c.h.b16 %v6533
    %v6913 = vunpack.c.l.b16 %v6534
    %v6914 = vunpack.c.h.b16 %v6534
    %v6915 = vunpack.c.l.b16 %v6535
    %v6916 = vunpack.c.h.b16 %v6535
    %v6917 = vunpack.c.l.b16 %v6536
    %v6918 = vunpack.c.h.b16 %v6536
    %v6919 = vunpack.c.l.b16 %v6537
    %v6920 = vunpack.c.h.b16 %v6537
    %v6921 = vunpack.c.l.b16 %v6538
    %v6922 = vunpack.c.h.b16 %v6538
    %v6923 = vunpack.c.l.b16 %v6539
    %v6924 = vunpack.c.h.b16 %v6539
    %v6925 = vunpack.c.l.b16 %v6540
    %v6926 = vunpack.c.h.b16 %v6540
    %v6927 = vunpack.c.l.b16 %v6541
    %v6928 = vunpack.c.h.b16 %v6541
    %v6929 = vunpack.c.l.b16 %v6542
    %v6930 = vunpack.c.h.b16 %v6542
    %v6931 = vunpack.c.l.b16 %v6543
    %v6932 = vunpack.c.h.b16 %v6543
    %v6933 = vunpack.c.l.b16 %v6544
    %v6934 = vunpack.c.h.b16 %v6544
    %v6935 = vunpack.c.l.b16 %v6545
    %v6936 = vunpack.c.h.b16 %v6545
    %v6937 = vunpack.c.l.b16 %v6546
    %v6938 = vunpack.c.h.b16 %v6546
    %v6939 = vunpack.c.l.b16 %v6547
    %v6940 = vunpack.c.h.b16 %v6547
    %v6941 = vunpack.c.l.b16 %v6548
    %v6942 = vunpack.c.h.b16 %v6548
    %v6943 = vunpack.c.l.b16 %v6549
    %v6944 = vunpack.c.h.b16 %v6549
    %v6945 = vunpack.c.l.b16 %v6550
    %v6946 = vunpack.c.h.b16 %v6550
    %v6947 = vunpack.c.l.b16 %v6551
    %v6948 = vunpack.c.h.b16 %v6551
    %v6949 = vunpack.c.l.b16 %v6552
    %v6950 = vunpack.c.h.b16 %v6552
    %v6951 = vunpack.c.l.b16 %v6553
    %v6952 = vunpack.c.h.b16 %v6553
    %v6953 = vunpack.c.l.b16 %v6554
    %v6954 = vunpack.c.h.b16 %v6554
    %v6955 = vunpack.c.l.b16 %v6555
    %v6956 = vunpack.c.h.b16 %v6555
    %v6957 = vunpack.c.l.b16 %v6556
    %v6958 = vunpack.c.h.b16 %v6556
    %v6959 = vunpack.c.l.b16 %v6557
    %v6960 = vunpack.c.h.b16 %v6557
    %v6961 = vunpack.c.l.b16 %v6558
    %v6962 = vunpack.c.h.b16 %v6558
    %v6963 = vunpack.c.l.b16 %v6559
    %v6964 = vunpack.c.h.b16 %v6559
    %v6965 = vunpack.c.l.b16 %v6560
    %v6966 = vunpack.c.h.b16 %v6560
    %v6967 = vpack.c.b16 %v6715, %v6711
    %v6968 = vpack.c.b16 %v6716, %v6712
    %v6969 = vpack.c.b16 %v6717, %v6713
    %v6970 = vpack.c.b16 %v6718, %v6714
    %v6971 = vpack.c.b16 %v6723, %v6719
    %v6972 = vpack.c.b16 %v6724, %v6720
    %v6973 = vpack.c.b16 %v6725, %v6721
    %v6974 = vpack.c.b16 %v6726, %v6722
    %v6975 = vpack.c.b16 %v6731, %v6727
    %v6976 = vpack.c.b16 %v6732, %v6728
    %v6977 = vpack.c.b16 %v6733, %v6729
    %v6978 = vpack.c.b16 %v6734, %v6730
    %v6979 = vpack.c.b16 %v6739, %v6735
    %v6980 = vpack.c.b16 %v6740, %v6736
    %v6981 = vpack.c.b16 %v6741, %v6737
    %v6982 = vpack.c.b16 %v6742, %v6738
    %v6983 = vpack.c.b16 %v6747, %v6743
    %v6984 = vpack.c.b16 %v6748, %v6744
    %v6985 = vpack.c.b16 %v6749, %v6745
    %v6986 = vpack.c.b16 %v6750, %v6746
    %v6987 = vpack.c.b16 %v6755, %v6751
    %v6988 = vpack.c.b16 %v6756, %v6752
    %v6989 = vpack.c.b16 %v6757, %v6753
    %v6990 = vpack.c.b16 %v6758, %v6754
    %v6991 = vpack.c.b16 %v6763, %v6759
    %v6992 = vpack.c.b16 %v6764, %v6760
    %v6993 = vpack.c.b16 %v6765, %v6761
    %v6994 = vpack.c.b16 %v6766, %v6762
    %v6995 = vpack.c.b16 %v6771, %v6767
    %v6996 = vpack.c.b16 %v6772, %v6768
    %v6997 = vpack.c.b16 %v6773, %v6769
    %v6998 = vpack.c.b16 %v6774, %v6770
    %v6999 = vpack.c.b16 %v6779, %v6775
    %v7000 = vpack.c.b16 %v6780, %v6776
    %v7001 = vpack.c.b16 %v6781, %v6777
    %v7002 = vpack.c.b16 %v6782, %v6778
    %v7003 = vpack.c.b16 %v6787, %v6783
    %v7004 = vpack.c.b16 %v6788, %v6784
    %v7005 = vpack.c.b16 %v6789, %v6785
    %v7006 = vpack.c.b16 %v6790, %v6786
    %v7007 = vpack.c.b16 %v6795, %v6791
    %v7008 = vpack.c.b16 %v6796, %v6792
    %v7009 = vpack.c.b16 %v6797, %v6793
    %v7010 = vpack.c.b16 %v6798, %v6794
    %v7011 = vpack.c.b16 %v6803, %v6799
    %v7012 = vpack.c.b16 %v6804, %v6800
    %v7013 = vpack.c.b16 %v6805, %v6801
    %v7014 = vpack.c.b16 %v6806, %v6802
    %v7015 = vpack.c.b16 %v6811, %v6807
    %v7016 = vpack.c.b16 %v6812, %v6808
    %v7017 = vpack.c.b16 %v6813, %v6809
    %v7018 = vpack.c.b16 %v6814, %v6810
    %v7019 = vpack.c.b16 %v6819, %v6815
    %v7020 = vpack.c.b16 %v6820, %v6816
    %v7021 = vpack.c.b16 %v6821, %v6817
    %v7022 = vpack.c.b16 %v6822, %v6818
    %v7023 = vpack.c.b16 %v6827, %v6823
    %v7024 = vpack.c.b16 %v6828, %v6824
    %v7025 = vpack.c.b16 %v6829, %v6825
    %v7026 = vpack.c.b16 %v6830, %v6826
    %v7027 = vpack.c.b16 %v6835, %v6831
    %v7028 = vpack.c.b16 %v6836, %v6832
    %v7029 = vpack.c.b16 %v6837, %v6833
    %v7030 = vpack.c.b16 %v6838, %v6834
    %v7031 = vpack.c.b16 %v6843, %v6839
    %v7032 = vpack.c.b16 %v6844, %v6840
    %v7033 = vpack.c.b16 %v6845, %v6841
    %v7034 = vpack.c.b16 %v6846, %v6842
    %v7035 = vpack.c.b16 %v6851, %v6847
    %v7036 = vpack.c.b16 %v6852, %v6848
    %v7037 = vpack.c.b16 %v6853, %v6849
    %v7038 = vpack.c.b16 %v6854, %v6850
    %v7039 = vpack.c.b16 %v6859, %v6855
    %v7040 = vpack.c.b16 %v6860, %v6856
    %v7041 = vpack.c.b16 %v6861, %v6857
    %v7042 = vpack.c.b16 %v6862, %v6858
    %v7043 = vpack.c.b16 %v6867, %v6863
    %v7044 = vpack.c.b16 %v6868, %v6864
    %v7045 = vpack.c.b16 %v6869, %v6865
    %v7046 = vpack.c.b16 %v6870, %v6866
    %v7047 = vpack.c.b16 %v6875, %v6871
    %v7048 = vpack.c.b16 %v6876, %v6872
    %v7049 = vpack.c.b16 %v6877, %v6873
    %v7050 = vpack.c.b16 %v6878, %v6874
    %v7051 = vpack.c.b16 %v6883, %v6879
    %v7052 = vpack.c.b16 %v6884, %v6880
    %v7053 = vpack.c.b16 %v6885, %v6881
    %v7054 = vpack.c.b16 %v6886, %v6882
    %v7055 = vpack.c.b16 %v6891, %v6887
    %v7056 = vpack.c.b16 %v6892, %v6888
    %v7057 = vpack.c.b16 %v6893, %v6889
    %v7058 = vpack.c.b16 %v6894, %v6890
    %v7059 = vpack.c.b16 %v6899, %v6895
    %v7060 = vpack.c.b16 %v6900, %v6896
    %v7061 = vpack.c.b16 %v6901, %v6897
    %v7062 = vpack.c.b16 %v6902, %v6898
    %v7063 = vpack.c.b16 %v6907, %v6903
    %v7064 = vpack.c.b16 %v6908, %v6904
    %v7065 = vpack.c.b16 %v6909, %v6905
    %v7066 = vpack.c.b16 %v6910, %v6906
    %v7067 = vpack.c.b16 %v6915, %v6911
    %v7068 = vpack.c.b16 %v6916, %v6912
    %v7069 = vpack.c.b16 %v6917, %v6913
    %v7070 = vpack.c.b16 %v6918, %v6914
    %v7071 = vpack.c.b16 %v6923, %v6919
    %v7072 = vpack.c.b16 %v6924, %v6920
    %v7073 = vpack.c.b16 %v6925, %v6921
    %v7074 = vpack.c.b16 %v6926, %v6922
    %v7075 = vpack.c.b16 %v6931, %v6927
    %v7076 = vpack.c.b16 %v6932, %v6928
    %v7077 = vpack.c.b16 %v6933, %v6929
    %v7078 = vpack.c.b16 %v6934, %v6930
    %v7079 = vpack.c.b16 %v6939, %v6935
    %v7080 = vpack.c.b16 %v6940, %v6936
    %v7081 = vpack.c.b16 %v6941, %v6937
    %v7082 = vpack.c.b16 %v6942, %v6938
    %v7083 = vpack.c.b16 %v6947, %v6943
    %v7084 = vpack.c.b16 %v6948, %v6944
    %v7085 = vpack.c.b16 %v6949, %v6945
    %v7086 = vpack.c.b16 %v6950, %v6946
    %v7087 = vpack.c.b16 %v6955, %v6951
    %v7088 = vpack.c.b16 %v6956, %v6952
    %v7089 = vpack.c.b16 %v6957, %v6953
    %v7090 = vpack.c.b16 %v6958, %v6954
    %v7091 = vpack.c.b16 %v6963, %v6959
    %v7092 = vpack.c.b16 %v6964, %v6960
    %v7093 = vpack.c.b16 %v6965, %v6961
    %v7094 = vpack.c.b16 %v6966, %v6962
    %7223 = vmatprep.subr.bf16.mxu0 %v6996
    %7224 = vmatpush1.bf16.msra.mxu0 %v6995
    %7225 = vmatprep.subr.bf16.mxu0 %v6992
    %7226 = vmatpush1.bf16.msra.mxu0 %v6991
    %7227 = vmatprep.subr.bf16.mxu0 %v6988
    %7228 = vmatpush1.bf16.msra.mxu0 %v6987
    %7229 = vmatprep.subr.bf16.mxu0 %v6984
    %7230 = vmatpush1.bf16.msra.mxu0 %v6983
    %7231 = vmatprep.subr.bf16.mxu0 %v6980
    %7232 = vmatpush1.bf16.msra.mxu0 %v6979
    %7233 = vmatprep.subr.bf16.mxu0 %v6976
    %7234 = vmatpush1.bf16.msra.mxu0 %v6975
    %7235 = vmatprep.subr.bf16.mxu0 %v6972
    %7236 = vmatpush1.bf16.msra.mxu0 %v6971
    %7237 = vmatprep.subr.bf16.mxu0 %v6968
    %7238 = vmatpush1.bf16.msra.mxu0 %v6967
    %7239 = vmatprep.subr.bf16.mxu0 %v7028
    %7240 = vmatpush2.bf16.msra.mxu0 %v7027
    %7241 = vmatprep.subr.bf16.mxu0 %v7024
    %7242 = vmatpush2.bf16.msra.mxu0 %v7023
    %7243 = vmatprep.subr.bf16.mxu0 %v7020
    %7244 = vmatpush2.bf16.msra.mxu0 %v7019
    %7245 = vmatprep.subr.bf16.mxu0 %v7016
    %7246 = vmatpush2.bf16.msra.mxu0 %v7015
    %7247 = vmatprep.subr.bf16.mxu0 %v7012
    %7248 = vmatpush2.bf16.msra.mxu0 %v7011
    %7249 = vmatprep.subr.bf16.mxu0 %v7008
    %7250 = vmatpush2.bf16.msra.mxu0 %v7007
    %7251 = vmatprep.subr.bf16.mxu0 %v7004
    %7252 = vmatpush2.bf16.msra.mxu0 %v7003
    %7253 = vmatprep.subr.bf16.mxu0 %v7000
    %7254 = vmatpush2.bf16.msra.mxu0 %v6999
    %7255 = vmatprep.mubr.bf16.mxu0 %v6430
    %7256 = vmatmul.mubr.bf16.gmra.mxu0 %v6429
    %v7257 = vpop.f32.mrf.mxu0
    %v7258 = vadd.f32 %v6566, %v7257
    %v7259 = vpop.f32.mrf.mxu0
    %v7260 = vadd.f32 %v6570, %v7259
    %v7261 = vpop.f32.mrf.mxu0
    %v7262 = vadd.f32 %v6566, %v7261
    %v7263 = vpop.f32.mrf.mxu0
    %v7264 = vadd.f32 %v6570, %v7263
    %7265 = vdwg.mxu0
    %7266 = vmatprep.subr.bf16.mxu0 %v7060
    %7267 = vmatpush1.bf16.msra.mxu0 %v7059
    %7268 = vmatprep.subr.bf16.mxu0 %v7056
    %7269 = vmatpush1.bf16.msra.mxu0 %v7055
    %7270 = vmatprep.subr.bf16.mxu0 %v7052
    %7271 = vmatpush1.bf16.msra.mxu0 %v7051
    %7272 = vmatprep.subr.bf16.mxu0 %v7048
    %7273 = vmatpush1.bf16.msra.mxu0 %v7047
    %7274 = vmatprep.subr.bf16.mxu0 %v7044
    %7275 = vmatpush1.bf16.msra.mxu0 %v7043
    %7276 = vmatprep.subr.bf16.mxu0 %v7040
    %7277 = vmatpush1.bf16.msra.mxu0 %v7039
    %7278 = vmatprep.subr.bf16.mxu0 %v7036
    %7279 = vmatpush1.bf16.msra.mxu0 %v7035
    %7280 = vmatprep.subr.bf16.mxu0 %v7032
    %7281 = vmatpush1.bf16.msra.mxu0 %v7031
    %7282 = vmatprep.subr.bf16.mxu0 %v7092
    %7283 = vmatpush2.bf16.msra.mxu0 %v7091
    %7284 = vmatprep.subr.bf16.mxu0 %v7088
    %7285 = vmatpush2.bf16.msra.mxu0 %v7087
    %7286 = vmatprep.subr.bf16.mxu0 %v7084
    %7287 = vmatpush2.bf16.msra.mxu0 %v7083
    %7288 = vmatprep.subr.bf16.mxu0 %v7080
    %7289 = vmatpush2.bf16.msra.mxu0 %v7079
    %7290 = vmatprep.subr.bf16.mxu0 %v7076
    %7291 = vmatpush2.bf16.msra.mxu0 %v7075
    %7292 = vmatprep.subr.bf16.mxu0 %v7072
    %7293 = vmatpush2.bf16.msra.mxu0 %v7071
    %7294 = vmatprep.subr.bf16.mxu0 %v7068
    %7295 = vmatpush2.bf16.msra.mxu0 %v7067
    %7296 = vmatprep.subr.bf16.mxu0 %v7064
    %7297 = vmatpush2.bf16.msra.mxu0 %v7063
    %7298 = vmatprep.mubr.bf16.mxu0 %v6432
    %7299 = vmatmul.mubr.bf16.gmra.mxu0 %v6431
    %v7300 = vpop.f32.mrf.mxu0
    %v7301 = vadd.f32 %v7258, %v7300
    %v7302 = vpop.f32.mrf.mxu0
    %v7303 = vadd.f32 %v7260, %v7302
    %v7304 = vpop.f32.mrf.mxu0
    %v7305 = vadd.f32 %v7262, %v7304
    %v7306 = vpop.f32.mrf.mxu0
    %v7307 = vadd.f32 %v7264, %v7306
    %7308 = vdwg.mxu0
    %7309 = vmatprep.subr.bf16.mxu0 %v6998
    %7310 = vmatpush1.bf16.msra.mxu0 %v6997
    %7311 = vmatprep.subr.bf16.mxu0 %v6994
    %7312 = vmatpush1.bf16.msra.mxu0 %v6993
    %7313 = vmatprep.subr.bf16.mxu0 %v6990
    %7314 = vmatpush1.bf16.msra.mxu0 %v6989
    %7315 = vmatprep.subr.bf16.mxu0 %v6986
    %7316 = vmatpush1.bf16.msra.mxu0 %v6985
    %7317 = vmatprep.subr.bf16.mxu0 %v6982
    %7318 = vmatpush1.bf16.msra.mxu0 %v6981
    %7319 = vmatprep.subr.bf16.mxu0 %v6978
    %7320 = vmatpush1.bf16.msra.mxu0 %v6977
    %7321 = vmatprep.subr.bf16.mxu0 %v6974
    %7322 = vmatpush1.bf16.msra.mxu0 %v6973
    %7323 = vmatprep.subr.bf16.mxu0 %v6970
    %7324 = vmatpush1.bf16.msra.mxu0 %v6969
    %7325 = vmatprep.subr.bf16.mxu0 %v7030
    %7326 = vmatpush2.bf16.msra.mxu0 %v7029
    %7327 = vmatprep.subr.bf16.mxu0 %v7026
    %7328 = vmatpush2.bf16.msra.mxu0 %v7025
    %7329 = vmatprep.subr.bf16.mxu0 %v7022
    %7330 = vmatpush2.bf16.msra.mxu0 %v7021
    %7331 = vmatprep.subr.bf16.mxu0 %v7018
    %7332 = vmatpush2.bf16.msra.mxu0 %v7017
    %7333 = vmatprep.subr.bf16.mxu0 %v7014
    %7334 = vmatpush2.bf16.msra.mxu0 %v7013
    %7335 = vmatprep.subr.bf16.mxu0 %v7010
    %7336 = vmatpush2.bf16.msra.mxu0 %v7009
    %7337 = vmatprep.subr.bf16.mxu0 %v7006
    %7338 = vmatpush2.bf16.msra.mxu0 %v7005
    %7339 = vmatprep.subr.bf16.mxu0 %v7002
    %7340 = vmatpush2.bf16.msra.mxu0 %v7001
    %7341 = vmatprep.mubr.bf16.mxu0 %v6430
    %7342 = vmatmul.mubr.bf16.gmra.mxu0 %v6429
    %v7343 = vpop.f32.mrf.mxu0
    %v7344 = vadd.f32 %v6574, %v7343
    %v7345 = vpop.f32.mrf.mxu0
    %v7346 = vadd.f32 %v6578, %v7345
    %v7347 = vpop.f32.mrf.mxu0
    %v7348 = vadd.f32 %v6574, %v7347
    %v7349 = vpop.f32.mrf.mxu0
    %v7350 = vadd.f32 %v6578, %v7349
    %7351 = vdwg.mxu0
    %7352 = vmatprep.subr.bf16.mxu0 %v7062
    %7353 = vmatpush1.bf16.msra.mxu0 %v7061
    %7354 = vmatprep.subr.bf16.mxu0 %v7058
    %7355 = vmatpush1.bf16.msra.mxu0 %v7057
    %7356 = vmatprep.subr.bf16.mxu0 %v7054
    %7357 = vmatpush1.bf16.msra.mxu0 %v7053
    %7358 = vmatprep.subr.bf16.mxu0 %v7050
    %7359 = vmatpush1.bf16.msra.mxu0 %v7049
    %7360 = vmatprep.subr.bf16.mxu0 %v7046
    %7361 = vmatpush1.bf16.msra.mxu0 %v7045
    %7362 = vmatprep.subr.bf16.mxu0 %v7042
    %7363 = vmatpush1.bf16.msra.mxu0 %v7041
    %7364 = vmatprep.subr.bf16.mxu0 %v7038
    %7365 = vmatpush1.bf16.msra.mxu0 %v7037
    %7366 = vmatprep.subr.bf16.mxu0 %v7034
    %7367 = vmatpush1.bf16.msra.mxu0 %v7033
    %7368 = vmatprep.subr.bf16.mxu0 %v7094
    %7369 = vmatpush2.bf16.msra.mxu0 %v7093
    %7370 = vmatprep.subr.bf16.mxu0 %v7090
    %7371 = vmatpush2.bf16.msra.mxu0 %v7089
    %7372 = vmatprep.subr.bf16.mxu0 %v7086
    %7373 = vmatpush2.bf16.msra.mxu0 %v7085
    %7374 = vmatprep.subr.bf16.mxu0 %v7082
    %7375 = vmatpush2.bf16.msra.mxu0 %v7081
    %7376 = vmatprep.subr.bf16.mxu0 %v7078
    %7377 = vmatpush2.bf16.msra.mxu0 %v7077
    %7378 = vmatprep.subr.bf16.mxu0 %v7074
    %7379 = vmatpush2.bf16.msra.mxu0 %v7073
    %7380 = vmatprep.subr.bf16.mxu0 %v7070
    %7381 = vmatpush2.bf16.msra.mxu0 %v7069
    %7382 = vmatprep.subr.bf16.mxu0 %v7066
    %7383 = vmatpush2.bf16.msra.mxu0 %v7065
    %7384 = vmatprep.mubr.bf16.mxu0 %v6432
    %7385 = vmatmul.mubr.bf16.gmra.mxu0 %v6431
    %v7386 = vpop.f32.mrf.mxu0
    %v7387 = vadd.f32 %v7344, %v7386
    %v7388 = vpop.f32.mrf.mxu0
    %v7389 = vadd.f32 %v7346, %v7388
    %v7390 = vpop.f32.mrf.mxu0
    %v7391 = vadd.f32 %v7348, %v7390
    %v7392 = vpop.f32.mrf.mxu0
    %v7393 = vadd.f32 %v7350, %v7392
    %7394 = vdwg.mxu0
    %v7395 = vmax.f32 %v7301, 0.0
    %v7396 = vmax.f32 %v7303, 0.0
    %v7397 = vmax.f32 %v7387, 0.0
    %v7398 = vmax.f32 %v7389, 0.0
    %v7399 = vmax.f32 %v7305, 0.0
    %v7400 = vmax.f32 %v7307, 0.0
    %v7401 = vmax.f32 %v7391, 0.0
    %v7402 = vmax.f32 %v7393, 0.0
    %v7403 = vpack.c.bf16 %v7399, %v7395
    %v7404 = vpack.c.bf16 %v7400, %v7396
    %v7405 = vpack.c.bf16 %v7401, %v7397
    %v7406 = vpack.c.bf16 %v7402, %v7398
    %v7407 = vld [vmem:[%s5] sm:$0xf]
    %v7408 = vld [vmem:[%s5 + $0x4] sm:$0xf]
    %v7409 = vld [vmem:[%s5 + $0x8] sm:$0xf]
    %v7410 = vld [vmem:[%s5 + $0xc] sm:$0xf]
    %v7411 = vld [vmem:[%s5 + $0x10] sm:$0xf]
    %v7412 = vld [vmem:[%s5 + $0x14] sm:$0xf]
    %v7413 = vld [vmem:[%s5 + $0x18] sm:$0xf]
    %v7414 = vld [vmem:[%s5 + $0x1c] sm:$0xf]
    %v7415 = vld [vmem:[%s5 + $0x20] sm:$0xf]
    %v7416 = vld [vmem:[%s5 + $0x24] sm:$0xf]
    %v7417 = vld [vmem:[%s5 + $0x28] sm:$0xf]
    %v7418 = vld [vmem:[%s5 + $0x2c] sm:$0xf]
    %v7419 = vld [vmem:[%s5 + $0x30] sm:$0xf]
    %v7420 = vld [vmem:[%s5 + $0x34] sm:$0xf]
    %v7421 = vld [vmem:[%s5 + $0x38] sm:$0xf]
    %v7422 = vld [vmem:[%s5 + $0x3c] sm:$0xf]
    %v7423 = vld [vmem:[%s5 + $0x40] sm:$0xf]
    %v7424 = vld [vmem:[%s5 + $0x44] sm:$0xf]
    %v7425 = vld [vmem:[%s5 + $0x48] sm:$0xf]
    %v7426 = vld [vmem:[%s5 + $0x4c] sm:$0xf]
    %v7427 = vld [vmem:[%s5 + $0x50] sm:$0xf]
    %v7428 = vld [vmem:[%s5 + $0x54] sm:$0xf]
    %v7429 = vld [vmem:[%s5 + $0x58] sm:$0xf]
    %v7430 = vld [vmem:[%s5 + $0x5c] sm:$0xf]
    %v7431 = vld [vmem:[%s5 + $0x60] sm:$0xf]
    %v7432 = vld [vmem:[%s5 + $0x64] sm:$0xf]
    %v7433 = vld [vmem:[%s5 + $0x68] sm:$0xf]
    %v7434 = vld [vmem:[%s5 + $0x6c] sm:$0xf]
    %v7435 = vld [vmem:[%s5 + $0x70] sm:$0xf]
    %v7436 = vld [vmem:[%s5 + $0x74] sm:$0xf]
    %v7437 = vld [vmem:[%s5 + $0x78] sm:$0xf]
    %v7438 = vld [vmem:[%s5 + $0x7c] sm:$0xf]
    %v7439 = vld [vmem:[%s5 + $0x80] sm:$0xf]
    %v7440 = vld [vmem:[%s5 + $0x84] sm:$0xf]
    %v7441 = vld [vmem:[%s5 + $0x88] sm:$0xf]
    %v7442 = vld [vmem:[%s5 + $0x8c] sm:$0xf]
    %v7443 = vld [vmem:[%s5 + $0x90] sm:$0xf]
    %v7444 = vld [vmem:[%s5 + $0x94] sm:$0xf]
    %v7445 = vld [vmem:[%s5 + $0x98] sm:$0xf]
    %v7446 = vld [vmem:[%s5 + $0x9c] sm:$0xf]
    %v7447 = vld [vmem:[%s5 + $0xa0] sm:$0xf]
    %v7448 = vld [vmem:[%s5 + $0xa4] sm:$0xf]
    %v7449 = vld [vmem:[%s5 + $0xa8] sm:$0xf]
    %v7450 = vld [vmem:[%s5 + $0xac] sm:$0xf]
    %v7451 = vld [vmem:[%s5 + $0xb0] sm:$0xf]
    %v7452 = vld [vmem:[%s5 + $0xb4] sm:$0xf]
    %v7453 = vld [vmem:[%s5 + $0xb8] sm:$0xf]
    %v7454 = vld [vmem:[%s5 + $0xbc] sm:$0xf]
    %v7455 = vld [vmem:[%s5 + $0xc0] sm:$0xf]
    %v7456 = vld [vmem:[%s5 + $0xc4] sm:$0xf]
    %v7457 = vld [vmem:[%s5 + $0xc8] sm:$0xf]
    %v7458 = vld [vmem:[%s5 + $0xcc] sm:$0xf]
    %v7459 = vld [vmem:[%s5 + $0xd0] sm:$0xf]
    %v7460 = vld [vmem:[%s5 + $0xd4] sm:$0xf]
    %v7461 = vld [vmem:[%s5 + $0xd8] sm:$0xf]
    %v7462 = vld [vmem:[%s5 + $0xdc] sm:$0xf]
    %v7463 = vld [vmem:[%s5 + $0xe0] sm:$0xf]
    %v7464 = vld [vmem:[%s5 + $0xe4] sm:$0xf]
    %v7465 = vld [vmem:[%s5 + $0xe8] sm:$0xf]
    %v7466 = vld [vmem:[%s5 + $0xec] sm:$0xf]
    %v7467 = vld [vmem:[%s5 + $0xf0] sm:$0xf]
    %v7468 = vld [vmem:[%s5 + $0xf4] sm:$0xf]
    %v7469 = vld [vmem:[%s5 + $0xf8] sm:$0xf]
    %v7470 = vld [vmem:[%s5 + $0xfc] sm:$0xf]
    %v7471 = vld [vmem:[%s6] sm:$0x1]
    %v7473 = vlaneseq
    %v7474 = vshrl.u32 %v7473, 7
    %v7475 = vsub.s32 0, %v7474
    %v7476 = vrot.slane %v7471, %v7475
    %v7542 = vunpack.c.l.b16 %v7407
    %v7543 = vunpack.c.l.b16 %v7408
    %v7544 = vunpack.c.l.b16 %v7409
    %v7545 = vunpack.c.l.b16 %v7410
    %v7546 = vunpack.c.l.b16 %v7411
    %v7547 = vunpack.c.l.b16 %v7412
    %v7548 = vunpack.c.l.b16 %v7413
    %v7549 = vunpack.c.l.b16 %v7414
    %v7550 = vunpack.c.l.b16 %v7415
    %v7551 = vunpack.c.l.b16 %v7416
    %v7552 = vunpack.c.l.b16 %v7417
    %v7553 = vunpack.c.l.b16 %v7418
    %v7554 = vunpack.c.l.b16 %v7419
    %v7555 = vunpack.c.l.b16 %v7420
    %v7556 = vunpack.c.l.b16 %v7421
    %v7557 = vunpack.c.l.b16 %v7422
    %v7558 = vunpack.c.l.b16 %v7423
    %v7559 = vunpack.c.l.b16 %v7424
    %v7560 = vunpack.c.l.b16 %v7425
    %v7561 = vunpack.c.l.b16 %v7426
    %v7562 = vunpack.c.l.b16 %v7427
    %v7563 = vunpack.c.l.b16 %v7428
    %v7564 = vunpack.c.l.b16 %v7429
    %v7565 = vunpack.c.l.b16 %v7430
    %v7566 = vunpack.c.l.b16 %v7431
    %v7567 = vunpack.c.l.b16 %v7432
    %v7568 = vunpack.c.l.b16 %v7433
    %v7569 = vunpack.c.l.b16 %v7434
    %v7570 = vunpack.c.l.b16 %v7435
    %v7571 = vunpack.c.l.b16 %v7436
    %v7572 = vunpack.c.l.b16 %v7437
    %v7573 = vunpack.c.l.b16 %v7438
    %v7574 = vunpack.c.l.b16 %v7439
    %v7575 = vunpack.c.l.b16 %v7440
    %v7576 = vunpack.c.l.b16 %v7441
    %v7577 = vunpack.c.l.b16 %v7442
    %v7578 = vunpack.c.l.b16 %v7443
    %v7579 = vunpack.c.l.b16 %v7444
    %v7580 = vunpack.c.l.b16 %v7445
    %v7581 = vunpack.c.l.b16 %v7446
    %v7582 = vunpack.c.l.b16 %v7447
    %v7583 = vunpack.c.l.b16 %v7448
    %v7584 = vunpack.c.l.b16 %v7449
    %v7585 = vunpack.c.l.b16 %v7450
    %v7586 = vunpack.c.l.b16 %v7451
    %v7587 = vunpack.c.l.b16 %v7452
    %v7588 = vunpack.c.l.b16 %v7453
    %v7589 = vunpack.c.l.b16 %v7454
    %v7590 = vunpack.c.l.b16 %v7455
    %v7591 = vunpack.c.l.b16 %v7456
    %v7592 = vunpack.c.l.b16 %v7457
    %v7593 = vunpack.c.l.b16 %v7458
    %v7594 = vunpack.c.l.b16 %v7459
    %v7595 = vunpack.c.l.b16 %v7460
    %v7596 = vunpack.c.l.b16 %v7461
    %v7597 = vunpack.c.l.b16 %v7462
    %v7598 = vunpack.c.l.b16 %v7463
    %v7599 = vunpack.c.l.b16 %v7464
    %v7600 = vunpack.c.l.b16 %v7465
    %v7601 = vunpack.c.l.b16 %v7466
    %v7602 = vunpack.c.l.b16 %v7467
    %v7603 = vunpack.c.l.b16 %v7468
    %v7604 = vunpack.c.l.b16 %v7469
    %v7605 = vunpack.c.l.b16 %v7470
    %v7606 = vpack.c.b16 %v7543, %v7542
    %v7607 = vpack.c.b16 %v7545, %v7544
    %v7608 = vpack.c.b16 %v7547, %v7546
    %v7609 = vpack.c.b16 %v7549, %v7548
    %v7610 = vpack.c.b16 %v7551, %v7550
    %v7611 = vpack.c.b16 %v7553, %v7552
    %v7612 = vpack.c.b16 %v7555, %v7554
    %v7613 = vpack.c.b16 %v7557, %v7556
    %v7614 = vpack.c.b16 %v7559, %v7558
    %v7615 = vpack.c.b16 %v7561, %v7560
    %v7616 = vpack.c.b16 %v7563, %v7562
    %v7617 = vpack.c.b16 %v7565, %v7564
    %v7618 = vpack.c.b16 %v7567, %v7566
    %v7619 = vpack.c.b16 %v7569, %v7568
    %v7620 = vpack.c.b16 %v7571, %v7570
    %v7621 = vpack.c.b16 %v7573, %v7572
    %v7622 = vpack.c.b16 %v7575, %v7574
    %v7623 = vpack.c.b16 %v7577, %v7576
    %v7624 = vpack.c.b16 %v7579, %v7578
    %v7625 = vpack.c.b16 %v7581, %v7580
    %v7626 = vpack.c.b16 %v7583, %v7582
    %v7627 = vpack.c.b16 %v7585, %v7584
    %v7628 = vpack.c.b16 %v7587, %v7586
    %v7629 = vpack.c.b16 %v7589, %v7588
    %v7630 = vpack.c.b16 %v7591, %v7590
    %v7631 = vpack.c.b16 %v7593, %v7592
    %v7632 = vpack.c.b16 %v7595, %v7594
    %v7633 = vpack.c.b16 %v7597, %v7596
    %v7634 = vpack.c.b16 %v7599, %v7598
    %v7635 = vpack.c.b16 %v7601, %v7600
    %v7636 = vpack.c.b16 %v7603, %v7602
    %v7637 = vpack.c.b16 %v7605, %v7604
    %7670 = vmatprep.subr.bf16.mxu0 0
    %7671 = vmatpush1.bf16.msra.mxu0 %v7613
    %7672 = vmatprep.subr.bf16.mxu0 0
    %7673 = vmatpush1.bf16.msra.mxu0 %v7612
    %7674 = vmatprep.subr.bf16.mxu0 0
    %7675 = vmatpush1.bf16.msra.mxu0 %v7611
    %7676 = vmatprep.subr.bf16.mxu0 0
    %7677 = vmatpush1.bf16.msra.mxu0 %v7610
    %7678 = vmatprep.subr.bf16.mxu0 0
    %7679 = vmatpush1.bf16.msra.mxu0 %v7609
    %7680 = vmatprep.subr.bf16.mxu0 0
    %7681 = vmatpush1.bf16.msra.mxu0 %v7608
    %7682 = vmatprep.subr.bf16.mxu0 0
    %7683 = vmatpush1.bf16.msra.mxu0 %v7607
    %7684 = vmatprep.subr.bf16.mxu0 0
    %7685 = vmatpush1.bf16.msra.mxu0 %v7606
    %7686 = vmatprep.subr.bf16.mxu0 0
    %7687 = vmatpush2.bf16.msra.mxu0 %v7621
    %7688 = vmatprep.subr.bf16.mxu0 0
    %7689 = vmatpush2.bf16.msra.mxu0 %v7620
    %7690 = vmatprep.subr.bf16.mxu0 0
    %7691 = vmatpush2.bf16.msra.mxu0 %v7619
    %7692 = vmatprep.subr.bf16.mxu0 0
    %7693 = vmatpush2.bf16.msra.mxu0 %v7618
    %7694 = vmatprep.subr.bf16.mxu0 0
    %7695 = vmatpush2.bf16.msra.mxu0 %v7617
    %7696 = vmatprep.subr.bf16.mxu0 0
    %7697 = vmatpush2.bf16.msra.mxu0 %v7616
    %7698 = vmatprep.subr.bf16.mxu0 0
    %7699 = vmatpush2.bf16.msra.mxu0 %v7615
    %7700 = vmatprep.subr.bf16.mxu0 0
    %7701 = vmatpush2.bf16.msra.mxu0 %v7614
    %7702 = vmatprep.mubr.bf16.mxu0 %v7404
    %7703 = vmatmul.mubr.bf16.gmra.mxu0 %v7403
    %v7704 = vpop.f32.mrf.mxu0
    %v7705 = vadd.f32 %v7476, %v7704
    %v7706 = vpop.f32.mrf.mxu0
    %v7707 = vpop.f32.mrf.mxu0
    %v7708 = vadd.f32 %v7476, %v7707
    %v7709 = vpop.f32.mrf.mxu0
    %7710 = vdwg.mxu0
    %7711 = vmatprep.subr.bf16.mxu0 0
    %7712 = vmatpush1.bf16.msra.mxu0 %v7629
    %7713 = vmatprep.subr.bf16.mxu0 0
    %7714 = vmatpush1.bf16.msra.mxu0 %v7628
    %7715 = vmatprep.subr.bf16.mxu0 0
    %7716 = vmatpush1.bf16.msra.mxu0 %v7627
    %7717 = vmatprep.subr.bf16.mxu0 0
    %7718 = vmatpush1.bf16.msra.mxu0 %v7626
    %7719 = vmatprep.subr.bf16.mxu0 0
    %7720 = vmatpush1.bf16.msra.mxu0 %v7625
    %7721 = vmatprep.subr.bf16.mxu0 0
    %7722 = vmatpush1.bf16.msra.mxu0 %v7624
    %7723 = vmatprep.subr.bf16.mxu0 0
    %7724 = vmatpush1.bf16.msra.mxu0 %v7623
    %7725 = vmatprep.subr.bf16.mxu0 0
    %7726 = vmatpush1.bf16.msra.mxu0 %v7622
    %7727 = vmatprep.subr.bf16.mxu0 0
    %7728 = vmatpush2.bf16.msra.mxu0 %v7637
    %7729 = vmatprep.subr.bf16.mxu0 0
    %7730 = vmatpush2.bf16.msra.mxu0 %v7636
    %7731 = vmatprep.subr.bf16.mxu0 0
    %7732 = vmatpush2.bf16.msra.mxu0 %v7635
    %7733 = vmatprep.subr.bf16.mxu0 0
    %7734 = vmatpush2.bf16.msra.mxu0 %v7634
    %7735 = vmatprep.subr.bf16.mxu0 0
    %7736 = vmatpush2.bf16.msra.mxu0 %v7633
    %7737 = vmatprep.subr.bf16.mxu0 0
    %7738 = vmatpush2.bf16.msra.mxu0 %v7632
    %7739 = vmatprep.subr.bf16.mxu0 0
    %7740 = vmatpush2.bf16.msra.mxu0 %v7631
    %7741 = vmatprep.subr.bf16.mxu0 0
    %7742 = vmatpush2.bf16.msra.mxu0 %v7630
    %7743 = vmatprep.mubr.bf16.mxu0 %v7406
    %7744 = vmatmul.mubr.bf16.gmra.mxu0 %v7405
    %v7745 = vpop.f32.mrf.mxu0
    %v7746 = vadd.f32 %v7705, %v7745
    %v7747 = vpop.f32.mrf.mxu0
    %v7748 = vpop.f32.mrf.mxu0
    %v7749 = vadd.f32 %v7708, %v7748
    %v7750 = vpop.f32.mrf.mxu0
    %7751 = vdwg.mxu0
    %7752 = vst [vmem:[#allocation2] sm:$0xff] %v7746
    %7753 = vst [vmem:[#allocation2 + $0x8] sm:$0xff] %v7749
    // Predicated region
    $region30: #{net_forward.3} parent=1 // pred_check
      _
    $region31: #{net_forward.3} parent=1 // pred_check_branch
      %7755 = sbr.rel (0) target = $region33
    $region32: #{net_forward.3} parent=1 // pred_region
      %s7757 = ssub.s32 256, 32
      %7758 = vsyncadd [#allocation3], %s7757
      %s7759 = sshll.u32 [#allocation2], 4
      %s7760 = int_to_ptr.vmem [resolvable:$true] %s7759
      %7765 = dma.vmem_to_hbm [thread:$0]  %s7760, 32, %s7, [#allocation3], 32, 32, 2
    $region33: #{net_forward.3} parent=1 // pred_fallthru
      _
    // Predicated region
    $region34: #{net_forward.3} parent=1 // pred_check
      _
    $region35: #{net_forward.3} parent=1 // pred_check_branch
      %7767 = sbr.rel (0) target = $region37
    $region36: #{net_forward.3} parent=1 // pred_region
      %7768 = dma.done [#allocation3], 256
    $region37: #{net_forward.3} parent=1 // pred_fallthru
      _
    %7769 = vsyncpa [#allocation3], 1

</llo_original>
